<compile_context>
chip_gen: v6e
topology: v6e:2x2x1
jax: 0.10.0
libtpu: 0.0.40
codegen_flags: <defaults>
</compile_context>

<pallas_src>
import functools

import jax
import jax.numpy as jnp
from jax.experimental import pallas as pl
from jax.experimental.pallas import tpu as pltpu


def _round_up(x, m):
    return (x + m - 1) // m * m


@functools.lru_cache(maxsize=1)
def _is_dual_tensorcore():
    """True on dual-TensorCore chips (v7x-class); conservative False otherwise."""
    try:
        kind = jax.devices()[0].device_kind.lower()
    except Exception:
        return False
    return "v7" in kind


def _choose_k_tiling(K, tk_max=2048):
    """Pick (Kp, tk): Kp multiple of tk, tk multiple of 128, tk ~<= tk_max."""
    Kp = _round_up(K, 128)
    if Kp <= tk_max:
        return Kp, Kp
    steps = -(-Kp // tk_max)
    tk = _round_up(-(-Kp // steps), 128)
    return tk * steps, tk


def _choose_m_tiling(M, dual_tc):
    """Pick (Mp, tm).  Rows padded to a multiple of 16 (clean bf16 sublane
    tiles).  Dual-TC chips: cap tm at 256 so the parallel M axis splits across
    the two TensorCores.  Single-TC chips: one big tile (fewer grid steps),
    capped at 512 to bound VMEM."""
    Mp = _round_up(max(M, 16), 16)
    cap = 256 if dual_tc else 512
    if Mp <= cap:
        return Mp, Mp
    return _round_up(Mp, cap), cap


# ----------------------------------------------------------------------------
# Generic fused linear kernels (used by the convs):  y = act(x @ W + b)
# grid = (M tiles, N tiles, K tiles).
# ----------------------------------------------------------------------------
def _linear_kernel_1k(x_ref, w_ref, b_ref, o_ref, *, relu):
    y = jnp.dot(x_ref[...], w_ref[...], preferred_element_type=jnp.float32)
    y = y + b_ref[...]
    if relu:
        y = jnp.maximum(y, 0.0)
    o_ref[...] = y.astype(o_ref.dtype)


def _linear_kernel_multik(x_ref, w_ref, b_ref, o_ref, acc_ref, *, relu):
    k = pl.program_id(2)

    @pl.when(k == 0)
    def _():
        acc_ref[...] = jnp.zeros_like(acc_ref)

    acc_ref[...] += jnp.dot(x_ref[...], w_ref[...],
                            preferred_element_type=jnp.float32)

    @pl.when(k == pl.num_programs(2) - 1)
    def _():
        y = acc_ref[...] + b_ref[...]
        if relu:
            y = jnp.maximum(y, 0.0)
        o_ref[...] = y.astype(o_ref.dtype)


def pack_linear(w, b, *, relu, n_exact=False, out_dtype=jnp.bfloat16,
                tk_max=2048):
    """Pre-pad + pre-cast one (in, out) linear layer.  Done ONCE, offline."""
    K, N = w.shape
    Np = N if n_exact else _round_up(N, 128)
    Kp, tk = _choose_k_tiling(K, tk_max)
    wp = jnp.zeros((Kp, Np), jnp.bfloat16).at[:K, :N].set(w.astype(jnp.bfloat16))
    bp = jnp.zeros((1, Np), jnp.float32).at[0, :N].set(b.astype(jnp.float32))
    return dict(wp=wp, bp=bp, K=K, N=N, Kp=Kp, Np=Np, tk=tk, relu=relu,
                out_dtype=out_dtype)


def apply_linear(x, p):
    """x: (M, Kp) bf16 (already K-padded).  Returns padded (Mp, Np) output."""
    M, K = x.shape
    assert K == p["Kp"], (K, p["Kp"])
    dual_tc = _is_dual_tensorcore()
    Mp, tm = _choose_m_tiling(M, dual_tc)
    if Mp != M:
        x = jnp.pad(x, ((0, Mp - M), (0, 0)))

    Np, tk = p["Np"], p["tk"]
    tn = Np if (Np <= 512 or Np % 512 != 0) else 512  # single N tile here
    nk = p["Kp"] // tk
    grid = (Mp // tm, Np // tn, nk)

    if nk == 1:
        kernel = functools.partial(_linear_kernel_1k, relu=p["relu"])
        scratch = []
    else:
        kernel = functools.partial(_linear_kernel_multik, relu=p["relu"])
        scratch = [pltpu.VMEM((tm, tn), jnp.float32)]

    return pl.pallas_call(
        kernel,
        out_shape=jax.ShapeDtypeStruct((Mp, Np), p["out_dtype"]),
        grid_spec=pltpu.PrefetchScalarGridSpec(
            num_scalar_prefetch=0,
            grid=grid,
            in_specs=[
                pl.BlockSpec((tm, tk), lambda i, j, k: (i, k)),
                pl.BlockSpec((tk, tn), lambda i, j, k: (k, j)),
                pl.BlockSpec((1, tn), lambda i, j, k: (0, j)),
            ],
            out_specs=pl.BlockSpec((tm, tn), lambda i, j, k: (i, j)),
            scratch_shapes=scratch,
        ),
        compiler_params=pltpu.CompilerParams(
            dimension_semantics=("parallel", "parallel", "arbitrary")),
    )(x, p["wp"], p["bp"])


# ----------------------------------------------------------------------------
# Conv2d 3x3, stride 1, "same", NHWC  ->  bf16 im2col + fused Pallas matmul
# ----------------------------------------------------------------------------
def conv3x3_same_relu(x_nhwc, p):
    """x_nhwc: (B, H, W, C) bf16.  Returns (B, H, W, Np) bf16 (Np may include
    zero-padded channels that feed the next conv directly)."""
    B, H, W, C = x_nhwc.shape
    xp = jnp.pad(x_nhwc, ((0, 0), (1, 1), (1, 1), (0, 0)))
    cols = [xp[:, dh:dh + H, dw:dw + W, :] for dh in range(3) for dw in range(3)]
    patches = jnp.concatenate(cols, axis=-1).reshape(B * H * W, 9 * C)
    if patches.shape[1] != p["Kp"]:
        patches = jnp.pad(patches, ((0, 0), (0, p["Kp"] - patches.shape[1])))
    y = apply_linear(patches, p)                    # (Mp, Np) bf16
    if y.shape[0] != B * H * W:
        y = y[:B * H * W]
    return y.reshape(B, H, W, p["Np"])


# ----------------------------------------------------------------------------
# Fused FC trunk:  FC1 (K-streamed) -> [FC_i (resident)]* -> policy/value head
# grid = (K tiles of the FC1 grid-feature weight,)
# ----------------------------------------------------------------------------
def _fc_trunk_kernel(*refs, n_post):
    """refs = (xg, xs, w1g, w1s, b1, [w_i, b_i] * n_post, out, acc).
    Streams the FC1 grid-part weight over grid axis 0.  The last post layer is
    the fused policy+value head (no ReLU)."""
    xg_ref, xs_ref, w1g_ref, w1s_ref, b1_ref = refs[:5]
    post = refs[5:5 + 2 * n_post]
    out_ref = refs[5 + 2 * n_post]
    acc_ref = refs[6 + 2 * n_post]
    k = pl.program_id(0)

    @pl.when(k == 0)
    def _():
        # agent_state + env_features contribution seeds the f32 accumulator
        acc_ref[...] = jnp.dot(xs_ref[...], w1s_ref[...],
                               preferred_element_type=jnp.float32)

    acc_ref[...] += jnp.dot(xg_ref[...], w1g_ref[...],
                            preferred_element_type=jnp.float32)

    @pl.when(k == pl.num_programs(0) - 1)
    def _():
        h = jnp.maximum(acc_ref[...] + b1_ref[...], 0.0)
        for i in range(n_post):
            w_ref, b_ref = post[2 * i], post[2 * i + 1]
            h = jnp.dot(h.astype(jnp.bfloat16), w_ref[...],
                        preferred_element_type=jnp.float32) + b_ref[...]
            if i < n_post - 1:        # last post layer = heads (no ReLU)
                h = jnp.maximum(h, 0.0)
        out_ref[...] = h


def fc_trunk(grid_feat, small, tp):
    """grid_feat: (B, grid_k) bf16 NHWC-flat conv features.
    small: (B, small_k) bf16 agent_state+env_features.  Returns (B, nh_p) f32."""
    B, kg = grid_feat.shape
    Mp = _round_up(max(B, 16), 16)
    kg_p, tk, ks_p = tp["kg_p"], tp["tk"], tp["ks_p"]
    n1p, nh_p = tp["n1p"], tp["nh_p"]
    post = tp["post"]
    n_post = len(post)
    nk = kg_p // tk

    xg = jnp.pad(grid_feat, ((0, Mp - B), (0, kg_p - kg)))
    xs = jnp.pad(small, ((0, Mp - B), (0, ks_p - small.shape[1])))

    in_specs = [
        pl.BlockSpec((Mp, tk), lambda k: (0, k)),      # FC1 acts, grid part
        pl.BlockSpec((Mp, ks_p), lambda k: (0, 0)),    # FC1 acts, small part
        pl.BlockSpec((tk, n1p), lambda k: (k, 0)),     # FC1 weight (streamed)
        pl.BlockSpec((ks_p, n1p), lambda k: (0, 0)),   # FC1 small-part weight
        pl.BlockSpec((1, n1p), lambda k: (0, 0)),      # FC1 bias
    ]
    operands = [xg, xs, tp["w1g"], tp["w1s"], tp["b1"]]
    for wp, bp in post:                                # resident FC2.. + heads
        in_specs.append(pl.BlockSpec(wp.shape, lambda k: (0, 0)))
        in_specs.append(pl.BlockSpec(bp.shape, lambda k: (0, 0)))
        operands.extend([wp, bp])

    flops = 2 * Mp * ((kg_p + ks_p) * n1p
                      + sum(w.shape[0] * w.shape[1] for w, _ in post))
    bytes_accessed = (sum(int(o.size) * o.dtype.itemsize for o in operands)
                      + Mp * nh_p * 4)

    out = pl.pallas_call(
        functools.partial(_fc_trunk_kernel, n_post=n_post),
        out_shape=jax.ShapeDtypeStruct((Mp, nh_p), jnp.float32),
        grid_spec=pltpu.PrefetchScalarGridSpec(
            num_scalar_prefetch=0,
            grid=(nk,),
            in_specs=in_specs,
            out_specs=pl.BlockSpec((Mp, nh_p), lambda k: (0, 0)),
            scratch_shapes=[pltpu.VMEM((Mp, n1p), jnp.float32)],
        ),
        compiler_params=pltpu.CompilerParams(
            dimension_semantics=("arbitrary",)),
        cost_estimate=pl.CostEstimate(flops=int(flops), transcendentals=0,
                                      bytes_accessed=int(bytes_accessed)),
    )(*operands)
    return out[:B]


# ----------------------------------------------------------------------------
# Parameter construction (raw f32) and one-time packing (padded / bf16)
# ----------------------------------------------------------------------------
def init_params(key, grid_shape, agent_state_dim, env_features_dim, num_outputs,
                conv_filters=((32, 3), (64, 3)), fc_hiddens=(256, 128)):
    H, W, Cin = grid_shape
    params = {}
    ks = iter(jax.random.split(key, 32))

    convs = []
    in_c = Cin
    for out_c, k in conv_filters:
        wk = jax.random.normal(next(ks), (k, k, in_c, out_c), jnp.float32) * 0.05
        bk = jax.random.normal(next(ks), (out_c,), jnp.float32) * 0.05
        convs.append((wk, bk))
        in_c = out_c
    params["convs"] = convs

    combined = in_c * H * W + agent_state_dim + env_features_dim
    fcs = []
    prev = combined
    for size in fc_hiddens:
        wk = jax.random.normal(next(ks), (prev, size), jnp.float32) * 0.02
        bk = jax.random.normal(next(ks), (size,), jnp.float32) * 0.02
        fcs.append((wk, bk))
        prev = size
    params["fcs"] = fcs

    params["policy"] = (
        jax.random.normal(next(ks), (prev, num_outputs), jnp.float32) * 0.02,
        jax.random.normal(next(ks), (num_outputs,), jnp.float32) * 0.02,
    )
    params["value"] = (
        jax.random.normal(next(ks), (prev, 1), jnp.float32) * 0.02,
        jax.random.normal(next(ks), (1,), jnp.float32) * 0.02,
    )
    return params


def prepare_params(raw, grid_shape):
    """One-time packing: pad / permute / cast every weight to its kernel
    layout (hoisted out of the per-step forward)."""
    H, W, _ = grid_shape
    packed = {}

    # Conv stack: each conv consumes the previous conv's channel-PADDED bf16
    # output directly (padded channels are exactly zero), so its weight's
    # per-tap input-channel axis is padded to match.  The LAST conv keeps its
    # exact output width so the flattened grid features (and hence the big FC1
    # weight streamed from HBM) are not blown up by padding.
    packed_convs = []
    in_ch_feed = None
    n_convs = len(raw["convs"])
    for li, (w, b) in enumerate(raw["convs"]):
        kh, kw, cin, cout = w.shape
        assert kh == 3 and kw == 3, "only 3x3 stride-1 'same' convs supported"
        if in_ch_feed is not None and in_ch_feed != cin:
            w = jnp.zeros((kh, kw, in_ch_feed, cout),
                          w.dtype).at[:, :, :cin, :].set(w)
        p = pack_linear(w.reshape(-1, cout), b, relu=True,
                        n_exact=(li == n_convs - 1))
        packed_convs.append(p)
        in_ch_feed = p["Np"]
    packed["convs"] = packed_convs
    c_out = packed_convs[-1]["Np"]        # == real channel count (exact N)

    # Fused FC trunk (FC1 K-streamed) + resident FC2.. + policy/value heads.
    fcs = raw["fcs"]
    w1, b1 = fcs[0]
    grid_k = c_out * H * W
    small_k = w1.shape[0] - grid_k
    n1 = w1.shape[1]
    n1p = _round_up(n1, 128)

    # Permute FC1's grid-part rows from the module's NCHW-flatten order to
    # NHWC-flatten order so the conv output needs no transpose at runtime.
    w1g = w1[:grid_k].reshape(c_out, H, W, n1)
    w1g = jnp.transpose(w1g, (1, 2, 0, 3)).reshape(grid_k, n1)
    kg_p, tk = _choose_k_tiling(grid_k)
    w1g_p = jnp.zeros((kg_p, n1p), jnp.bfloat16).at[:grid_k, :n1].set(
        w1g.astype(jnp.bfloat16))

    ks_p = _round_up(max(small_k, 1), 128)
    w1s_p = jnp.zeros((ks_p, n1p), jnp.bfloat16).at[:small_k, :n1].set(
        w1[grid_k:].astype(jnp.bfloat16))
    b1_p = jnp.zeros((1, n1p), jnp.float32).at[0, :n1].set(
        b1.astype(jnp.float32))

    post = []
    prev, prev_p = n1, n1p
    for w, b in fcs[1:]:
        n = w.shape[1]
        n_p = _round_up(n, 128)
        wp = jnp.zeros((prev_p, n_p), jnp.bfloat16).at[:prev, :n].set(
            w.astype(jnp.bfloat16))
        bp = jnp.zeros((1, n_p), jnp.float32).at[0, :n].set(
            b.astype(jnp.float32))
        post.append((wp, bp))
        prev, prev_p = n, n_p

    # Fused policy + value head: (prev, num_outputs + 1), no ReLU.
    pw, pb = raw["policy"]
    vw, vb = raw["value"]
    hw = jnp.concatenate([pw, vw], axis=1)
    hb = jnp.concatenate([pb, vb], axis=0)
    nh = hw.shape[1]
    nh_p = _round_up(nh, 128)
    hw_p = jnp.zeros((prev_p, nh_p), jnp.bfloat16).at[:prev, :nh].set(
        hw.astype(jnp.bfloat16))
    hb_p = jnp.zeros((1, nh_p), jnp.float32).at[0, :nh].set(
        hb.astype(jnp.float32))
    post.append((hw_p, hb_p))

    packed["trunk"] = dict(w1g=w1g_p, w1s=w1s_p, b1=b1_p, post=post,
                           grid_k=grid_k, kg_p=kg_p, tk=tk,
                           small_k=small_k, ks_p=ks_p, n1p=n1p, nh_p=nh_p)
    packed["num_outputs"] = pw.shape[1]
    return packed


# ----------------------------------------------------------------------------
# Forward pass (dict-obs branch of ResourceCNNModel.forward + value_function)
# ----------------------------------------------------------------------------
def resource_cnn_forward(packed, grid, agent_state, env_features):
    """Returns (logits, value)."""
    B = grid.shape[0]
    x = grid.astype(jnp.bfloat16)

    for p in packed["convs"]:
        x = conv3x3_same_relu(x, p)

    # NHWC flatten; FC1's weight rows were pre-permuted from the module's
    # NCHW-flatten order, so no transpose is needed here.
    grid_feat = x.reshape(B, -1)

    small = jnp.concatenate(
        [agent_state.astype(jnp.bfloat16), env_features.astype(jnp.bfloat16)],
        axis=1)

    heads = fc_trunk(grid_feat, small, packed["trunk"])
    n_out = packed["num_outputs"]
    logits = heads[:, :n_out]
    value = heads[:, n_out]          # value_head(features).squeeze(1)
    return logits, value


# ----------------------------------------------------------------------------
# Pure-JAX f32 reference (tolerance check against the bf16 Pallas path)
# ----------------------------------------------------------------------------
def reference_forward(raw, grid, agent_state, env_features):
    B = grid.shape[0]
    x = grid.astype(jnp.float32)
    for w, b in raw["convs"]:
        H, W = x.shape[1], x.shape[2]
        xp = jnp.pad(x, ((0, 0), (1, 1), (1, 1), (0, 0)))
        cols = [xp[:, dh:dh + H, dw:dw + W, :]
                for dh in range(3) for dw in range(3)]
        patches = jnp.concatenate(cols, axis=-1).reshape(B * H * W, -1)
        y = patches @ w.reshape(-1, w.shape[-1]) + b
        x = jnp.maximum(y, 0.0).reshape(B, H, W, -1)
    feat = jnp.transpose(x, (0, 3, 1, 2)).reshape(B, -1)
    h = jnp.concatenate([feat, agent_state.astype(jnp.float32),
                         env_features.astype(jnp.float32)], axis=1)
    for w, b in raw["fcs"]:
        h = jnp.maximum(h @ w + b, 0.0)
    logits = h @ raw["policy"][0] + raw["policy"][1]
    value = (h @ raw["value"][0] + raw["value"][1])[:, 0]
    return logits, value


if __name__ == "__main__":
    B = 2
    H = W = 16
    C_GRID = 4
    AGENT_STATE = 8
    ENV_FEATURES = 4
    NUM_OUTPUTS = 6

    key = jax.random.PRNGKey(0)
    k_grid, k_as, k_ef, k_param = jax.random.split(key, 4)

    grid = jax.random.uniform(k_grid, (B, H, W, C_GRID), jnp.float32)
    agent_state = jax.random.normal(k_as, (B, AGENT_STATE), jnp.float32)
    env_features = jax.random.normal(k_ef, (B, ENV_FEATURES), jnp.float32)

    raw = init_params(k_param, (H, W, C_GRID), AGENT_STATE, ENV_FEATURES,
                      NUM_OUTPUTS)
    packed = prepare_params(raw, (H, W, C_GRID))   # one-time pad/permute/cast

    fwd = jax.jit(functools.partial(resource_cnn_forward, packed))
    logits, value = fwd(grid, agent_state, env_features)
    jax.block_until_ready((logits, value))

    assert logits.shape == (B, NUM_OUTPUTS), logits.shape
    assert value.shape == (B,), value.shape

    # bf16 weight/activation streaming => small deviations vs f32 reference.
    ref_logits, ref_value = reference_forward(raw, grid, agent_state,
                                              env_features)
    assert bool(jnp.allclose(logits, ref_logits, rtol=1e-1, atol=2e-2)), (
        float(jnp.max(jnp.abs(logits - ref_logits))))
    assert bool(jnp.allclose(value, ref_value, rtol=1e-1, atol=2e-2)), (
        float(jnp.max(jnp.abs(value - ref_value))))

    print("KERNEL_OK")
</pallas_src>

<mosaic_0001>
module attributes {stable_mosaic.version = 11 : i64} {
  func.func @_linear_kernel_1k(%arg0: i32, %arg1: i32, %arg2: i32, %arg3: memref<512x128xbf16, #tpu.memory_space<vmem>>, %arg4: memref<128x128xbf16, #tpu.memory_space<vmem>>, %arg5: memref<1x128xf32, #tpu.memory_space<vmem>>, %arg6: memref<512x128xbf16, #tpu.memory_space<vmem>>) attributes {dimension_semantics = [#tpu.dimension_semantics<parallel>, #tpu.dimension_semantics<parallel>, #tpu.dimension_semantics<arbitrary>], iteration_bounds = array<i64: 1, 1, 1>, scalar_prefetch = 0 : i64, scratch_operands = 0 : i64, tpu.core_type = #tpu.core_type<tc>, window_params = [{transform_indices = @transform_0, window_bounds = array<i64: 512, 128>}, {transform_indices = @transform_1, window_bounds = array<i64: 128, 128>}, {transform_indices = @transform_2, window_bounds = array<i64: 1, 128>}, {transform_indices = @transform_3, window_bounds = array<i64: 512, 128>}]} {
    %c0 = arith.constant 0 : index
    %c0_0 = arith.constant 0 : index
    %0 = vector.load %arg3[%c0, %c0_0] : memref<512x128xbf16, #tpu.memory_space<vmem>>, vector<512x128xbf16>
    %c0_1 = arith.constant 0 : index
    %c0_2 = arith.constant 0 : index
    %1 = vector.load %arg4[%c0_1, %c0_2] : memref<128x128xbf16, #tpu.memory_space<vmem>>, vector<128x128xbf16>
    %cst = arith.constant dense<0.000000e+00> : vector<512x128xf32>
    %2 = tpu.matmul %0, %1, %cst {dimension_numbers = #tpu.dot_dimension_numbers<[1], [0], [0], [1], [0, 0, 1, 1], [], []>} : vector<512x128xbf16>, vector<128x128xbf16>, vector<512x128xf32> -> vector<512x128xf32>
    %c0_3 = arith.constant 0 : index
    %c0_4 = arith.constant 0 : index
    %3 = vector.load %arg5[%c0_3, %c0_4] : memref<1x128xf32, #tpu.memory_space<vmem>>, vector<1x128xf32>
    %4 = vector.broadcast %3 : vector<1x128xf32> to vector<512x128xf32>
    %5 = arith.addf %2, %4 : vector<512x128xf32>
    %cst_5 = arith.constant 0.000000e+00 : f32
    %6 = vector.broadcast %cst_5 : f32 to vector<512x128xf32>
    %7 = arith.maximumf %5, %6 : vector<512x128xf32>
    %8 = arith.truncf %7 : vector<512x128xf32> to vector<512x128xbf16>
    %c0_6 = arith.constant 0 : index
    %c0_7 = arith.constant 0 : index
    %9 = vector.load %arg6[%c0_6, %c0_7] : memref<512x128xbf16, #tpu.memory_space<vmem>>, vector<512x128xbf16>
    tpu.vector_store %arg6[%c0_6, %c0_7], %8 {strides = array<i32>} : memref<512x128xbf16, #tpu.memory_space<vmem>>, vector<512x128xbf16>,
    return
  }
  func.func @transform_0(%arg0: i32, %arg1: i32, %arg2: i32) -> (i32, i32) {
    %c0_i32 = arith.constant 0 : i32
    return %arg0, %arg2 : i32, i32
  }
  func.func @transform_1(%arg0: i32, %arg1: i32, %arg2: i32) -> (i32, i32) {
    %c0_i32 = arith.constant 0 : i32
    return %arg2, %arg1 : i32, i32
  }
  func.func @transform_2(%arg0: i32, %arg1: i32, %arg2: i32) -> (i32, i32) {
    %c0_i32 = arith.constant 0 : i32
    %c0_i32_0 = arith.constant 0 : i32
    return %c0_i32, %arg1 : i32, i32
  }
  func.func @transform_3(%arg0: i32, %arg1: i32, %arg2: i32) -> (i32, i32) {
    %c0_i32 = arith.constant 0 : i32
    return %arg0, %arg1 : i32, i32
  }
}

module attributes {stable_mosaic.version = 11 : i64} {
  func.func @_linear_kernel_1k(%arg0: i32, %arg1: i32, %arg2: i32, %arg3: memref<512x1152xbf16, #tpu.memory_space<vmem>>, %arg4: memref<1152x64xbf16, #tpu.memory_space<vmem>>, %arg5: memref<1x64xf32, #tpu.memory_space<vmem>>, %arg6: memref<512x64xbf16, #tpu.memory_space<vmem>>) attributes {dimension_semantics = [#tpu.dimension_semantics<parallel>, #tpu.dimension_semantics<parallel>, #tpu.dimension_semantics<arbitrary>], iteration_bounds = array<i64: 1, 1, 1>, scalar_prefetch = 0 : i64, scratch_operands = 0 : i64, tpu.core_type = #tpu.core_type<tc>, window_params = [{transform_indices = @transform_0, window_bounds = array<i64: 512, 1152>}, {transform_indices = @transform_1, window_bounds = array<i64: 1152, 64>}, {transform_indices = @transform_2, window_bounds = array<i64: 1, 64>}, {transform_indices = @transform_3, window_bounds = array<i64: 512, 64>}]} {
    %c0 = arith.constant 0 : index
    %c0_0 = arith.constant 0 : index
    %0 = vector.load %arg3[%c0, %c0_0] : memref<512x1152xbf16, #tpu.memory_space<vmem>>, vector<512x1152xbf16>
    %c0_1 = arith.constant 0 : index
    %c0_2 = arith.constant 0 : index
    %1 = vector.load %arg4[%c0_1, %c0_2] : memref<1152x64xbf16, #tpu.memory_space<vmem>>, vector<1152x64xbf16>
    %cst = arith.constant dense<0.000000e+00> : vector<512x64xf32>
    %2 = tpu.matmul %0, %1, %cst {dimension_numbers = #tpu.dot_dimension_numbers<[1], [0], [0], [1], [0, 0, 1, 1], [], []>} : vector<512x1152xbf16>, vector<1152x64xbf16>, vector<512x64xf32> -> vector<512x64xf32>
    %c0_3 = arith.constant 0 : index
    %c0_4 = arith.constant 0 : index
    %3 = vector.load %arg5[%c0_3, %c0_4] : memref<1x64xf32, #tpu.memory_space<vmem>>, vector<1x64xf32>
    %4 = vector.broadcast %3 : vector<1x64xf32> to vector<512x64xf32>
    %5 = arith.addf %2, %4 : vector<512x64xf32>
    %cst_5 = arith.constant 0.000000e+00 : f32
    %6 = vector.broadcast %cst_5 : f32 to vector<512x64xf32>
    %7 = arith.maximumf %5, %6 : vector<512x64xf32>
    %8 = arith.truncf %7 : vector<512x64xf32> to vector<512x64xbf16>
    %c0_6 = arith.constant 0 : index
    %c0_7 = arith.constant 0 : index
    %9 = vector.load %arg6[%c0_6, %c0_7] : memref<512x64xbf16, #tpu.memory_space<vmem>>, vector<512x64xbf16>
    tpu.vector_store %arg6[%c0_6, %c0_7], %8 {strides = array<i32>} : memref<512x64xbf16, #tpu.memory_space<vmem>>, vector<512x64xbf16>,
    return
  }
  func.func @transform_0(%arg0: i32, %arg1: i32, %arg2: i32) -> (i32, i32) {
    %c0_i32 = arith.constant 0 : i32
    return %arg0, %arg2 : i32, i32
  }
  func.func @transform_1(%arg0: i32, %arg1: i32, %arg2: i32) -> (i32, i32) {
    %c0_i32 = arith.constant 0 : i32
    return %arg2, %arg1 : i32, i32
  }
  func.func @transform_2(%arg0: i32, %arg1: i32, %arg2: i32) -> (i32, i32) {
    %c0_i32 = arith.constant 0 : i32
    %c0_i32_0 = arith.constant 0 : i32
    return %c0_i32, %arg1 : i32, i32
  }
  func.func @transform_3(%arg0: i32, %arg1: i32, %arg2: i32) -> (i32, i32) {
    %c0_i32 = arith.constant 0 : i32
    return %arg0, %arg1 : i32, i32
  }
}

module attributes {stable_mosaic.version = 11 : i64} {
  func.func @_fc_trunk_kernel(%arg0: i32, %arg1: memref<16x2048xbf16, #tpu.memory_space<vmem>>, %arg2: memref<16x128xbf16, #tpu.memory_space<vmem>>, %arg3: memref<2048x256xbf16, #tpu.memory_space<vmem>>, %arg4: memref<128x256xbf16, #tpu.memory_space<vmem>>, %arg5: memref<1x256xf32, #tpu.memory_space<vmem>>, %arg6: memref<256x128xbf16, #tpu.memory_space<vmem>>, %arg7: memref<1x128xf32, #tpu.memory_space<vmem>>, %arg8: memref<128x128xbf16, #tpu.memory_space<vmem>>, %arg9: memref<1x128xf32, #tpu.memory_space<vmem>>, %arg10: memref<16x128xf32, #tpu.memory_space<vmem>>, %arg11: memref<16x256xf32, #tpu.memory_space<vmem>>) attributes {dimension_semantics = [#tpu.dimension_semantics<arbitrary>], iteration_bounds = array<i64: 8>, scalar_prefetch = 0 : i64, scratch_operands = 1 : i64, tpu.core_type = #tpu.core_type<tc>, window_params = [{transform_indices = @transform_0, window_bounds = array<i64: 16, 2048>}, {pipeline_mode = #tpu.pipeline_mode<synchronous>, transform_indices = @transform_1, window_bounds = array<i64: 16, 128>}, {transform_indices = @transform_2, window_bounds = array<i64: 2048, 256>}, {pipeline_mode = #tpu.pipeline_mode<synchronous>, transform_indices = @transform_3, window_bounds = array<i64: 128, 256>}, {pipeline_mode = #tpu.pipeline_mode<synchronous>, transform_indices = @transform_4, window_bounds = array<i64: 1, 256>}, {pipeline_mode = #tpu.pipeline_mode<synchronous>, transform_indices = @transform_5, window_bounds = array<i64: 256, 128>}, {pipeline_mode = #tpu.pipeline_mode<synchronous>, transform_indices = @transform_6, window_bounds = array<i64: 1, 128>}, {pipeline_mode = #tpu.pipeline_mode<synchronous>, transform_indices = @transform_7, window_bounds = array<i64: 128, 128>}, {pipeline_mode = #tpu.pipeline_mode<synchronous>, transform_indices = @transform_8, window_bounds = array<i64: 1, 128>}, {pipeline_mode = #tpu.pipeline_mode<synchronous>, transform_indices = @transform_9, window_bounds = array<i64: 16, 128>}]} {
    %c0_i32 = arith.constant 0 : i32
    %0 = arith.cmpi eq, %arg0, %c0_i32 : i32
    %1 = arith.extui %0 : i1 to i32
    %c0_i32_0 = arith.constant 0 : i32
    %2 = arith.cmpi ne, %1, %c0_i32_0 : i32
    scf.if %2 {
      %c0_9 = arith.constant 0 : index
      %c0_10 = arith.constant 0 : index
      %12 = vector.load %arg2[%c0_9, %c0_10] : memref<16x128xbf16, #tpu.memory_space<vmem>>, vector<16x128xbf16>
      %c0_11 = arith.constant 0 : index
      %c0_12 = arith.constant 0 : index
      %13 = vector.load %arg4[%c0_11, %c0_12] : memref<128x256xbf16, #tpu.memory_space<vmem>>, vector<128x256xbf16>
      %cst_13 = arith.constant dense<0.000000e+00> : vector<16x256xf32>
      %14 = tpu.matmul %12, %13, %cst_13 {dimension_numbers = #tpu.dot_dimension_numbers<[1], [0], [0], [1], [0, 0, 1, 1], [], []>} : vector<16x128xbf16>, vector<128x256xbf16>, vector<16x256xf32> -> vector<16x256xf32>
      %c0_14 = arith.constant 0 : index
      %c0_15 = arith.constant 0 : index
      %15 = vector.load %arg11[%c0_14, %c0_15] : memref<16x256xf32, #tpu.memory_space<vmem>>, vector<16x256xf32>
      tpu.vector_store %arg11[%c0_14, %c0_15], %14 {strides = array<i32>} : memref<16x256xf32, #tpu.memory_space<vmem>>, vector<16x256xf32>,
    } else {
    }
    %c0 = arith.constant 0 : index
    %c0_1 = arith.constant 0 : index
    %3 = vector.load %arg11[%c0, %c0_1] : memref<16x256xf32, #tpu.memory_space<vmem>>, vector<16x256xf32>
    %c0_2 = arith.constant 0 : index
    %c0_3 = arith.constant 0 : index
    %4 = vector.load %arg1[%c0_2, %c0_3] : memref<16x2048xbf16, #tpu.memory_space<vmem>>, vector<16x2048xbf16>
    %c0_4 = arith.constant 0 : index
    %c0_5 = arith.constant 0 : index
    %5 = vector.load %arg3[%c0_4, %c0_5] : memref<2048x256xbf16, #tpu.memory_space<vmem>>, vector<2048x256xbf16>
    %cst = arith.constant dense<0.000000e+00> : vector<16x256xf32>
    %6 = tpu.matmul %4, %5, %cst {dimension_numbers = #tpu.dot_dimension_numbers<[1], [0], [0], [1], [0, 0, 1, 1], [], []>} : vector<16x2048xbf16>, vector<2048x256xbf16>, vector<16x256xf32> -> vector<16x256xf32>
    %7 = arith.addf %3, %6 : vector<16x256xf32>
    %c0_6 = arith.constant 0 : index
    %c0_7 = arith.constant 0 : index
    %8 = vector.load %arg11[%c0_6, %c0_7] : memref<16x256xf32, #tpu.memory_space<vmem>>, vector<16x256xf32>
    tpu.vector_store %arg11[%c0_6, %c0_7], %7 {strides = array<i32>} : memref<16x256xf32, #tpu.memory_space<vmem>>, vector<16x256xf32>,
    %c7_i32 = arith.constant 7 : i32
    %9 = arith.cmpi eq, %arg0, %c7_i32 : i32
    %10 = arith.extui %9 : i1 to i32
    %c0_i32_8 = arith.constant 0 : i32
    %11 = arith.cmpi ne, %10, %c0_i32_8 : i32
    scf.if %11 {
      %c0_9 = arith.constant 0 : index
      %c0_10 = arith.constant 0 : index
      %12 = vector.load %arg11[%c0_9, %c0_10] : memref<16x256xf32, #tpu.memory_space<vmem>>, vector<16x256xf32>
      %c0_11 = arith.constant 0 : index
      %c0_12 = arith.constant 0 : index
      %13 = vector.load %arg5[%c0_11, %c0_12] : memref<1x256xf32, #tpu.memory_space<vmem>>, vector<1x256xf32>
      %14 = vector.broadcast %13 : vector<1x256xf32> to vector<16x256xf32>
      %15 = arith.addf %12, %14 : vector<16x256xf32>
      %cst_13 = arith.constant 0.000000e+00 : f32
      %16 = vector.broadcast %cst_13 : f32 to vector<16x256xf32>
      %17 = arith.maximumf %15, %16 : vector<16x256xf32>
      %18 = arith.truncf %17 : vector<16x256xf32> to vector<16x256xbf16>
      %c0_14 = arith.constant 0 : index
      %c0_15 = arith.constant 0 : index
      %19 = vector.load %arg6[%c0_14, %c0_15] : memref<256x128xbf16, #tpu.memory_space<vmem>>, vector<256x128xbf16>
      %cst_16 = arith.constant dense<0.000000e+00> : vector<16x128xf32>
      %20 = tpu.matmul %18, %19, %cst_16 {dimension_numbers = #tpu.dot_dimension_numbers<[1], [0], [0], [1], [0, 0, 1, 1], [], []>} : vector<16x256xbf16>, vector<256x128xbf16>, vector<16x128xf32> -> vector<16x128xf32>
      %c0_17 = arith.constant 0 : index
      %c0_18 = arith.constant 0 : index
      %21 = vector.load %arg7[%c0_17, %c0_18] : memref<1x128xf32, #tpu.memory_space<vmem>>, vector<1x128xf32>
      %22 = vector.broadcast %21 : vector<1x128xf32> to vector<16x128xf32>
      %23 = arith.addf %20, %22 : vector<16x128xf32>
      %cst_19 = arith.constant 0.000000e+00 : f32
      %24 = vector.broadcast %cst_19 : f32 to vector<16x128xf32>
      %25 = arith.maximumf %23, %24 : vector<16x128xf32>
      %26 = arith.truncf %25 : vector<16x128xf32> to vector<16x128xbf16>
      %c0_20 = arith.constant 0 : index
      %c0_21 = arith.constant 0 : index
      %27 = vector.load %arg8[%c0_20, %c0_21] : memref<128x128xbf16, #tpu.memory_space<vmem>>, vector<128x128xbf16>
      %cst_22 = arith.constant dense<0.000000e+00> : vector<16x128xf32>
      %28 = tpu.matmul %26, %27, %cst_22 {dimension_numbers = #tpu.dot_dimension_numbers<[1], [0], [0], [1], [0, 0, 1, 1], [], []>} : vector<16x128xbf16>, vector<128x128xbf16>, vector<16x128xf32> -> vector<16x128xf32>
      %c0_23 = arith.constant 0 : index
      %c0_24 = arith.constant 0 : index
      %29 = vector.load %arg9[%c0_23, %c0_24] : memref<1x128xf32, #tpu.memory_space<vmem>>, vector<1x128xf32>
      %30 = vector.broadcast %29 : vector<1x128xf32> to vector<16x128xf32>
      %31 = arith.addf %28, %30 : vector<16x128xf32>
      %c0_25 = arith.constant 0 : index
      %c0_26 = arith.constant 0 : index
      %32 = vector.load %arg10[%c0_25, %c0_26] : memref<16x128xf32, #tpu.memory_space<vmem>>, vector<16x128xf32>
      tpu.vector_store %arg10[%c0_25, %c0_26], %31 {strides = array<i32>} : memref<16x128xf32, #tpu.memory_space<vmem>>, vector<16x128xf32>,
    } else {
    }
    return
  }
  func.func @transform_0(%arg0: i32) -> (i32, i32) {
    %c0_i32 = arith.constant 0 : i32
    %c0_i32_0 = arith.constant 0 : i32
    return %c0_i32, %arg0 : i32, i32
  }
  func.func @transform_1(%arg0: i32) -> (i32, i32) {
    %c0_i32 = arith.constant 0 : i32
    %c0_i32_0 = arith.constant 0 : i32
    %c0_i32_1 = arith.constant 0 : i32
    return %c0_i32, %c0_i32_0 : i32, i32
  }
  func.func @transform_2(%arg0: i32) -> (i32, i32) {
    %c0_i32 = arith.constant 0 : i32
    %c0_i32_0 = arith.constant 0 : i32
    return %arg0, %c0_i32 : i32, i32
  }
  func.func @transform_3(%arg0: i32) -> (i32, i32) {
    %c0_i32 = arith.constant 0 : i32
    %c0_i32_0 = arith.constant 0 : i32
    %c0_i32_1 = arith.constant 0 : i32
    return %c0_i32, %c0_i32_0 : i32, i32
  }
  func.func @transform_4(%arg0: i32) -> (i32, i32) {
    %c0_i32 = arith.constant 0 : i32
    %c0_i32_0 = arith.constant 0 : i32
    %c0_i32_1 = arith.constant 0 : i32
    return %c0_i32, %c0_i32_0 : i32, i32
  }
  func.func @transform_5(%arg0: i32) -> (i32, i32) {
    %c0_i32 = arith.constant 0 : i32
    %c0_i32_0 = arith.constant 0 : i32
    %c0_i32_1 = arith.constant 0 : i32
    return %c0_i32, %c0_i32_0 : i32, i32
  }
  func.func @transform_6(%arg0: i32) -> (i32, i32) {
    %c0_i32 = arith.constant 0 : i32
    %c0_i32_0 = arith.constant 0 : i32
    %c0_i32_1 = arith.constant 0 : i32
    return %c0_i32, %c0_i32_0 : i32, i32
  }
  func.func @transform_7(%arg0: i32) -> (i32, i32) {
    %c0_i32 = arith.constant 0 : i32
    %c0_i32_0 = arith.constant 0 : i32
    %c0_i32_1 = arith.constant 0 : i32
    return %c0_i32, %c0_i32_0 : i32, i32
  }
  func.func @transform_8(%arg0: i32) -> (i32, i32) {
    %c0_i32 = arith.constant 0 : i32
    %c0_i32_0 = arith.constant 0 : i32
    %c0_i32_1 = arith.constant 0 : i32
    return %c0_i32, %c0_i32_0 : i32, i32
  }
  func.func @transform_9(%arg0: i32) -> (i32, i32) {
    %c0_i32 = arith.constant 0 : i32
    %c0_i32_0 = arith.constant 0 : i32
    %c0_i32_1 = arith.constant 0 : i32
    return %c0_i32, %c0_i32_0 : i32, i32
  }
}

</mosaic_0001>

<llo_original>
// kernel: resource_cnn_forward.3
$region0: #{resource_cnn_forward.3}
  #allocation0 [shape = 'u32[]', space=smem, size = 0x4, offset = 0x4, fixed_abs, tag = 'smem constant byte address 0x4 - core index']
  #allocation1 [shape = 'u32[144,128]{1,0:T(1,128)}', space=vmem, size = 0x12000, scoped, tag = 'internal scratch']
  %s0 = inlined_call_operand.vmem [shape: bf16[512,128], index: 0, kind: input, shape index: {}]
  %s1 = inlined_call_operand.vmem [shape: bf16[128,128], index: 1, kind: input, shape index: {}]
  %s2 = inlined_call_operand.vmem [shape: f32[1,128], index: 2, kind: input, shape index: {}]
  %s3 = inlined_call_operand.vmem [shape: bf16[512,128], index: 3, kind: output, shape index: {}]
  %s4 = sld [smem:[#allocation0]]
  $region22: #{resource_cnn_forward.3} parent=0
    _
  %s6 = ssub.s32 1, %s4
  %s7 = scalar_select 0, %s6, %s4
  // Predicated region
  $region2: #{resource_cnn_forward.3} parent=0 // pred_check
    _
  $region3: #{resource_cnn_forward.3} parent=0 // pred_check_branch
    %9 = sbr.rel (0) target = $region5
  $region4: #{resource_cnn_forward.3} parent=0 // pred_region
    _
  $region5: #{resource_cnn_forward.3} parent=0 // pred_fallthru
    _
  // Predicated region
  $region6: #{resource_cnn_forward.3} parent=0 // pred_check
    _
  $region7: #{resource_cnn_forward.3} parent=0 // pred_check_branch
    %11 = sbr.rel (0) target = $region9
  $region8: #{resource_cnn_forward.3} parent=0 // pred_region
    _
  $region9: #{resource_cnn_forward.3} parent=0 // pred_fallthru
    _
  // Predicated region
  $region10: #{resource_cnn_forward.3} parent=0 // pred_check
    _
  $region11: #{resource_cnn_forward.3} parent=0 // pred_check_branch
    %13 = sbr.rel (0) target = $region13
  $region12: #{resource_cnn_forward.3} parent=0 // pred_region
    _
  $region13: #{resource_cnn_forward.3} parent=0 // pred_fallthru
    _
  %v15 = vld [vmem:[%s0] sm:$0xf]
  %v16 = vld [vmem:[%s0 + $0x4] sm:$0xf]
  %v17 = vld [vmem:[%s0 + $0x8] sm:$0xf]
  %v18 = vld [vmem:[%s0 + $0xc] sm:$0xf]
  %v19 = vld [vmem:[%s0 + $0x10] sm:$0xf]
  %v20 = vld [vmem:[%s0 + $0x14] sm:$0xf]
  %v21 = vld [vmem:[%s0 + $0x18] sm:$0xf]
  %v22 = vld [vmem:[%s0 + $0x1c] sm:$0xf]
  %v23 = vld [vmem:[%s0 + $0x20] sm:$0xf]
  %v24 = vld [vmem:[%s0 + $0x24] sm:$0xf]
  %v25 = vld [vmem:[%s0 + $0x28] sm:$0xf]
  %v26 = vld [vmem:[%s0 + $0x2c] sm:$0xf]
  %v27 = vld [vmem:[%s0 + $0x30] sm:$0xf]
  %v28 = vld [vmem:[%s0 + $0x34] sm:$0xf]
  %v29 = vld [vmem:[%s0 + $0x38] sm:$0xf]
  %v30 = vld [vmem:[%s0 + $0x3c] sm:$0xf]
  %v31 = vld [vmem:[%s0 + $0x40] sm:$0xf]
  %v32 = vld [vmem:[%s0 + $0x44] sm:$0xf]
  %v33 = vld [vmem:[%s0 + $0x48] sm:$0xf]
  %v34 = vld [vmem:[%s0 + $0x4c] sm:$0xf]
  %v35 = vld [vmem:[%s0 + $0x50] sm:$0xf]
  %v36 = vld [vmem:[%s0 + $0x54] sm:$0xf]
  %v37 = vld [vmem:[%s0 + $0x58] sm:$0xf]
  %v38 = vld [vmem:[%s0 + $0x5c] sm:$0xf]
  %v39 = vld [vmem:[%s0 + $0x60] sm:$0xf]
  %v40 = vld [vmem:[%s0 + $0x64] sm:$0xf]
  %v41 = vld [vmem:[%s0 + $0x68] sm:$0xf]
  %v42 = vld [vmem:[%s0 + $0x6c] sm:$0xf]
  %v43 = vld [vmem:[%s0 + $0x70] sm:$0xf]
  %v44 = vld [vmem:[%s0 + $0x74] sm:$0xf]
  %v45 = vld [vmem:[%s0 + $0x78] sm:$0xf]
  %v46 = vld [vmem:[%s0 + $0x7c] sm:$0xf]
  %v47 = vld [vmem:[%s0 + $0x80] sm:$0xf]
  %v48 = vld [vmem:[%s0 + $0x84] sm:$0xf]
  %v49 = vld [vmem:[%s0 + $0x88] sm:$0xf]
  %v50 = vld [vmem:[%s0 + $0x8c] sm:$0xf]
  %v51 = vld [vmem:[%s0 + $0x90] sm:$0xf]
  %v52 = vld [vmem:[%s0 + $0x94] sm:$0xf]
  %v53 = vld [vmem:[%s0 + $0x98] sm:$0xf]
  %v54 = vld [vmem:[%s0 + $0x9c] sm:$0xf]
  %v55 = vld [vmem:[%s0 + $0xa0] sm:$0xf]
  %v56 = vld [vmem:[%s0 + $0xa4] sm:$0xf]
  %v57 = vld [vmem:[%s0 + $0xa8] sm:$0xf]
  %v58 = vld [vmem:[%s0 + $0xac] sm:$0xf]
  %v59 = vld [vmem:[%s0 + $0xb0] sm:$0xf]
  %v60 = vld [vmem:[%s0 + $0xb4] sm:$0xf]
  %v61 = vld [vmem:[%s0 + $0xb8] sm:$0xf]
  %v62 = vld [vmem:[%s0 + $0xbc] sm:$0xf]
  %v63 = vld [vmem:[%s0 + $0xc0] sm:$0xf]
  %v64 = vld [vmem:[%s0 + $0xc4] sm:$0xf]
  %v65 = vld [vmem:[%s0 + $0xc8] sm:$0xf]
  %v66 = vld [vmem:[%s0 + $0xcc] sm:$0xf]
  %v67 = vld [vmem:[%s0 + $0xd0] sm:$0xf]
  %v68 = vld [vmem:[%s0 + $0xd4] sm:$0xf]
  %v69 = vld [vmem:[%s0 + $0xd8] sm:$0xf]
  %v70 = vld [vmem:[%s0 + $0xdc] sm:$0xf]
  %v71 = vld [vmem:[%s0 + $0xe0] sm:$0xf]
  %v72 = vld [vmem:[%s0 + $0xe4] sm:$0xf]
  %v73 = vld [vmem:[%s0 + $0xe8] sm:$0xf]
  %v74 = vld [vmem:[%s0 + $0xec] sm:$0xf]
  %v75 = vld [vmem:[%s0 + $0xf0] sm:$0xf]
  %v76 = vld [vmem:[%s0 + $0xf4] sm:$0xf]
  %v77 = vld [vmem:[%s0 + $0xf8] sm:$0xf]
  %v78 = vld [vmem:[%s0 + $0xfc] sm:$0xf]
  %v79 = vld [vmem:[%s1] sm:$0xf]
  %v80 = vld [vmem:[%s1 + $0x4] sm:$0xf]
  %v81 = vld [vmem:[%s1 + $0x8] sm:$0xf]
  %v82 = vld [vmem:[%s1 + $0xc] sm:$0xf]
  %v83 = vld [vmem:[%s1 + $0x10] sm:$0xf]
  %v84 = vld [vmem:[%s1 + $0x14] sm:$0xf]
  %v85 = vld [vmem:[%s1 + $0x18] sm:$0xf]
  %v86 = vld [vmem:[%s1 + $0x1c] sm:$0xf]
  %v87 = vld [vmem:[%s1 + $0x20] sm:$0xf]
  %v88 = vld [vmem:[%s1 + $0x24] sm:$0xf]
  %v89 = vld [vmem:[%s1 + $0x28] sm:$0xf]
  %v90 = vld [vmem:[%s1 + $0x2c] sm:$0xf]
  %v91 = vld [vmem:[%s1 + $0x30] sm:$0xf]
  %v92 = vld [vmem:[%s1 + $0x34] sm:$0xf]
  %v93 = vld [vmem:[%s1 + $0x38] sm:$0xf]
  %v94 = vld [vmem:[%s1 + $0x3c] sm:$0xf]
  %v95 = vld [vmem:[%s2] sm:$0x1]
  %v97 = vlaneseq
  %v98 = vshrl.u32 %v97, 7
  %v99 = vsub.s32 0, %v98
  %v100 = vrot.slane %v95, %v99
  %v166 = vunpack.c.l.b16 %v15
  %v167 = vunpack.c.l.b16 %v16
  %v168 = vunpack.c.l.b16 %v17
  %v169 = vunpack.c.l.b16 %v18
  %v170 = vunpack.c.l.b16 %v19
  %v171 = vunpack.c.l.b16 %v20
  %v172 = vunpack.c.l.b16 %v21
  %v173 = vunpack.c.l.b16 %v22
  %v174 = vunpack.c.l.b16 %v23
  %v175 = vunpack.c.l.b16 %v24
  %v176 = vunpack.c.l.b16 %v25
  %v177 = vunpack.c.l.b16 %v26
  %v178 = vunpack.c.l.b16 %v27
  %v179 = vunpack.c.l.b16 %v28
  %v180 = vunpack.c.l.b16 %v29
  %v181 = vunpack.c.l.b16 %v30
  %v182 = vunpack.c.l.b16 %v31
  %v183 = vunpack.c.l.b16 %v32
  %v184 = vunpack.c.l.b16 %v33
  %v185 = vunpack.c.l.b16 %v34
  %v186 = vunpack.c.l.b16 %v35
  %v187 = vunpack.c.l.b16 %v36
  %v188 = vunpack.c.l.b16 %v37
  %v189 = vunpack.c.l.b16 %v38
  %v190 = vunpack.c.l.b16 %v39
  %v191 = vunpack.c.l.b16 %v40
  %v192 = vunpack.c.l.b16 %v41
  %v193 = vunpack.c.l.b16 %v42
  %v194 = vunpack.c.l.b16 %v43
  %v195 = vunpack.c.l.b16 %v44
  %v196 = vunpack.c.l.b16 %v45
  %v197 = vunpack.c.l.b16 %v46
  %v198 = vunpack.c.l.b16 %v47
  %v199 = vunpack.c.l.b16 %v48
  %v200 = vunpack.c.l.b16 %v49
  %v201 = vunpack.c.l.b16 %v50
  %v202 = vunpack.c.l.b16 %v51
  %v203 = vunpack.c.l.b16 %v52
  %v204 = vunpack.c.l.b16 %v53
  %v205 = vunpack.c.l.b16 %v54
  %v206 = vunpack.c.l.b16 %v55
  %v207 = vunpack.c.l.b16 %v56
  %v208 = vunpack.c.l.b16 %v57
  %v209 = vunpack.c.l.b16 %v58
  %v210 = vunpack.c.l.b16 %v59
  %v211 = vunpack.c.l.b16 %v60
  %v212 = vunpack.c.l.b16 %v61
  %v213 = vunpack.c.l.b16 %v62
  %v214 = vunpack.c.l.b16 %v63
  %v215 = vunpack.c.l.b16 %v64
  %v216 = vunpack.c.l.b16 %v65
  %v217 = vunpack.c.l.b16 %v66
  %v218 = vunpack.c.l.b16 %v67
  %v219 = vunpack.c.l.b16 %v68
  %v220 = vunpack.c.l.b16 %v69
  %v221 = vunpack.c.l.b16 %v70
  %v222 = vunpack.c.l.b16 %v71
  %v223 = vunpack.c.l.b16 %v72
  %v224 = vunpack.c.l.b16 %v73
  %v225 = vunpack.c.l.b16 %v74
  %v226 = vunpack.c.l.b16 %v75
  %v227 = vunpack.c.l.b16 %v76
  %v228 = vunpack.c.l.b16 %v77
  %v229 = vunpack.c.l.b16 %v78
  %v230 = vpack.c.b16 %v167, %v166
  %v231 = vpack.c.b16 %v169, %v168
  %v232 = vpack.c.b16 %v171, %v170
  %v233 = vpack.c.b16 %v173, %v172
  %v234 = vpack.c.b16 %v175, %v174
  %v235 = vpack.c.b16 %v177, %v176
  %v236 = vpack.c.b16 %v179, %v178
  %v237 = vpack.c.b16 %v181, %v180
  %v238 = vpack.c.b16 %v183, %v182
  %v239 = vpack.c.b16 %v185, %v184
  %v240 = vpack.c.b16 %v187, %v186
  %v241 = vpack.c.b16 %v189, %v188
  %v242 = vpack.c.b16 %v191, %v190
  %v243 = vpack.c.b16 %v193, %v192
  %v244 = vpack.c.b16 %v195, %v194
  %v245 = vpack.c.b16 %v197, %v196
  %v246 = vpack.c.b16 %v199, %v198
  %v247 = vpack.c.b16 %v201, %v200
  %v248 = vpack.c.b16 %v203, %v202
  %v249 = vpack.c.b16 %v205, %v204
  %v250 = vpack.c.b16 %v207, %v206
  %v251 = vpack.c.b16 %v209, %v208
  %v252 = vpack.c.b16 %v211, %v210
  %v253 = vpack.c.b16 %v213, %v212
  %v254 = vpack.c.b16 %v215, %v214
  %v255 = vpack.c.b16 %v217, %v216
  %v256 = vpack.c.b16 %v219, %v218
  %v257 = vpack.c.b16 %v221, %v220
  %v258 = vpack.c.b16 %v223, %v222
  %v259 = vpack.c.b16 %v225, %v224
  %v260 = vpack.c.b16 %v227, %v226
  %v261 = vpack.c.b16 %v229, %v228
  %v310 = vunpack.c.l.b16 %v79
  %v311 = vunpack.c.l.b16 %v80
  %v312 = vunpack.c.l.b16 %v81
  %v313 = vunpack.c.l.b16 %v82
  %v314 = vunpack.c.l.b16 %v83
  %v315 = vunpack.c.l.b16 %v84
  %v316 = vunpack.c.l.b16 %v85
  %v317 = vunpack.c.l.b16 %v86
  %v318 = vunpack.c.l.b16 %v87
  %v319 = vunpack.c.l.b16 %v88
  %v320 = vunpack.c.l.b16 %v89
  %v321 = vunpack.c.l.b16 %v90
  %v322 = vunpack.c.l.b16 %v91
  %v323 = vunpack.c.l.b16 %v92
  %v324 = vunpack.c.l.b16 %v93
  %v325 = vunpack.c.l.b16 %v94
  %v326 = vpack.c.b16 %v311, %v310
  %v327 = vpack.c.b16 %v313, %v312
  %v328 = vpack.c.b16 %v315, %v314
  %v329 = vpack.c.b16 %v317, %v316
  %v330 = vpack.c.b16 %v319, %v318
  %v331 = vpack.c.b16 %v321, %v320
  %v332 = vpack.c.b16 %v323, %v322
  %v333 = vpack.c.b16 %v325, %v324
  %342 = vmatprep.subr.bf16.mxu0 0
  %343 = vmatpush1.bf16.msra.mxu0 %v333
  %344 = vmatprep.subr.bf16.mxu0 0
  %345 = vmatpush1.bf16.msra.mxu0 %v332
  %346 = vmatprep.subr.bf16.mxu0 0
  %347 = vmatpush1.bf16.msra.mxu0 %v331
  %348 = vmatprep.subr.bf16.mxu0 0
  %349 = vmatpush1.bf16.msra.mxu0 %v330
  %350 = vmatprep.subr.bf16.mxu0 0
  %351 = vmatpush1.bf16.msra.mxu0 %v329
  %352 = vmatprep.subr.bf16.mxu0 0
  %353 = vmatpush1.bf16.msra.mxu0 %v328
  %354 = vmatprep.subr.bf16.mxu0 0
  %355 = vmatpush1.bf16.msra.mxu0 %v327
  %356 = vmatprep.subr.bf16.mxu0 0
  %357 = vmatpush1.bf16.msra.mxu0 %v326
  %358 = vmatprep.subr.bf16.mxu0 0
  %359 = vmatpush2.bf16.msra.mxu0 0
  %360 = vmatprep.subr.bf16.mxu0 0
  %361 = vmatpush2.bf16.msra.mxu0 0
  %362 = vmatprep.subr.bf16.mxu0 0
  %363 = vmatpush2.bf16.msra.mxu0 0
  %364 = vmatprep.subr.bf16.mxu0 0
  %365 = vmatpush2.bf16.msra.mxu0 0
  %366 = vmatprep.subr.bf16.mxu0 0
  %367 = vmatpush2.bf16.msra.mxu0 0
  %368 = vmatprep.subr.bf16.mxu0 0
  %369 = vmatpush2.bf16.msra.mxu0 0
  %370 = vmatprep.subr.bf16.mxu0 0
  %371 = vmatpush2.bf16.msra.mxu0 0
  %372 = vmatprep.subr.bf16.mxu0 0
  %373 = vmatpush2.bf16.msra.mxu0 0
  %374 = vmatprep.mubr.bf16.mxu0 0
  %375 = vmatmul.mubr.bf16.gmra.mxu0 %v230
  %v376 = vpop.f32.mrf.mxu0
  %v377 = vadd.f32 %v100, %v376
  %v378 = vpop.f32.mrf.mxu0
  %v379 = vpop.f32.mrf.mxu0
  %v380 = vadd.f32 %v100, %v379
  %v381 = vpop.f32.mrf.mxu0
  %382 = vmatprep.mubr.bf16.mxu0 0
  %383 = vmatmul.mubr.bf16.gmra.mxu0 %v231
  %v384 = vpop.f32.mrf.mxu0
  %v385 = vadd.f32 %v100, %v384
  %v386 = vpop.f32.mrf.mxu0
  %v387 = vpop.f32.mrf.mxu0
  %v388 = vadd.f32 %v100, %v387
  %v389 = vpop.f32.mrf.mxu0
  %390 = vmatprep.mubr.bf16.mxu0 0
  %391 = vmatmul.mubr.bf16.gmra.mxu0 %v232
  %v392 = vpop.f32.mrf.mxu0
  %v393 = vadd.f32 %v100, %v392
  %v394 = vpop.f32.mrf.mxu0
  %v395 = vpop.f32.mrf.mxu0
  %v396 = vadd.f32 %v100, %v395
  %v397 = vpop.f32.mrf.mxu0
  %398 = vmatprep.mubr.bf16.mxu0 0
  %399 = vmatmul.mubr.bf16.gmra.mxu0 %v233
  %v400 = vpop.f32.mrf.mxu0
  %v401 = vadd.f32 %v100, %v400
  %v402 = vpop.f32.mrf.mxu0
  %v403 = vpop.f32.mrf.mxu0
  %v404 = vadd.f32 %v100, %v403
  %v405 = vpop.f32.mrf.mxu0
  %406 = vmatprep.mubr.bf16.mxu0 0
  %407 = vmatmul.mubr.bf16.gmra.mxu0 %v234
  %v408 = vpop.f32.mrf.mxu0
  %v409 = vadd.f32 %v100, %v408
  %v410 = vpop.f32.mrf.mxu0
  %v411 = vpop.f32.mrf.mxu0
  %v412 = vadd.f32 %v100, %v411
  %v413 = vpop.f32.mrf.mxu0
  %414 = vmatprep.mubr.bf16.mxu0 0
  %415 = vmatmul.mubr.bf16.gmra.mxu0 %v235
  %v416 = vpop.f32.mrf.mxu0
  %v417 = vadd.f32 %v100, %v416
  %v418 = vpop.f32.mrf.mxu0
  %v419 = vpop.f32.mrf.mxu0
  %v420 = vadd.f32 %v100, %v419
  %v421 = vpop.f32.mrf.mxu0
  %422 = vmatprep.mubr.bf16.mxu0 0
  %423 = vmatmul.mubr.bf16.gmra.mxu0 %v236
  %v424 = vpop.f32.mrf.mxu0
  %v425 = vadd.f32 %v100, %v424
  %v426 = vpop.f32.mrf.mxu0
  %v427 = vpop.f32.mrf.mxu0
  %v428 = vadd.f32 %v100, %v427
  %v429 = vpop.f32.mrf.mxu0
  %430 = vmatprep.mubr.bf16.mxu0 0
  %431 = vmatmul.mubr.bf16.gmra.mxu0 %v237
  %v432 = vpop.f32.mrf.mxu0
  %v433 = vadd.f32 %v100, %v432
  %v434 = vpop.f32.mrf.mxu0
  %v435 = vpop.f32.mrf.mxu0
  %v436 = vadd.f32 %v100, %v435
  %v437 = vpop.f32.mrf.mxu0
  %438 = vmatprep.mubr.bf16.mxu0 0
  %439 = vmatmul.mubr.bf16.gmra.mxu0 %v238
  %v440 = vpop.f32.mrf.mxu0
  %v441 = vadd.f32 %v100, %v440
  %v442 = vpop.f32.mrf.mxu0
  %v443 = vpop.f32.mrf.mxu0
  %v444 = vadd.f32 %v100, %v443
  %v445 = vpop.f32.mrf.mxu0
  %446 = vmatprep.mubr.bf16.mxu0 0
  %447 = vmatmul.mubr.bf16.gmra.mxu0 %v239
  %v448 = vpop.f32.mrf.mxu0
  %v449 = vadd.f32 %v100, %v448
  %v450 = vpop.f32.mrf.mxu0
  %v451 = vpop.f32.mrf.mxu0
  %v452 = vadd.f32 %v100, %v451
  %v453 = vpop.f32.mrf.mxu0
  %454 = vmatprep.mubr.bf16.mxu0 0
  %455 = vmatmul.mubr.bf16.gmra.mxu0 %v240
  %v456 = vpop.f32.mrf.mxu0
  %v457 = vadd.f32 %v100, %v456
  %v458 = vpop.f32.mrf.mxu0
  %v459 = vpop.f32.mrf.mxu0
  %v460 = vadd.f32 %v100, %v459
  %v461 = vpop.f32.mrf.mxu0
  %462 = vmatprep.mubr.bf16.mxu0 0
  %463 = vmatmul.mubr.bf16.gmra.mxu0 %v241
  %v464 = vpop.f32.mrf.mxu0
  %v465 = vadd.f32 %v100, %v464
  %v466 = vpop.f32.mrf.mxu0
  %v467 = vpop.f32.mrf.mxu0
  %v468 = vadd.f32 %v100, %v467
  %v469 = vpop.f32.mrf.mxu0
  %470 = vmatprep.mubr.bf16.mxu0 0
  %471 = vmatmul.mubr.bf16.gmra.mxu0 %v242
  %v472 = vpop.f32.mrf.mxu0
  %v473 = vadd.f32 %v100, %v472
  %v474 = vpop.f32.mrf.mxu0
  %v475 = vpop.f32.mrf.mxu0
  %v476 = vadd.f32 %v100, %v475
  %v477 = vpop.f32.mrf.mxu0
  %478 = vmatprep.mubr.bf16.mxu0 0
  %479 = vmatmul.mubr.bf16.gmra.mxu0 %v243
  %v480 = vpop.f32.mrf.mxu0
  %v481 = vadd.f32 %v100, %v480
  %v482 = vpop.f32.mrf.mxu0
  %v483 = vpop.f32.mrf.mxu0
  %v484 = vadd.f32 %v100, %v483
  %v485 = vpop.f32.mrf.mxu0
  %486 = vmatprep.mubr.bf16.mxu0 0
  %487 = vmatmul.mubr.bf16.gmra.mxu0 %v244
  %v488 = vpop.f32.mrf.mxu0
  %v489 = vadd.f32 %v100, %v488
  %v490 = vpop.f32.mrf.mxu0
  %v491 = vpop.f32.mrf.mxu0
  %v492 = vadd.f32 %v100, %v491
  %v493 = vpop.f32.mrf.mxu0
  %494 = vmatprep.mubr.bf16.mxu0 0
  %495 = vmatmul.mubr.bf16.gmra.mxu0 %v245
  %v496 = vpop.f32.mrf.mxu0
  %v497 = vadd.f32 %v100, %v496
  %v498 = vpop.f32.mrf.mxu0
  %v499 = vpop.f32.mrf.mxu0
  %v500 = vadd.f32 %v100, %v499
  %v501 = vpop.f32.mrf.mxu0
  %502 = vmatprep.mubr.bf16.mxu0 0
  %503 = vmatmul.mubr.bf16.gmra.mxu0 %v246
  %v504 = vpop.f32.mrf.mxu0
  %v505 = vadd.f32 %v100, %v504
  %v506 = vpop.f32.mrf.mxu0
  %v507 = vpop.f32.mrf.mxu0
  %v508 = vadd.f32 %v100, %v507
  %v509 = vpop.f32.mrf.mxu0
  %510 = vmatprep.mubr.bf16.mxu0 0
  %511 = vmatmul.mubr.bf16.gmra.mxu0 %v247
  %v512 = vpop.f32.mrf.mxu0
  %v513 = vadd.f32 %v100, %v512
  %v514 = vpop.f32.mrf.mxu0
  %v515 = vpop.f32.mrf.mxu0
  %v516 = vadd.f32 %v100, %v515
  %v517 = vpop.f32.mrf.mxu0
  %518 = vmatprep.mubr.bf16.mxu0 0
  %519 = vmatmul.mubr.bf16.gmra.mxu0 %v248
  %v520 = vpop.f32.mrf.mxu0
  %v521 = vadd.f32 %v100, %v520
  %v522 = vpop.f32.mrf.mxu0
  %v523 = vpop.f32.mrf.mxu0
  %v524 = vadd.f32 %v100, %v523
  %v525 = vpop.f32.mrf.mxu0
  %526 = vmatprep.mubr.bf16.mxu0 0
  %527 = vmatmul.mubr.bf16.gmra.mxu0 %v249
  %v528 = vpop.f32.mrf.mxu0
  %v529 = vadd.f32 %v100, %v528
  %v530 = vpop.f32.mrf.mxu0
  %v531 = vpop.f32.mrf.mxu0
  %v532 = vadd.f32 %v100, %v531
  %v533 = vpop.f32.mrf.mxu0
  %534 = vmatprep.mubr.bf16.mxu0 0
  %535 = vmatmul.mubr.bf16.gmra.mxu0 %v250
  %v536 = vpop.f32.mrf.mxu0
  %v537 = vadd.f32 %v100, %v536
  %v538 = vpop.f32.mrf.mxu0
  %v539 = vpop.f32.mrf.mxu0
  %v540 = vadd.f32 %v100, %v539
  %v541 = vpop.f32.mrf.mxu0
  %542 = vmatprep.mubr.bf16.mxu0 0
  %543 = vmatmul.mubr.bf16.gmra.mxu0 %v251
  %v544 = vpop.f32.mrf.mxu0
  %v545 = vadd.f32 %v100, %v544
  %v546 = vpop.f32.mrf.mxu0
  %v547 = vpop.f32.mrf.mxu0
  %v548 = vadd.f32 %v100, %v547
  %v549 = vpop.f32.mrf.mxu0
  %550 = vmatprep.mubr.bf16.mxu0 0
  %551 = vmatmul.mubr.bf16.gmra.mxu0 %v252
  %v552 = vpop.f32.mrf.mxu0
  %v553 = vadd.f32 %v100, %v552
  %v554 = vpop.f32.mrf.mxu0
  %v555 = vpop.f32.mrf.mxu0
  %v556 = vadd.f32 %v100, %v555
  %v557 = vpop.f32.mrf.mxu0
  %558 = vmatprep.mubr.bf16.mxu0 0
  %559 = vmatmul.mubr.bf16.gmra.mxu0 %v253
  %v560 = vpop.f32.mrf.mxu0
  %v561 = vadd.f32 %v100, %v560
  %v562 = vpop.f32.mrf.mxu0
  %v563 = vpop.f32.mrf.mxu0
  %v564 = vadd.f32 %v100, %v563
  %v565 = vpop.f32.mrf.mxu0
  %566 = vmatprep.mubr.bf16.mxu0 0
  %567 = vmatmul.mubr.bf16.gmra.mxu0 %v254
  %v568 = vpop.f32.mrf.mxu0
  %v569 = vadd.f32 %v100, %v568
  %v570 = vpop.f32.mrf.mxu0
  %v571 = vpop.f32.mrf.mxu0
  %v572 = vadd.f32 %v100, %v571
  %v573 = vpop.f32.mrf.mxu0
  %574 = vmatprep.mubr.bf16.mxu0 0
  %575 = vmatmul.mubr.bf16.gmra.mxu0 %v255
  %v576 = vpop.f32.mrf.mxu0
  %v577 = vadd.f32 %v100, %v576
  %v578 = vpop.f32.mrf.mxu0
  %v579 = vpop.f32.mrf.mxu0
  %v580 = vadd.f32 %v100, %v579
  %v581 = vpop.f32.mrf.mxu0
  %582 = vmatprep.mubr.bf16.mxu0 0
  %583 = vmatmul.mubr.bf16.gmra.mxu0 %v256
  %v584 = vpop.f32.mrf.mxu0
  %v585 = vadd.f32 %v100, %v584
  %v586 = vpop.f32.mrf.mxu0
  %v587 = vpop.f32.mrf.mxu0
  %v588 = vadd.f32 %v100, %v587
  %v589 = vpop.f32.mrf.mxu0
  %590 = vmatprep.mubr.bf16.mxu0 0
  %591 = vmatmul.mubr.bf16.gmra.mxu0 %v257
  %v592 = vpop.f32.mrf.mxu0
  %v593 = vadd.f32 %v100, %v592
  %v594 = vpop.f32.mrf.mxu0
  %v595 = vpop.f32.mrf.mxu0
  %v596 = vadd.f32 %v100, %v595
  %v597 = vpop.f32.mrf.mxu0
  %598 = vmatprep.mubr.bf16.mxu0 0
  %599 = vmatmul.mubr.bf16.gmra.mxu0 %v258
  %v600 = vpop.f32.mrf.mxu0
  %v601 = vadd.f32 %v100, %v600
  %v602 = vpop.f32.mrf.mxu0
  %v603 = vpop.f32.mrf.mxu0
  %v604 = vadd.f32 %v100, %v603
  %v605 = vpop.f32.mrf.mxu0
  %606 = vmatprep.mubr.bf16.mxu0 0
  %607 = vmatmul.mubr.bf16.gmra.mxu0 %v259
  %v608 = vpop.f32.mrf.mxu0
  %v609 = vadd.f32 %v100, %v608
  %v610 = vpop.f32.mrf.mxu0
  %v611 = vpop.f32.mrf.mxu0
  %v612 = vadd.f32 %v100, %v611
  %v613 = vpop.f32.mrf.mxu0
  %614 = vmatprep.mubr.bf16.mxu0 0
  %615 = vmatmul.mubr.bf16.gmra.mxu0 %v260
  %v616 = vpop.f32.mrf.mxu0
  %v617 = vadd.f32 %v100, %v616
  %v618 = vpop.f32.mrf.mxu0
  %v619 = vpop.f32.mrf.mxu0
  %v620 = vadd.f32 %v100, %v619
  %v621 = vpop.f32.mrf.mxu0
  %622 = vmatprep.mubr.bf16.mxu0 0
  %623 = vmatmul.mubr.bf16.gmra.mxu0 %v261
  %v624 = vpop.f32.mrf.mxu0
  %v625 = vadd.f32 %v100, %v624
  %v626 = vpop.f32.mrf.mxu0
  %v627 = vpop.f32.mrf.mxu0
  %v628 = vadd.f32 %v100, %v627
  %v629 = vpop.f32.mrf.mxu0
  %630 = vdwg.mxu0
  %v631 = vmax.f32 %v377, 0.0
  %v632 = vmax.f32 %v380, 0.0
  %v633 = vmax.f32 %v385, 0.0
  %v634 = vmax.f32 %v388, 0.0
  %v635 = vmax.f32 %v393, 0.0
  %v636 = vmax.f32 %v396, 0.0
  %v637 = vmax.f32 %v401, 0.0
  %v638 = vmax.f32 %v404, 0.0
  %v639 = vmax.f32 %v409, 0.0
  %v640 = vmax.f32 %v412, 0.0
  %v641 = vmax.f32 %v417, 0.0
  %v642 = vmax.f32 %v420, 0.0
  %v643 = vmax.f32 %v425, 0.0
  %v644 = vmax.f32 %v428, 0.0
  %v645 = vmax.f32 %v433, 0.0
  %v646 = vmax.f32 %v436, 0.0
  %v647 = vmax.f32 %v441, 0.0
  %v648 = vmax.f32 %v444, 0.0
  %v649 = vmax.f32 %v449, 0.0
  %v650 = vmax.f32 %v452, 0.0
  %v651 = vmax.f32 %v457, 0.0
  %v652 = vmax.f32 %v460, 0.0
  %v653 = vmax.f32 %v465, 0.0
  %v654 = vmax.f32 %v468, 0.0
  %v655 = vmax.f32 %v473, 0.0
  %v656 = vmax.f32 %v476, 0.0
  %v657 = vmax.f32 %v481, 0.0
  %v658 = vmax.f32 %v484, 0.0
  %v659 = vmax.f32 %v489, 0.0
  %v660 = vmax.f32 %v492, 0.0
  %v661 = vmax.f32 %v497, 0.0
  %v662 = vmax.f32 %v500, 0.0
  %v663 = vmax.f32 %v505, 0.0
  %v664 = vmax.f32 %v508, 0.0
  %v665 = vmax.f32 %v513, 0.0
  %v666 = vmax.f32 %v516, 0.0
  %v667 = vmax.f32 %v521, 0.0
  %v668 = vmax.f32 %v524, 0.0
  %v669 = vmax.f32 %v529, 0.0
  %v670 = vmax.f32 %v532, 0.0
  %v671 = vmax.f32 %v537, 0.0
  %v672 = vmax.f32 %v540, 0.0
  %v673 = vmax.f32 %v545, 0.0
  %v674 = vmax.f32 %v548, 0.0
  %v675 = vmax.f32 %v553, 0.0
  %v676 = vmax.f32 %v556, 0.0
  %v677 = vmax.f32 %v561, 0.0
  %v678 = vmax.f32 %v564, 0.0
  %v679 = vmax.f32 %v569, 0.0
  %v680 = vmax.f32 %v572, 0.0
  %v681 = vmax.f32 %v577, 0.0
  %v682 = vmax.f32 %v580, 0.0
  %v683 = vmax.f32 %v585, 0.0
  %v684 = vmax.f32 %v588, 0.0
  %v685 = vmax.f32 %v593, 0.0
  %v686 = vmax.f32 %v596, 0.0
  %v687 = vmax.f32 %v601, 0.0
  %v688 = vmax.f32 %v604, 0.0
  %v689 = vmax.f32 %v609, 0.0
  %v690 = vmax.f32 %v612, 0.0
  %v691 = vmax.f32 %v617, 0.0
  %v692 = vmax.f32 %v620, 0.0
  %v693 = vmax.f32 %v625, 0.0
  %v694 = vmax.f32 %v628, 0.0
  %v695 = vpack.c.bf16 %v632, %v631
  %v696 = vpack.c.bf16 %v634, %v633
  %v697 = vpack.c.bf16 %v636, %v635
  %v698 = vpack.c.bf16 %v638, %v637
  %v699 = vpack.c.bf16 %v640, %v639
  %v700 = vpack.c.bf16 %v642, %v641
  %v701 = vpack.c.bf16 %v644, %v643
  %v702 = vpack.c.bf16 %v646, %v645
  %v703 = vpack.c.bf16 %v648, %v647
  %v704 = vpack.c.bf16 %v650, %v649
  %v705 = vpack.c.bf16 %v652, %v651
  %v706 = vpack.c.bf16 %v654, %v653
  %v707 = vpack.c.bf16 %v656, %v655
  %v708 = vpack.c.bf16 %v658, %v657
  %v709 = vpack.c.bf16 %v660, %v659
  %v710 = vpack.c.bf16 %v662, %v661
  %v711 = vpack.c.bf16 %v664, %v663
  %v712 = vpack.c.bf16 %v666, %v665
  %v713 = vpack.c.bf16 %v668, %v667
  %v714 = vpack.c.bf16 %v670, %v669
  %v715 = vpack.c.bf16 %v672, %v671
  %v716 = vpack.c.bf16 %v674, %v673
  %v717 = vpack.c.bf16 %v676, %v675
  %v718 = vpack.c.bf16 %v678, %v677
  %v719 = vpack.c.bf16 %v680, %v679
  %v720 = vpack.c.bf16 %v682, %v681
  %v721 = vpack.c.bf16 %v684, %v683
  %v722 = vpack.c.bf16 %v686, %v685
  %v723 = vpack.c.bf16 %v688, %v687
  %v724 = vpack.c.bf16 %v690, %v689
  %v725 = vpack.c.bf16 %v692, %v691
  %v726 = vpack.c.bf16 %v694, %v693
  %v759 = vunpack.c.l.b16 %v695
  %v760 = vunpack.c.h.b16 %v695
  %v761 = vunpack.c.l.b16 %v696
  %v762 = vunpack.c.h.b16 %v696
  %v763 = vunpack.c.l.b16 %v697
  %v764 = vunpack.c.h.b16 %v697
  %v765 = vunpack.c.l.b16 %v698
  %v766 = vunpack.c.h.b16 %v698
  %v767 = vunpack.c.l.b16 %v699
  %v768 = vunpack.c.h.b16 %v699
  %v769 = vunpack.c.l.b16 %v700
  %v770 = vunpack.c.h.b16 %v700
  %v771 = vunpack.c.l.b16 %v701
  %v772 = vunpack.c.h.b16 %v701
  %v773 = vunpack.c.l.b16 %v702
  %v774 = vunpack.c.h.b16 %v702
  %v775 = vunpack.c.l.b16 %v703
  %v776 = vunpack.c.h.b16 %v703
  %v777 = vunpack.c.l.b16 %v704
  %v778 = vunpack.c.h.b16 %v704
  %v779 = vunpack.c.l.b16 %v705
  %v780 = vunpack.c.h.b16 %v705
  %v781 = vunpack.c.l.b16 %v706
  %v782 = vunpack.c.h.b16 %v706
  %v783 = vunpack.c.l.b16 %v707
  %v784 = vunpack.c.h.b16 %v707
  %v785 = vunpack.c.l.b16 %v708
  %v786 = vunpack.c.h.b16 %v708
  %v787 = vunpack.c.l.b16 %v709
  %v788 = vunpack.c.h.b16 %v709
  %v789 = vunpack.c.l.b16 %v710
  %v790 = vunpack.c.h.b16 %v710
  %v791 = vunpack.c.l.b16 %v711
  %v792 = vunpack.c.h.b16 %v711
  %v793 = vunpack.c.l.b16 %v712
  %v794 = vunpack.c.h.b16 %v712
  %v795 = vunpack.c.l.b16 %v713
  %v796 = vunpack.c.h.b16 %v713
  %v797 = vunpack.c.l.b16 %v714
  %v798 = vunpack.c.h.b16 %v714
  %v799 = vunpack.c.l.b16 %v715
  %v800 = vunpack.c.h.b16 %v715
  %v801 = vunpack.c.l.b16 %v716
  %v802 = vunpack.c.h.b16 %v716
  %v803 = vunpack.c.l.b16 %v717
  %v804 = vunpack.c.h.b16 %v717
  %v805 = vunpack.c.l.b16 %v718
  %v806 = vunpack.c.h.b16 %v718
  %v807 = vunpack.c.l.b16 %v719
  %v808 = vunpack.c.h.b16 %v719
  %v809 = vunpack.c.l.b16 %v720
  %v810 = vunpack.c.h.b16 %v720
  %v811 = vunpack.c.l.b16 %v721
  %v812 = vunpack.c.h.b16 %v721
  %v813 = vunpack.c.l.b16 %v722
  %v814 = vunpack.c.h.b16 %v722
  %v815 = vunpack.c.l.b16 %v723
  %v816 = vunpack.c.h.b16 %v723
  %v817 = vunpack.c.l.b16 %v724
  %v818 = vunpack.c.h.b16 %v724
  %v819 = vunpack.c.l.b16 %v725
  %v820 = vunpack.c.h.b16 %v725
  %v821 = vunpack.c.l.b16 %v726
  %v822 = vunpack.c.h.b16 %v726
  %v823 = vpack.c.b16 %v759, %v759
  %v824 = vpack.c.b16 %v760, %v760
  %v825 = vpack.c.b16 %v761, %v761
  %v826 = vpack.c.b16 %v762, %v762
  %v827 = vpack.c.b16 %v763, %v763
  %v828 = vpack.c.b16 %v764, %v764
  %v829 = vpack.c.b16 %v765, %v765
  %v830 = vpack.c.b16 %v766, %v766
  %v831 = vpack.c.b16 %v767, %v767
  %v832 = vpack.c.b16 %v768, %v768
  %v833 = vpack.c.b16 %v769, %v769
  %v834 = vpack.c.b16 %v770, %v770
  %v835 = vpack.c.b16 %v771, %v771
  %v836 = vpack.c.b16 %v772, %v772
  %v837 = vpack.c.b16 %v773, %v773
  %v838 = vpack.c.b16 %v774, %v774
  %v839 = vpack.c.b16 %v775, %v775
  %v840 = vpack.c.b16 %v776, %v776
  %v841 = vpack.c.b16 %v777, %v777
  %v842 = vpack.c.b16 %v778, %v778
  %v843 = vpack.c.b16 %v779, %v779
  %v844 = vpack.c.b16 %v780, %v780
  %v845 = vpack.c.b16 %v781, %v781
  %v846 = vpack.c.b16 %v782, %v782
  %v847 = vpack.c.b16 %v783, %v783
  %v848 = vpack.c.b16 %v784, %v784
  %v849 = vpack.c.b16 %v785, %v785
  %v850 = vpack.c.b16 %v786, %v786
  %v851 = vpack.c.b16 %v787, %v787
  %v852 = vpack.c.b16 %v788, %v788
  %v853 = vpack.c.b16 %v789, %v789
  %v854 = vpack.c.b16 %v790, %v790
  %v855 = vpack.c.b16 %v791, %v791
  %v856 = vpack.c.b16 %v792, %v792
  %v857 = vpack.c.b16 %v793, %v793
  %v858 = vpack.c.b16 %v794, %v794
  %v859 = vpack.c.b16 %v795, %v795
  %v860 = vpack.c.b16 %v796, %v796
  %v861 = vpack.c.b16 %v797, %v797
  %v862 = vpack.c.b16 %v798, %v798
  %v863 = vpack.c.b16 %v799, %v799
  %v864 = vpack.c.b16 %v800, %v800
  %v865 = vpack.c.b16 %v801, %v801
  %v866 = vpack.c.b16 %v802, %v802
  %v867 = vpack.c.b16 %v803, %v803
  %v868 = vpack.c.b16 %v804, %v804
  %v869 = vpack.c.b16 %v805, %v805
  %v870 = vpack.c.b16 %v806, %v806
  %v871 = vpack.c.b16 %v807, %v807
  %v872 = vpack.c.b16 %v808, %v808
  %v873 = vpack.c.b16 %v809, %v809
  %v874 = vpack.c.b16 %v810, %v810
  %v875 = vpack.c.b16 %v811, %v811
  %v876 = vpack.c.b16 %v812, %v812
  %v877 = vpack.c.b16 %v813, %v813
  %v878 = vpack.c.b16 %v814, %v814
  %v879 = vpack.c.b16 %v815, %v815
  %v880 = vpack.c.b16 %v816, %v816
  %v881 = vpack.c.b16 %v817, %v817
  %v882 = vpack.c.b16 %v818, %v818
  %v883 = vpack.c.b16 %v819, %v819
  %v884 = vpack.c.b16 %v820, %v820
  %v885 = vpack.c.b16 %v821, %v821
  %v886 = vpack.c.b16 %v822, %v822
  %951 = vst [vmem:[%s3] sm:$0xf] %v823
  %952 = vst [vmem:[%s3 + $0x4] sm:$0xf] %v824
  %953 = vst [vmem:[%s3 + $0x8] sm:$0xf] %v825
  %954 = vst [vmem:[%s3 + $0xc] sm:$0xf] %v826
  %955 = vst [vmem:[%s3 + $0x10] sm:$0xf] %v827
  %956 = vst [vmem:[%s3 + $0x14] sm:$0xf] %v828
  %957 = vst [vmem:[%s3 + $0x18] sm:$0xf] %v829
  %958 = vst [vmem:[%s3 + $0x1c] sm:$0xf] %v830
  %959 = vst [vmem:[%s3 + $0x20] sm:$0xf] %v831
  %960 = vst [vmem:[%s3 + $0x24] sm:$0xf] %v832
  %961 = vst [vmem:[%s3 + $0x28] sm:$0xf] %v833
  %962 = vst [vmem:[%s3 + $0x2c] sm:$0xf] %v834
  %963 = vst [vmem:[%s3 + $0x30] sm:$0xf] %v835
  %964 = vst [vmem:[%s3 + $0x34] sm:$0xf] %v836
  %965 = vst [vmem:[%s3 + $0x38] sm:$0xf] %v837
  %966 = vst [vmem:[%s3 + $0x3c] sm:$0xf] %v838
  %967 = vst [vmem:[%s3 + $0x40] sm:$0xf] %v839
  %968 = vst [vmem:[%s3 + $0x44] sm:$0xf] %v840
  %969 = vst [vmem:[%s3 + $0x48] sm:$0xf] %v841
  %970 = vst [vmem:[%s3 + $0x4c] sm:$0xf] %v842
  %971 = vst [vmem:[%s3 + $0x50] sm:$0xf] %v843
  %972 = vst [vmem:[%s3 + $0x54] sm:$0xf] %v844
  %973 = vst [vmem:[%s3 + $0x58] sm:$0xf] %v845
  %974 = vst [vmem:[%s3 + $0x5c] sm:$0xf] %v846
  %975 = vst [vmem:[%s3 + $0x60] sm:$0xf] %v847
  %976 = vst [vmem:[%s3 + $0x64] sm:$0xf] %v848
  %977 = vst [vmem:[%s3 + $0x68] sm:$0xf] %v849
  %978 = vst [vmem:[%s3 + $0x6c] sm:$0xf] %v850
  %979 = vst [vmem:[%s3 + $0x70] sm:$0xf] %v851
  %980 = vst [vmem:[%s3 + $0x74] sm:$0xf] %v852
  %981 = vst [vmem:[%s3 + $0x78] sm:$0xf] %v853
  %982 = vst [vmem:[%s3 + $0x7c] sm:$0xf] %v854
  %983 = vst [vmem:[%s3 + $0x80] sm:$0xf] %v855
  %984 = vst [vmem:[%s3 + $0x84] sm:$0xf] %v856
  %985 = vst [vmem:[%s3 + $0x88] sm:$0xf] %v857
  %986 = vst [vmem:[%s3 + $0x8c] sm:$0xf] %v858
  %987 = vst [vmem:[%s3 + $0x90] sm:$0xf] %v859
  %988 = vst [vmem:[%s3 + $0x94] sm:$0xf] %v860
  %989 = vst [vmem:[%s3 + $0x98] sm:$0xf] %v861
  %990 = vst [vmem:[%s3 + $0x9c] sm:$0xf] %v862
  %991 = vst [vmem:[%s3 + $0xa0] sm:$0xf] %v863
  %992 = vst [vmem:[%s3 + $0xa4] sm:$0xf] %v864
  %993 = vst [vmem:[%s3 + $0xa8] sm:$0xf] %v865
  %994 = vst [vmem:[%s3 + $0xac] sm:$0xf] %v866
  %995 = vst [vmem:[%s3 + $0xb0] sm:$0xf] %v867
  %996 = vst [vmem:[%s3 + $0xb4] sm:$0xf] %v868
  %997 = vst [vmem:[%s3 + $0xb8] sm:$0xf] %v869
  %998 = vst [vmem:[%s3 + $0xbc] sm:$0xf] %v870
  %999 = vst [vmem:[%s3 + $0xc0] sm:$0xf] %v871
  %1000 = vst [vmem:[%s3 + $0xc4] sm:$0xf] %v872
  %1001 = vst [vmem:[%s3 + $0xc8] sm:$0xf] %v873
  %1002 = vst [vmem:[%s3 + $0xcc] sm:$0xf] %v874
  %1003 = vst [vmem:[%s3 + $0xd0] sm:$0xf] %v875
  %1004 = vst [vmem:[%s3 + $0xd4] sm:$0xf] %v876
  %1005 = vst [vmem:[%s3 + $0xd8] sm:$0xf] %v877
  %1006 = vst [vmem:[%s3 + $0xdc] sm:$0xf] %v878
  %1007 = vst [vmem:[%s3 + $0xe0] sm:$0xf] %v879
  %1008 = vst [vmem:[%s3 + $0xe4] sm:$0xf] %v880
  %1009 = vst [vmem:[%s3 + $0xe8] sm:$0xf] %v881
  %1010 = vst [vmem:[%s3 + $0xec] sm:$0xf] %v882
  %1011 = vst [vmem:[%s3 + $0xf0] sm:$0xf] %v883
  %1012 = vst [vmem:[%s3 + $0xf4] sm:$0xf] %v884
  %1013 = vst [vmem:[%s3 + $0xf8] sm:$0xf] %v885
  %1014 = vst [vmem:[%s3 + $0xfc] sm:$0xf] %v886
  // Predicated region
  $region14: #{resource_cnn_forward.3} parent=0 // pred_check
    _
  $region15: #{resource_cnn_forward.3} parent=0 // pred_check_branch
    %1016 = sbr.rel (0) target = $region17
  $region16: #{resource_cnn_forward.3} parent=0 // pred_region
    _
  $region17: #{resource_cnn_forward.3} parent=0 // pred_fallthru
    _
  // Predicated region
  $region18: #{resource_cnn_forward.3} parent=0 // pred_check
    _
  $region19: #{resource_cnn_forward.3} parent=0 // pred_check_branch
    %1018 = sbr.rel (0) target = $region21
  $region20: #{resource_cnn_forward.3} parent=0 // pred_region
    _
  $region21: #{resource_cnn_forward.3} parent=0 // pred_fallthru
    _

// kernel: resource_cnn_forward.5
$region0: #{resource_cnn_forward.5}
  #allocation0 [shape = 'u32[]', space=smem, size = 0x4, offset = 0x4, fixed_abs, tag = 'smem constant byte address 0x4 - core index']
  #allocation1 [shape = 'u32[144,128]{1,0:T(1,128)}', space=vmem, size = 0x12000, scoped, tag = 'internal scratch']
  #allocation2 [shape = 'f32[16,256]{1,0:T(8,128)}', space=vmem, size = 0x4000, scoped, tag = 'scratch operand']
  %s0 = inlined_call_operand.vmem [shape: bf16[16,16384], index: 0, kind: input, shape index: {}]
  %s1 = inlined_call_operand.vmem [shape: bf16[16,128], index: 1, kind: input, shape index: {}]
  %s2 = inlined_call_operand.vmem [shape: bf16[16384,256], index: 2, kind: input, shape index: {}]
  %s3 = inlined_call_operand.vmem [shape: bf16[128,256], index: 3, kind: input, shape index: {}]
  %s4 = inlined_call_operand.vmem [shape: f32[1,256], index: 4, kind: input, shape index: {}]
  %s5 = inlined_call_operand.vmem [shape: bf16[256,128], index: 5, kind: input, shape index: {}]
  %s6 = inlined_call_operand.vmem [shape: f32[1,128], index: 6, kind: input, shape index: {}]
  %s7 = inlined_call_operand.vmem [shape: bf16[128,128], index: 7, kind: input, shape index: {}]
  %s8 = inlined_call_operand.vmem [shape: f32[1,128], index: 8, kind: input, shape index: {}]
  %s9 = inlined_call_operand.vmem [shape: f32[16,128], index: 9, kind: output, shape index: {}]
  %s10 = sld [smem:[#allocation0]]
  $region100: #{resource_cnn_forward.5} parent=0
    _
  %s12 = ssub.s32 1, %s10
  %s13 = scalar_select 0, %s12, %s10
  $region1: #{resource_cnn_forward.5} parent=0
    #allocation3 [shape = 'u8[131072]{0}', space=vmem, size = 0x20000, scoped, tag = 'input window, operand 0']
    loop: start=0, step=1, limit=10
    $region2: #{resource_cnn_forward.5} parent=1 // loop_pre_header
      _
    $region3: #{resource_cnn_forward.5} parent=1 // loop_header
      %s15 = sphi 0, %s19
      %p16 = scmp.ge.s32.totalorder %s15, 10
      %s25 = sphi 0, %s27
      %s28 = sphi 0, %s25
      %s29 = sphi 0, %s28
      %s45 = sphi 0, %s29
      %s49 = sphi 0, %s49
      %s51 = sphi 0, %s49
      %s52 = sphi 0, %s51
      %s66 = sphi 0, %s52
      %s72 = sphi 0, %s74
      %s75 = sphi 0, %s72
      %s76 = sphi 0, %s75
      %s92 = sphi 0, %s76
      %s96 = sphi 0, %s96
      %s98 = sphi 0, %s96
      %s99 = sphi 0, %s98
      %s113 = sphi 0, %s99
      %s117 = sphi 0, %s117
      %s119 = sphi 0, %s117
      %s120 = sphi 0, %s119
      %s134 = sphi 0, %s120
      %s138 = sphi 0, %s138
      %s140 = sphi 0, %s138
      %s141 = sphi 0, %s140
      %s155 = sphi 0, %s141
      %s159 = sphi 0, %s159
      %s161 = sphi 0, %s159
      %s162 = sphi 0, %s161
      %s176 = sphi 0, %s162
      %s180 = sphi 0, %s180
      %s182 = sphi 0, %s180
      %s183 = sphi 0, %s182
      %s197 = sphi 0, %s183
      %s201 = sphi 0, %s201
      %s203 = sphi 0, %s201
      %s204 = sphi 0, %s203
      %s218 = sphi 0, %s204
      %s222 = sphi 0, %s222
      %s224 = sphi 0, %s222
      %s225 = sphi 0, %s224
      %s239 = sphi 0, %s225
    $region4: #{resource_cnn_forward.5} parent=1 // loop_header_branch
      %18 = sbr.rel (%p16) target = $region8
    $region5: #{resource_cnn_forward.5} parent=1 // loop_body
      %s20 = ssub.s32 %s15, 1
      %s21 = ssub.s32 %s15, 2
      %s22 = sadd.s32 %s15, 1
      %s23 = ssub.s32 %s15, %s22
      %p24 = scmp.eq.s32.totalorder %s23, 0
      %s26 = sadd.s32 %s25, 1
      %s27 = scalar_select %p24, %s25, %s26
      %p30 = pneg %p24
      %p31 = scmp.eq.s32.totalorder %s15, 7
      %p32 = por %p30, %p31
      %p33 = scmp.ne.s32.totalorder %s25, %s28
      %p34 = scmp.eq.s32.totalorder %s15, 0
      %p35 = por %p33, %p34
      %p36 = scmp.ne.s32.totalorder %s25, %s28
      %p37 = scmp.eq.s32.totalorder %s20, 7
      %p38 = por %p36, %p37
      %p39 = scmp.ne.s32.totalorder %s28, %s29
      %p40 = scmp.eq.s32.totalorder %s20, 0
      %p41 = por %p39, %p40
      %p42 = scmp.ne.s32.totalorder %s28, %s29
      %p43 = scmp.eq.s32.totalorder %s21, 7
      %p44 = por %p42, %p43
      %p46 = scmp.ne.s32.totalorder %s29, %s45
      %p47 = scmp.eq.s32.totalorder %s21, 0
      %p48 = por %p46, %p47
      %s50 = sadd.s32 %s49, 1
      %p53 = scmp.eq.s32.totalorder %s15, 7
      %p54 = scmp.ne.s32.totalorder %s49, %s51
      %p55 = scmp.eq.s32.totalorder %s15, 0
      %p56 = por %p54, %p55
      %p57 = scmp.ne.s32.totalorder %s49, %s51
      %p58 = scmp.eq.s32.totalorder %s20, 7
      %p59 = por %p57, %p58
      %p60 = scmp.ne.s32.totalorder %s51, %s52
      %p61 = scmp.eq.s32.totalorder %s20, 0
      %p62 = por %p60, %p61
      %p63 = scmp.ne.s32.totalorder %s51, %s52
      %p64 = scmp.eq.s32.totalorder %s21, 7
      %p65 = por %p63, %p64
      %p67 = scmp.ne.s32.totalorder %s52, %s66
      %p68 = scmp.eq.s32.totalorder %s21, 0
      %p69 = por %p67, %p68
      %s70 = ssub.s32 %s15, %s22
      %p71 = scmp.eq.s32.totalorder %s70, 0
      %s73 = sadd.s32 %s72, 1
      %s74 = scalar_select %p71, %s72, %s73
      %p77 = pneg %p71
      %p78 = scmp.eq.s32.totalorder %s15, 7
      %p79 = por %p77, %p78
      %p80 = scmp.ne.s32.totalorder %s72, %s75
      %p81 = scmp.eq.s32.totalorder %s15, 0
      %p82 = por %p80, %p81
      %p83 = scmp.ne.s32.totalorder %s72, %s75
      %p84 = scmp.eq.s32.totalorder %s20, 7
      %p85 = por %p83, %p84
      %p86 = scmp.ne.s32.totalorder %s75, %s76
      %p87 = scmp.eq.s32.totalorder %s20, 0
      %p88 = por %p86, %p87
      %p89 = scmp.ne.s32.totalorder %s75, %s76
      %p90 = scmp.eq.s32.totalorder %s21, 7
      %p91 = por %p89, %p90
      %p93 = scmp.ne.s32.totalorder %s76, %s92
      %p94 = scmp.eq.s32.totalorder %s21, 0
      %p95 = por %p93, %p94
      %s97 = sadd.s32 %s96, 1
      %p100 = scmp.eq.s32.totalorder %s15, 7
      %p101 = scmp.ne.s32.totalorder %s96, %s98
      %p102 = scmp.eq.s32.totalorder %s15, 0
      %p103 = por %p101, %p102
      %p104 = scmp.ne.s32.totalorder %s96, %s98
      %p105 = scmp.eq.s32.totalorder %s20, 7
      %p106 = por %p104, %p105
      %p107 = scmp.ne.s32.totalorder %s98, %s99
      %p108 = scmp.eq.s32.totalorder %s20, 0
      %p109 = por %p107, %p108
      %p110 = scmp.ne.s32.totalorder %s98, %s99
      %p111 = scmp.eq.s32.totalorder %s21, 7
      %p112 = por %p110, %p111
      %p114 = scmp.ne.s32.totalorder %s99, %s113
      %p115 = scmp.eq.s32.totalorder %s21, 0
      %p116 = por %p114, %p115
      %s118 = sadd.s32 %s117, 1
      %p121 = scmp.eq.s32.totalorder %s15, 7
      %p122 = scmp.ne.s32.totalorder %s117, %s119
      %p123 = scmp.eq.s32.totalorder %s15, 0
      %p124 = por %p122, %p123
      %p125 = scmp.ne.s32.totalorder %s117, %s119
      %p126 = scmp.eq.s32.totalorder %s20, 7
      %p127 = por %p125, %p126
      %p128 = scmp.ne.s32.totalorder %s119, %s120
      %p129 = scmp.eq.s32.totalorder %s20, 0
      %p130 = por %p128, %p129
      %p131 = scmp.ne.s32.totalorder %s119, %s120
      %p132 = scmp.eq.s32.totalorder %s21, 7
      %p133 = por %p131, %p132
      %p135 = scmp.ne.s32.totalorder %s120, %s134
      %p136 = scmp.eq.s32.totalorder %s21, 0
      %p137 = por %p135, %p136
      %s139 = sadd.s32 %s138, 1
      %p142 = scmp.eq.s32.totalorder %s15, 7
      %p143 = scmp.ne.s32.totalorder %s138, %s140
      %p144 = scmp.eq.s32.totalorder %s15, 0
      %p145 = por %p143, %p144
      %p146 = scmp.ne.s32.totalorder %s138, %s140
      %p147 = scmp.eq.s32.totalorder %s20, 7
      %p148 = por %p146, %p147
      %p149 = scmp.ne.s32.totalorder %s140, %s141
      %p150 = scmp.eq.s32.totalorder %s20, 0
      %p151 = por %p149, %p150
      %p152 = scmp.ne.s32.totalorder %s140, %s141
      %p153 = scmp.eq.s32.totalorder %s21, 7
      %p154 = por %p152, %p153
      %p156 = scmp.ne.s32.totalorder %s141, %s155
      %p157 = scmp.eq.s32.totalorder %s21, 0
      %p158 = por %p156, %p157
      %s160 = sadd.s32 %s159, 1
      %p163 = scmp.eq.s32.totalorder %s15, 7
      %p164 = scmp.ne.s32.totalorder %s159, %s161
      %p165 = scmp.eq.s32.totalorder %s15, 0
      %p166 = por %p164, %p165
      %p167 = scmp.ne.s32.totalorder %s159, %s161
      %p168 = scmp.eq.s32.totalorder %s20, 7
      %p169 = por %p167, %p168
      %p170 = scmp.ne.s32.totalorder %s161, %s162
      %p171 = scmp.eq.s32.totalorder %s20, 0
      %p172 = por %p170, %p171
      %p173 = scmp.ne.s32.totalorder %s161, %s162
      %p174 = scmp.eq.s32.totalorder %s21, 7
      %p175 = por %p173, %p174
      %p177 = scmp.ne.s32.totalorder %s162, %s176
      %p178 = scmp.eq.s32.totalorder %s21, 0
      %p179 = por %p177, %p178
      %s181 = sadd.s32 %s180, 1
      %p184 = scmp.eq.s32.totalorder %s15, 7
      %p185 = scmp.ne.s32.totalorder %s180, %s182
      %p186 = scmp.eq.s32.totalorder %s15, 0
      %p187 = por %p185, %p186
      %p188 = scmp.ne.s32.totalorder %s180, %s182
      %p189 = scmp.eq.s32.totalorder %s20, 7
      %p190 = por %p188, %p189
      %p191 = scmp.ne.s32.totalorder %s182, %s183
      %p192 = scmp.eq.s32.totalorder %s20, 0
      %p193 = por %p191, %p192
      %p194 = scmp.ne.s32.totalorder %s182, %s183
      %p195 = scmp.eq.s32.totalorder %s21, 7
      %p196 = por %p194, %p195
      %p198 = scmp.ne.s32.totalorder %s183, %s197
      %p199 = scmp.eq.s32.totalorder %s21, 0
      %p200 = por %p198, %p199
      %s202 = sadd.s32 %s201, 1
      %p205 = scmp.eq.s32.totalorder %s15, 7
      %p206 = scmp.ne.s32.totalorder %s201, %s203
      %p207 = scmp.eq.s32.totalorder %s15, 0
      %p208 = por %p206, %p207
      %p209 = scmp.ne.s32.totalorder %s201, %s203
      %p210 = scmp.eq.s32.totalorder %s20, 7
      %p211 = por %p209, %p210
      %p212 = scmp.ne.s32.totalorder %s203, %s204
      %p213 = scmp.eq.s32.totalorder %s20, 0
      %p214 = por %p212, %p213
      %p215 = scmp.ne.s32.totalorder %s203, %s204
      %p216 = scmp.eq.s32.totalorder %s21, 7
      %p217 = por %p215, %p216
      %p219 = scmp.ne.s32.totalorder %s204, %s218
      %p220 = scmp.eq.s32.totalorder %s21, 0
      %p221 = por %p219, %p220
      %s223 = sadd.s32 %s222, 1
      %p226 = scmp.eq.s32.totalorder %s15, 7
      %p227 = scmp.ne.s32.totalorder %s222, %s224
      %p228 = scmp.eq.s32.totalorder %s15, 0
      %p229 = por %p227, %p228
      %p230 = scmp.ne.s32.totalorder %s222, %s224
      %p231 = scmp.eq.s32.totalorder %s20, 7
      %p232 = por %p230, %p231
      %p233 = scmp.ne.s32.totalorder %s224, %s225
      %p234 = scmp.eq.s32.totalorder %s20, 0
      %p235 = por %p233, %p234
      %p236 = scmp.ne.s32.totalorder %s224, %s225
      %p237 = scmp.eq.s32.totalorder %s21, 7
      %p238 = por %p236, %p237
      %p240 = scmp.ne.s32.totalorder %s225, %s239
      %p241 = scmp.eq.s32.totalorder %s21, 0
      %p242 = por %p240, %p241
      %p243 = scmp.le.s32.totalorder 1, %s15
      %p244 = scmp.lt.s32.totalorder %s15, 9
      %p245 = pnand %p243, %p244
      %p246 = pneg %p245
      // Predicated region
      $region9: #{resource_cnn_forward.5} parent=5 // pred_check
        _
      $region10: #{resource_cnn_forward.5} parent=5 // pred_check_branch
        %248 = sbr.rel (%p245) target = $region12
      $region11: #{resource_cnn_forward.5} parent=5 // pred_region
        %s249 = ssub.s32 %s15, 1
        // Predicated region
        $region13: #{resource_cnn_forward.5} parent=11 // pred_check
          %p250 = pneg %p62
        $region14: #{resource_cnn_forward.5} parent=11 // pred_check_branch
          %252 = sbr.rel (%p250) target = $region16
        $region15: #{resource_cnn_forward.5} parent=11 // pred_region
          _
        $region16: #{resource_cnn_forward.5} parent=11 // pred_fallthru
          _
        // Predicated region
        $region17: #{resource_cnn_forward.5} parent=11 // pred_check
          %p253 = pneg %p109
        $region18: #{resource_cnn_forward.5} parent=11 // pred_check_branch
          %255 = sbr.rel (%p253) target = $region20
        $region19: #{resource_cnn_forward.5} parent=11 // pred_region
          _
        $region20: #{resource_cnn_forward.5} parent=11 // pred_fallthru
          _
        // Predicated region
        $region21: #{resource_cnn_forward.5} parent=11 // pred_check
          %p256 = pneg %p130
        $region22: #{resource_cnn_forward.5} parent=11 // pred_check_branch
          %258 = sbr.rel (%p256) target = $region24
        $region23: #{resource_cnn_forward.5} parent=11 // pred_region
          _
        $region24: #{resource_cnn_forward.5} parent=11 // pred_fallthru
          _
        // Predicated region
        $region25: #{resource_cnn_forward.5} parent=11 // pred_check
          %p259 = pneg %p151
        $region26: #{resource_cnn_forward.5} parent=11 // pred_check_branch
          %261 = sbr.rel (%p259) target = $region28
        $region27: #{resource_cnn_forward.5} parent=11 // pred_region
          _
        $region28: #{resource_cnn_forward.5} parent=11 // pred_fallthru
          _
        // Predicated region
        $region29: #{resource_cnn_forward.5} parent=11 // pred_check
          %p262 = pneg %p172
        $region30: #{resource_cnn_forward.5} parent=11 // pred_check_branch
          %264 = sbr.rel (%p262) target = $region32
        $region31: #{resource_cnn_forward.5} parent=11 // pred_region
          _
        $region32: #{resource_cnn_forward.5} parent=11 // pred_fallthru
          _
        // Predicated region
        $region33: #{resource_cnn_forward.5} parent=11 // pred_check
          %p265 = pneg %p193
        $region34: #{resource_cnn_forward.5} parent=11 // pred_check_branch
          %267 = sbr.rel (%p265) target = $region36
        $region35: #{resource_cnn_forward.5} parent=11 // pred_region
          _
        $region36: #{resource_cnn_forward.5} parent=11 // pred_fallthru
          _
        // Predicated region
        $region37: #{resource_cnn_forward.5} parent=11 // pred_check
          %p268 = pneg %p214
        $region38: #{resource_cnn_forward.5} parent=11 // pred_check_branch
          %270 = sbr.rel (%p268) target = $region40
        $region39: #{resource_cnn_forward.5} parent=11 // pred_region
          _
        $region40: #{resource_cnn_forward.5} parent=11 // pred_fallthru
          _
      $region12: #{resource_cnn_forward.5} parent=5 // pred_fallthru
        _
      %p271 = scmp.lt.s32.totalorder %s15, 8
      // Predicated region
      $region41: #{resource_cnn_forward.5} parent=5 // pred_check
        %p272 = pneg %p271
      $region42: #{resource_cnn_forward.5} parent=5 // pred_check_branch
        %274 = sbr.rel (%p272) target = $region44
      $region43: #{resource_cnn_forward.5} parent=5 // pred_region
        // Predicated region
        $region45: #{resource_cnn_forward.5} parent=43 // pred_check
          %p275 = pneg %p35
        $region46: #{resource_cnn_forward.5} parent=43 // pred_check_branch
          %277 = sbr.rel (%p275) target = $region48
        $region47: #{resource_cnn_forward.5} parent=43 // pred_region
          %s278 = sand.u32 %s25, 1
          %s279 = sand.u32 %s25, 1
          %s280 = smul.addr %s279, 128
          %s281 = scalar_lea.vmem [#allocation3], %s280
          %s282 = smul.u32 16, %s15
          %s283 = smul.addr %s282, 4
          %s284 = scalar_lea.vmem %s0, %s283
          // Predicated region
          $region49: #{resource_cnn_forward.5} parent=47 // pred_check
            _
          $region50: #{resource_cnn_forward.5} parent=47 // pred_check_branch
            %286 = sbr.rel (0) target = $region52
          $region51: #{resource_cnn_forward.5} parent=47 // pred_region
            // Predicated region
            $region53: #{resource_cnn_forward.5} parent=51 // pred_check
              _
            $region54: #{resource_cnn_forward.5} parent=51 // pred_check_branch
              %288 = sbr.rel (0) target = $region56
            $region55: #{resource_cnn_forward.5} parent=51 // pred_region
              loop: start=0, step=1, limit=1
              $region57: #{resource_cnn_forward.5} parent=55 // loop_pre_header
                _
              $region58: #{resource_cnn_forward.5} parent=55 // loop_header
                %s290 = sphi 0, %s294
                %p291 = scmp.ge.s32.totalorder %s290, 1
                %s295 = sphi %s284, %s284
                %s296 = sphi %s281, %s281
              $region59: #{resource_cnn_forward.5} parent=55 // loop_header_branch
                %293 = sbr.rel (%p291) target = $region63
              $region60: #{resource_cnn_forward.5} parent=55 // loop_body
                %v297 = vld [vmem:[%s295] sm:$0xff]
                %298 = vst [vmem:[%s296] sm:$0xff] %v297
                %v299 = vld [vmem:[%s295 + $0x8] sm:$0xff]
                %300 = vst [vmem:[%s296 + $0x8] sm:$0xff] %v299
                %v301 = vld [vmem:[%s295 + $0x10] sm:$0xff]
                %302 = vst [vmem:[%s296 + $0x10] sm:$0xff] %v301
                %v303 = vld [vmem:[%s295 + $0x18] sm:$0xff]
                %304 = vst [vmem:[%s296 + $0x18] sm:$0xff] %v303
                %v305 = vld [vmem:[%s295 + $0x20] sm:$0xff]
                %306 = vst [vmem:[%s296 + $0x20] sm:$0xff] %v305
                %v307 = vld [vmem:[%s295 + $0x28] sm:$0xff]
                %308 = vst [vmem:[%s296 + $0x28] sm:$0xff] %v307
                %v309 = vld [vmem:[%s295 + $0x30] sm:$0xff]
                %310 = vst [vmem:[%s296 + $0x30] sm:$0xff] %v309
                %v311 = vld [vmem:[%s295 + $0x38] sm:$0xff]
                %312 = vst [vmem:[%s296 + $0x38] sm:$0xff] %v311
                %v313 = vld [vmem:[%s295 + $0x200] sm:$0xff]
                %314 = vst [vmem:[%s296 + $0x40] sm:$0xff] %v313
                %v315 = vld [vmem:[%s295 + $0x208] sm:$0xff]
                %316 = vst [vmem:[%s296 + $0x48] sm:$0xff] %v315
                %v317 = vld [vmem:[%s295 + $0x210] sm:$0xff]
                %318 = vst [vmem:[%s296 + $0x50] sm:$0xff] %v317
                %v319 = vld [vmem:[%s295 + $0x218] sm:$0xff]
                %320 = vst [vmem:[%s296 + $0x58] sm:$0xff] %v319
                %v321 = vld [vmem:[%s295 + $0x220] sm:$0xff]
                %322 = vst [vmem:[%s296 + $0x60] sm:$0xff] %v321
                %v323 = vld [vmem:[%s295 + $0x228] sm:$0xff]
                %324 = vst [vmem:[%s296 + $0x68] sm:$0xff] %v323
                %v325 = vld [vmem:[%s295 + $0x230] sm:$0xff]
                %326 = vst [vmem:[%s296 + $0x70] sm:$0xff] %v325
                %v327 = vld [vmem:[%s295 + $0x238] sm:$0xff]
                %328 = vst [vmem:[%s296 + $0x78] sm:$0xff] %v327
              $region61: #{resource_cnn_forward.5} parent=55 // loop_footer
                %s294 = sadd.s32 1, %s290
              $region62: #{resource_cnn_forward.5} parent=55 // loop_footer_branch
                %289 = sbr.rel target = $region58
              $region63: #{resource_cnn_forward.5} parent=55 // loop_exit
                _
            $region56: #{resource_cnn_forward.5} parent=51 // pred_fallthru
              _
            // Predicated region
            $region64: #{resource_cnn_forward.5} parent=51 // pred_check
              _
            $region65: #{resource_cnn_forward.5} parent=51 // pred_check_branch
              %330 = sbr.rel target = $region67
            $region66: #{resource_cnn_forward.5} parent=51 // pred_region
              _
            $region67: #{resource_cnn_forward.5} parent=51 // pred_fallthru
              _
          $region52: #{resource_cnn_forward.5} parent=47 // pred_fallthru
            _
          %331 = vnop
        $region48: #{resource_cnn_forward.5} parent=43 // pred_fallthru
          _
        // Predicated region
        $region68: #{resource_cnn_forward.5} parent=43 // pred_check
          %p332 = pneg %p82
        $region69: #{resource_cnn_forward.5} parent=43 // pred_check_branch
          %334 = sbr.rel (%p332) target = $region71
        $region70: #{resource_cnn_forward.5} parent=43 // pred_region
          %s335 = smul.u32 256, %s15
          %p336 = scmp.lt.s32.totalorder %s335, 2047
          %s337 = scalar_select %p336, %s335, 2047
          %s338 = smul.addr %s337, 2
          %s339 = smul.addr %s338, 4
          %s340 = scalar_lea.vmem %s2, %s339
          %s341 = smul.u32 256, %s15
        $region71: #{resource_cnn_forward.5} parent=43 // pred_fallthru
          _
      $region44: #{resource_cnn_forward.5} parent=5 // pred_fallthru
        _
      %p342 = scmp.le.s32.totalorder 1, %s15
      %p343 = scmp.lt.s32.totalorder %s15, 9
      %p344 = pnand %p342, %p343
      %p345 = pneg %p344
      // Predicated region
      $region72: #{resource_cnn_forward.5} parent=5 // pred_check
        _
      $region73: #{resource_cnn_forward.5} parent=5 // pred_check_branch
        %347 = sbr.rel (%p344) target = $region75
      $region74: #{resource_cnn_forward.5} parent=5 // pred_region
        %s348 = ssub.s32 %s15, 1
        %s349 = sand.u32 %s28, 1
        %s350 = sand.u32 %s28, 1
        %s351 = smul.addr %s350, 128
        %s352 = scalar_lea.vmem [#allocation3], %s351
        // Predicated region
        $region76: #{resource_cnn_forward.5} parent=74 // pred_check
          %p353 = pneg %p41
        $region77: #{resource_cnn_forward.5} parent=74 // pred_check_branch
          %355 = sbr.rel (%p353) target = $region79
        $region78: #{resource_cnn_forward.5} parent=74 // pred_region
          _
        $region79: #{resource_cnn_forward.5} parent=74 // pred_fallthru
          _
        %s356 = sand.u32 %s28, 1
        %s357 = sand.u32 %s28, 1
        %s358 = smul.addr %s357, 128
        %s359 = scalar_lea.vmem [#allocation3], %s358
        %p360 = pneg %p41
        %p361 = pneg %p38
        %p362 = pneg %p62
        %p363 = pneg %p59
        %s364 = smul.u32 256, %s20
        %p365 = scmp.lt.s32.totalorder %s364, 2047
        %s366 = scalar_select %p365, %s364, 2047
        %s367 = smul.addr %s366, 2
        %s368 = smul.addr %s367, 4
        %s369 = scalar_lea.vmem %s2, %s368
        %p370 = pneg %p88
        %p371 = pneg %p85
        %p372 = pneg %p109
        %p373 = pneg %p106
        %p374 = pneg %p130
        %p375 = pneg %p127
        %p376 = pneg %p151
        %p377 = pneg %p148
        %p378 = pneg %p172
        %p379 = pneg %p169
        %p380 = pneg %p193
        %p381 = pneg %p190
        %p382 = pneg %p214
        %p383 = pneg %p211
        %p384 = pneg %p235
        %p385 = pneg %p232
        %s386 = smul.u32 16, %s20
        %s387 = smul.u32 256, %s20
        %p388 = scmp.lt.s32.totalorder %s387, 2047
        %s389 = scalar_select %p388, %s387, 2047
        %s390 = smul.addr %s389, 2
        %s391 = smul.addr %s390, 4
        %s392 = scalar_lea.vmem %s2, %s391
        %s393 = smul.u32 256, %s20
        %p395 = scmp.eq.s32.totalorder %s20, 0
        // Predicated region
        $region80: #{resource_cnn_forward.5} parent=74 // pred_check
          %p396 = pneg %p395
        $region81: #{resource_cnn_forward.5} parent=74 // pred_check_branch
          %398 = sbr.rel (%p396) target = $region83
        $region82: #{resource_cnn_forward.5} parent=74 // pred_region
          %v399 = vld [vmem:[%s1] sm:$0xf]
          %v400 = vld [vmem:[%s1 + $0x4] sm:$0xf]
          %v401 = vld [vmem:[%s3] sm:$0xff]
          %v402 = vld [vmem:[%s3 + $0x8] sm:$0xff]
          %v403 = vld [vmem:[%s3 + $0x10] sm:$0xff]
          %v404 = vld [vmem:[%s3 + $0x18] sm:$0xff]
          %v405 = vld [vmem:[%s3 + $0x20] sm:$0xff]
          %v406 = vld [vmem:[%s3 + $0x28] sm:$0xff]
          %v407 = vld [vmem:[%s3 + $0x30] sm:$0xff]
          %v408 = vld [vmem:[%s3 + $0x38] sm:$0xff]
          %v409 = vld [vmem:[%s3 + $0x40] sm:$0xff]
          %v410 = vld [vmem:[%s3 + $0x48] sm:$0xff]
          %v411 = vld [vmem:[%s3 + $0x50] sm:$0xff]
          %v412 = vld [vmem:[%s3 + $0x58] sm:$0xff]
          %v413 = vld [vmem:[%s3 + $0x60] sm:$0xff]
          %v414 = vld [vmem:[%s3 + $0x68] sm:$0xff]
          %v415 = vld [vmem:[%s3 + $0x70] sm:$0xff]
          %v416 = vld [vmem:[%s3 + $0x78] sm:$0xff]
          %v419 = vunpack.c.l.b16 %v399
          %v420 = vunpack.c.l.b16 %v400
          %v421 = vpack.c.b16 %v420, %v419
          %v439 = vunpack.c.l.b16 %v401
          %v440 = vunpack.c.h.b16 %v401
          %v441 = vunpack.c.l.b16 %v402
          %v442 = vunpack.c.h.b16 %v402
          %v443 = vunpack.c.l.b16 %v403
          %v444 = vunpack.c.h.b16 %v403
          %v445 = vunpack.c.l.b16 %v404
          %v446 = vunpack.c.h.b16 %v404
          %v447 = vunpack.c.l.b16 %v405
          %v448 = vunpack.c.h.b16 %v405
          %v449 = vunpack.c.l.b16 %v406
          %v450 = vunpack.c.h.b16 %v406
          %v451 = vunpack.c.l.b16 %v407
          %v452 = vunpack.c.h.b16 %v407
          %v453 = vunpack.c.l.b16 %v408
          %v454 = vunpack.c.h.b16 %v408
          %v455 = vunpack.c.l.b16 %v409
          %v456 = vunpack.c.h.b16 %v409
          %v457 = vunpack.c.l.b16 %v410
          %v458 = vunpack.c.h.b16 %v410
          %v459 = vunpack.c.l.b16 %v411
          %v460 = vunpack.c.h.b16 %v411
          %v461 = vunpack.c.l.b16 %v412
          %v462 = vunpack.c.h.b16 %v412
          %v463 = vunpack.c.l.b16 %v413
          %v464 = vunpack.c.h.b16 %v413
          %v465 = vunpack.c.l.b16 %v414
          %v466 = vunpack.c.h.b16 %v414
          %v467 = vunpack.c.l.b16 %v415
          %v468 = vunpack.c.h.b16 %v415
          %v469 = vunpack.c.l.b16 %v416
          %v470 = vunpack.c.h.b16 %v416
          %v471 = vpack.c.b16 %v441, %v439
          %v472 = vpack.c.b16 %v442, %v440
          %v473 = vpack.c.b16 %v445, %v443
          %v474 = vpack.c.b16 %v446, %v444
          %v475 = vpack.c.b16 %v449, %v447
          %v476 = vpack.c.b16 %v450, %v448
          %v477 = vpack.c.b16 %v453, %v451
          %v478 = vpack.c.b16 %v454, %v452
          %v479 = vpack.c.b16 %v457, %v455
          %v480 = vpack.c.b16 %v458, %v456
          %v481 = vpack.c.b16 %v461, %v459
          %v482 = vpack.c.b16 %v462, %v460
          %v483 = vpack.c.b16 %v465, %v463
          %v484 = vpack.c.b16 %v466, %v464
          %v485 = vpack.c.b16 %v469, %v467
          %v486 = vpack.c.b16 %v470, %v468
          %503 = vmatprep.subr.bf16.mxu0 %v486
          %504 = vmatpush1.bf16.msra.mxu0 %v485
          %505 = vmatprep.subr.bf16.mxu0 %v484
          %506 = vmatpush1.bf16.msra.mxu0 %v483
          %507 = vmatprep.subr.bf16.mxu0 %v482
          %508 = vmatpush1.bf16.msra.mxu0 %v481
          %509 = vmatprep.subr.bf16.mxu0 %v480
          %510 = vmatpush1.bf16.msra.mxu0 %v479
          %511 = vmatprep.subr.bf16.mxu0 %v478
          %512 = vmatpush1.bf16.msra.mxu0 %v477
          %513 = vmatprep.subr.bf16.mxu0 %v476
          %514 = vmatpush1.bf16.msra.mxu0 %v475
          %515 = vmatprep.subr.bf16.mxu0 %v474
          %516 = vmatpush1.bf16.msra.mxu0 %v473
          %517 = vmatprep.subr.bf16.mxu0 %v472
          %518 = vmatpush1.bf16.msra.mxu0 %v471
          %519 = vmatprep.subr.bf16.mxu0 0
          %520 = vmatpush2.bf16.msra.mxu0 0
          %521 = vmatprep.subr.bf16.mxu0 0
          %522 = vmatpush2.bf16.msra.mxu0 0
          %523 = vmatprep.subr.bf16.mxu0 0
          %524 = vmatpush2.bf16.msra.mxu0 0
          %525 = vmatprep.subr.bf16.mxu0 0
          %526 = vmatpush2.bf16.msra.mxu0 0
          %527 = vmatprep.subr.bf16.mxu0 0
          %528 = vmatpush2.bf16.msra.mxu0 0
          %529 = vmatprep.subr.bf16.mxu0 0
          %530 = vmatpush2.bf16.msra.mxu0 0
          %531 = vmatprep.subr.bf16.mxu0 0
          %532 = vmatpush2.bf16.msra.mxu0 0
          %533 = vmatprep.subr.bf16.mxu0 0
          %534 = vmatpush2.bf16.msra.mxu0 0
          %535 = vmatprep.mubr.bf16.mxu0 0
          %536 = vmatmul.mubr.bf16.gmra.mxu0 %v421
          %v537 = vpop.f32.mrf.mxu0
          %v538 = vadd.f32 0.0, %v537
          %v539 = vpop.f32.mrf.mxu0
          %v540 = vadd.f32 0.0, %v539
          %v541 = vpop.f32.mrf.mxu0
          %v542 = vadd.f32 0.0, %v541
          %v543 = vpop.f32.mrf.mxu0
          %v544 = vadd.f32 0.0, %v543
          %545 = vdwg.mxu0
          %546 = vst [vmem:[#allocation2] sm:$0xff] %v538
          %547 = vst [vmem:[#allocation2 + $0x8] sm:$0xff] %v540
          %548 = vst [vmem:[#allocation2 + $0x10] sm:$0xff] %v542
          %549 = vst [vmem:[#allocation2 + $0x18] sm:$0xff] %v544
        $region83: #{resource_cnn_forward.5} parent=74 // pred_fallthru
          _
        %v550 = vld [vmem:[#allocation2] sm:$0xff]
        %v551 = vld [vmem:[#allocation2 + $0x8] sm:$0xff]
        %v552 = vld [vmem:[#allocation2 + $0x10] sm:$0xff]
        %v553 = vld [vmem:[#allocation2 + $0x18] sm:$0xff]
        %v554 = vld [vmem:[%s352] sm:$0xff]
        %v555 = vld [vmem:[%s352 + $0x8] sm:$0xff]
        %v556 = vld [vmem:[%s352 + $0x10] sm:$0xff]
        %v557 = vld [vmem:[%s352 + $0x18] sm:$0xff]
        %v558 = vld [vmem:[%s352 + $0x20] sm:$0xff]
        %v559 = vld [vmem:[%s352 + $0x28] sm:$0xff]
        %v560 = vld [vmem:[%s352 + $0x30] sm:$0xff]
        %v561 = vld [vmem:[%s352 + $0x38] sm:$0xff]
        %v562 = vld [vmem:[%s352 + $0x40] sm:$0xff]
        %v563 = vld [vmem:[%s352 + $0x48] sm:$0xff]
        %v564 = vld [vmem:[%s352 + $0x50] sm:$0xff]
        %v565 = vld [vmem:[%s352 + $0x58] sm:$0xff]
        %v566 = vld [vmem:[%s352 + $0x60] sm:$0xff]
        %v567 = vld [vmem:[%s352 + $0x68] sm:$0xff]
        %v568 = vld [vmem:[%s352 + $0x70] sm:$0xff]
        %v569 = vld [vmem:[%s352 + $0x78] sm:$0xff]
        %v570 = vld [vmem:[%s392] sm:$0xff]
        %v571 = vld [vmem:[%s392 + $0x8] sm:$0xff]
        %v572 = vld [vmem:[%s392 + $0x10] sm:$0xff]
        %v573 = vld [vmem:[%s392 + $0x18] sm:$0xff]
        %v574 = vld [vmem:[%s392 + $0x20] sm:$0xff]
        %v575 = vld [vmem:[%s392 + $0x28] sm:$0xff]
        %v576 = vld [vmem:[%s392 + $0x30] sm:$0xff]
        %v577 = vld [vmem:[%s392 + $0x38] sm:$0xff]
        %v578 = vld [vmem:[%s392 + $0x40] sm:$0xff]
        %v579 = vld [vmem:[%s392 + $0x48] sm:$0xff]
        %v580 = vld [vmem:[%s392 + $0x50] sm:$0xff]
        %v581 = vld [vmem:[%s392 + $0x58] sm:$0xff]
        %v582 = vld [vmem:[%s392 + $0x60] sm:$0xff]
        %v583 = vld [vmem:[%s392 + $0x68] sm:$0xff]
        %v584 = vld [vmem:[%s392 + $0x70] sm:$0xff]
        %v585 = vld [vmem:[%s392 + $0x78] sm:$0xff]
        %v586 = vld [vmem:[%s392 + $0x80] sm:$0xff]
        %v587 = vld [vmem:[%s392 + $0x88] sm:$0xff]
        %v588 = vld [vmem:[%s392 + $0x90] sm:$0xff]
        %v589 = vld [vmem:[%s392 + $0x98] sm:$0xff]
        %v590 = vld [vmem:[%s392 + $0xa0] sm:$0xff]
        %v591 = vld [vmem:[%s392 + $0xa8] sm:$0xff]
        %v592 = vld [vmem:[%s392 + $0xb0] sm:$0xff]
        %v593 = vld [vmem:[%s392 + $0xb8] sm:$0xff]
        %v594 = vld [vmem:[%s392 + $0xc0] sm:$0xff]
        %v595 = vld [vmem:[%s392 + $0xc8] sm:$0xff]
        %v596 = vld [vmem:[%s392 + $0xd0] sm:$0xff]
        %v597 = vld [vmem:[%s392 + $0xd8] sm:$0xff]
        %v598 = vld [vmem:[%s392 + $0xe0] sm:$0xff]
        %v599 = vld [vmem:[%s392 + $0xe8] sm:$0xff]
        %v600 = vld [vmem:[%s392 + $0xf0] sm:$0xff]
        %v601 = vld [vmem:[%s392 + $0xf8] sm:$0xff]
        %v602 = vld [vmem:[%s392 + $0x100] sm:$0xff]
        %v603 = vld [vmem:[%s392 + $0x108] sm:$0xff]
        %v604 = vld [vmem:[%s392 + $0x110] sm:$0xff]
        %v605 = vld [vmem:[%s392 + $0x118] sm:$0xff]
        %v606 = vld [vmem:[%s392 + $0x120] sm:$0xff]
        %v607 = vld [vmem:[%s392 + $0x128] sm:$0xff]
        %v608 = vld [vmem:[%s392 + $0x130] sm:$0xff]
        %v609 = vld [vmem:[%s392 + $0x138] sm:$0xff]
        %v610 = vld [vmem:[%s392 + $0x140] sm:$0xff]
        %v611 = vld [vmem:[%s392 + $0x148] sm:$0xff]
        %v612 = vld [vmem:[%s392 + $0x150] sm:$0xff]
        %v613 = vld [vmem:[%s392 + $0x158] sm:$0xff]
        %v614 = vld [vmem:[%s392 + $0x160] sm:$0xff]
        %v615 = vld [vmem:[%s392 + $0x168] sm:$0xff]
        %v616 = vld [vmem:[%s392 + $0x170] sm:$0xff]
        %v617 = vld [vmem:[%s392 + $0x178] sm:$0xff]
        %v618 = vld [vmem:[%s392 + $0x180] sm:$0xff]
        %v619 = vld [vmem:[%s392 + $0x188] sm:$0xff]
        %v620 = vld [vmem:[%s392 + $0x190] sm:$0xff]
        %v621 = vld [vmem:[%s392 + $0x198] sm:$0xff]
        %v622 = vld [vmem:[%s392 + $0x1a0] sm:$0xff]
        %v623 = vld [vmem:[%s392 + $0x1a8] sm:$0xff]
        %v624 = vld [vmem:[%s392 + $0x1b0] sm:$0xff]
        %v625 = vld [vmem:[%s392 + $0x1b8] sm:$0xff]
        %v626 = vld [vmem:[%s392 + $0x1c0] sm:$0xff]
        %v627 = vld [vmem:[%s392 + $0x1c8] sm:$0xff]
        %v628 = vld [vmem:[%s392 + $0x1d0] sm:$0xff]
        %v629 = vld [vmem:[%s392 + $0x1d8] sm:$0xff]
        %v630 = vld [vmem:[%s392 + $0x1e0] sm:$0xff]
        %v631 = vld [vmem:[%s392 + $0x1e8] sm:$0xff]
        %v632 = vld [vmem:[%s392 + $0x1f0] sm:$0xff]
        %v633 = vld [vmem:[%s392 + $0x1f8] sm:$0xff]
        %v634 = vld [vmem:[%s392 + $0x200] sm:$0xff]
        %v635 = vld [vmem:[%s392 + $0x208] sm:$0xff]
        %v636 = vld [vmem:[%s392 + $0x210] sm:$0xff]
        %v637 = vld [vmem:[%s392 + $0x218] sm:$0xff]
        %v638 = vld [vmem:[%s392 + $0x220] sm:$0xff]
        %v639 = vld [vmem:[%s392 + $0x228] sm:$0xff]
        %v640 = vld [vmem:[%s392 + $0x230] sm:$0xff]
        %v641 = vld [vmem:[%s392 + $0x238] sm:$0xff]
        %v642 = vld [vmem:[%s392 + $0x240] sm:$0xff]
        %v643 = vld [vmem:[%s392 + $0x248] sm:$0xff]
        %v644 = vld [vmem:[%s392 + $0x250] sm:$0xff]
        %v645 = vld [vmem:[%s392 + $0x258] sm:$0xff]
        %v646 = vld [vmem:[%s392 + $0x260] sm:$0xff]
        %v647 = vld [vmem:[%s392 + $0x268] sm:$0xff]
        %v648 = vld [vmem:[%s392 + $0x270] sm:$0xff]
        %v649 = vld [vmem:[%s392 + $0x278] sm:$0xff]
        %v650 = vld [vmem:[%s392 + $0x280] sm:$0xff]
        %v651 = vld [vmem:[%s392 + $0x288] sm:$0xff]
        %v652 = vld [vmem:[%s392 + $0x290] sm:$0xff]
        %v653 = vld [vmem:[%s392 + $0x298] sm:$0xff]
        %v654 = vld [vmem:[%s392 + $0x2a0] sm:$0xff]
        %v655 = vld [vmem:[%s392 + $0x2a8] sm:$0xff]
        %v656 = vld [vmem:[%s392 + $0x2b0] sm:$0xff]
        %v657 = vld [vmem:[%s392 + $0x2b8] sm:$0xff]
        %v658 = vld [vmem:[%s392 + $0x2c0] sm:$0xff]
        %v659 = vld [vmem:[%s392 + $0x2c8] sm:$0xff]
        %v660 = vld [vmem:[%s392 + $0x2d0] sm:$0xff]
        %v661 = vld [vmem:[%s392 + $0x2d8] sm:$0xff]
        %v662 = vld [vmem:[%s392 + $0x2e0] sm:$0xff]
        %v663 = vld [vmem:[%s392 + $0x2e8] sm:$0xff]
        %v664 = vld [vmem:[%s392 + $0x2f0] sm:$0xff]
        %v665 = vld [vmem:[%s392 + $0x2f8] sm:$0xff]
        %v666 = vld [vmem:[%s392 + $0x300] sm:$0xff]
        %v667 = vld [vmem:[%s392 + $0x308] sm:$0xff]
        %v668 = vld [vmem:[%s392 + $0x310] sm:$0xff]
        %v669 = vld [vmem:[%s392 + $0x318] sm:$0xff]
        %v670 = vld [vmem:[%s392 + $0x320] sm:$0xff]
        %v671 = vld [vmem:[%s392 + $0x328] sm:$0xff]
        %v672 = vld [vmem:[%s392 + $0x330] sm:$0xff]
        %v673 = vld [vmem:[%s392 + $0x338] sm:$0xff]
        %v674 = vld [vmem:[%s392 + $0x340] sm:$0xff]
        %v675 = vld [vmem:[%s392 + $0x348] sm:$0xff]
        %v676 = vld [vmem:[%s392 + $0x350] sm:$0xff]
        %v677 = vld [vmem:[%s392 + $0x358] sm:$0xff]
        %v678 = vld [vmem:[%s392 + $0x360] sm:$0xff]
        %v679 = vld [vmem:[%s392 + $0x368] sm:$0xff]
        %v680 = vld [vmem:[%s392 + $0x370] sm:$0xff]
        %v681 = vld [vmem:[%s392 + $0x378] sm:$0xff]
        %v682 = vld [vmem:[%s392 + $0x380] sm:$0xff]
        %v683 = vld [vmem:[%s392 + $0x388] sm:$0xff]
        %v684 = vld [vmem:[%s392 + $0x390] sm:$0xff]
        %v685 = vld [vmem:[%s392 + $0x398] sm:$0xff]
        %v686 = vld [vmem:[%s392 + $0x3a0] sm:$0xff]
        %v687 = vld [vmem:[%s392 + $0x3a8] sm:$0xff]
        %v688 = vld [vmem:[%s392 + $0x3b0] sm:$0xff]
        %v689 = vld [vmem:[%s392 + $0x3b8] sm:$0xff]
        %v690 = vld [vmem:[%s392 + $0x3c0] sm:$0xff]
        %v691 = vld [vmem:[%s392 + $0x3c8] sm:$0xff]
        %v692 = vld [vmem:[%s392 + $0x3d0] sm:$0xff]
        %v693 = vld [vmem:[%s392 + $0x3d8] sm:$0xff]
        %v694 = vld [vmem:[%s392 + $0x3e0] sm:$0xff]
        %v695 = vld [vmem:[%s392 + $0x3e8] sm:$0xff]
        %v696 = vld [vmem:[%s392 + $0x3f0] sm:$0xff]
        %v697 = vld [vmem:[%s392 + $0x3f8] sm:$0xff]
        %v698 = vld [vmem:[%s392 + $0x400] sm:$0xff]
        %v699 = vld [vmem:[%s392 + $0x408] sm:$0xff]
        %v700 = vld [vmem:[%s392 + $0x410] sm:$0xff]
        %v701 = vld [vmem:[%s392 + $0x418] sm:$0xff]
        %v702 = vld [vmem:[%s392 + $0x420] sm:$0xff]
        %v703 = vld [vmem:[%s392 + $0x428] sm:$0xff]
        %v704 = vld [vmem:[%s392 + $0x430] sm:$0xff]
        %v705 = vld [vmem:[%s392 + $0x438] sm:$0xff]
        %v706 = vld [vmem:[%s392 + $0x440] sm:$0xff]
        %v707 = vld [vmem:[%s392 + $0x448] sm:$0xff]
        %v708 = vld [vmem:[%s392 + $0x450] sm:$0xff]
        %v709 = vld [vmem:[%s392 + $0x458] sm:$0xff]
        %v710 = vld [vmem:[%s392 + $0x460] sm:$0xff]
        %v711 = vld [vmem:[%s392 + $0x468] sm:$0xff]
        %v712 = vld [vmem:[%s392 + $0x470] sm:$0xff]
        %v713 = vld [vmem:[%s392 + $0x478] sm:$0xff]
        %v714 = vld [vmem:[%s392 + $0x480] sm:$0xff]
        %v715 = vld [vmem:[%s392 + $0x488] sm:$0xff]
        %v716 = vld [vmem:[%s392 + $0x490] sm:$0xff]
        %v717 = vld [vmem:[%s392 + $0x498] sm:$0xff]
        %v718 = vld [vmem:[%s392 + $0x4a0] sm:$0xff]
        %v719 = vld [vmem:[%s392 + $0x4a8] sm:$0xff]
        %v720 = vld [vmem:[%s392 + $0x4b0] sm:$0xff]
        %v721 = vld [vmem:[%s392 + $0x4b8] sm:$0xff]
        %v722 = vld [vmem:[%s392 + $0x4c0] sm:$0xff]
        %v723 = vld [vmem:[%s392 + $0x4c8] sm:$0xff]
        %v724 = vld [vmem:[%s392 + $0x4d0] sm:$0xff]
        %v725 = vld [vmem:[%s392 + $0x4d8] sm:$0xff]
        %v726 = vld [vmem:[%s392 + $0x4e0] sm:$0xff]
        %v727 = vld [vmem:[%s392 + $0x4e8] sm:$0xff]
        %v728 = vld [vmem:[%s392 + $0x4f0] sm:$0xff]
        %v729 = vld [vmem:[%s392 + $0x4f8] sm:$0xff]
        %v730 = vld [vmem:[%s392 + $0x500] sm:$0xff]
        %v731 = vld [vmem:[%s392 + $0x508] sm:$0xff]
        %v732 = vld [vmem:[%s392 + $0x510] sm:$0xff]
        %v733 = vld [vmem:[%s392 + $0x518] sm:$0xff]
        %v734 = vld [vmem:[%s392 + $0x520] sm:$0xff]
        %v735 = vld [vmem:[%s392 + $0x528] sm:$0xff]
        %v736 = vld [vmem:[%s392 + $0x530] sm:$0xff]
        %v737 = vld [vmem:[%s392 + $0x538] sm:$0xff]
        %v738 = vld [vmem:[%s392 + $0x540] sm:$0xff]
        %v739 = vld [vmem:[%s392 + $0x548] sm:$0xff]
        %v740 = vld [vmem:[%s392 + $0x550] sm:$0xff]
        %v741 = vld [vmem:[%s392 + $0x558] sm:$0xff]
        %v742 = vld [vmem:[%s392 + $0x560] sm:$0xff]
        %v743 = vld [vmem:[%s392 + $0x568] sm:$0xff]
        %v744 = vld [vmem:[%s392 + $0x570] sm:$0xff]
        %v745 = vld [vmem:[%s392 + $0x578] sm:$0xff]
        %v746 = vld [vmem:[%s392 + $0x580] sm:$0xff]
        %v747 = vld [vmem:[%s392 + $0x588] sm:$0xff]
        %v748 = vld [vmem:[%s392 + $0x590] sm:$0xff]
        %v749 = vld [vmem:[%s392 + $0x598] sm:$0xff]
        %v750 = vld [vmem:[%s392 + $0x5a0] sm:$0xff]
        %v751 = vld [vmem:[%s392 + $0x5a8] sm:$0xff]
        %v752 = vld [vmem:[%s392 + $0x5b0] sm:$0xff]
        %v753 = vld [vmem:[%s392 + $0x5b8] sm:$0xff]
        %v754 = vld [vmem:[%s392 + $0x5c0] sm:$0xff]
        %v755 = vld [vmem:[%s392 + $0x5c8] sm:$0xff]
        %v756 = vld [vmem:[%s392 + $0x5d0] sm:$0xff]
        %v757 = vld [vmem:[%s392 + $0x5d8] sm:$0xff]
        %v758 = vld [vmem:[%s392 + $0x5e0] sm:$0xff]
        %v759 = vld [vmem:[%s392 + $0x5e8] sm:$0xff]
        %v760 = vld [vmem:[%s392 + $0x5f0] sm:$0xff]
        %v761 = vld [vmem:[%s392 + $0x5f8] sm:$0xff]
        %v762 = vld [vmem:[%s392 + $0x600] sm:$0xff]
        %v763 = vld [vmem:[%s392 + $0x608] sm:$0xff]
        %v764 = vld [vmem:[%s392 + $0x610] sm:$0xff]
        %v765 = vld [vmem:[%s392 + $0x618] sm:$0xff]
        %v766 = vld [vmem:[%s392 + $0x620] sm:$0xff]
        %v767 = vld [vmem:[%s392 + $0x628] sm:$0xff]
        %v768 = vld [vmem:[%s392 + $0x630] sm:$0xff]
        %v769 = vld [vmem:[%s392 + $0x638] sm:$0xff]
        %v770 = vld [vmem:[%s392 + $0x640] sm:$0xff]
        %v771 = vld [vmem:[%s392 + $0x648] sm:$0xff]
        %v772 = vld [vmem:[%s392 + $0x650] sm:$0xff]
        %v773 = vld [vmem:[%s392 + $0x658] sm:$0xff]
        %v774 = vld [vmem:[%s392 + $0x660] sm:$0xff]
        %v775 = vld [vmem:[%s392 + $0x668] sm:$0xff]
        %v776 = vld [vmem:[%s392 + $0x670] sm:$0xff]
        %v777 = vld [vmem:[%s392 + $0x678] sm:$0xff]
        %v778 = vld [vmem:[%s392 + $0x680] sm:$0xff]
        %v779 = vld [vmem:[%s392 + $0x688] sm:$0xff]
        %v780 = vld [vmem:[%s392 + $0x690] sm:$0xff]
        %v781 = vld [vmem:[%s392 + $0x698] sm:$0xff]
        %v782 = vld [vmem:[%s392 + $0x6a0] sm:$0xff]
        %v783 = vld [vmem:[%s392 + $0x6a8] sm:$0xff]
        %v784 = vld [vmem:[%s392 + $0x6b0] sm:$0xff]
        %v785 = vld [vmem:[%s392 + $0x6b8] sm:$0xff]
        %v786 = vld [vmem:[%s392 + $0x6c0] sm:$0xff]
        %v787 = vld [vmem:[%s392 + $0x6c8] sm:$0xff]
        %v788 = vld [vmem:[%s392 + $0x6d0] sm:$0xff]
        %v789 = vld [vmem:[%s392 + $0x6d8] sm:$0xff]
        %v790 = vld [vmem:[%s392 + $0x6e0] sm:$0xff]
        %v791 = vld [vmem:[%s392 + $0x6e8] sm:$0xff]
        %v792 = vld [vmem:[%s392 + $0x6f0] sm:$0xff]
        %v793 = vld [vmem:[%s392 + $0x6f8] sm:$0xff]
        %v794 = vld [vmem:[%s392 + $0x700] sm:$0xff]
        %v795 = vld [vmem:[%s392 + $0x708] sm:$0xff]
        %v796 = vld [vmem:[%s392 + $0x710] sm:$0xff]
        %v797 = vld [vmem:[%s392 + $0x718] sm:$0xff]
        %v798 = vld [vmem:[%s392 + $0x720] sm:$0xff]
        %v799 = vld [vmem:[%s392 + $0x728] sm:$0xff]
        %v800 = vld [vmem:[%s392 + $0x730] sm:$0xff]
        %v801 = vld [vmem:[%s392 + $0x738] sm:$0xff]
        %v802 = vld [vmem:[%s392 + $0x740] sm:$0xff]
        %v803 = vld [vmem:[%s392 + $0x748] sm:$0xff]
        %v804 = vld [vmem:[%s392 + $0x750] sm:$0xff]
        %v805 = vld [vmem:[%s392 + $0x758] sm:$0xff]
        %v806 = vld [vmem:[%s392 + $0x760] sm:$0xff]
        %v807 = vld [vmem:[%s392 + $0x768] sm:$0xff]
        %v808 = vld [vmem:[%s392 + $0x770] sm:$0xff]
        %v809 = vld [vmem:[%s392 + $0x778] sm:$0xff]
        %v810 = vld [vmem:[%s392 + $0x780] sm:$0xff]
        %v811 = vld [vmem:[%s392 + $0x788] sm:$0xff]
        %v812 = vld [vmem:[%s392 + $0x790] sm:$0xff]
        %v813 = vld [vmem:[%s392 + $0x798] sm:$0xff]
        %v814 = vld [vmem:[%s392 + $0x7a0] sm:$0xff]
        %v815 = vld [vmem:[%s392 + $0x7a8] sm:$0xff]
        %v816 = vld [vmem:[%s392 + $0x7b0] sm:$0xff]
        %v817 = vld [vmem:[%s392 + $0x7b8] sm:$0xff]
        %v818 = vld [vmem:[%s392 + $0x7c0] sm:$0xff]
        %v819 = vld [vmem:[%s392 + $0x7c8] sm:$0xff]
        %v820 = vld [vmem:[%s392 + $0x7d0] sm:$0xff]
        %v821 = vld [vmem:[%s392 + $0x7d8] sm:$0xff]
        %v822 = vld [vmem:[%s392 + $0x7e0] sm:$0xff]
        %v823 = vld [vmem:[%s392 + $0x7e8] sm:$0xff]
        %v824 = vld [vmem:[%s392 + $0x7f0] sm:$0xff]
        %v825 = vld [vmem:[%s392 + $0x7f8] sm:$0xff]
        %v842 = vunpack.c.l.b16 %v554
        %v843 = vunpack.c.h.b16 %v554
        %v844 = vunpack.c.l.b16 %v555
        %v845 = vunpack.c.h.b16 %v555
        %v846 = vunpack.c.l.b16 %v556
        %v847 = vunpack.c.h.b16 %v556
        %v848 = vunpack.c.l.b16 %v557
        %v849 = vunpack.c.h.b16 %v557
        %v850 = vunpack.c.l.b16 %v558
        %v851 = vunpack.c.h.b16 %v558
        %v852 = vunpack.c.l.b16 %v559
        %v853 = vunpack.c.h.b16 %v559
        %v854 = vunpack.c.l.b16 %v560
        %v855 = vunpack.c.h.b16 %v560
        %v856 = vunpack.c.l.b16 %v561
        %v857 = vunpack.c.h.b16 %v561
        %v858 = vunpack.c.l.b16 %v562
        %v859 = vunpack.c.h.b16 %v562
        %v860 = vunpack.c.l.b16 %v563
        %v861 = vunpack.c.h.b16 %v563
        %v862 = vunpack.c.l.b16 %v564
        %v863 = vunpack.c.h.b16 %v564
        %v864 = vunpack.c.l.b16 %v565
        %v865 = vunpack.c.h.b16 %v565
        %v866 = vunpack.c.l.b16 %v566
        %v867 = vunpack.c.h.b16 %v566
        %v868 = vunpack.c.l.b16 %v567
        %v869 = vunpack.c.h.b16 %v567
        %v870 = vunpack.c.l.b16 %v568
        %v871 = vunpack.c.h.b16 %v568
        %v872 = vunpack.c.l.b16 %v569
        %v873 = vunpack.c.h.b16 %v569
        %v874 = vpack.c.b16 %v858, %v842
        %v875 = vpack.c.b16 %v859, %v843
        %v876 = vpack.c.b16 %v860, %v844
        %v877 = vpack.c.b16 %v861, %v845
        %v878 = vpack.c.b16 %v862, %v846
        %v879 = vpack.c.b16 %v863, %v847
        %v880 = vpack.c.b16 %v864, %v848
        %v881 = vpack.c.b16 %v865, %v849
        %v882 = vpack.c.b16 %v866, %v850
        %v883 = vpack.c.b16 %v867, %v851
        %v884 = vpack.c.b16 %v868, %v852
        %v885 = vpack.c.b16 %v869, %v853
        %v886 = vpack.c.b16 %v870, %v854
        %v887 = vpack.c.b16 %v871, %v855
        %v888 = vpack.c.b16 %v872, %v856
        %v889 = vpack.c.b16 %v873, %v857
        %v1162 = vunpack.c.l.b16 %v570
        %v1163 = vunpack.c.h.b16 %v570
        %v1164 = vunpack.c.l.b16 %v571
        %v1165 = vunpack.c.h.b16 %v571
        %v1166 = vunpack.c.l.b16 %v572
        %v1167 = vunpack.c.h.b16 %v572
        %v1168 = vunpack.c.l.b16 %v573
        %v1169 = vunpack.c.h.b16 %v573
        %v1170 = vunpack.c.l.b16 %v574
        %v1171 = vunpack.c.h.b16 %v574
        %v1172 = vunpack.c.l.b16 %v575
        %v1173 = vunpack.c.h.b16 %v575
        %v1174 = vunpack.c.l.b16 %v576
        %v1175 = vunpack.c.h.b16 %v576
        %v1176 = vunpack.c.l.b16 %v577
        %v1177 = vunpack.c.h.b16 %v577
        %v1178 = vunpack.c.l.b16 %v578
        %v1179 = vunpack.c.h.b16 %v578
        %v1180 = vunpack.c.l.b16 %v579
        %v1181 = vunpack.c.h.b16 %v579
        %v1182 = vunpack.c.l.b16 %v580
        %v1183 = vunpack.c.h.b16 %v580
        %v1184 = vunpack.c.l.b16 %v581
        %v1185 = vunpack.c.h.b16 %v581
        %v1186 = vunpack.c.l.b16 %v582
        %v1187 = vunpack.c.h.b16 %v582
        %v1188 = vunpack.c.l.b16 %v583
        %v1189 = vunpack.c.h.b16 %v583
        %v1190 = vunpack.c.l.b16 %v584
        %v1191 = vunpack.c.h.b16 %v584
        %v1192 = vunpack.c.l.b16 %v585
        %v1193 = vunpack.c.h.b16 %v585
        %v1194 = vunpack.c.l.b16 %v586
        %v1195 = vunpack.c.h.b16 %v586
        %v1196 = vunpack.c.l.b16 %v587
        %v1197 = vunpack.c.h.b16 %v587
        %v1198 = vunpack.c.l.b16 %v588
        %v1199 = vunpack.c.h.b16 %v588
        %v1200 = vunpack.c.l.b16 %v589
        %v1201 = vunpack.c.h.b16 %v589
        %v1202 = vunpack.c.l.b16 %v590
        %v1203 = vunpack.c.h.b16 %v590
        %v1204 = vunpack.c.l.b16 %v591
        %v1205 = vunpack.c.h.b16 %v591
        %v1206 = vunpack.c.l.b16 %v592
        %v1207 = vunpack.c.h.b16 %v592
        %v1208 = vunpack.c.l.b16 %v593
        %v1209 = vunpack.c.h.b16 %v593
        %v1210 = vunpack.c.l.b16 %v594
        %v1211 = vunpack.c.h.b16 %v594
        %v1212 = vunpack.c.l.b16 %v595
        %v1213 = vunpack.c.h.b16 %v595
        %v1214 = vunpack.c.l.b16 %v596
        %v1215 = vunpack.c.h.b16 %v596
        %v1216 = vunpack.c.l.b16 %v597
        %v1217 = vunpack.c.h.b16 %v597
        %v1218 = vunpack.c.l.b16 %v598
        %v1219 = vunpack.c.h.b16 %v598
        %v1220 = vunpack.c.l.b16 %v599
        %v1221 = vunpack.c.h.b16 %v599
        %v1222 = vunpack.c.l.b16 %v600
        %v1223 = vunpack.c.h.b16 %v600
        %v1224 = vunpack.c.l.b16 %v601
        %v1225 = vunpack.c.h.b16 %v601
        %v1226 = vunpack.c.l.b16 %v602
        %v1227 = vunpack.c.h.b16 %v602
        %v1228 = vunpack.c.l.b16 %v603
        %v1229 = vunpack.c.h.b16 %v603
        %v1230 = vunpack.c.l.b16 %v604
        %v1231 = vunpack.c.h.b16 %v604
        %v1232 = vunpack.c.l.b16 %v605
        %v1233 = vunpack.c.h.b16 %v605
        %v1234 = vunpack.c.l.b16 %v606
        %v1235 = vunpack.c.h.b16 %v606
        %v1236 = vunpack.c.l.b16 %v607
        %v1237 = vunpack.c.h.b16 %v607
        %v1238 = vunpack.c.l.b16 %v608
        %v1239 = vunpack.c.h.b16 %v608
        %v1240 = vunpack.c.l.b16 %v609
        %v1241 = vunpack.c.h.b16 %v609
        %v1242 = vunpack.c.l.b16 %v610
        %v1243 = vunpack.c.h.b16 %v610
        %v1244 = vunpack.c.l.b16 %v611
        %v1245 = vunpack.c.h.b16 %v611
        %v1246 = vunpack.c.l.b16 %v612
        %v1247 = vunpack.c.h.b16 %v612
        %v1248 = vunpack.c.l.b16 %v613
        %v1249 = vunpack.c.h.b16 %v613
        %v1250 = vunpack.c.l.b16 %v614
        %v1251 = vunpack.c.h.b16 %v614
        %v1252 = vunpack.c.l.b16 %v615
        %v1253 = vunpack.c.h.b16 %v615
        %v1254 = vunpack.c.l.b16 %v616
        %v1255 = vunpack.c.h.b16 %v616
        %v1256 = vunpack.c.l.b16 %v617
        %v1257 = vunpack.c.h.b16 %v617
        %v1258 = vunpack.c.l.b16 %v618
        %v1259 = vunpack.c.h.b16 %v618
        %v1260 = vunpack.c.l.b16 %v619
        %v1261 = vunpack.c.h.b16 %v619
        %v1262 = vunpack.c.l.b16 %v620
        %v1263 = vunpack.c.h.b16 %v620
        %v1264 = vunpack.c.l.b16 %v621
        %v1265 = vunpack.c.h.b16 %v621
        %v1266 = vunpack.c.l.b16 %v622
        %v1267 = vunpack.c.h.b16 %v622
        %v1268 = vunpack.c.l.b16 %v623
        %v1269 = vunpack.c.h.b16 %v623
        %v1270 = vunpack.c.l.b16 %v624
        %v1271 = vunpack.c.h.b16 %v624
        %v1272 = vunpack.c.l.b16 %v625
        %v1273 = vunpack.c.h.b16 %v625
        %v1274 = vunpack.c.l.b16 %v626
        %v1275 = vunpack.c.h.b16 %v626
        %v1276 = vunpack.c.l.b16 %v627
        %v1277 = vunpack.c.h.b16 %v627
        %v1278 = vunpack.c.l.b16 %v628
        %v1279 = vunpack.c.h.b16 %v628
        %v1280 = vunpack.c.l.b16 %v629
        %v1281 = vunpack.c.h.b16 %v629
        %v1282 = vunpack.c.l.b16 %v630
        %v1283 = vunpack.c.h.b16 %v630
        %v1284 = vunpack.c.l.b16 %v631
        %v1285 = vunpack.c.h.b16 %v631
        %v1286 = vunpack.c.l.b16 %v632
        %v1287 = vunpack.c.h.b16 %v632
        %v1288 = vunpack.c.l.b16 %v633
        %v1289 = vunpack.c.h.b16 %v633
        %v1290 = vunpack.c.l.b16 %v634
        %v1291 = vunpack.c.h.b16 %v634
        %v1292 = vunpack.c.l.b16 %v635
        %v1293 = vunpack.c.h.b16 %v635
        %v1294 = vunpack.c.l.b16 %v636
        %v1295 = vunpack.c.h.b16 %v636
        %v1296 = vunpack.c.l.b16 %v637
        %v1297 = vunpack.c.h.b16 %v637
        %v1298 = vunpack.c.l.b16 %v638
        %v1299 = vunpack.c.h.b16 %v638
        %v1300 = vunpack.c.l.b16 %v639
        %v1301 = vunpack.c.h.b16 %v639
        %v1302 = vunpack.c.l.b16 %v640
        %v1303 = vunpack.c.h.b16 %v640
        %v1304 = vunpack.c.l.b16 %v641
        %v1305 = vunpack.c.h.b16 %v641
        %v1306 = vunpack.c.l.b16 %v642
        %v1307 = vunpack.c.h.b16 %v642
        %v1308 = vunpack.c.l.b16 %v643
        %v1309 = vunpack.c.h.b16 %v643
        %v1310 = vunpack.c.l.b16 %v644
        %v1311 = vunpack.c.h.b16 %v644
        %v1312 = vunpack.c.l.b16 %v645
        %v1313 = vunpack.c.h.b16 %v645
        %v1314 = vunpack.c.l.b16 %v646
        %v1315 = vunpack.c.h.b16 %v646
        %v1316 = vunpack.c.l.b16 %v647
        %v1317 = vunpack.c.h.b16 %v647
        %v1318 = vunpack.c.l.b16 %v648
        %v1319 = vunpack.c.h.b16 %v648
        %v1320 = vunpack.c.l.b16 %v649
        %v1321 = vunpack.c.h.b16 %v649
        %v1322 = vunpack.c.l.b16 %v650
        %v1323 = vunpack.c.h.b16 %v650
        %v1324 = vunpack.c.l.b16 %v651
        %v1325 = vunpack.c.h.b16 %v651
        %v1326 = vunpack.c.l.b16 %v652
        %v1327 = vunpack.c.h.b16 %v652
        %v1328 = vunpack.c.l.b16 %v653
        %v1329 = vunpack.c.h.b16 %v653
        %v1330 = vunpack.c.l.b16 %v654
        %v1331 = vunpack.c.h.b16 %v654
        %v1332 = vunpack.c.l.b16 %v655
        %v1333 = vunpack.c.h.b16 %v655
        %v1334 = vunpack.c.l.b16 %v656
        %v1335 = vunpack.c.h.b16 %v656
        %v1336 = vunpack.c.l.b16 %v657
        %v1337 = vunpack.c.h.b16 %v657
        %v1338 = vunpack.c.l.b16 %v658
        %v1339 = vunpack.c.h.b16 %v658
        %v1340 = vunpack.c.l.b16 %v659
        %v1341 = vunpack.c.h.b16 %v659
        %v1342 = vunpack.c.l.b16 %v660
        %v1343 = vunpack.c.h.b16 %v660
        %v1344 = vunpack.c.l.b16 %v661
        %v1345 = vunpack.c.h.b16 %v661
        %v1346 = vunpack.c.l.b16 %v662
        %v1347 = vunpack.c.h.b16 %v662
        %v1348 = vunpack.c.l.b16 %v663
        %v1349 = vunpack.c.h.b16 %v663
        %v1350 = vunpack.c.l.b16 %v664
        %v1351 = vunpack.c.h.b16 %v664
        %v1352 = vunpack.c.l.b16 %v665
        %v1353 = vunpack.c.h.b16 %v665
        %v1354 = vunpack.c.l.b16 %v666
        %v1355 = vunpack.c.h.b16 %v666
        %v1356 = vunpack.c.l.b16 %v667
        %v1357 = vunpack.c.h.b16 %v667
        %v1358 = vunpack.c.l.b16 %v668
        %v1359 = vunpack.c.h.b16 %v668
        %v1360 = vunpack.c.l.b16 %v669
        %v1361 = vunpack.c.h.b16 %v669
        %v1362 = vunpack.c.l.b16 %v670
        %v1363 = vunpack.c.h.b16 %v670
        %v1364 = vunpack.c.l.b16 %v671
        %v1365 = vunpack.c.h.b16 %v671
        %v1366 = vunpack.c.l.b16 %v672
        %v1367 = vunpack.c.h.b16 %v672
        %v1368 = vunpack.c.l.b16 %v673
        %v1369 = vunpack.c.h.b16 %v673
        %v1370 = vunpack.c.l.b16 %v674
        %v1371 = vunpack.c.h.b16 %v674
        %v1372 = vunpack.c.l.b16 %v675
        %v1373 = vunpack.c.h.b16 %v675
        %v1374 = vunpack.c.l.b16 %v676
        %v1375 = vunpack.c.h.b16 %v676
        %v1376 = vunpack.c.l.b16 %v677
        %v1377 = vunpack.c.h.b16 %v677
        %v1378 = vunpack.c.l.b16 %v678
        %v1379 = vunpack.c.h.b16 %v678
        %v1380 = vunpack.c.l.b16 %v679
        %v1381 = vunpack.c.h.b16 %v679
        %v1382 = vunpack.c.l.b16 %v680
        %v1383 = vunpack.c.h.b16 %v680
        %v1384 = vunpack.c.l.b16 %v681
        %v1385 = vunpack.c.h.b16 %v681
        %v1386 = vunpack.c.l.b16 %v682
        %v1387 = vunpack.c.h.b16 %v682
        %v1388 = vunpack.c.l.b16 %v683
        %v1389 = vunpack.c.h.b16 %v683
        %v1390 = vunpack.c.l.b16 %v684
        %v1391 = vunpack.c.h.b16 %v684
        %v1392 = vunpack.c.l.b16 %v685
        %v1393 = vunpack.c.h.b16 %v685
        %v1394 = vunpack.c.l.b16 %v686
        %v1395 = vunpack.c.h.b16 %v686
        %v1396 = vunpack.c.l.b16 %v687
        %v1397 = vunpack.c.h.b16 %v687
        %v1398 = vunpack.c.l.b16 %v688
        %v1399 = vunpack.c.h.b16 %v688
        %v1400 = vunpack.c.l.b16 %v689
        %v1401 = vunpack.c.h.b16 %v689
        %v1402 = vunpack.c.l.b16 %v690
        %v1403 = vunpack.c.h.b16 %v690
        %v1404 = vunpack.c.l.b16 %v691
        %v1405 = vunpack.c.h.b16 %v691
        %v1406 = vunpack.c.l.b16 %v692
        %v1407 = vunpack.c.h.b16 %v692
        %v1408 = vunpack.c.l.b16 %v693
        %v1409 = vunpack.c.h.b16 %v693
        %v1410 = vunpack.c.l.b16 %v694
        %v1411 = vunpack.c.h.b16 %v694
        %v1412 = vunpack.c.l.b16 %v695
        %v1413 = vunpack.c.h.b16 %v695
        %v1414 = vunpack.c.l.b16 %v696
        %v1415 = vunpack.c.h.b16 %v696
        %v1416 = vunpack.c.l.b16 %v697
        %v1417 = vunpack.c.h.b16 %v697
        %v1418 = vunpack.c.l.b16 %v698
        %v1419 = vunpack.c.h.b16 %v698
        %v1420 = vunpack.c.l.b16 %v699
        %v1421 = vunpack.c.h.b16 %v699
        %v1422 = vunpack.c.l.b16 %v700
        %v1423 = vunpack.c.h.b16 %v700
        %v1424 = vunpack.c.l.b16 %v701
        %v1425 = vunpack.c.h.b16 %v701
        %v1426 = vunpack.c.l.b16 %v702
        %v1427 = vunpack.c.h.b16 %v702
        %v1428 = vunpack.c.l.b16 %v703
        %v1429 = vunpack.c.h.b16 %v703
        %v1430 = vunpack.c.l.b16 %v704
        %v1431 = vunpack.c.h.b16 %v704
        %v1432 = vunpack.c.l.b16 %v705
        %v1433 = vunpack.c.h.b16 %v705
        %v1434 = vunpack.c.l.b16 %v706
        %v1435 = vunpack.c.h.b16 %v706
        %v1436 = vunpack.c.l.b16 %v707
        %v1437 = vunpack.c.h.b16 %v707
        %v1438 = vunpack.c.l.b16 %v708
        %v1439 = vunpack.c.h.b16 %v708
        %v1440 = vunpack.c.l.b16 %v709
        %v1441 = vunpack.c.h.b16 %v709
        %v1442 = vunpack.c.l.b16 %v710
        %v1443 = vunpack.c.h.b16 %v710
        %v1444 = vunpack.c.l.b16 %v711
        %v1445 = vunpack.c.h.b16 %v711
        %v1446 = vunpack.c.l.b16 %v712
        %v1447 = vunpack.c.h.b16 %v712
        %v1448 = vunpack.c.l.b16 %v713
        %v1449 = vunpack.c.h.b16 %v713
        %v1450 = vunpack.c.l.b16 %v714
        %v1451 = vunpack.c.h.b16 %v714
        %v1452 = vunpack.c.l.b16 %v715
        %v1453 = vunpack.c.h.b16 %v715
        %v1454 = vunpack.c.l.b16 %v716
        %v1455 = vunpack.c.h.b16 %v716
        %v1456 = vunpack.c.l.b16 %v717
        %v1457 = vunpack.c.h.b16 %v717
        %v1458 = vunpack.c.l.b16 %v718
        %v1459 = vunpack.c.h.b16 %v718
        %v1460 = vunpack.c.l.b16 %v719
        %v1461 = vunpack.c.h.b16 %v719
        %v1462 = vunpack.c.l.b16 %v720
        %v1463 = vunpack.c.h.b16 %v720
        %v1464 = vunpack.c.l.b16 %v721
        %v1465 = vunpack.c.h.b16 %v721
        %v1466 = vunpack.c.l.b16 %v722
        %v1467 = vunpack.c.h.b16 %v722
        %v1468 = vunpack.c.l.b16 %v723
        %v1469 = vunpack.c.h.b16 %v723
        %v1470 = vunpack.c.l.b16 %v724
        %v1471 = vunpack.c.h.b16 %v724
        %v1472 = vunpack.c.l.b16 %v725
        %v1473 = vunpack.c.h.b16 %v725
        %v1474 = vunpack.c.l.b16 %v726
        %v1475 = vunpack.c.h.b16 %v726
        %v1476 = vunpack.c.l.b16 %v727
        %v1477 = vunpack.c.h.b16 %v727
        %v1478 = vunpack.c.l.b16 %v728
        %v1479 = vunpack.c.h.b16 %v728
        %v1480 = vunpack.c.l.b16 %v729
        %v1481 = vunpack.c.h.b16 %v729
        %v1482 = vunpack.c.l.b16 %v730
        %v1483 = vunpack.c.h.b16 %v730
        %v1484 = vunpack.c.l.b16 %v731
        %v1485 = vunpack.c.h.b16 %v731
        %v1486 = vunpack.c.l.b16 %v732
        %v1487 = vunpack.c.h.b16 %v732
        %v1488 = vunpack.c.l.b16 %v733
        %v1489 = vunpack.c.h.b16 %v733
        %v1490 = vunpack.c.l.b16 %v734
        %v1491 = vunpack.c.h.b16 %v734
        %v1492 = vunpack.c.l.b16 %v735
        %v1493 = vunpack.c.h.b16 %v735
        %v1494 = vunpack.c.l.b16 %v736
        %v1495 = vunpack.c.h.b16 %v736
        %v1496 = vunpack.c.l.b16 %v737
        %v1497 = vunpack.c.h.b16 %v737
        %v1498 = vunpack.c.l.b16 %v738
        %v1499 = vunpack.c.h.b16 %v738
        %v1500 = vunpack.c.l.b16 %v739
        %v1501 = vunpack.c.h.b16 %v739
        %v1502 = vunpack.c.l.b16 %v740
        %v1503 = vunpack.c.h.b16 %v740
        %v1504 = vunpack.c.l.b16 %v741
        %v1505 = vunpack.c.h.b16 %v741
        %v1506 = vunpack.c.l.b16 %v742
        %v1507 = vunpack.c.h.b16 %v742
        %v1508 = vunpack.c.l.b16 %v743
        %v1509 = vunpack.c.h.b16 %v743
        %v1510 = vunpack.c.l.b16 %v744
        %v1511 = vunpack.c.h.b16 %v744
        %v1512 = vunpack.c.l.b16 %v745
        %v1513 = vunpack.c.h.b16 %v745
        %v1514 = vunpack.c.l.b16 %v746
        %v1515 = vunpack.c.h.b16 %v746
        %v1516 = vunpack.c.l.b16 %v747
        %v1517 = vunpack.c.h.b16 %v747
        %v1518 = vunpack.c.l.b16 %v748
        %v1519 = vunpack.c.h.b16 %v748
        %v1520 = vunpack.c.l.b16 %v749
        %v1521 = vunpack.c.h.b16 %v749
        %v1522 = vunpack.c.l.b16 %v750
        %v1523 = vunpack.c.h.b16 %v750
        %v1524 = vunpack.c.l.b16 %v751
        %v1525 = vunpack.c.h.b16 %v751
        %v1526 = vunpack.c.l.b16 %v752
        %v1527 = vunpack.c.h.b16 %v752
        %v1528 = vunpack.c.l.b16 %v753
        %v1529 = vunpack.c.h.b16 %v753
        %v1530 = vunpack.c.l.b16 %v754
        %v1531 = vunpack.c.h.b16 %v754
        %v1532 = vunpack.c.l.b16 %v755
        %v1533 = vunpack.c.h.b16 %v755
        %v1534 = vunpack.c.l.b16 %v756
        %v1535 = vunpack.c.h.b16 %v756
        %v1536 = vunpack.c.l.b16 %v757
        %v1537 = vunpack.c.h.b16 %v757
        %v1538 = vunpack.c.l.b16 %v758
        %v1539 = vunpack.c.h.b16 %v758
        %v1540 = vunpack.c.l.b16 %v759
        %v1541 = vunpack.c.h.b16 %v759
        %v1542 = vunpack.c.l.b16 %v760
        %v1543 = vunpack.c.h.b16 %v760
        %v1544 = vunpack.c.l.b16 %v761
        %v1545 = vunpack.c.h.b16 %v761
        %v1546 = vunpack.c.l.b16 %v762
        %v1547 = vunpack.c.h.b16 %v762
        %v1548 = vunpack.c.l.b16 %v763
        %v1549 = vunpack.c.h.b16 %v763
        %v1550 = vunpack.c.l.b16 %v764
        %v1551 = vunpack.c.h.b16 %v764
        %v1552 = vunpack.c.l.b16 %v765
        %v1553 = vunpack.c.h.b16 %v765
        %v1554 = vunpack.c.l.b16 %v766
        %v1555 = vunpack.c.h.b16 %v766
        %v1556 = vunpack.c.l.b16 %v767
        %v1557 = vunpack.c.h.b16 %v767
        %v1558 = vunpack.c.l.b16 %v768
        %v1559 = vunpack.c.h.b16 %v768
        %v1560 = vunpack.c.l.b16 %v769
        %v1561 = vunpack.c.h.b16 %v769
        %v1562 = vunpack.c.l.b16 %v770
        %v1563 = vunpack.c.h.b16 %v770
        %v1564 = vunpack.c.l.b16 %v771
        %v1565 = vunpack.c.h.b16 %v771
        %v1566 = vunpack.c.l.b16 %v772
        %v1567 = vunpack.c.h.b16 %v772
        %v1568 = vunpack.c.l.b16 %v773
        %v1569 = vunpack.c.h.b16 %v773
        %v1570 = vunpack.c.l.b16 %v774
        %v1571 = vunpack.c.h.b16 %v774
        %v1572 = vunpack.c.l.b16 %v775
        %v1573 = vunpack.c.h.b16 %v775
        %v1574 = vunpack.c.l.b16 %v776
        %v1575 = vunpack.c.h.b16 %v776
        %v1576 = vunpack.c.l.b16 %v777
        %v1577 = vunpack.c.h.b16 %v777
        %v1578 = vunpack.c.l.b16 %v778
        %v1579 = vunpack.c.h.b16 %v778
        %v1580 = vunpack.c.l.b16 %v779
        %v1581 = vunpack.c.h.b16 %v779
        %v1582 = vunpack.c.l.b16 %v780
        %v1583 = vunpack.c.h.b16 %v780
        %v1584 = vunpack.c.l.b16 %v781
        %v1585 = vunpack.c.h.b16 %v781
        %v1586 = vunpack.c.l.b16 %v782
        %v1587 = vunpack.c.h.b16 %v782
        %v1588 = vunpack.c.l.b16 %v783
        %v1589 = vunpack.c.h.b16 %v783
        %v1590 = vunpack.c.l.b16 %v784
        %v1591 = vunpack.c.h.b16 %v784
        %v1592 = vunpack.c.l.b16 %v785
        %v1593 = vunpack.c.h.b16 %v785
        %v1594 = vunpack.c.l.b16 %v786
        %v1595 = vunpack.c.h.b16 %v786
        %v1596 = vunpack.c.l.b16 %v787
        %v1597 = vunpack.c.h.b16 %v787
        %v1598 = vunpack.c.l.b16 %v788
        %v1599 = vunpack.c.h.b16 %v788
        %v1600 = vunpack.c.l.b16 %v789
        %v1601 = vunpack.c.h.b16 %v789
        %v1602 = vunpack.c.l.b16 %v790
        %v1603 = vunpack.c.h.b16 %v790
        %v1604 = vunpack.c.l.b16 %v791
        %v1605 = vunpack.c.h.b16 %v791
        %v1606 = vunpack.c.l.b16 %v792
        %v1607 = vunpack.c.h.b16 %v792
        %v1608 = vunpack.c.l.b16 %v793
        %v1609 = vunpack.c.h.b16 %v793
        %v1610 = vunpack.c.l.b16 %v794
        %v1611 = vunpack.c.h.b16 %v794
        %v1612 = vunpack.c.l.b16 %v795
        %v1613 = vunpack.c.h.b16 %v795
        %v1614 = vunpack.c.l.b16 %v796
        %v1615 = vunpack.c.h.b16 %v796
        %v1616 = vunpack.c.l.b16 %v797
        %v1617 = vunpack.c.h.b16 %v797
        %v1618 = vunpack.c.l.b16 %v798
        %v1619 = vunpack.c.h.b16 %v798
        %v1620 = vunpack.c.l.b16 %v799
        %v1621 = vunpack.c.h.b16 %v799
        %v1622 = vunpack.c.l.b16 %v800
        %v1623 = vunpack.c.h.b16 %v800
        %v1624 = vunpack.c.l.b16 %v801
        %v1625 = vunpack.c.h.b16 %v801
        %v1626 = vunpack.c.l.b16 %v802
        %v1627 = vunpack.c.h.b16 %v802
        %v1628 = vunpack.c.l.b16 %v803
        %v1629 = vunpack.c.h.b16 %v803
        %v1630 = vunpack.c.l.b16 %v804
        %v1631 = vunpack.c.h.b16 %v804
        %v1632 = vunpack.c.l.b16 %v805
        %v1633 = vunpack.c.h.b16 %v805
        %v1634 = vunpack.c.l.b16 %v806
        %v1635 = vunpack.c.h.b16 %v806
        %v1636 = vunpack.c.l.b16 %v807
        %v1637 = vunpack.c.h.b16 %v807
        %v1638 = vunpack.c.l.b16 %v808
        %v1639 = vunpack.c.h.b16 %v808
        %v1640 = vunpack.c.l.b16 %v809
        %v1641 = vunpack.c.h.b16 %v809
        %v1642 = vunpack.c.l.b16 %v810
        %v1643 = vunpack.c.h.b16 %v810
        %v1644 = vunpack.c.l.b16 %v811
        %v1645 = vunpack.c.h.b16 %v811
        %v1646 = vunpack.c.l.b16 %v812
        %v1647 = vunpack.c.h.b16 %v812
        %v1648 = vunpack.c.l.b16 %v813
        %v1649 = vunpack.c.h.b16 %v813
        %v1650 = vunpack.c.l.b16 %v814
        %v1651 = vunpack.c.h.b16 %v814
        %v1652 = vunpack.c.l.b16 %v815
        %v1653 = vunpack.c.h.b16 %v815
        %v1654 = vunpack.c.l.b16 %v816
        %v1655 = vunpack.c.h.b16 %v816
        %v1656 = vunpack.c.l.b16 %v817
        %v1657 = vunpack.c.h.b16 %v817
        %v1658 = vunpack.c.l.b16 %v818
        %v1659 = vunpack.c.h.b16 %v818
        %v1660 = vunpack.c.l.b16 %v819
        %v1661 = vunpack.c.h.b16 %v819
        %v1662 = vunpack.c.l.b16 %v820
        %v1663 = vunpack.c.h.b16 %v820
        %v1664 = vunpack.c.l.b16 %v821
        %v1665 = vunpack.c.h.b16 %v821
        %v1666 = vunpack.c.l.b16 %v822
        %v1667 = vunpack.c.h.b16 %v822
        %v1668 = vunpack.c.l.b16 %v823
        %v1669 = vunpack.c.h.b16 %v823
        %v1670 = vunpack.c.l.b16 %v824
        %v1671 = vunpack.c.h.b16 %v824
        %v1672 = vunpack.c.l.b16 %v825
        %v1673 = vunpack.c.h.b16 %v825
        %v1674 = vpack.c.b16 %v1164, %v1162
        %v1675 = vpack.c.b16 %v1165, %v1163
        %v1676 = vpack.c.b16 %v1168, %v1166
        %v1677 = vpack.c.b16 %v1169, %v1167
        %v1678 = vpack.c.b16 %v1172, %v1170
        %v1679 = vpack.c.b16 %v1173, %v1171
        %v1680 = vpack.c.b16 %v1176, %v1174
        %v1681 = vpack.c.b16 %v1177, %v1175
        %v1682 = vpack.c.b16 %v1180, %v1178
        %v1683 = vpack.c.b16 %v1181, %v1179
        %v1684 = vpack.c.b16 %v1184, %v1182
        %v1685 = vpack.c.b16 %v1185, %v1183
        %v1686 = vpack.c.b16 %v1188, %v1186
        %v1687 = vpack.c.b16 %v1189, %v1187
        %v1688 = vpack.c.b16 %v1192, %v1190
        %v1689 = vpack.c.b16 %v1193, %v1191
        %v1690 = vpack.c.b16 %v1196, %v1194
        %v1691 = vpack.c.b16 %v1197, %v1195
        %v1692 = vpack.c.b16 %v1200, %v1198
        %v1693 = vpack.c.b16 %v1201, %v1199
        %v1694 = vpack.c.b16 %v1204, %v1202
        %v1695 = vpack.c.b16 %v1205, %v1203
        %v1696 = vpack.c.b16 %v1208, %v1206
        %v1697 = vpack.c.b16 %v1209, %v1207
        %v1698 = vpack.c.b16 %v1212, %v1210
        %v1699 = vpack.c.b16 %v1213, %v1211
        %v1700 = vpack.c.b16 %v1216, %v1214
        %v1701 = vpack.c.b16 %v1217, %v1215
        %v1702 = vpack.c.b16 %v1220, %v1218
        %v1703 = vpack.c.b16 %v1221, %v1219
        %v1704 = vpack.c.b16 %v1224, %v1222
        %v1705 = vpack.c.b16 %v1225, %v1223
        %v1706 = vpack.c.b16 %v1228, %v1226
        %v1707 = vpack.c.b16 %v1229, %v1227
        %v1708 = vpack.c.b16 %v1232, %v1230
        %v1709 = vpack.c.b16 %v1233, %v1231
        %v1710 = vpack.c.b16 %v1236, %v1234
        %v1711 = vpack.c.b16 %v1237, %v1235
        %v1712 = vpack.c.b16 %v1240, %v1238
        %v1713 = vpack.c.b16 %v1241, %v1239
        %v1714 = vpack.c.b16 %v1244, %v1242
        %v1715 = vpack.c.b16 %v1245, %v1243
        %v1716 = vpack.c.b16 %v1248, %v1246
        %v1717 = vpack.c.b16 %v1249, %v1247
        %v1718 = vpack.c.b16 %v1252, %v1250
        %v1719 = vpack.c.b16 %v1253, %v1251
        %v1720 = vpack.c.b16 %v1256, %v1254
        %v1721 = vpack.c.b16 %v1257, %v1255
        %v1722 = vpack.c.b16 %v1260, %v1258
        %v1723 = vpack.c.b16 %v1261, %v1259
        %v1724 = vpack.c.b16 %v1264, %v1262
        %v1725 = vpack.c.b16 %v1265, %v1263
        %v1726 = vpack.c.b16 %v1268, %v1266
        %v1727 = vpack.c.b16 %v1269, %v1267
        %v1728 = vpack.c.b16 %v1272, %v1270
        %v1729 = vpack.c.b16 %v1273, %v1271
        %v1730 = vpack.c.b16 %v1276, %v1274
        %v1731 = vpack.c.b16 %v1277, %v1275
        %v1732 = vpack.c.b16 %v1280, %v1278
        %v1733 = vpack.c.b16 %v1281, %v1279
        %v1734 = vpack.c.b16 %v1284, %v1282
        %v1735 = vpack.c.b16 %v1285, %v1283
        %v1736 = vpack.c.b16 %v1288, %v1286
        %v1737 = vpack.c.b16 %v1289, %v1287
        %v1738 = vpack.c.b16 %v1292, %v1290
        %v1739 = vpack.c.b16 %v1293, %v1291
        %v1740 = vpack.c.b16 %v1296, %v1294
        %v1741 = vpack.c.b16 %v1297, %v1295
        %v1742 = vpack.c.b16 %v1300, %v1298
        %v1743 = vpack.c.b16 %v1301, %v1299
        %v1744 = vpack.c.b16 %v1304, %v1302
        %v1745 = vpack.c.b16 %v1305, %v1303
        %v1746 = vpack.c.b16 %v1308, %v1306
        %v1747 = vpack.c.b16 %v1309, %v1307
        %v1748 = vpack.c.b16 %v1312, %v1310
        %v1749 = vpack.c.b16 %v1313, %v1311
        %v1750 = vpack.c.b16 %v1316, %v1314
        %v1751 = vpack.c.b16 %v1317, %v1315
        %v1752 = vpack.c.b16 %v1320, %v1318
        %v1753 = vpack.c.b16 %v1321, %v1319
        %v1754 = vpack.c.b16 %v1324, %v1322
        %v1755 = vpack.c.b16 %v1325, %v1323
        %v1756 = vpack.c.b16 %v1328, %v1326
        %v1757 = vpack.c.b16 %v1329, %v1327
        %v1758 = vpack.c.b16 %v1332, %v1330
        %v1759 = vpack.c.b16 %v1333, %v1331
        %v1760 = vpack.c.b16 %v1336, %v1334
        %v1761 = vpack.c.b16 %v1337, %v1335
        %v1762 = vpack.c.b16 %v1340, %v1338
        %v1763 = vpack.c.b16 %v1341, %v1339
        %v1764 = vpack.c.b16 %v1344, %v1342
        %v1765 = vpack.c.b16 %v1345, %v1343
        %v1766 = vpack.c.b16 %v1348, %v1346
        %v1767 = vpack.c.b16 %v1349, %v1347
        %v1768 = vpack.c.b16 %v1352, %v1350
        %v1769 = vpack.c.b16 %v1353, %v1351
        %v1770 = vpack.c.b16 %v1356, %v1354
        %v1771 = vpack.c.b16 %v1357, %v1355
        %v1772 = vpack.c.b16 %v1360, %v1358
        %v1773 = vpack.c.b16 %v1361, %v1359
        %v1774 = vpack.c.b16 %v1364, %v1362
        %v1775 = vpack.c.b16 %v1365, %v1363
        %v1776 = vpack.c.b16 %v1368, %v1366
        %v1777 = vpack.c.b16 %v1369, %v1367
        %v1778 = vpack.c.b16 %v1372, %v1370
        %v1779 = vpack.c.b16 %v1373, %v1371
        %v1780 = vpack.c.b16 %v1376, %v1374
        %v1781 = vpack.c.b16 %v1377, %v1375
        %v1782 = vpack.c.b16 %v1380, %v1378
        %v1783 = vpack.c.b16 %v1381, %v1379
        %v1784 = vpack.c.b16 %v1384, %v1382
        %v1785 = vpack.c.b16 %v1385, %v1383
        %v1786 = vpack.c.b16 %v1388, %v1386
        %v1787 = vpack.c.b16 %v1389, %v1387
        %v1788 = vpack.c.b16 %v1392, %v1390
        %v1789 = vpack.c.b16 %v1393, %v1391
        %v1790 = vpack.c.b16 %v1396, %v1394
        %v1791 = vpack.c.b16 %v1397, %v1395
        %v1792 = vpack.c.b16 %v1400, %v1398
        %v1793 = vpack.c.b16 %v1401, %v1399
        %v1794 = vpack.c.b16 %v1404, %v1402
        %v1795 = vpack.c.b16 %v1405, %v1403
        %v1796 = vpack.c.b16 %v1408, %v1406
        %v1797 = vpack.c.b16 %v1409, %v1407
        %v1798 = vpack.c.b16 %v1412, %v1410
        %v1799 = vpack.c.b16 %v1413, %v1411
        %v1800 = vpack.c.b16 %v1416, %v1414
        %v1801 = vpack.c.b16 %v1417, %v1415
        %v1802 = vpack.c.b16 %v1420, %v1418
        %v1803 = vpack.c.b16 %v1421, %v1419
        %v1804 = vpack.c.b16 %v1424, %v1422
        %v1805 = vpack.c.b16 %v1425, %v1423
        %v1806 = vpack.c.b16 %v1428, %v1426
        %v1807 = vpack.c.b16 %v1429, %v1427
        %v1808 = vpack.c.b16 %v1432, %v1430
        %v1809 = vpack.c.b16 %v1433, %v1431
        %v1810 = vpack.c.b16 %v1436, %v1434
        %v1811 = vpack.c.b16 %v1437, %v1435
        %v1812 = vpack.c.b16 %v1440, %v1438
        %v1813 = vpack.c.b16 %v1441, %v1439
        %v1814 = vpack.c.b16 %v1444, %v1442
        %v1815 = vpack.c.b16 %v1445, %v1443
        %v1816 = vpack.c.b16 %v1448, %v1446
        %v1817 = vpack.c.b16 %v1449, %v1447
        %v1818 = vpack.c.b16 %v1452, %v1450
        %v1819 = vpack.c.b16 %v1453, %v1451
        %v1820 = vpack.c.b16 %v1456, %v1454
        %v1821 = vpack.c.b16 %v1457, %v1455
        %v1822 = vpack.c.b16 %v1460, %v1458
        %v1823 = vpack.c.b16 %v1461, %v1459
        %v1824 = vpack.c.b16 %v1464, %v1462
        %v1825 = vpack.c.b16 %v1465, %v1463
        %v1826 = vpack.c.b16 %v1468, %v1466
        %v1827 = vpack.c.b16 %v1469, %v1467
        %v1828 = vpack.c.b16 %v1472, %v1470
        %v1829 = vpack.c.b16 %v1473, %v1471
        %v1830 = vpack.c.b16 %v1476, %v1474
        %v1831 = vpack.c.b16 %v1477, %v1475
        %v1832 = vpack.c.b16 %v1480, %v1478
        %v1833 = vpack.c.b16 %v1481, %v1479
        %v1834 = vpack.c.b16 %v1484, %v1482
        %v1835 = vpack.c.b16 %v1485, %v1483
        %v1836 = vpack.c.b16 %v1488, %v1486
        %v1837 = vpack.c.b16 %v1489, %v1487
        %v1838 = vpack.c.b16 %v1492, %v1490
        %v1839 = vpack.c.b16 %v1493, %v1491
        %v1840 = vpack.c.b16 %v1496, %v1494
        %v1841 = vpack.c.b16 %v1497, %v1495
        %v1842 = vpack.c.b16 %v1500, %v1498
        %v1843 = vpack.c.b16 %v1501, %v1499
        %v1844 = vpack.c.b16 %v1504, %v1502
        %v1845 = vpack.c.b16 %v1505, %v1503
        %v1846 = vpack.c.b16 %v1508, %v1506
        %v1847 = vpack.c.b16 %v1509, %v1507
        %v1848 = vpack.c.b16 %v1512, %v1510
        %v1849 = vpack.c.b16 %v1513, %v1511
        %v1850 = vpack.c.b16 %v1516, %v1514
        %v1851 = vpack.c.b16 %v1517, %v1515
        %v1852 = vpack.c.b16 %v1520, %v1518
        %v1853 = vpack.c.b16 %v1521, %v1519
        %v1854 = vpack.c.b16 %v1524, %v1522
        %v1855 = vpack.c.b16 %v1525, %v1523
        %v1856 = vpack.c.b16 %v1528, %v1526
        %v1857 = vpack.c.b16 %v1529, %v1527
        %v1858 = vpack.c.b16 %v1532, %v1530
        %v1859 = vpack.c.b16 %v1533, %v1531
        %v1860 = vpack.c.b16 %v1536, %v1534
        %v1861 = vpack.c.b16 %v1537, %v1535
        %v1862 = vpack.c.b16 %v1540, %v1538
        %v1863 = vpack.c.b16 %v1541, %v1539
        %v1864 = vpack.c.b16 %v1544, %v1542
        %v1865 = vpack.c.b16 %v1545, %v1543
        %v1866 = vpack.c.b16 %v1548, %v1546
        %v1867 = vpack.c.b16 %v1549, %v1547
        %v1868 = vpack.c.b16 %v1552, %v1550
        %v1869 = vpack.c.b16 %v1553, %v1551
        %v1870 = vpack.c.b16 %v1556, %v1554
        %v1871 = vpack.c.b16 %v1557, %v1555
        %v1872 = vpack.c.b16 %v1560, %v1558
        %v1873 = vpack.c.b16 %v1561, %v1559
        %v1874 = vpack.c.b16 %v1564, %v1562
        %v1875 = vpack.c.b16 %v1565, %v1563
        %v1876 = vpack.c.b16 %v1568, %v1566
        %v1877 = vpack.c.b16 %v1569, %v1567
        %v1878 = vpack.c.b16 %v1572, %v1570
        %v1879 = vpack.c.b16 %v1573, %v1571
        %v1880 = vpack.c.b16 %v1576, %v1574
        %v1881 = vpack.c.b16 %v1577, %v1575
        %v1882 = vpack.c.b16 %v1580, %v1578
        %v1883 = vpack.c.b16 %v1581, %v1579
        %v1884 = vpack.c.b16 %v1584, %v1582
        %v1885 = vpack.c.b16 %v1585, %v1583
        %v1886 = vpack.c.b16 %v1588, %v1586
        %v1887 = vpack.c.b16 %v1589, %v1587
        %v1888 = vpack.c.b16 %v1592, %v1590
        %v1889 = vpack.c.b16 %v1593, %v1591
        %v1890 = vpack.c.b16 %v1596, %v1594
        %v1891 = vpack.c.b16 %v1597, %v1595
        %v1892 = vpack.c.b16 %v1600, %v1598
        %v1893 = vpack.c.b16 %v1601, %v1599
        %v1894 = vpack.c.b16 %v1604, %v1602
        %v1895 = vpack.c.b16 %v1605, %v1603
        %v1896 = vpack.c.b16 %v1608, %v1606
        %v1897 = vpack.c.b16 %v1609, %v1607
        %v1898 = vpack.c.b16 %v1612, %v1610
        %v1899 = vpack.c.b16 %v1613, %v1611
        %v1900 = vpack.c.b16 %v1616, %v1614
        %v1901 = vpack.c.b16 %v1617, %v1615
        %v1902 = vpack.c.b16 %v1620, %v1618
        %v1903 = vpack.c.b16 %v1621, %v1619
        %v1904 = vpack.c.b16 %v1624, %v1622
        %v1905 = vpack.c.b16 %v1625, %v1623
        %v1906 = vpack.c.b16 %v1628, %v1626
        %v1907 = vpack.c.b16 %v1629, %v1627
        %v1908 = vpack.c.b16 %v1632, %v1630
        %v1909 = vpack.c.b16 %v1633, %v1631
        %v1910 = vpack.c.b16 %v1636, %v1634
        %v1911 = vpack.c.b16 %v1637, %v1635
        %v1912 = vpack.c.b16 %v1640, %v1638
        %v1913 = vpack.c.b16 %v1641, %v1639
        %v1914 = vpack.c.b16 %v1644, %v1642
        %v1915 = vpack.c.b16 %v1645, %v1643
        %v1916 = vpack.c.b16 %v1648, %v1646
        %v1917 = vpack.c.b16 %v1649, %v1647
        %v1918 = vpack.c.b16 %v1652, %v1650
        %v1919 = vpack.c.b16 %v1653, %v1651
        %v1920 = vpack.c.b16 %v1656, %v1654
        %v1921 = vpack.c.b16 %v1657, %v1655
        %v1922 = vpack.c.b16 %v1660, %v1658
        %v1923 = vpack.c.b16 %v1661, %v1659
        %v1924 = vpack.c.b16 %v1664, %v1662
        %v1925 = vpack.c.b16 %v1665, %v1663
        %v1926 = vpack.c.b16 %v1668, %v1666
        %v1927 = vpack.c.b16 %v1669, %v1667
        %v1928 = vpack.c.b16 %v1672, %v1670
        %v1929 = vpack.c.b16 %v1673, %v1671
        %2186 = vmatprep.subr.bf16.mxu0 %v1689
        %2187 = vmatpush1.bf16.msra.mxu0 %v1688
        %2188 = vmatprep.subr.bf16.mxu0 %v1687
        %2189 = vmatpush1.bf16.msra.mxu0 %v1686
        %2190 = vmatprep.subr.bf16.mxu0 %v1685
        %2191 = vmatpush1.bf16.msra.mxu0 %v1684
        %2192 = vmatprep.subr.bf16.mxu0 %v1683
        %2193 = vmatpush1.bf16.msra.mxu0 %v1682
        %2194 = vmatprep.subr.bf16.mxu0 %v1681
        %2195 = vmatpush1.bf16.msra.mxu0 %v1680
        %2196 = vmatprep.subr.bf16.mxu0 %v1679
        %2197 = vmatpush1.bf16.msra.mxu0 %v1678
        %2198 = vmatprep.subr.bf16.mxu0 %v1677
        %2199 = vmatpush1.bf16.msra.mxu0 %v1676
        %2200 = vmatprep.subr.bf16.mxu0 %v1675
        %2201 = vmatpush1.bf16.msra.mxu0 %v1674
        %2202 = vmatprep.subr.bf16.mxu0 %v1705
        %2203 = vmatpush2.bf16.msra.mxu0 %v1704
        %2204 = vmatprep.subr.bf16.mxu0 %v1703
        %2205 = vmatpush2.bf16.msra.mxu0 %v1702
        %2206 = vmatprep.subr.bf16.mxu0 %v1701
        %2207 = vmatpush2.bf16.msra.mxu0 %v1700
        %2208 = vmatprep.subr.bf16.mxu0 %v1699
        %2209 = vmatpush2.bf16.msra.mxu0 %v1698
        %2210 = vmatprep.subr.bf16.mxu0 %v1697
        %2211 = vmatpush2.bf16.msra.mxu0 %v1696
        %2212 = vmatprep.subr.bf16.mxu0 %v1695
        %2213 = vmatpush2.bf16.msra.mxu0 %v1694
        %2214 = vmatprep.subr.bf16.mxu0 %v1693
        %2215 = vmatpush2.bf16.msra.mxu0 %v1692
        %2216 = vmatprep.subr.bf16.mxu0 %v1691
        %2217 = vmatpush2.bf16.msra.mxu0 %v1690
        %2218 = vmatprep.mubr.bf16.mxu0 %v875
        %2219 = vmatmul.mubr.bf16.gmra.mxu0 %v874
        %v2220 = vpop.f32.mrf.mxu0
        %v2221 = vadd.f32 0.0, %v2220
        %v2222 = vpop.f32.mrf.mxu0
        %v2223 = vadd.f32 0.0, %v2222
        %v2224 = vpop.f32.mrf.mxu0
        %v2225 = vadd.f32 0.0, %v2224
        %v2226 = vpop.f32.mrf.mxu0
        %v2227 = vadd.f32 0.0, %v2226
        %2228 = vdwg.mxu0
        %2229 = vmatprep.subr.bf16.mxu0 %v1721
        %2230 = vmatpush1.bf16.msra.mxu0 %v1720
        %2231 = vmatprep.subr.bf16.mxu0 %v1719
        %2232 = vmatpush1.bf16.msra.mxu0 %v1718
        %2233 = vmatprep.subr.bf16.mxu0 %v1717
        %2234 = vmatpush1.bf16.msra.mxu0 %v1716
        %2235 = vmatprep.subr.bf16.mxu0 %v1715
        %2236 = vmatpush1.bf16.msra.mxu0 %v1714
        %2237 = vmatprep.subr.bf16.mxu0 %v1713
        %2238 = vmatpush1.bf16.msra.mxu0 %v1712
        %2239 = vmatprep.subr.bf16.mxu0 %v1711
        %2240 = vmatpush1.bf16.msra.mxu0 %v1710
        %2241 = vmatprep.subr.bf16.mxu0 %v1709
        %2242 = vmatpush1.bf16.msra.mxu0 %v1708
        %2243 = vmatprep.subr.bf16.mxu0 %v1707
        %2244 = vmatpush1.bf16.msra.mxu0 %v1706
        %2245 = vmatprep.subr.bf16.mxu0 %v1737
        %2246 = vmatpush2.bf16.msra.mxu0 %v1736
        %2247 = vmatprep.subr.bf16.mxu0 %v1735
        %2248 = vmatpush2.bf16.msra.mxu0 %v1734
        %2249 = vmatprep.subr.bf16.mxu0 %v1733
        %2250 = vmatpush2.bf16.msra.mxu0 %v1732
        %2251 = vmatprep.subr.bf16.mxu0 %v1731
        %2252 = vmatpush2.bf16.msra.mxu0 %v1730
        %2253 = vmatprep.subr.bf16.mxu0 %v1729
        %2254 = vmatpush2.bf16.msra.mxu0 %v1728
        %2255 = vmatprep.subr.bf16.mxu0 %v1727
        %2256 = vmatpush2.bf16.msra.mxu0 %v1726
        %2257 = vmatprep.subr.bf16.mxu0 %v1725
        %2258 = vmatpush2.bf16.msra.mxu0 %v1724
        %2259 = vmatprep.subr.bf16.mxu0 %v1723
        %2260 = vmatpush2.bf16.msra.mxu0 %v1722
        %2261 = vmatprep.mubr.bf16.mxu0 %v877
        %2262 = vmatmul.mubr.bf16.gmra.mxu0 %v876
        %v2263 = vpop.f32.mrf.mxu0
        %v2264 = vadd.f32 %v2221, %v2263
        %v2265 = vpop.f32.mrf.mxu0
        %v2266 = vadd.f32 %v2223, %v2265
        %v2267 = vpop.f32.mrf.mxu0
        %v2268 = vadd.f32 %v2225, %v2267
        %v2269 = vpop.f32.mrf.mxu0
        %v2270 = vadd.f32 %v2227, %v2269
        %2271 = vdwg.mxu0
        %2272 = vmatprep.subr.bf16.mxu0 %v1753
        %2273 = vmatpush1.bf16.msra.mxu0 %v1752
        %2274 = vmatprep.subr.bf16.mxu0 %v1751
        %2275 = vmatpush1.bf16.msra.mxu0 %v1750
        %2276 = vmatprep.subr.bf16.mxu0 %v1749
        %2277 = vmatpush1.bf16.msra.mxu0 %v1748
        %2278 = vmatprep.subr.bf16.mxu0 %v1747
        %2279 = vmatpush1.bf16.msra.mxu0 %v1746
        %2280 = vmatprep.subr.bf16.mxu0 %v1745
        %2281 = vmatpush1.bf16.msra.mxu0 %v1744
        %2282 = vmatprep.subr.bf16.mxu0 %v1743
        %2283 = vmatpush1.bf16.msra.mxu0 %v1742
        %2284 = vmatprep.subr.bf16.mxu0 %v1741
        %2285 = vmatpush1.bf16.msra.mxu0 %v1740
        %2286 = vmatprep.subr.bf16.mxu0 %v1739
        %2287 = vmatpush1.bf16.msra.mxu0 %v1738
        %2288 = vmatprep.subr.bf16.mxu0 %v1769
        %2289 = vmatpush2.bf16.msra.mxu0 %v1768
        %2290 = vmatprep.subr.bf16.mxu0 %v1767
        %2291 = vmatpush2.bf16.msra.mxu0 %v1766
        %2292 = vmatprep.subr.bf16.mxu0 %v1765
        %2293 = vmatpush2.bf16.msra.mxu0 %v1764
        %2294 = vmatprep.subr.bf16.mxu0 %v1763
        %2295 = vmatpush2.bf16.msra.mxu0 %v1762
        %2296 = vmatprep.subr.bf16.mxu0 %v1761
        %2297 = vmatpush2.bf16.msra.mxu0 %v1760
        %2298 = vmatprep.subr.bf16.mxu0 %v1759
        %2299 = vmatpush2.bf16.msra.mxu0 %v1758
        %2300 = vmatprep.subr.bf16.mxu0 %v1757
        %2301 = vmatpush2.bf16.msra.mxu0 %v1756
        %2302 = vmatprep.subr.bf16.mxu0 %v1755
        %2303 = vmatpush2.bf16.msra.mxu0 %v1754
        %2304 = vmatprep.mubr.bf16.mxu0 %v879
        %2305 = vmatmul.mubr.bf16.gmra.mxu0 %v878
        %v2306 = vpop.f32.mrf.mxu0
        %v2307 = vadd.f32 %v2264, %v2306
        %v2308 = vpop.f32.mrf.mxu0
        %v2309 = vadd.f32 %v2266, %v2308
        %v2310 = vpop.f32.mrf.mxu0
        %v2311 = vadd.f32 %v2268, %v2310
        %v2312 = vpop.f32.mrf.mxu0
        %v2313 = vadd.f32 %v2270, %v2312
        %2314 = vdwg.mxu0
        %2315 = vmatprep.subr.bf16.mxu0 %v1785
        %2316 = vmatpush1.bf16.msra.mxu0 %v1784
        %2317 = vmatprep.subr.bf16.mxu0 %v1783
        %2318 = vmatpush1.bf16.msra.mxu0 %v1782
        %2319 = vmatprep.subr.bf16.mxu0 %v1781
        %2320 = vmatpush1.bf16.msra.mxu0 %v1780
        %2321 = vmatprep.subr.bf16.mxu0 %v1779
        %2322 = vmatpush1.bf16.msra.mxu0 %v1778
        %2323 = vmatprep.subr.bf16.mxu0 %v1777
        %2324 = vmatpush1.bf16.msra.mxu0 %v1776
        %2325 = vmatprep.subr.bf16.mxu0 %v1775
        %2326 = vmatpush1.bf16.msra.mxu0 %v1774
        %2327 = vmatprep.subr.bf16.mxu0 %v1773
        %2328 = vmatpush1.bf16.msra.mxu0 %v1772
        %2329 = vmatprep.subr.bf16.mxu0 %v1771
        %2330 = vmatpush1.bf16.msra.mxu0 %v1770
        %2331 = vmatprep.subr.bf16.mxu0 %v1801
        %2332 = vmatpush2.bf16.msra.mxu0 %v1800
        %2333 = vmatprep.subr.bf16.mxu0 %v1799
        %2334 = vmatpush2.bf16.msra.mxu0 %v1798
        %2335 = vmatprep.subr.bf16.mxu0 %v1797
        %2336 = vmatpush2.bf16.msra.mxu0 %v1796
        %2337 = vmatprep.subr.bf16.mxu0 %v1795
        %2338 = vmatpush2.bf16.msra.mxu0 %v1794
        %2339 = vmatprep.subr.bf16.mxu0 %v1793
        %2340 = vmatpush2.bf16.msra.mxu0 %v1792
        %2341 = vmatprep.subr.bf16.mxu0 %v1791
        %2342 = vmatpush2.bf16.msra.mxu0 %v1790
        %2343 = vmatprep.subr.bf16.mxu0 %v1789
        %2344 = vmatpush2.bf16.msra.mxu0 %v1788
        %2345 = vmatprep.subr.bf16.mxu0 %v1787
        %2346 = vmatpush2.bf16.msra.mxu0 %v1786
        %2347 = vmatprep.mubr.bf16.mxu0 %v881
        %2348 = vmatmul.mubr.bf16.gmra.mxu0 %v880
        %v2349 = vpop.f32.mrf.mxu0
        %v2350 = vadd.f32 %v2307, %v2349
        %v2351 = vpop.f32.mrf.mxu0
        %v2352 = vadd.f32 %v2309, %v2351
        %v2353 = vpop.f32.mrf.mxu0
        %v2354 = vadd.f32 %v2311, %v2353
        %v2355 = vpop.f32.mrf.mxu0
        %v2356 = vadd.f32 %v2313, %v2355
        %2357 = vdwg.mxu0
        %2358 = vmatprep.subr.bf16.mxu0 %v1817
        %2359 = vmatpush1.bf16.msra.mxu0 %v1816
        %2360 = vmatprep.subr.bf16.mxu0 %v1815
        %2361 = vmatpush1.bf16.msra.mxu0 %v1814
        %2362 = vmatprep.subr.bf16.mxu0 %v1813
        %2363 = vmatpush1.bf16.msra.mxu0 %v1812
        %2364 = vmatprep.subr.bf16.mxu0 %v1811
        %2365 = vmatpush1.bf16.msra.mxu0 %v1810
        %2366 = vmatprep.subr.bf16.mxu0 %v1809
        %2367 = vmatpush1.bf16.msra.mxu0 %v1808
        %2368 = vmatprep.subr.bf16.mxu0 %v1807
        %2369 = vmatpush1.bf16.msra.mxu0 %v1806
        %2370 = vmatprep.subr.bf16.mxu0 %v1805
        %2371 = vmatpush1.bf16.msra.mxu0 %v1804
        %2372 = vmatprep.subr.bf16.mxu0 %v1803
        %2373 = vmatpush1.bf16.msra.mxu0 %v1802
        %2374 = vmatprep.subr.bf16.mxu0 %v1833
        %2375 = vmatpush2.bf16.msra.mxu0 %v1832
        %2376 = vmatprep.subr.bf16.mxu0 %v1831
        %2377 = vmatpush2.bf16.msra.mxu0 %v1830
        %2378 = vmatprep.subr.bf16.mxu0 %v1829
        %2379 = vmatpush2.bf16.msra.mxu0 %v1828
        %2380 = vmatprep.subr.bf16.mxu0 %v1827
        %2381 = vmatpush2.bf16.msra.mxu0 %v1826
        %2382 = vmatprep.subr.bf16.mxu0 %v1825
        %2383 = vmatpush2.bf16.msra.mxu0 %v1824
        %2384 = vmatprep.subr.bf16.mxu0 %v1823
        %2385 = vmatpush2.bf16.msra.mxu0 %v1822
        %2386 = vmatprep.subr.bf16.mxu0 %v1821
        %2387 = vmatpush2.bf16.msra.mxu0 %v1820
        %2388 = vmatprep.subr.bf16.mxu0 %v1819
        %2389 = vmatpush2.bf16.msra.mxu0 %v1818
        %2390 = vmatprep.mubr.bf16.mxu0 %v883
        %2391 = vmatmul.mubr.bf16.gmra.mxu0 %v882
        %v2392 = vpop.f32.mrf.mxu0
        %v2393 = vadd.f32 %v2350, %v2392
        %v2394 = vpop.f32.mrf.mxu0
        %v2395 = vadd.f32 %v2352, %v2394
        %v2396 = vpop.f32.mrf.mxu0
        %v2397 = vadd.f32 %v2354, %v2396
        %v2398 = vpop.f32.mrf.mxu0
        %v2399 = vadd.f32 %v2356, %v2398
        %2400 = vdwg.mxu0
        %2401 = vmatprep.subr.bf16.mxu0 %v1849
        %2402 = vmatpush1.bf16.msra.mxu0 %v1848
        %2403 = vmatprep.subr.bf16.mxu0 %v1847
        %2404 = vmatpush1.bf16.msra.mxu0 %v1846
        %2405 = vmatprep.subr.bf16.mxu0 %v1845
        %2406 = vmatpush1.bf16.msra.mxu0 %v1844
        %2407 = vmatprep.subr.bf16.mxu0 %v1843
        %2408 = vmatpush1.bf16.msra.mxu0 %v1842
        %2409 = vmatprep.subr.bf16.mxu0 %v1841
        %2410 = vmatpush1.bf16.msra.mxu0 %v1840
        %2411 = vmatprep.subr.bf16.mxu0 %v1839
        %2412 = vmatpush1.bf16.msra.mxu0 %v1838
        %2413 = vmatprep.subr.bf16.mxu0 %v1837
        %2414 = vmatpush1.bf16.msra.mxu0 %v1836
        %2415 = vmatprep.subr.bf16.mxu0 %v1835
        %2416 = vmatpush1.bf16.msra.mxu0 %v1834
        %2417 = vmatprep.subr.bf16.mxu0 %v1865
        %2418 = vmatpush2.bf16.msra.mxu0 %v1864
        %2419 = vmatprep.subr.bf16.mxu0 %v1863
        %2420 = vmatpush2.bf16.msra.mxu0 %v1862
        %2421 = vmatprep.subr.bf16.mxu0 %v1861
        %2422 = vmatpush2.bf16.msra.mxu0 %v1860
        %2423 = vmatprep.subr.bf16.mxu0 %v1859
        %2424 = vmatpush2.bf16.msra.mxu0 %v1858
        %2425 = vmatprep.subr.bf16.mxu0 %v1857
        %2426 = vmatpush2.bf16.msra.mxu0 %v1856
        %2427 = vmatprep.subr.bf16.mxu0 %v1855
        %2428 = vmatpush2.bf16.msra.mxu0 %v1854
        %2429 = vmatprep.subr.bf16.mxu0 %v1853
        %2430 = vmatpush2.bf16.msra.mxu0 %v1852
        %2431 = vmatprep.subr.bf16.mxu0 %v1851
        %2432 = vmatpush2.bf16.msra.mxu0 %v1850
        %2433 = vmatprep.mubr.bf16.mxu0 %v885
        %2434 = vmatmul.mubr.bf16.gmra.mxu0 %v884
        %v2435 = vpop.f32.mrf.mxu0
        %v2436 = vadd.f32 %v2393, %v2435
        %v2437 = vpop.f32.mrf.mxu0
        %v2438 = vadd.f32 %v2395, %v2437
        %v2439 = vpop.f32.mrf.mxu0
        %v2440 = vadd.f32 %v2397, %v2439
        %v2441 = vpop.f32.mrf.mxu0
        %v2442 = vadd.f32 %v2399, %v2441
        %2443 = vdwg.mxu0
        %2444 = vmatprep.subr.bf16.mxu0 %v1881
        %2445 = vmatpush1.bf16.msra.mxu0 %v1880
        %2446 = vmatprep.subr.bf16.mxu0 %v1879
        %2447 = vmatpush1.bf16.msra.mxu0 %v1878
        %2448 = vmatprep.subr.bf16.mxu0 %v1877
        %2449 = vmatpush1.bf16.msra.mxu0 %v1876
        %2450 = vmatprep.subr.bf16.mxu0 %v1875
        %2451 = vmatpush1.bf16.msra.mxu0 %v1874
        %2452 = vmatprep.subr.bf16.mxu0 %v1873
        %2453 = vmatpush1.bf16.msra.mxu0 %v1872
        %2454 = vmatprep.subr.bf16.mxu0 %v1871
        %2455 = vmatpush1.bf16.msra.mxu0 %v1870
        %2456 = vmatprep.subr.bf16.mxu0 %v1869
        %2457 = vmatpush1.bf16.msra.mxu0 %v1868
        %2458 = vmatprep.subr.bf16.mxu0 %v1867
        %2459 = vmatpush1.bf16.msra.mxu0 %v1866
        %2460 = vmatprep.subr.bf16.mxu0 %v1897
        %2461 = vmatpush2.bf16.msra.mxu0 %v1896
        %2462 = vmatprep.subr.bf16.mxu0 %v1895
        %2463 = vmatpush2.bf16.msra.mxu0 %v1894
        %2464 = vmatprep.subr.bf16.mxu0 %v1893
        %2465 = vmatpush2.bf16.msra.mxu0 %v1892
        %2466 = vmatprep.subr.bf16.mxu0 %v1891
        %2467 = vmatpush2.bf16.msra.mxu0 %v1890
        %2468 = vmatprep.subr.bf16.mxu0 %v1889
        %2469 = vmatpush2.bf16.msra.mxu0 %v1888
        %2470 = vmatprep.subr.bf16.mxu0 %v1887
        %2471 = vmatpush2.bf16.msra.mxu0 %v1886
        %2472 = vmatprep.subr.bf16.mxu0 %v1885
        %2473 = vmatpush2.bf16.msra.mxu0 %v1884
        %2474 = vmatprep.subr.bf16.mxu0 %v1883
        %2475 = vmatpush2.bf16.msra.mxu0 %v1882
        %2476 = vmatprep.mubr.bf16.mxu0 %v887
        %2477 = vmatmul.mubr.bf16.gmra.mxu0 %v886
        %v2478 = vpop.f32.mrf.mxu0
        %v2479 = vadd.f32 %v2436, %v2478
        %v2480 = vpop.f32.mrf.mxu0
        %v2481 = vadd.f32 %v2438, %v2480
        %v2482 = vpop.f32.mrf.mxu0
        %v2483 = vadd.f32 %v2440, %v2482
        %v2484 = vpop.f32.mrf.mxu0
        %v2485 = vadd.f32 %v2442, %v2484
        %2486 = vdwg.mxu0
        %2487 = vmatprep.subr.bf16.mxu0 %v1913
        %2488 = vmatpush1.bf16.msra.mxu0 %v1912
        %2489 = vmatprep.subr.bf16.mxu0 %v1911
        %2490 = vmatpush1.bf16.msra.mxu0 %v1910
        %2491 = vmatprep.subr.bf16.mxu0 %v1909
        %2492 = vmatpush1.bf16.msra.mxu0 %v1908
        %2493 = vmatprep.subr.bf16.mxu0 %v1907
        %2494 = vmatpush1.bf16.msra.mxu0 %v1906
        %2495 = vmatprep.subr.bf16.mxu0 %v1905
        %2496 = vmatpush1.bf16.msra.mxu0 %v1904
        %2497 = vmatprep.subr.bf16.mxu0 %v1903
        %2498 = vmatpush1.bf16.msra.mxu0 %v1902
        %2499 = vmatprep.subr.bf16.mxu0 %v1901
        %2500 = vmatpush1.bf16.msra.mxu0 %v1900
        %2501 = vmatprep.subr.bf16.mxu0 %v1899
        %2502 = vmatpush1.bf16.msra.mxu0 %v1898
        %2503 = vmatprep.subr.bf16.mxu0 %v1929
        %2504 = vmatpush2.bf16.msra.mxu0 %v1928
        %2505 = vmatprep.subr.bf16.mxu0 %v1927
        %2506 = vmatpush2.bf16.msra.mxu0 %v1926
        %2507 = vmatprep.subr.bf16.mxu0 %v1925
        %2508 = vmatpush2.bf16.msra.mxu0 %v1924
        %2509 = vmatprep.subr.bf16.mxu0 %v1923
        %2510 = vmatpush2.bf16.msra.mxu0 %v1922
        %2511 = vmatprep.subr.bf16.mxu0 %v1921
        %2512 = vmatpush2.bf16.msra.mxu0 %v1920
        %2513 = vmatprep.subr.bf16.mxu0 %v1919
        %2514 = vmatpush2.bf16.msra.mxu0 %v1918
        %2515 = vmatprep.subr.bf16.mxu0 %v1917
        %2516 = vmatpush2.bf16.msra.mxu0 %v1916
        %2517 = vmatprep.subr.bf16.mxu0 %v1915
        %2518 = vmatpush2.bf16.msra.mxu0 %v1914
        %2519 = vmatprep.mubr.bf16.mxu0 %v889
        %2520 = vmatmul.mubr.bf16.gmra.mxu0 %v888
        %v2521 = vpop.f32.mrf.mxu0
        %v2522 = vadd.f32 %v2479, %v2521
        %v2523 = vpop.f32.mrf.mxu0
        %v2524 = vadd.f32 %v2481, %v2523
        %v2525 = vpop.f32.mrf.mxu0
        %v2526 = vadd.f32 %v2483, %v2525
        %v2527 = vpop.f32.mrf.mxu0
        %v2528 = vadd.f32 %v2485, %v2527
        %2529 = vdwg.mxu0
        %v2530 = vadd.f32 %v550, %v2522
        %v2531 = vadd.f32 %v551, %v2524
        %v2532 = vadd.f32 %v552, %v2526
        %v2533 = vadd.f32 %v553, %v2528
        %2534 = vst [vmem:[#allocation2] sm:$0xff] %v2530
        %2535 = vst [vmem:[#allocation2 + $0x8] sm:$0xff] %v2531
        %2536 = vst [vmem:[#allocation2 + $0x10] sm:$0xff] %v2532
        %2537 = vst [vmem:[#allocation2 + $0x18] sm:$0xff] %v2533
        %p2538 = scmp.eq.s32.totalorder %s20, 7
        // Predicated region
        $region84: #{resource_cnn_forward.5} parent=74 // pred_check
          %p2539 = pneg %p2538
        $region85: #{resource_cnn_forward.5} parent=74 // pred_check_branch
          %2541 = sbr.rel (%p2539) target = $region87
        $region86: #{resource_cnn_forward.5} parent=74 // pred_region
          %v2542 = vld [vmem:[#allocation2] sm:$0xff]
          %v2543 = vld [vmem:[#allocation2 + $0x8] sm:$0xff]
          %v2544 = vld [vmem:[#allocation2 + $0x10] sm:$0xff]
          %v2545 = vld [vmem:[#allocation2 + $0x18] sm:$0xff]
          %v2546 = vld [vmem:[%s4] sm:$0x3]
          %v2548 = vlaneseq
          %v2549 = vshrl.u32 %v2548, 7
          %v2550 = vsub.s32 0, %v2549
          %v2551 = vrot.slane %v2546, %v2550
          %v2552 = vlaneseq
          %v2553 = vshrl.u32 %v2552, 7
          %v2554 = vsub.s32 1, %v2553
          %v2555 = vrot.slane %v2546, %v2554
          %v2558 = vadd.f32 %v2542, %v2551
          %v2559 = vadd.f32 %v2543, %v2555
          %v2560 = vadd.f32 %v2544, %v2551
          %v2561 = vadd.f32 %v2545, %v2555
          %v2562 = vmax.f32 %v2558, 0.0
          %v2563 = vmax.f32 %v2559, 0.0
          %v2564 = vmax.f32 %v2560, 0.0
          %v2565 = vmax.f32 %v2561, 0.0
          %v2566 = vpack.c.bf16 %v2564, %v2562
          %v2567 = vpack.c.bf16 %v2565, %v2563
          %v2568 = vld [vmem:[%s5] sm:$0xf]
          %v2569 = vld [vmem:[%s5 + $0x4] sm:$0xf]
          %v2570 = vld [vmem:[%s5 + $0x8] sm:$0xf]
          %v2571 = vld [vmem:[%s5 + $0xc] sm:$0xf]
          %v2572 = vld [vmem:[%s5 + $0x10] sm:$0xf]
          %v2573 = vld [vmem:[%s5 + $0x14] sm:$0xf]
          %v2574 = vld [vmem:[%s5 + $0x18] sm:$0xf]
          %v2575 = vld [vmem:[%s5 + $0x1c] sm:$0xf]
          %v2576 = vld [vmem:[%s5 + $0x20] sm:$0xf]
          %v2577 = vld [vmem:[%s5 + $0x24] sm:$0xf]
          %v2578 = vld [vmem:[%s5 + $0x28] sm:$0xf]
          %v2579 = vld [vmem:[%s5 + $0x2c] sm:$0xf]
          %v2580 = vld [vmem:[%s5 + $0x30] sm:$0xf]
          %v2581 = vld [vmem:[%s5 + $0x34] sm:$0xf]
          %v2582 = vld [vmem:[%s5 + $0x38] sm:$0xf]
          %v2583 = vld [vmem:[%s5 + $0x3c] sm:$0xf]
          %v2584 = vld [vmem:[%s5 + $0x40] sm:$0xf]
          %v2585 = vld [vmem:[%s5 + $0x44] sm:$0xf]
          %v2586 = vld [vmem:[%s5 + $0x48] sm:$0xf]
          %v2587 = vld [vmem:[%s5 + $0x4c] sm:$0xf]
          %v2588 = vld [vmem:[%s5 + $0x50] sm:$0xf]
          %v2589 = vld [vmem:[%s5 + $0x54] sm:$0xf]
          %v2590 = vld [vmem:[%s5 + $0x58] sm:$0xf]
          %v2591 = vld [vmem:[%s5 + $0x5c] sm:$0xf]
          %v2592 = vld [vmem:[%s5 + $0x60] sm:$0xf]
          %v2593 = vld [vmem:[%s5 + $0x64] sm:$0xf]
          %v2594 = vld [vmem:[%s5 + $0x68] sm:$0xf]
          %v2595 = vld [vmem:[%s5 + $0x6c] sm:$0xf]
          %v2596 = vld [vmem:[%s5 + $0x70] sm:$0xf]
          %v2597 = vld [vmem:[%s5 + $0x74] sm:$0xf]
          %v2598 = vld [vmem:[%s5 + $0x78] sm:$0xf]
          %v2599 = vld [vmem:[%s5 + $0x7c] sm:$0xf]
          %v2600 = vld [vmem:[%s6] sm:$0x1]
          %v2602 = vlaneseq
          %v2603 = vshrl.u32 %v2602, 7
          %v2604 = vsub.s32 0, %v2603
          %v2605 = vrot.slane %v2600, %v2604
          %v2639 = vunpack.c.l.b16 %v2568
          %v2640 = vunpack.c.l.b16 %v2569
          %v2641 = vunpack.c.l.b16 %v2570
          %v2642 = vunpack.c.l.b16 %v2571
          %v2643 = vunpack.c.l.b16 %v2572
          %v2644 = vunpack.c.l.b16 %v2573
          %v2645 = vunpack.c.l.b16 %v2574
          %v2646 = vunpack.c.l.b16 %v2575
          %v2647 = vunpack.c.l.b16 %v2576
          %v2648 = vunpack.c.l.b16 %v2577
          %v2649 = vunpack.c.l.b16 %v2578
          %v2650 = vunpack.c.l.b16 %v2579
          %v2651 = vunpack.c.l.b16 %v2580
          %v2652 = vunpack.c.l.b16 %v2581
          %v2653 = vunpack.c.l.b16 %v2582
          %v2654 = vunpack.c.l.b16 %v2583
          %v2655 = vunpack.c.l.b16 %v2584
          %v2656 = vunpack.c.l.b16 %v2585
          %v2657 = vunpack.c.l.b16 %v2586
          %v2658 = vunpack.c.l.b16 %v2587
          %v2659 = vunpack.c.l.b16 %v2588
          %v2660 = vunpack.c.l.b16 %v2589
          %v2661 = vunpack.c.l.b16 %v2590
          %v2662 = vunpack.c.l.b16 %v2591
          %v2663 = vunpack.c.l.b16 %v2592
          %v2664 = vunpack.c.l.b16 %v2593
          %v2665 = vunpack.c.l.b16 %v2594
          %v2666 = vunpack.c.l.b16 %v2595
          %v2667 = vunpack.c.l.b16 %v2596
          %v2668 = vunpack.c.l.b16 %v2597
          %v2669 = vunpack.c.l.b16 %v2598
          %v2670 = vunpack.c.l.b16 %v2599
          %v2671 = vpack.c.b16 %v2640, %v2639
          %v2672 = vpack.c.b16 %v2642, %v2641
          %v2673 = vpack.c.b16 %v2644, %v2643
          %v2674 = vpack.c.b16 %v2646, %v2645
          %v2675 = vpack.c.b16 %v2648, %v2647
          %v2676 = vpack.c.b16 %v2650, %v2649
          %v2677 = vpack.c.b16 %v2652, %v2651
          %v2678 = vpack.c.b16 %v2654, %v2653
          %v2679 = vpack.c.b16 %v2656, %v2655
          %v2680 = vpack.c.b16 %v2658, %v2657
          %v2681 = vpack.c.b16 %v2660, %v2659
          %v2682 = vpack.c.b16 %v2662, %v2661
          %v2683 = vpack.c.b16 %v2664, %v2663
          %v2684 = vpack.c.b16 %v2666, %v2665
          %v2685 = vpack.c.b16 %v2668, %v2667
          %v2686 = vpack.c.b16 %v2670, %v2669
          %2703 = vmatprep.subr.bf16.mxu0 0
          %2704 = vmatpush1.bf16.msra.mxu0 %v2678
          %2705 = vmatprep.subr.bf16.mxu0 0
          %2706 = vmatpush1.bf16.msra.mxu0 %v2677
          %2707 = vmatprep.subr.bf16.mxu0 0
          %2708 = vmatpush1.bf16.msra.mxu0 %v2676
          %2709 = vmatprep.subr.bf16.mxu0 0
          %2710 = vmatpush1.bf16.msra.mxu0 %v2675
          %2711 = vmatprep.subr.bf16.mxu0 0
          %2712 = vmatpush1.bf16.msra.mxu0 %v2674
          %2713 = vmatprep.subr.bf16.mxu0 0
          %2714 = vmatpush1.bf16.msra.mxu0 %v2673
          %2715 = vmatprep.subr.bf16.mxu0 0
          %2716 = vmatpush1.bf16.msra.mxu0 %v2672
          %2717 = vmatprep.subr.bf16.mxu0 0
          %2718 = vmatpush1.bf16.msra.mxu0 %v2671
          %2719 = vmatprep.subr.bf16.mxu0 0
          %2720 = vmatpush2.bf16.msra.mxu0 %v2686
          %2721 = vmatprep.subr.bf16.mxu0 0
          %2722 = vmatpush2.bf16.msra.mxu0 %v2685
          %2723 = vmatprep.subr.bf16.mxu0 0
          %2724 = vmatpush2.bf16.msra.mxu0 %v2684
          %2725 = vmatprep.subr.bf16.mxu0 0
          %2726 = vmatpush2.bf16.msra.mxu0 %v2683
          %2727 = vmatprep.subr.bf16.mxu0 0
          %2728 = vmatpush2.bf16.msra.mxu0 %v2682
          %2729 = vmatprep.subr.bf16.mxu0 0
          %2730 = vmatpush2.bf16.msra.mxu0 %v2681
          %2731 = vmatprep.subr.bf16.mxu0 0
          %2732 = vmatpush2.bf16.msra.mxu0 %v2680
          %2733 = vmatprep.subr.bf16.mxu0 0
          %2734 = vmatpush2.bf16.msra.mxu0 %v2679
          %2735 = vmatprep.mubr.bf16.mxu0 %v2567
          %2736 = vmatmul.mubr.bf16.gmra.mxu0 %v2566
          %v2737 = vpop.f32.mrf.mxu0
          %v2738 = vadd.f32 %v2605, %v2737
          %v2739 = vpop.f32.mrf.mxu0
          %v2740 = vpop.f32.mrf.mxu0
          %v2741 = vadd.f32 %v2605, %v2740
          %v2742 = vpop.f32.mrf.mxu0
          %2743 = vdwg.mxu0
          %v2744 = vmax.f32 %v2738, 0.0
          %v2745 = vmax.f32 %v2741, 0.0
          %v2746 = vpack.c.bf16 %v2745, %v2744
          %v2747 = vld [vmem:[%s7] sm:$0xf]
          %v2748 = vld [vmem:[%s7 + $0x4] sm:$0xf]
          %v2749 = vld [vmem:[%s7 + $0x8] sm:$0xf]
          %v2750 = vld [vmem:[%s7 + $0xc] sm:$0xf]
          %v2751 = vld [vmem:[%s7 + $0x10] sm:$0xf]
          %v2752 = vld [vmem:[%s7 + $0x14] sm:$0xf]
          %v2753 = vld [vmem:[%s7 + $0x18] sm:$0xf]
          %v2754 = vld [vmem:[%s7 + $0x1c] sm:$0xf]
          %v2755 = vld [vmem:[%s7 + $0x20] sm:$0xf]
          %v2756 = vld [vmem:[%s7 + $0x24] sm:$0xf]
          %v2757 = vld [vmem:[%s7 + $0x28] sm:$0xf]
          %v2758 = vld [vmem:[%s7 + $0x2c] sm:$0xf]
          %v2759 = vld [vmem:[%s7 + $0x30] sm:$0xf]
          %v2760 = vld [vmem:[%s7 + $0x34] sm:$0xf]
          %v2761 = vld [vmem:[%s7 + $0x38] sm:$0xf]
          %v2762 = vld [vmem:[%s7 + $0x3c] sm:$0xf]
          %v2763 = vld [vmem:[%s8] sm:$0x1]
          %v2765 = vlaneseq
          %v2766 = vshrl.u32 %v2765, 7
          %v2767 = vsub.s32 0, %v2766
          %v2768 = vrot.slane %v2763, %v2767
          %v2786 = vunpack.c.l.b16 %v2747
          %v2787 = vunpack.c.l.b16 %v2748
          %v2788 = vunpack.c.l.b16 %v2749
          %v2789 = vunpack.c.l.b16 %v2750
          %v2790 = vunpack.c.l.b16 %v2751
          %v2791 = vunpack.c.l.b16 %v2752
          %v2792 = vunpack.c.l.b16 %v2753
          %v2793 = vunpack.c.l.b16 %v2754
          %v2794 = vunpack.c.l.b16 %v2755
          %v2795 = vunpack.c.l.b16 %v2756
          %v2796 = vunpack.c.l.b16 %v2757
          %v2797 = vunpack.c.l.b16 %v2758
          %v2798 = vunpack.c.l.b16 %v2759
          %v2799 = vunpack.c.l.b16 %v2760
          %v2800 = vunpack.c.l.b16 %v2761
          %v2801 = vunpack.c.l.b16 %v2762
          %v2802 = vpack.c.b16 %v2787, %v2786
          %v2803 = vpack.c.b16 %v2789, %v2788
          %v2804 = vpack.c.b16 %v2791, %v2790
          %v2805 = vpack.c.b16 %v2793, %v2792
          %v2806 = vpack.c.b16 %v2795, %v2794
          %v2807 = vpack.c.b16 %v2797, %v2796
          %v2808 = vpack.c.b16 %v2799, %v2798
          %v2809 = vpack.c.b16 %v2801, %v2800
          %2818 = vmatprep.subr.bf16.mxu0 0
          %2819 = vmatpush1.bf16.msra.mxu0 %v2809
          %2820 = vmatprep.subr.bf16.mxu0 0
          %2821 = vmatpush1.bf16.msra.mxu0 %v2808
          %2822 = vmatprep.subr.bf16.mxu0 0
          %2823 = vmatpush1.bf16.msra.mxu0 %v2807
          %2824 = vmatprep.subr.bf16.mxu0 0
          %2825 = vmatpush1.bf16.msra.mxu0 %v2806
          %2826 = vmatprep.subr.bf16.mxu0 0
          %2827 = vmatpush1.bf16.msra.mxu0 %v2805
          %2828 = vmatprep.subr.bf16.mxu0 0
          %2829 = vmatpush1.bf16.msra.mxu0 %v2804
          %2830 = vmatprep.subr.bf16.mxu0 0
          %2831 = vmatpush1.bf16.msra.mxu0 %v2803
          %2832 = vmatprep.subr.bf16.mxu0 0
          %2833 = vmatpush1.bf16.msra.mxu0 %v2802
          %2834 = vmatprep.subr.bf16.mxu0 0
          %2835 = vmatpush2.bf16.msra.mxu0 0
          %2836 = vmatprep.subr.bf16.mxu0 0
          %2837 = vmatpush2.bf16.msra.mxu0 0
          %2838 = vmatprep.subr.bf16.mxu0 0
          %2839 = vmatpush2.bf16.msra.mxu0 0
          %2840 = vmatprep.subr.bf16.mxu0 0
          %2841 = vmatpush2.bf16.msra.mxu0 0
          %2842 = vmatprep.subr.bf16.mxu0 0
          %2843 = vmatpush2.bf16.msra.mxu0 0
          %2844 = vmatprep.subr.bf16.mxu0 0
          %2845 = vmatpush2.bf16.msra.mxu0 0
          %2846 = vmatprep.subr.bf16.mxu0 0
          %2847 = vmatpush2.bf16.msra.mxu0 0
          %2848 = vmatprep.subr.bf16.mxu0 0
          %2849 = vmatpush2.bf16.msra.mxu0 0
          %2850 = vmatprep.mubr.bf16.mxu0 0
          %2851 = vmatmul.mubr.bf16.gmra.mxu0 %v2746
          %v2852 = vpop.f32.mrf.mxu0
          %v2853 = vadd.f32 %v2768, %v2852
          %v2854 = vpop.f32.mrf.mxu0
          %v2855 = vpop.f32.mrf.mxu0
          %v2856 = vadd.f32 %v2768, %v2855
          %v2857 = vpop.f32.mrf.mxu0
          %2858 = vdwg.mxu0
          %2859 = vst [vmem:[%s9] sm:$0xff] %v2853
          %2860 = vst [vmem:[%s9 + $0x8] sm:$0xff] %v2856
        $region87: #{resource_cnn_forward.5} parent=74 // pred_fallthru
          _
        // Predicated region
        $region88: #{resource_cnn_forward.5} parent=74 // pred_check
          %p2861 = pneg %p232
        $region89: #{resource_cnn_forward.5} parent=74 // pred_check_branch
          %2863 = sbr.rel (%p2861) target = $region91
        $region90: #{resource_cnn_forward.5} parent=74 // pred_region
          _
        $region91: #{resource_cnn_forward.5} parent=74 // pred_fallthru
          _
        // Predicated region
        $region92: #{resource_cnn_forward.5} parent=74 // pred_check
          %p2864 = pneg %p232
        $region93: #{resource_cnn_forward.5} parent=74 // pred_check_branch
          %2866 = sbr.rel (%p2864) target = $region95
        $region94: #{resource_cnn_forward.5} parent=74 // pred_region
          _
        $region95: #{resource_cnn_forward.5} parent=74 // pred_fallthru
          _
      $region75: #{resource_cnn_forward.5} parent=5 // pred_fallthru
        _
      %p2867 = scmp.le.s32.totalorder 2, %s15
      // Predicated region
      $region96: #{resource_cnn_forward.5} parent=5 // pred_check
        %p2868 = pneg %p2867
      $region97: #{resource_cnn_forward.5} parent=5 // pred_check_branch
        %2870 = sbr.rel (%p2868) target = $region99
      $region98: #{resource_cnn_forward.5} parent=5 // pred_region
        %s2871 = ssub.s32 %s15, 2
      $region99: #{resource_cnn_forward.5} parent=5 // pred_fallthru
        _
    $region6: #{resource_cnn_forward.5} parent=1 // loop_footer
      %s19 = sadd.s32 1, %s15
    $region7: #{resource_cnn_forward.5} parent=1 // loop_footer_branch
      %14 = sbr.rel target = $region3
    $region8: #{resource_cnn_forward.5} parent=1 // loop_exit
      _

// kernel: resource_cnn_forward.4
$region0: #{resource_cnn_forward.4}
  #allocation0 [shape = 'u32[]', space=smem, size = 0x4, offset = 0x4, fixed_abs, tag = 'smem constant byte address 0x4 - core index']
  #allocation1 [shape = 'u32[144,128]{1,0:T(1,128)}', space=vmem, size = 0x12000, scoped, tag = 'internal scratch']
  %s0 = inlined_call_operand.vmem [shape: bf16[512,1152], index: 0, kind: input, shape index: {}]
  %s1 = inlined_call_operand.vmem [shape: bf16[1152,64], index: 1, kind: input, shape index: {}]
  %s2 = inlined_call_operand.vmem [shape: f32[1,64], index: 2, kind: input, shape index: {}]
  %s3 = inlined_call_operand.vmem [shape: bf16[512,64], index: 3, kind: output, shape index: {}]
  %s4 = sld [smem:[#allocation0]]
  $region22: #{resource_cnn_forward.4} parent=0
    _
  %s6 = ssub.s32 1, %s4
  %s7 = scalar_select 0, %s6, %s4
  // Predicated region
  $region2: #{resource_cnn_forward.4} parent=0 // pred_check
    _
  $region3: #{resource_cnn_forward.4} parent=0 // pred_check_branch
    %9 = sbr.rel (0) target = $region5
  $region4: #{resource_cnn_forward.4} parent=0 // pred_region
    _
  $region5: #{resource_cnn_forward.4} parent=0 // pred_fallthru
    _
  // Predicated region
  $region6: #{resource_cnn_forward.4} parent=0 // pred_check
    _
  $region7: #{resource_cnn_forward.4} parent=0 // pred_check_branch
    %11 = sbr.rel (0) target = $region9
  $region8: #{resource_cnn_forward.4} parent=0 // pred_region
    _
  $region9: #{resource_cnn_forward.4} parent=0 // pred_fallthru
    _
  // Predicated region
  $region10: #{resource_cnn_forward.4} parent=0 // pred_check
    _
  $region11: #{resource_cnn_forward.4} parent=0 // pred_check_branch
    %13 = sbr.rel (0) target = $region13
  $region12: #{resource_cnn_forward.4} parent=0 // pred_region
    _
  $region13: #{resource_cnn_forward.4} parent=0 // pred_fallthru
    _
  %v15 = vld [vmem:[%s0] sm:$0xff]
  %v16 = vld [vmem:[%s0 + $0x8] sm:$0xff]
  %v17 = vld [vmem:[%s0 + $0x10] sm:$0xff]
  %v18 = vld [vmem:[%s0 + $0x18] sm:$0xff]
  %v19 = vld [vmem:[%s0 + $0x20] sm:$0xf]
  %v20 = vld [vmem:[%s0 + $0x24] sm:$0xff]
  %v21 = vld [vmem:[%s0 + $0x2c] sm:$0xff]
  %v22 = vld [vmem:[%s0 + $0x34] sm:$0xff]
  %v23 = vld [vmem:[%s0 + $0x3c] sm:$0xff]
  %v24 = vld [vmem:[%s0 + $0x44] sm:$0xf]
  %v25 = vld [vmem:[%s0 + $0x48] sm:$0xff]
  %v26 = vld [vmem:[%s0 + $0x50] sm:$0xff]
  %v27 = vld [vmem:[%s0 + $0x58] sm:$0xff]
  %v28 = vld [vmem:[%s0 + $0x60] sm:$0xff]
  %v29 = vld [vmem:[%s0 + $0x68] sm:$0xf]
  %v30 = vld [vmem:[%s0 + $0x6c] sm:$0xff]
  %v31 = vld [vmem:[%s0 + $0x74] sm:$0xff]
  %v32 = vld [vmem:[%s0 + $0x7c] sm:$0xff]
  %v33 = vld [vmem:[%s0 + $0x84] sm:$0xff]
  %v34 = vld [vmem:[%s0 + $0x8c] sm:$0xf]
  %v35 = vld [vmem:[%s0 + $0x90] sm:$0xff]
  %v36 = vld [vmem:[%s0 + $0x98] sm:$0xff]
  %v37 = vld [vmem:[%s0 + $0xa0] sm:$0xff]
  %v38 = vld [vmem:[%s0 + $0xa8] sm:$0xff]
  %v39 = vld [vmem:[%s0 + $0xb0] sm:$0xf]
  %v40 = vld [vmem:[%s0 + $0xb4] sm:$0xff]
  %v41 = vld [vmem:[%s0 + $0xbc] sm:$0xff]
  %v42 = vld [vmem:[%s0 + $0xc4] sm:$0xff]
  %v43 = vld [vmem:[%s0 + $0xcc] sm:$0xff]
  %v44 = vld [vmem:[%s0 + $0xd4] sm:$0xf]
  %v45 = vld [vmem:[%s0 + $0xd8] sm:$0xff]
  %v46 = vld [vmem:[%s0 + $0xe0] sm:$0xff]
  %v47 = vld [vmem:[%s0 + $0xe8] sm:$0xff]
  %v48 = vld [vmem:[%s0 + $0xf0] sm:$0xff]
  %v49 = vld [vmem:[%s0 + $0xf8] sm:$0xf]
  %v50 = vld [vmem:[%s0 + $0xfc] sm:$0xff]
  %v51 = vld [vmem:[%s0 + $0x104] sm:$0xff]
  %v52 = vld [vmem:[%s0 + $0x10c] sm:$0xff]
  %v53 = vld [vmem:[%s0 + $0x114] sm:$0xff]
  %v54 = vld [vmem:[%s0 + $0x11c] sm:$0xf]
  %v55 = vld [vmem:[%s0 + $0x120] sm:$0xff]
  %v56 = vld [vmem:[%s0 + $0x128] sm:$0xff]
  %v57 = vld [vmem:[%s0 + $0x130] sm:$0xff]
  %v58 = vld [vmem:[%s0 + $0x138] sm:$0xff]
  %v59 = vld [vmem:[%s0 + $0x140] sm:$0xf]
  %v60 = vld [vmem:[%s0 + $0x144] sm:$0xff]
  %v61 = vld [vmem:[%s0 + $0x14c] sm:$0xff]
  %v62 = vld [vmem:[%s0 + $0x154] sm:$0xff]
  %v63 = vld [vmem:[%s0 + $0x15c] sm:$0xff]
  %v64 = vld [vmem:[%s0 + $0x164] sm:$0xf]
  %v65 = vld [vmem:[%s0 + $0x168] sm:$0xff]
  %v66 = vld [vmem:[%s0 + $0x170] sm:$0xff]
  %v67 = vld [vmem:[%s0 + $0x178] sm:$0xff]
  %v68 = vld [vmem:[%s0 + $0x180] sm:$0xff]
  %v69 = vld [vmem:[%s0 + $0x188] sm:$0xf]
  %v70 = vld [vmem:[%s0 + $0x18c] sm:$0xff]
  %v71 = vld [vmem:[%s0 + $0x194] sm:$0xff]
  %v72 = vld [vmem:[%s0 + $0x19c] sm:$0xff]
  %v73 = vld [vmem:[%s0 + $0x1a4] sm:$0xff]
  %v74 = vld [vmem:[%s0 + $0x1ac] sm:$0xf]
  %v75 = vld [vmem:[%s0 + $0x1b0] sm:$0xff]
  %v76 = vld [vmem:[%s0 + $0x1b8] sm:$0xff]
  %v77 = vld [vmem:[%s0 + $0x1c0] sm:$0xff]
  %v78 = vld [vmem:[%s0 + $0x1c8] sm:$0xff]
  %v79 = vld [vmem:[%s0 + $0x1d0] sm:$0xf]
  %v80 = vld [vmem:[%s0 + $0x1d4] sm:$0xff]
  %v81 = vld [vmem:[%s0 + $0x1dc] sm:$0xff]
  %v82 = vld [vmem:[%s0 + $0x1e4] sm:$0xff]
  %v83 = vld [vmem:[%s0 + $0x1ec] sm:$0xff]
  %v84 = vld [vmem:[%s0 + $0x1f4] sm:$0xf]
  %v85 = vld [vmem:[%s0 + $0x1f8] sm:$0xff]
  %v86 = vld [vmem:[%s0 + $0x200] sm:$0xff]
  %v87 = vld [vmem:[%s0 + $0x208] sm:$0xff]
  %v88 = vld [vmem:[%s0 + $0x210] sm:$0xff]
  %v89 = vld [vmem:[%s0 + $0x218] sm:$0xf]
  %v90 = vld [vmem:[%s0 + $0x21c] sm:$0xff]
  %v91 = vld [vmem:[%s0 + $0x224] sm:$0xff]
  %v92 = vld [vmem:[%s0 + $0x22c] sm:$0xff]
  %v93 = vld [vmem:[%s0 + $0x234] sm:$0xff]
  %v94 = vld [vmem:[%s0 + $0x23c] sm:$0xf]
  %v95 = vld [vmem:[%s0 + $0x240] sm:$0xff]
  %v96 = vld [vmem:[%s0 + $0x248] sm:$0xff]
  %v97 = vld [vmem:[%s0 + $0x250] sm:$0xff]
  %v98 = vld [vmem:[%s0 + $0x258] sm:$0xff]
  %v99 = vld [vmem:[%s0 + $0x260] sm:$0xf]
  %v100 = vld [vmem:[%s0 + $0x264] sm:$0xff]
  %v101 = vld [vmem:[%s0 + $0x26c] sm:$0xff]
  %v102 = vld [vmem:[%s0 + $0x274] sm:$0xff]
  %v103 = vld [vmem:[%s0 + $0x27c] sm:$0xff]
  %v104 = vld [vmem:[%s0 + $0x284] sm:$0xf]
  %v105 = vld [vmem:[%s0 + $0x288] sm:$0xff]
  %v106 = vld [vmem:[%s0 + $0x290] sm:$0xff]
  %v107 = vld [vmem:[%s0 + $0x298] sm:$0xff]
  %v108 = vld [vmem:[%s0 + $0x2a0] sm:$0xff]
  %v109 = vld [vmem:[%s0 + $0x2a8] sm:$0xf]
  %v110 = vld [vmem:[%s0 + $0x2ac] sm:$0xff]
  %v111 = vld [vmem:[%s0 + $0x2b4] sm:$0xff]
  %v112 = vld [vmem:[%s0 + $0x2bc] sm:$0xff]
  %v113 = vld [vmem:[%s0 + $0x2c4] sm:$0xff]
  %v114 = vld [vmem:[%s0 + $0x2cc] sm:$0xf]
  %v115 = vld [vmem:[%s0 + $0x2d0] sm:$0xff]
  %v116 = vld [vmem:[%s0 + $0x2d8] sm:$0xff]
  %v117 = vld [vmem:[%s0 + $0x2e0] sm:$0xff]
  %v118 = vld [vmem:[%s0 + $0x2e8] sm:$0xff]
  %v119 = vld [vmem:[%s0 + $0x2f0] sm:$0xf]
  %v120 = vld [vmem:[%s0 + $0x2f4] sm:$0xff]
  %v121 = vld [vmem:[%s0 + $0x2fc] sm:$0xff]
  %v122 = vld [vmem:[%s0 + $0x304] sm:$0xff]
  %v123 = vld [vmem:[%s0 + $0x30c] sm:$0xff]
  %v124 = vld [vmem:[%s0 + $0x314] sm:$0xf]
  %v125 = vld [vmem:[%s0 + $0x318] sm:$0xff]
  %v126 = vld [vmem:[%s0 + $0x320] sm:$0xff]
  %v127 = vld [vmem:[%s0 + $0x328] sm:$0xff]
  %v128 = vld [vmem:[%s0 + $0x330] sm:$0xff]
  %v129 = vld [vmem:[%s0 + $0x338] sm:$0xf]
  %v130 = vld [vmem:[%s0 + $0x33c] sm:$0xff]
  %v131 = vld [vmem:[%s0 + $0x344] sm:$0xff]
  %v132 = vld [vmem:[%s0 + $0x34c] sm:$0xff]
  %v133 = vld [vmem:[%s0 + $0x354] sm:$0xff]
  %v134 = vld [vmem:[%s0 + $0x35c] sm:$0xf]
  %v135 = vld [vmem:[%s0 + $0x360] sm:$0xff]
  %v136 = vld [vmem:[%s0 + $0x368] sm:$0xff]
  %v137 = vld [vmem:[%s0 + $0x370] sm:$0xff]
  %v138 = vld [vmem:[%s0 + $0x378] sm:$0xff]
  %v139 = vld [vmem:[%s0 + $0x380] sm:$0xf]
  %v140 = vld [vmem:[%s0 + $0x384] sm:$0xff]
  %v141 = vld [vmem:[%s0 + $0x38c] sm:$0xff]
  %v142 = vld [vmem:[%s0 + $0x394] sm:$0xff]
  %v143 = vld [vmem:[%s0 + $0x39c] sm:$0xff]
  %v144 = vld [vmem:[%s0 + $0x3a4] sm:$0xf]
  %v145 = vld [vmem:[%s0 + $0x3a8] sm:$0xff]
  %v146 = vld [vmem:[%s0 + $0x3b0] sm:$0xff]
  %v147 = vld [vmem:[%s0 + $0x3b8] sm:$0xff]
  %v148 = vld [vmem:[%s0 + $0x3c0] sm:$0xff]
  %v149 = vld [vmem:[%s0 + $0x3c8] sm:$0xf]
  %v150 = vld [vmem:[%s0 + $0x3cc] sm:$0xff]
  %v151 = vld [vmem:[%s0 + $0x3d4] sm:$0xff]
  %v152 = vld [vmem:[%s0 + $0x3dc] sm:$0xff]
  %v153 = vld [vmem:[%s0 + $0x3e4] sm:$0xff]
  %v154 = vld [vmem:[%s0 + $0x3ec] sm:$0xf]
  %v155 = vld [vmem:[%s0 + $0x3f0] sm:$0xff]
  %v156 = vld [vmem:[%s0 + $0x3f8] sm:$0xff]
  %v157 = vld [vmem:[%s0 + $0x400] sm:$0xff]
  %v158 = vld [vmem:[%s0 + $0x408] sm:$0xff]
  %v159 = vld [vmem:[%s0 + $0x410] sm:$0xf]
  %v160 = vld [vmem:[%s0 + $0x414] sm:$0xff]
  %v161 = vld [vmem:[%s0 + $0x41c] sm:$0xff]
  %v162 = vld [vmem:[%s0 + $0x424] sm:$0xff]
  %v163 = vld [vmem:[%s0 + $0x42c] sm:$0xff]
  %v164 = vld [vmem:[%s0 + $0x434] sm:$0xf]
  %v165 = vld [vmem:[%s0 + $0x438] sm:$0xff]
  %v166 = vld [vmem:[%s0 + $0x440] sm:$0xff]
  %v167 = vld [vmem:[%s0 + $0x448] sm:$0xff]
  %v168 = vld [vmem:[%s0 + $0x450] sm:$0xff]
  %v169 = vld [vmem:[%s0 + $0x458] sm:$0xf]
  %v170 = vld [vmem:[%s0 + $0x45c] sm:$0xff]
  %v171 = vld [vmem:[%s0 + $0x464] sm:$0xff]
  %v172 = vld [vmem:[%s0 + $0x46c] sm:$0xff]
  %v173 = vld [vmem:[%s0 + $0x474] sm:$0xff]
  %v174 = vld [vmem:[%s0 + $0x47c] sm:$0xf]
  %v175 = vld [vmem:[%s0 + $0x480] sm:$0xff]
  %v176 = vld [vmem:[%s0 + $0x488] sm:$0xff]
  %v177 = vld [vmem:[%s0 + $0x490] sm:$0xff]
  %v178 = vld [vmem:[%s0 + $0x498] sm:$0xff]
  %v179 = vld [vmem:[%s0 + $0x4a0] sm:$0xf]
  %v180 = vld [vmem:[%s0 + $0x4a4] sm:$0xff]
  %v181 = vld [vmem:[%s0 + $0x4ac] sm:$0xff]
  %v182 = vld [vmem:[%s0 + $0x4b4] sm:$0xff]
  %v183 = vld [vmem:[%s0 + $0x4bc] sm:$0xff]
  %v184 = vld [vmem:[%s0 + $0x4c4] sm:$0xf]
  %v185 = vld [vmem:[%s0 + $0x4c8] sm:$0xff]
  %v186 = vld [vmem:[%s0 + $0x4d0] sm:$0xff]
  %v187 = vld [vmem:[%s0 + $0x4d8] sm:$0xff]
  %v188 = vld [vmem:[%s0 + $0x4e0] sm:$0xff]
  %v189 = vld [vmem:[%s0 + $0x4e8] sm:$0xf]
  %v190 = vld [vmem:[%s0 + $0x4ec] sm:$0xff]
  %v191 = vld [vmem:[%s0 + $0x4f4] sm:$0xff]
  %v192 = vld [vmem:[%s0 + $0x4fc] sm:$0xff]
  %v193 = vld [vmem:[%s0 + $0x504] sm:$0xff]
  %v194 = vld [vmem:[%s0 + $0x50c] sm:$0xf]
  %v195 = vld [vmem:[%s0 + $0x510] sm:$0xff]
  %v196 = vld [vmem:[%s0 + $0x518] sm:$0xff]
  %v197 = vld [vmem:[%s0 + $0x520] sm:$0xff]
  %v198 = vld [vmem:[%s0 + $0x528] sm:$0xff]
  %v199 = vld [vmem:[%s0 + $0x530] sm:$0xf]
  %v200 = vld [vmem:[%s0 + $0x534] sm:$0xff]
  %v201 = vld [vmem:[%s0 + $0x53c] sm:$0xff]
  %v202 = vld [vmem:[%s0 + $0x544] sm:$0xff]
  %v203 = vld [vmem:[%s0 + $0x54c] sm:$0xff]
  %v204 = vld [vmem:[%s0 + $0x554] sm:$0xf]
  %v205 = vld [vmem:[%s0 + $0x558] sm:$0xff]
  %v206 = vld [vmem:[%s0 + $0x560] sm:$0xff]
  %v207 = vld [vmem:[%s0 + $0x568] sm:$0xff]
  %v208 = vld [vmem:[%s0 + $0x570] sm:$0xff]
  %v209 = vld [vmem:[%s0 + $0x578] sm:$0xf]
  %v210 = vld [vmem:[%s0 + $0x57c] sm:$0xff]
  %v211 = vld [vmem:[%s0 + $0x584] sm:$0xff]
  %v212 = vld [vmem:[%s0 + $0x58c] sm:$0xff]
  %v213 = vld [vmem:[%s0 + $0x594] sm:$0xff]
  %v214 = vld [vmem:[%s0 + $0x59c] sm:$0xf]
  %v215 = vld [vmem:[%s0 + $0x5a0] sm:$0xff]
  %v216 = vld [vmem:[%s0 + $0x5a8] sm:$0xff]
  %v217 = vld [vmem:[%s0 + $0x5b0] sm:$0xff]
  %v218 = vld [vmem:[%s0 + $0x5b8] sm:$0xff]
  %v219 = vld [vmem:[%s0 + $0x5c0] sm:$0xf]
  %v220 = vld [vmem:[%s0 + $0x5c4] sm:$0xff]
  %v221 = vld [vmem:[%s0 + $0x5cc] sm:$0xff]
  %v222 = vld [vmem:[%s0 + $0x5d4] sm:$0xff]
  %v223 = vld [vmem:[%s0 + $0x5dc] sm:$0xff]
  %v224 = vld [vmem:[%s0 + $0x5e4] sm:$0xf]
  %v225 = vld [vmem:[%s0 + $0x5e8] sm:$0xff]
  %v226 = vld [vmem:[%s0 + $0x5f0] sm:$0xff]
  %v227 = vld [vmem:[%s0 + $0x5f8] sm:$0xff]
  %v228 = vld [vmem:[%s0 + $0x600] sm:$0xff]
  %v229 = vld [vmem:[%s0 + $0x608] sm:$0xf]
  %v230 = vld [vmem:[%s0 + $0x60c] sm:$0xff]
  %v231 = vld [vmem:[%s0 + $0x614] sm:$0xff]
  %v232 = vld [vmem:[%s0 + $0x61c] sm:$0xff]
  %v233 = vld [vmem:[%s0 + $0x624] sm:$0xff]
  %v234 = vld [vmem:[%s0 + $0x62c] sm:$0xf]
  %v235 = vld [vmem:[%s0 + $0x630] sm:$0xff]
  %v236 = vld [vmem:[%s0 + $0x638] sm:$0xff]
  %v237 = vld [vmem:[%s0 + $0x640] sm:$0xff]
  %v238 = vld [vmem:[%s0 + $0x648] sm:$0xff]
  %v239 = vld [vmem:[%s0 + $0x650] sm:$0xf]
  %v240 = vld [vmem:[%s0 + $0x654] sm:$0xff]
  %v241 = vld [vmem:[%s0 + $0x65c] sm:$0xff]
  %v242 = vld [vmem:[%s0 + $0x664] sm:$0xff]
  %v243 = vld [vmem:[%s0 + $0x66c] sm:$0xff]
  %v244 = vld [vmem:[%s0 + $0x674] sm:$0xf]
  %v245 = vld [vmem:[%s0 + $0x678] sm:$0xff]
  %v246 = vld [vmem:[%s0 + $0x680] sm:$0xff]
  %v247 = vld [vmem:[%s0 + $0x688] sm:$0xff]
  %v248 = vld [vmem:[%s0 + $0x690] sm:$0xff]
  %v249 = vld [vmem:[%s0 + $0x698] sm:$0xf]
  %v250 = vld [vmem:[%s0 + $0x69c] sm:$0xff]
  %v251 = vld [vmem:[%s0 + $0x6a4] sm:$0xff]
  %v252 = vld [vmem:[%s0 + $0x6ac] sm:$0xff]
  %v253 = vld [vmem:[%s0 + $0x6b4] sm:$0xff]
  %v254 = vld [vmem:[%s0 + $0x6bc] sm:$0xf]
  %v255 = vld [vmem:[%s0 + $0x6c0] sm:$0xff]
  %v256 = vld [vmem:[%s0 + $0x6c8] sm:$0xff]
  %v257 = vld [vmem:[%s0 + $0x6d0] sm:$0xff]
  %v258 = vld [vmem:[%s0 + $0x6d8] sm:$0xff]
  %v259 = vld [vmem:[%s0 + $0x6e0] sm:$0xf]
  %v260 = vld [vmem:[%s0 + $0x6e4] sm:$0xff]
  %v261 = vld [vmem:[%s0 + $0x6ec] sm:$0xff]
  %v262 = vld [vmem:[%s0 + $0x6f4] sm:$0xff]
  %v263 = vld [vmem:[%s0 + $0x6fc] sm:$0xff]
  %v264 = vld [vmem:[%s0 + $0x704] sm:$0xf]
  %v265 = vld [vmem:[%s0 + $0x708] sm:$0xff]
  %v266 = vld [vmem:[%s0 + $0x710] sm:$0xff]
  %v267 = vld [vmem:[%s0 + $0x718] sm:$0xff]
  %v268 = vld [vmem:[%s0 + $0x720] sm:$0xff]
  %v269 = vld [vmem:[%s0 + $0x728] sm:$0xf]
  %v270 = vld [vmem:[%s0 + $0x72c] sm:$0xff]
  %v271 = vld [vmem:[%s0 + $0x734] sm:$0xff]
  %v272 = vld [vmem:[%s0 + $0x73c] sm:$0xff]
  %v273 = vld [vmem:[%s0 + $0x744] sm:$0xff]
  %v274 = vld [vmem:[%s0 + $0x74c] sm:$0xf]
  %v275 = vld [vmem:[%s0 + $0x750] sm:$0xff]
  %v276 = vld [vmem:[%s0 + $0x758] sm:$0xff]
  %v277 = vld [vmem:[%s0 + $0x760] sm:$0xff]
  %v278 = vld [vmem:[%s0 + $0x768] sm:$0xff]
  %v279 = vld [vmem:[%s0 + $0x770] sm:$0xf]
  %v280 = vld [vmem:[%s0 + $0x774] sm:$0xff]
  %v281 = vld [vmem:[%s0 + $0x77c] sm:$0xff]
  %v282 = vld [vmem:[%s0 + $0x784] sm:$0xff]
  %v283 = vld [vmem:[%s0 + $0x78c] sm:$0xff]
  %v284 = vld [vmem:[%s0 + $0x794] sm:$0xf]
  %v285 = vld [vmem:[%s0 + $0x798] sm:$0xff]
  %v286 = vld [vmem:[%s0 + $0x7a0] sm:$0xff]
  %v287 = vld [vmem:[%s0 + $0x7a8] sm:$0xff]
  %v288 = vld [vmem:[%s0 + $0x7b0] sm:$0xff]
  %v289 = vld [vmem:[%s0 + $0x7b8] sm:$0xf]
  %v290 = vld [vmem:[%s0 + $0x7bc] sm:$0xff]
  %v291 = vld [vmem:[%s0 + $0x7c4] sm:$0xff]
  %v292 = vld [vmem:[%s0 + $0x7cc] sm:$0xff]
  %v293 = vld [vmem:[%s0 + $0x7d4] sm:$0xff]
  %v294 = vld [vmem:[%s0 + $0x7dc] sm:$0xf]
  %v295 = vld [vmem:[%s0 + $0x7e0] sm:$0xff]
  %v296 = vld [vmem:[%s0 + $0x7e8] sm:$0xff]
  %v297 = vld [vmem:[%s0 + $0x7f0] sm:$0xff]
  %v298 = vld [vmem:[%s0 + $0x7f8] sm:$0xff]
  %v299 = vld [vmem:[%s0 + $0x800] sm:$0xf]
  %v300 = vld [vmem:[%s0 + $0x804] sm:$0xff]
  %v301 = vld [vmem:[%s0 + $0x80c] sm:$0xff]
  %v302 = vld [vmem:[%s0 + $0x814] sm:$0xff]
  %v303 = vld [vmem:[%s0 + $0x81c] sm:$0xff]
  %v304 = vld [vmem:[%s0 + $0x824] sm:$0xf]
  %v305 = vld [vmem:[%s0 + $0x828] sm:$0xff]
  %v306 = vld [vmem:[%s0 + $0x830] sm:$0xff]
  %v307 = vld [vmem:[%s0 + $0x838] sm:$0xff]
  %v308 = vld [vmem:[%s0 + $0x840] sm:$0xff]
  %v309 = vld [vmem:[%s0 + $0x848] sm:$0xf]
  %v310 = vld [vmem:[%s0 + $0x84c] sm:$0xff]
  %v311 = vld [vmem:[%s0 + $0x854] sm:$0xff]
  %v312 = vld [vmem:[%s0 + $0x85c] sm:$0xff]
  %v313 = vld [vmem:[%s0 + $0x864] sm:$0xff]
  %v314 = vld [vmem:[%s0 + $0x86c] sm:$0xf]
  %v315 = vld [vmem:[%s0 + $0x870] sm:$0xff]
  %v316 = vld [vmem:[%s0 + $0x878] sm:$0xff]
  %v317 = vld [vmem:[%s0 + $0x880] sm:$0xff]
  %v318 = vld [vmem:[%s0 + $0x888] sm:$0xff]
  %v319 = vld [vmem:[%s0 + $0x890] sm:$0xf]
  %v320 = vld [vmem:[%s0 + $0x894] sm:$0xff]
  %v321 = vld [vmem:[%s0 + $0x89c] sm:$0xff]
  %v322 = vld [vmem:[%s0 + $0x8a4] sm:$0xff]
  %v323 = vld [vmem:[%s0 + $0x8ac] sm:$0xff]
  %v324 = vld [vmem:[%s0 + $0x8b4] sm:$0xf]
  %v325 = vld [vmem:[%s0 + $0x8b8] sm:$0xff]
  %v326 = vld [vmem:[%s0 + $0x8c0] sm:$0xff]
  %v327 = vld [vmem:[%s0 + $0x8c8] sm:$0xff]
  %v328 = vld [vmem:[%s0 + $0x8d0] sm:$0xff]
  %v329 = vld [vmem:[%s0 + $0x8d8] sm:$0xf]
  %v330 = vld [vmem:[%s0 + $0x8dc] sm:$0xff]
  %v331 = vld [vmem:[%s0 + $0x8e4] sm:$0xff]
  %v332 = vld [vmem:[%s0 + $0x8ec] sm:$0xff]
  %v333 = vld [vmem:[%s0 + $0x8f4] sm:$0xff]
  %v334 = vld [vmem:[%s0 + $0x8fc] sm:$0xf]
  %v335 = vld [vmem:[%s1] sm:$0xf]
  %v336 = vld [vmem:[%s1 + $0x4] sm:$0xf]
  %v337 = vld [vmem:[%s1 + $0x8] sm:$0xf]
  %v338 = vld [vmem:[%s1 + $0xc] sm:$0xf]
  %v339 = vld [vmem:[%s1 + $0x10] sm:$0xf]
  %v340 = vld [vmem:[%s1 + $0x14] sm:$0xf]
  %v341 = vld [vmem:[%s1 + $0x18] sm:$0xf]
  %v342 = vld [vmem:[%s1 + $0x1c] sm:$0xf]
  %v343 = vld [vmem:[%s1 + $0x20] sm:$0xf]
  %v344 = vld [vmem:[%s1 + $0x24] sm:$0xf]
  %v345 = vld [vmem:[%s1 + $0x28] sm:$0xf]
  %v346 = vld [vmem:[%s1 + $0x2c] sm:$0xf]
  %v347 = vld [vmem:[%s1 + $0x30] sm:$0xf]
  %v348 = vld [vmem:[%s1 + $0x34] sm:$0xf]
  %v349 = vld [vmem:[%s1 + $0x38] sm:$0xf]
  %v350 = vld [vmem:[%s1 + $0x3c] sm:$0xf]
  %v351 = vld [vmem:[%s1 + $0x40] sm:$0xf]
  %v352 = vld [vmem:[%s1 + $0x44] sm:$0xf]
  %v353 = vld [vmem:[%s1 + $0x48] sm:$0xf]
  %v354 = vld [vmem:[%s1 + $0x4c] sm:$0xf]
  %v355 = vld [vmem:[%s1 + $0x50] sm:$0xf]
  %v356 = vld [vmem:[%s1 + $0x54] sm:$0xf]
  %v357 = vld [vmem:[%s1 + $0x58] sm:$0xf]
  %v358 = vld [vmem:[%s1 + $0x5c] sm:$0xf]
  %v359 = vld [vmem:[%s1 + $0x60] sm:$0xf]
  %v360 = vld [vmem:[%s1 + $0x64] sm:$0xf]
  %v361 = vld [vmem:[%s1 + $0x68] sm:$0xf]
  %v362 = vld [vmem:[%s1 + $0x6c] sm:$0xf]
  %v363 = vld [vmem:[%s1 + $0x70] sm:$0xf]
  %v364 = vld [vmem:[%s1 + $0x74] sm:$0xf]
  %v365 = vld [vmem:[%s1 + $0x78] sm:$0xf]
  %v366 = vld [vmem:[%s1 + $0x7c] sm:$0xf]
  %v367 = vld [vmem:[%s1 + $0x80] sm:$0xf]
  %v368 = vld [vmem:[%s1 + $0x84] sm:$0xf]
  %v369 = vld [vmem:[%s1 + $0x88] sm:$0xf]
  %v370 = vld [vmem:[%s1 + $0x8c] sm:$0xf]
  %v371 = vld [vmem:[%s1 + $0x90] sm:$0xf]
  %v372 = vld [vmem:[%s1 + $0x94] sm:$0xf]
  %v373 = vld [vmem:[%s1 + $0x98] sm:$0xf]
  %v374 = vld [vmem:[%s1 + $0x9c] sm:$0xf]
  %v375 = vld [vmem:[%s1 + $0xa0] sm:$0xf]
  %v376 = vld [vmem:[%s1 + $0xa4] sm:$0xf]
  %v377 = vld [vmem:[%s1 + $0xa8] sm:$0xf]
  %v378 = vld [vmem:[%s1 + $0xac] sm:$0xf]
  %v379 = vld [vmem:[%s1 + $0xb0] sm:$0xf]
  %v380 = vld [vmem:[%s1 + $0xb4] sm:$0xf]
  %v381 = vld [vmem:[%s1 + $0xb8] sm:$0xf]
  %v382 = vld [vmem:[%s1 + $0xbc] sm:$0xf]
  %v383 = vld [vmem:[%s1 + $0xc0] sm:$0xf]
  %v384 = vld [vmem:[%s1 + $0xc4] sm:$0xf]
  %v385 = vld [vmem:[%s1 + $0xc8] sm:$0xf]
  %v386 = vld [vmem:[%s1 + $0xcc] sm:$0xf]
  %v387 = vld [vmem:[%s1 + $0xd0] sm:$0xf]
  %v388 = vld [vmem:[%s1 + $0xd4] sm:$0xf]
  %v389 = vld [vmem:[%s1 + $0xd8] sm:$0xf]
  %v390 = vld [vmem:[%s1 + $0xdc] sm:$0xf]
  %v391 = vld [vmem:[%s1 + $0xe0] sm:$0xf]
  %v392 = vld [vmem:[%s1 + $0xe4] sm:$0xf]
  %v393 = vld [vmem:[%s1 + $0xe8] sm:$0xf]
  %v394 = vld [vmem:[%s1 + $0xec] sm:$0xf]
  %v395 = vld [vmem:[%s1 + $0xf0] sm:$0xf]
  %v396 = vld [vmem:[%s1 + $0xf4] sm:$0xf]
  %v397 = vld [vmem:[%s1 + $0xf8] sm:$0xf]
  %v398 = vld [vmem:[%s1 + $0xfc] sm:$0xf]
  %v399 = vld [vmem:[%s1 + $0x100] sm:$0xf]
  %v400 = vld [vmem:[%s1 + $0x104] sm:$0xf]
  %v401 = vld [vmem:[%s1 + $0x108] sm:$0xf]
  %v402 = vld [vmem:[%s1 + $0x10c] sm:$0xf]
  %v403 = vld [vmem:[%s1 + $0x110] sm:$0xf]
  %v404 = vld [vmem:[%s1 + $0x114] sm:$0xf]
  %v405 = vld [vmem:[%s1 + $0x118] sm:$0xf]
  %v406 = vld [vmem:[%s1 + $0x11c] sm:$0xf]
  %v407 = vld [vmem:[%s1 + $0x120] sm:$0xf]
  %v408 = vld [vmem:[%s1 + $0x124] sm:$0xf]
  %v409 = vld [vmem:[%s1 + $0x128] sm:$0xf]
  %v410 = vld [vmem:[%s1 + $0x12c] sm:$0xf]
  %v411 = vld [vmem:[%s1 + $0x130] sm:$0xf]
  %v412 = vld [vmem:[%s1 + $0x134] sm:$0xf]
  %v413 = vld [vmem:[%s1 + $0x138] sm:$0xf]
  %v414 = vld [vmem:[%s1 + $0x13c] sm:$0xf]
  %v415 = vld [vmem:[%s1 + $0x140] sm:$0xf]
  %v416 = vld [vmem:[%s1 + $0x144] sm:$0xf]
  %v417 = vld [vmem:[%s1 + $0x148] sm:$0xf]
  %v418 = vld [vmem:[%s1 + $0x14c] sm:$0xf]
  %v419 = vld [vmem:[%s1 + $0x150] sm:$0xf]
  %v420 = vld [vmem:[%s1 + $0x154] sm:$0xf]
  %v421 = vld [vmem:[%s1 + $0x158] sm:$0xf]
  %v422 = vld [vmem:[%s1 + $0x15c] sm:$0xf]
  %v423 = vld [vmem:[%s1 + $0x160] sm:$0xf]
  %v424 = vld [vmem:[%s1 + $0x164] sm:$0xf]
  %v425 = vld [vmem:[%s1 + $0x168] sm:$0xf]
  %v426 = vld [vmem:[%s1 + $0x16c] sm:$0xf]
  %v427 = vld [vmem:[%s1 + $0x170] sm:$0xf]
  %v428 = vld [vmem:[%s1 + $0x174] sm:$0xf]
  %v429 = vld [vmem:[%s1 + $0x178] sm:$0xf]
  %v430 = vld [vmem:[%s1 + $0x17c] sm:$0xf]
  %v431 = vld [vmem:[%s1 + $0x180] sm:$0xf]
  %v432 = vld [vmem:[%s1 + $0x184] sm:$0xf]
  %v433 = vld [vmem:[%s1 + $0x188] sm:$0xf]
  %v434 = vld [vmem:[%s1 + $0x18c] sm:$0xf]
  %v435 = vld [vmem:[%s1 + $0x190] sm:$0xf]
  %v436 = vld [vmem:[%s1 + $0x194] sm:$0xf]
  %v437 = vld [vmem:[%s1 + $0x198] sm:$0xf]
  %v438 = vld [vmem:[%s1 + $0x19c] sm:$0xf]
  %v439 = vld [vmem:[%s1 + $0x1a0] sm:$0xf]
  %v440 = vld [vmem:[%s1 + $0x1a4] sm:$0xf]
  %v441 = vld [vmem:[%s1 + $0x1a8] sm:$0xf]
  %v442 = vld [vmem:[%s1 + $0x1ac] sm:$0xf]
  %v443 = vld [vmem:[%s1 + $0x1b0] sm:$0xf]
  %v444 = vld [vmem:[%s1 + $0x1b4] sm:$0xf]
  %v445 = vld [vmem:[%s1 + $0x1b8] sm:$0xf]
  %v446 = vld [vmem:[%s1 + $0x1bc] sm:$0xf]
  %v447 = vld [vmem:[%s1 + $0x1c0] sm:$0xf]
  %v448 = vld [vmem:[%s1 + $0x1c4] sm:$0xf]
  %v449 = vld [vmem:[%s1 + $0x1c8] sm:$0xf]
  %v450 = vld [vmem:[%s1 + $0x1cc] sm:$0xf]
  %v451 = vld [vmem:[%s1 + $0x1d0] sm:$0xf]
  %v452 = vld [vmem:[%s1 + $0x1d4] sm:$0xf]
  %v453 = vld [vmem:[%s1 + $0x1d8] sm:$0xf]
  %v454 = vld [vmem:[%s1 + $0x1dc] sm:$0xf]
  %v455 = vld [vmem:[%s1 + $0x1e0] sm:$0xf]
  %v456 = vld [vmem:[%s1 + $0x1e4] sm:$0xf]
  %v457 = vld [vmem:[%s1 + $0x1e8] sm:$0xf]
  %v458 = vld [vmem:[%s1 + $0x1ec] sm:$0xf]
  %v459 = vld [vmem:[%s1 + $0x1f0] sm:$0xf]
  %v460 = vld [vmem:[%s1 + $0x1f4] sm:$0xf]
  %v461 = vld [vmem:[%s1 + $0x1f8] sm:$0xf]
  %v462 = vld [vmem:[%s1 + $0x1fc] sm:$0xf]
  %v463 = vld [vmem:[%s1 + $0x200] sm:$0xf]
  %v464 = vld [vmem:[%s1 + $0x204] sm:$0xf]
  %v465 = vld [vmem:[%s1 + $0x208] sm:$0xf]
  %v466 = vld [vmem:[%s1 + $0x20c] sm:$0xf]
  %v467 = vld [vmem:[%s1 + $0x210] sm:$0xf]
  %v468 = vld [vmem:[%s1 + $0x214] sm:$0xf]
  %v469 = vld [vmem:[%s1 + $0x218] sm:$0xf]
  %v470 = vld [vmem:[%s1 + $0x21c] sm:$0xf]
  %v471 = vld [vmem:[%s1 + $0x220] sm:$0xf]
  %v472 = vld [vmem:[%s1 + $0x224] sm:$0xf]
  %v473 = vld [vmem:[%s1 + $0x228] sm:$0xf]
  %v474 = vld [vmem:[%s1 + $0x22c] sm:$0xf]
  %v475 = vld [vmem:[%s1 + $0x230] sm:$0xf]
  %v476 = vld [vmem:[%s1 + $0x234] sm:$0xf]
  %v477 = vld [vmem:[%s1 + $0x238] sm:$0xf]
  %v478 = vld [vmem:[%s1 + $0x23c] sm:$0xf]
  %v479 = vld [vmem:[%s2] sm:$0x1]
  %v481 = vlaneseq
  %v482 = vshrl.u32 %v481, 7
  %v483 = vsub.s32 0, %v482
  %v484 = vrot.slane %v479, %v483
  %v806 = vunpack.c.l.b16 %v15
  %v807 = vunpack.c.h.b16 %v15
  %v808 = vunpack.c.l.b16 %v16
  %v809 = vunpack.c.h.b16 %v16
  %v810 = vunpack.c.l.b16 %v17
  %v811 = vunpack.c.h.b16 %v17
  %v812 = vunpack.c.l.b16 %v18
  %v813 = vunpack.c.h.b16 %v18
  %v814 = vunpack.c.l.b16 %v19
  %v815 = vunpack.c.l.b16 %v20
  %v816 = vunpack.c.h.b16 %v20
  %v817 = vunpack.c.l.b16 %v21
  %v818 = vunpack.c.h.b16 %v21
  %v819 = vunpack.c.l.b16 %v22
  %v820 = vunpack.c.h.b16 %v22
  %v821 = vunpack.c.l.b16 %v23
  %v822 = vunpack.c.h.b16 %v23
  %v823 = vunpack.c.l.b16 %v24
  %v824 = vunpack.c.l.b16 %v25
  %v825 = vunpack.c.h.b16 %v25
  %v826 = vunpack.c.l.b16 %v26
  %v827 = vunpack.c.h.b16 %v26
  %v828 = vunpack.c.l.b16 %v27
  %v829 = vunpack.c.h.b16 %v27
  %v830 = vunpack.c.l.b16 %v28
  %v831 = vunpack.c.h.b16 %v28
  %v832 = vunpack.c.l.b16 %v29
  %v833 = vunpack.c.l.b16 %v30
  %v834 = vunpack.c.h.b16 %v30
  %v835 = vunpack.c.l.b16 %v31
  %v836 = vunpack.c.h.b16 %v31
  %v837 = vunpack.c.l.b16 %v32
  %v838 = vunpack.c.h.b16 %v32
  %v839 = vunpack.c.l.b16 %v33
  %v840 = vunpack.c.h.b16 %v33
  %v841 = vunpack.c.l.b16 %v34
  %v842 = vunpack.c.l.b16 %v35
  %v843 = vunpack.c.h.b16 %v35
  %v844 = vunpack.c.l.b16 %v36
  %v845 = vunpack.c.h.b16 %v36
  %v846 = vunpack.c.l.b16 %v37
  %v847 = vunpack.c.h.b16 %v37
  %v848 = vunpack.c.l.b16 %v38
  %v849 = vunpack.c.h.b16 %v38
  %v850 = vunpack.c.l.b16 %v39
  %v851 = vunpack.c.l.b16 %v40
  %v852 = vunpack.c.h.b16 %v40
  %v853 = vunpack.c.l.b16 %v41
  %v854 = vunpack.c.h.b16 %v41
  %v855 = vunpack.c.l.b16 %v42
  %v856 = vunpack.c.h.b16 %v42
  %v857 = vunpack.c.l.b16 %v43
  %v858 = vunpack.c.h.b16 %v43
  %v859 = vunpack.c.l.b16 %v44
  %v860 = vunpack.c.l.b16 %v45
  %v861 = vunpack.c.h.b16 %v45
  %v862 = vunpack.c.l.b16 %v46
  %v863 = vunpack.c.h.b16 %v46
  %v864 = vunpack.c.l.b16 %v47
  %v865 = vunpack.c.h.b16 %v47
  %v866 = vunpack.c.l.b16 %v48
  %v867 = vunpack.c.h.b16 %v48
  %v868 = vunpack.c.l.b16 %v49
  %v869 = vunpack.c.l.b16 %v50
  %v870 = vunpack.c.h.b16 %v50
  %v871 = vunpack.c.l.b16 %v51
  %v872 = vunpack.c.h.b16 %v51
  %v873 = vunpack.c.l.b16 %v52
  %v874 = vunpack.c.h.b16 %v52
  %v875 = vunpack.c.l.b16 %v53
  %v876 = vunpack.c.h.b16 %v53
  %v877 = vunpack.c.l.b16 %v54
  %v878 = vunpack.c.l.b16 %v55
  %v879 = vunpack.c.h.b16 %v55
  %v880 = vunpack.c.l.b16 %v56
  %v881 = vunpack.c.h.b16 %v56
  %v882 = vunpack.c.l.b16 %v57
  %v883 = vunpack.c.h.b16 %v57
  %v884 = vunpack.c.l.b16 %v58
  %v885 = vunpack.c.h.b16 %v58
  %v886 = vunpack.c.l.b16 %v59
  %v887 = vunpack.c.l.b16 %v60
  %v888 = vunpack.c.h.b16 %v60
  %v889 = vunpack.c.l.b16 %v61
  %v890 = vunpack.c.h.b16 %v61
  %v891 = vunpack.c.l.b16 %v62
  %v892 = vunpack.c.h.b16 %v62
  %v893 = vunpack.c.l.b16 %v63
  %v894 = vunpack.c.h.b16 %v63
  %v895 = vunpack.c.l.b16 %v64
  %v896 = vunpack.c.l.b16 %v65
  %v897 = vunpack.c.h.b16 %v65
  %v898 = vunpack.c.l.b16 %v66
  %v899 = vunpack.c.h.b16 %v66
  %v900 = vunpack.c.l.b16 %v67
  %v901 = vunpack.c.h.b16 %v67
  %v902 = vunpack.c.l.b16 %v68
  %v903 = vunpack.c.h.b16 %v68
  %v904 = vunpack.c.l.b16 %v69
  %v905 = vunpack.c.l.b16 %v70
  %v906 = vunpack.c.h.b16 %v70
  %v907 = vunpack.c.l.b16 %v71
  %v908 = vunpack.c.h.b16 %v71
  %v909 = vunpack.c.l.b16 %v72
  %v910 = vunpack.c.h.b16 %v72
  %v911 = vunpack.c.l.b16 %v73
  %v912 = vunpack.c.h.b16 %v73
  %v913 = vunpack.c.l.b16 %v74
  %v914 = vunpack.c.l.b16 %v75
  %v915 = vunpack.c.h.b16 %v75
  %v916 = vunpack.c.l.b16 %v76
  %v917 = vunpack.c.h.b16 %v76
  %v918 = vunpack.c.l.b16 %v77
  %v919 = vunpack.c.h.b16 %v77
  %v920 = vunpack.c.l.b16 %v78
  %v921 = vunpack.c.h.b16 %v78
  %v922 = vunpack.c.l.b16 %v79
  %v923 = vunpack.c.l.b16 %v80
  %v924 = vunpack.c.h.b16 %v80
  %v925 = vunpack.c.l.b16 %v81
  %v926 = vunpack.c.h.b16 %v81
  %v927 = vunpack.c.l.b16 %v82
  %v928 = vunpack.c.h.b16 %v82
  %v929 = vunpack.c.l.b16 %v83
  %v930 = vunpack.c.h.b16 %v83
  %v931 = vunpack.c.l.b16 %v84
  %v932 = vunpack.c.l.b16 %v85
  %v933 = vunpack.c.h.b16 %v85
  %v934 = vunpack.c.l.b16 %v86
  %v935 = vunpack.c.h.b16 %v86
  %v936 = vunpack.c.l.b16 %v87
  %v937 = vunpack.c.h.b16 %v87
  %v938 = vunpack.c.l.b16 %v88
  %v939 = vunpack.c.h.b16 %v88
  %v940 = vunpack.c.l.b16 %v89
  %v941 = vunpack.c.l.b16 %v90
  %v942 = vunpack.c.h.b16 %v90
  %v943 = vunpack.c.l.b16 %v91
  %v944 = vunpack.c.h.b16 %v91
  %v945 = vunpack.c.l.b16 %v92
  %v946 = vunpack.c.h.b16 %v92
  %v947 = vunpack.c.l.b16 %v93
  %v948 = vunpack.c.h.b16 %v93
  %v949 = vunpack.c.l.b16 %v94
  %v950 = vunpack.c.l.b16 %v95
  %v951 = vunpack.c.h.b16 %v95
  %v952 = vunpack.c.l.b16 %v96
  %v953 = vunpack.c.h.b16 %v96
  %v954 = vunpack.c.l.b16 %v97
  %v955 = vunpack.c.h.b16 %v97
  %v956 = vunpack.c.l.b16 %v98
  %v957 = vunpack.c.h.b16 %v98
  %v958 = vunpack.c.l.b16 %v99
  %v959 = vunpack.c.l.b16 %v100
  %v960 = vunpack.c.h.b16 %v100
  %v961 = vunpack.c.l.b16 %v101
  %v962 = vunpack.c.h.b16 %v101
  %v963 = vunpack.c.l.b16 %v102
  %v964 = vunpack.c.h.b16 %v102
  %v965 = vunpack.c.l.b16 %v103
  %v966 = vunpack.c.h.b16 %v103
  %v967 = vunpack.c.l.b16 %v104
  %v968 = vunpack.c.l.b16 %v105
  %v969 = vunpack.c.h.b16 %v105
  %v970 = vunpack.c.l.b16 %v106
  %v971 = vunpack.c.h.b16 %v106
  %v972 = vunpack.c.l.b16 %v107
  %v973 = vunpack.c.h.b16 %v107
  %v974 = vunpack.c.l.b16 %v108
  %v975 = vunpack.c.h.b16 %v108
  %v976 = vunpack.c.l.b16 %v109
  %v977 = vunpack.c.l.b16 %v110
  %v978 = vunpack.c.h.b16 %v110
  %v979 = vunpack.c.l.b16 %v111
  %v980 = vunpack.c.h.b16 %v111
  %v981 = vunpack.c.l.b16 %v112
  %v982 = vunpack.c.h.b16 %v112
  %v983 = vunpack.c.l.b16 %v113
  %v984 = vunpack.c.h.b16 %v113
  %v985 = vunpack.c.l.b16 %v114
  %v986 = vunpack.c.l.b16 %v115
  %v987 = vunpack.c.h.b16 %v115
  %v988 = vunpack.c.l.b16 %v116
  %v989 = vunpack.c.h.b16 %v116
  %v990 = vunpack.c.l.b16 %v117
  %v991 = vunpack.c.h.b16 %v117
  %v992 = vunpack.c.l.b16 %v118
  %v993 = vunpack.c.h.b16 %v118
  %v994 = vunpack.c.l.b16 %v119
  %v995 = vunpack.c.l.b16 %v120
  %v996 = vunpack.c.h.b16 %v120
  %v997 = vunpack.c.l.b16 %v121
  %v998 = vunpack.c.h.b16 %v121
  %v999 = vunpack.c.l.b16 %v122
  %v1000 = vunpack.c.h.b16 %v122
  %v1001 = vunpack.c.l.b16 %v123
  %v1002 = vunpack.c.h.b16 %v123
  %v1003 = vunpack.c.l.b16 %v124
  %v1004 = vunpack.c.l.b16 %v125
  %v1005 = vunpack.c.h.b16 %v125
  %v1006 = vunpack.c.l.b16 %v126
  %v1007 = vunpack.c.h.b16 %v126
  %v1008 = vunpack.c.l.b16 %v127
  %v1009 = vunpack.c.h.b16 %v127
  %v1010 = vunpack.c.l.b16 %v128
  %v1011 = vunpack.c.h.b16 %v128
  %v1012 = vunpack.c.l.b16 %v129
  %v1013 = vunpack.c.l.b16 %v130
  %v1014 = vunpack.c.h.b16 %v130
  %v1015 = vunpack.c.l.b16 %v131
  %v1016 = vunpack.c.h.b16 %v131
  %v1017 = vunpack.c.l.b16 %v132
  %v1018 = vunpack.c.h.b16 %v132
  %v1019 = vunpack.c.l.b16 %v133
  %v1020 = vunpack.c.h.b16 %v133
  %v1021 = vunpack.c.l.b16 %v134
  %v1022 = vunpack.c.l.b16 %v135
  %v1023 = vunpack.c.h.b16 %v135
  %v1024 = vunpack.c.l.b16 %v136
  %v1025 = vunpack.c.h.b16 %v136
  %v1026 = vunpack.c.l.b16 %v137
  %v1027 = vunpack.c.h.b16 %v137
  %v1028 = vunpack.c.l.b16 %v138
  %v1029 = vunpack.c.h.b16 %v138
  %v1030 = vunpack.c.l.b16 %v139
  %v1031 = vunpack.c.l.b16 %v140
  %v1032 = vunpack.c.h.b16 %v140
  %v1033 = vunpack.c.l.b16 %v141
  %v1034 = vunpack.c.h.b16 %v141
  %v1035 = vunpack.c.l.b16 %v142
  %v1036 = vunpack.c.h.b16 %v142
  %v1037 = vunpack.c.l.b16 %v143
  %v1038 = vunpack.c.h.b16 %v143
  %v1039 = vunpack.c.l.b16 %v144
  %v1040 = vunpack.c.l.b16 %v145
  %v1041 = vunpack.c.h.b16 %v145
  %v1042 = vunpack.c.l.b16 %v146
  %v1043 = vunpack.c.h.b16 %v146
  %v1044 = vunpack.c.l.b16 %v147
  %v1045 = vunpack.c.h.b16 %v147
  %v1046 = vunpack.c.l.b16 %v148
  %v1047 = vunpack.c.h.b16 %v148
  %v1048 = vunpack.c.l.b16 %v149
  %v1049 = vunpack.c.l.b16 %v150
  %v1050 = vunpack.c.h.b16 %v150
  %v1051 = vunpack.c.l.b16 %v151
  %v1052 = vunpack.c.h.b16 %v151
  %v1053 = vunpack.c.l.b16 %v152
  %v1054 = vunpack.c.h.b16 %v152
  %v1055 = vunpack.c.l.b16 %v153
  %v1056 = vunpack.c.h.b16 %v153
  %v1057 = vunpack.c.l.b16 %v154
  %v1058 = vunpack.c.l.b16 %v155
  %v1059 = vunpack.c.h.b16 %v155
  %v1060 = vunpack.c.l.b16 %v156
  %v1061 = vunpack.c.h.b16 %v156
  %v1062 = vunpack.c.l.b16 %v157
  %v1063 = vunpack.c.h.b16 %v157
  %v1064 = vunpack.c.l.b16 %v158
  %v1065 = vunpack.c.h.b16 %v158
  %v1066 = vunpack.c.l.b16 %v159
  %v1067 = vunpack.c.l.b16 %v160
  %v1068 = vunpack.c.h.b16 %v160
  %v1069 = vunpack.c.l.b16 %v161
  %v1070 = vunpack.c.h.b16 %v161
  %v1071 = vunpack.c.l.b16 %v162
  %v1072 = vunpack.c.h.b16 %v162
  %v1073 = vunpack.c.l.b16 %v163
  %v1074 = vunpack.c.h.b16 %v163
  %v1075 = vunpack.c.l.b16 %v164
  %v1076 = vunpack.c.l.b16 %v165
  %v1077 = vunpack.c.h.b16 %v165
  %v1078 = vunpack.c.l.b16 %v166
  %v1079 = vunpack.c.h.b16 %v166
  %v1080 = vunpack.c.l.b16 %v167
  %v1081 = vunpack.c.h.b16 %v167
  %v1082 = vunpack.c.l.b16 %v168
  %v1083 = vunpack.c.h.b16 %v168
  %v1084 = vunpack.c.l.b16 %v169
  %v1085 = vunpack.c.l.b16 %v170
  %v1086 = vunpack.c.h.b16 %v170
  %v1087 = vunpack.c.l.b16 %v171
  %v1088 = vunpack.c.h.b16 %v171
  %v1089 = vunpack.c.l.b16 %v172
  %v1090 = vunpack.c.h.b16 %v172
  %v1091 = vunpack.c.l.b16 %v173
  %v1092 = vunpack.c.h.b16 %v173
  %v1093 = vunpack.c.l.b16 %v174
  %v1094 = vunpack.c.l.b16 %v175
  %v1095 = vunpack.c.h.b16 %v175
  %v1096 = vunpack.c.l.b16 %v176
  %v1097 = vunpack.c.h.b16 %v176
  %v1098 = vunpack.c.l.b16 %v177
  %v1099 = vunpack.c.h.b16 %v177
  %v1100 = vunpack.c.l.b16 %v178
  %v1101 = vunpack.c.h.b16 %v178
  %v1102 = vunpack.c.l.b16 %v179
  %v1103 = vunpack.c.l.b16 %v180
  %v1104 = vunpack.c.h.b16 %v180
  %v1105 = vunpack.c.l.b16 %v181
  %v1106 = vunpack.c.h.b16 %v181
  %v1107 = vunpack.c.l.b16 %v182
  %v1108 = vunpack.c.h.b16 %v182
  %v1109 = vunpack.c.l.b16 %v183
  %v1110 = vunpack.c.h.b16 %v183
  %v1111 = vunpack.c.l.b16 %v184
  %v1112 = vunpack.c.l.b16 %v185
  %v1113 = vunpack.c.h.b16 %v185
  %v1114 = vunpack.c.l.b16 %v186
  %v1115 = vunpack.c.h.b16 %v186
  %v1116 = vunpack.c.l.b16 %v187
  %v1117 = vunpack.c.h.b16 %v187
  %v1118 = vunpack.c.l.b16 %v188
  %v1119 = vunpack.c.h.b16 %v188
  %v1120 = vunpack.c.l.b16 %v189
  %v1121 = vunpack.c.l.b16 %v190
  %v1122 = vunpack.c.h.b16 %v190
  %v1123 = vunpack.c.l.b16 %v191
  %v1124 = vunpack.c.h.b16 %v191
  %v1125 = vunpack.c.l.b16 %v192
  %v1126 = vunpack.c.h.b16 %v192
  %v1127 = vunpack.c.l.b16 %v193
  %v1128 = vunpack.c.h.b16 %v193
  %v1129 = vunpack.c.l.b16 %v194
  %v1130 = vunpack.c.l.b16 %v195
  %v1131 = vunpack.c.h.b16 %v195
  %v1132 = vunpack.c.l.b16 %v196
  %v1133 = vunpack.c.h.b16 %v196
  %v1134 = vunpack.c.l.b16 %v197
  %v1135 = vunpack.c.h.b16 %v197
  %v1136 = vunpack.c.l.b16 %v198
  %v1137 = vunpack.c.h.b16 %v198
  %v1138 = vunpack.c.l.b16 %v199
  %v1139 = vunpack.c.l.b16 %v200
  %v1140 = vunpack.c.h.b16 %v200
  %v1141 = vunpack.c.l.b16 %v201
  %v1142 = vunpack.c.h.b16 %v201
  %v1143 = vunpack.c.l.b16 %v202
  %v1144 = vunpack.c.h.b16 %v202
  %v1145 = vunpack.c.l.b16 %v203
  %v1146 = vunpack.c.h.b16 %v203
  %v1147 = vunpack.c.l.b16 %v204
  %v1148 = vunpack.c.l.b16 %v205
  %v1149 = vunpack.c.h.b16 %v205
  %v1150 = vunpack.c.l.b16 %v206
  %v1151 = vunpack.c.h.b16 %v206
  %v1152 = vunpack.c.l.b16 %v207
  %v1153 = vunpack.c.h.b16 %v207
  %v1154 = vunpack.c.l.b16 %v208
  %v1155 = vunpack.c.h.b16 %v208
  %v1156 = vunpack.c.l.b16 %v209
  %v1157 = vunpack.c.l.b16 %v210
  %v1158 = vunpack.c.h.b16 %v210
  %v1159 = vunpack.c.l.b16 %v211
  %v1160 = vunpack.c.h.b16 %v211
  %v1161 = vunpack.c.l.b16 %v212
  %v1162 = vunpack.c.h.b16 %v212
  %v1163 = vunpack.c.l.b16 %v213
  %v1164 = vunpack.c.h.b16 %v213
  %v1165 = vunpack.c.l.b16 %v214
  %v1166 = vunpack.c.l.b16 %v215
  %v1167 = vunpack.c.h.b16 %v215
  %v1168 = vunpack.c.l.b16 %v216
  %v1169 = vunpack.c.h.b16 %v216
  %v1170 = vunpack.c.l.b16 %v217
  %v1171 = vunpack.c.h.b16 %v217
  %v1172 = vunpack.c.l.b16 %v218
  %v1173 = vunpack.c.h.b16 %v218
  %v1174 = vunpack.c.l.b16 %v219
  %v1175 = vunpack.c.l.b16 %v220
  %v1176 = vunpack.c.h.b16 %v220
  %v1177 = vunpack.c.l.b16 %v221
  %v1178 = vunpack.c.h.b16 %v221
  %v1179 = vunpack.c.l.b16 %v222
  %v1180 = vunpack.c.h.b16 %v222
  %v1181 = vunpack.c.l.b16 %v223
  %v1182 = vunpack.c.h.b16 %v223
  %v1183 = vunpack.c.l.b16 %v224
  %v1184 = vunpack.c.l.b16 %v225
  %v1185 = vunpack.c.h.b16 %v225
  %v1186 = vunpack.c.l.b16 %v226
  %v1187 = vunpack.c.h.b16 %v226
  %v1188 = vunpack.c.l.b16 %v227
  %v1189 = vunpack.c.h.b16 %v227
  %v1190 = vunpack.c.l.b16 %v228
  %v1191 = vunpack.c.h.b16 %v228
  %v1192 = vunpack.c.l.b16 %v229
  %v1193 = vunpack.c.l.b16 %v230
  %v1194 = vunpack.c.h.b16 %v230
  %v1195 = vunpack.c.l.b16 %v231
  %v1196 = vunpack.c.h.b16 %v231
  %v1197 = vunpack.c.l.b16 %v232
  %v1198 = vunpack.c.h.b16 %v232
  %v1199 = vunpack.c.l.b16 %v233
  %v1200 = vunpack.c.h.b16 %v233
  %v1201 = vunpack.c.l.b16 %v234
  %v1202 = vunpack.c.l.b16 %v235
  %v1203 = vunpack.c.h.b16 %v235
  %v1204 = vunpack.c.l.b16 %v236
  %v1205 = vunpack.c.h.b16 %v236
  %v1206 = vunpack.c.l.b16 %v237
  %v1207 = vunpack.c.h.b16 %v237
  %v1208 = vunpack.c.l.b16 %v238
  %v1209 = vunpack.c.h.b16 %v238
  %v1210 = vunpack.c.l.b16 %v239
  %v1211 = vunpack.c.l.b16 %v240
  %v1212 = vunpack.c.h.b16 %v240
  %v1213 = vunpack.c.l.b16 %v241
  %v1214 = vunpack.c.h.b16 %v241
  %v1215 = vunpack.c.l.b16 %v242
  %v1216 = vunpack.c.h.b16 %v242
  %v1217 = vunpack.c.l.b16 %v243
  %v1218 = vunpack.c.h.b16 %v243
  %v1219 = vunpack.c.l.b16 %v244
  %v1220 = vunpack.c.l.b16 %v245
  %v1221 = vunpack.c.h.b16 %v245
  %v1222 = vunpack.c.l.b16 %v246
  %v1223 = vunpack.c.h.b16 %v246
  %v1224 = vunpack.c.l.b16 %v247
  %v1225 = vunpack.c.h.b16 %v247
  %v1226 = vunpack.c.l.b16 %v248
  %v1227 = vunpack.c.h.b16 %v248
  %v1228 = vunpack.c.l.b16 %v249
  %v1229 = vunpack.c.l.b16 %v250
  %v1230 = vunpack.c.h.b16 %v250
  %v1231 = vunpack.c.l.b16 %v251
  %v1232 = vunpack.c.h.b16 %v251
  %v1233 = vunpack.c.l.b16 %v252
  %v1234 = vunpack.c.h.b16 %v252
  %v1235 = vunpack.c.l.b16 %v253
  %v1236 = vunpack.c.h.b16 %v253
  %v1237 = vunpack.c.l.b16 %v254
  %v1238 = vunpack.c.l.b16 %v255
  %v1239 = vunpack.c.h.b16 %v255
  %v1240 = vunpack.c.l.b16 %v256
  %v1241 = vunpack.c.h.b16 %v256
  %v1242 = vunpack.c.l.b16 %v257
  %v1243 = vunpack.c.h.b16 %v257
  %v1244 = vunpack.c.l.b16 %v258
  %v1245 = vunpack.c.h.b16 %v258
  %v1246 = vunpack.c.l.b16 %v259
  %v1247 = vunpack.c.l.b16 %v260
  %v1248 = vunpack.c.h.b16 %v260
  %v1249 = vunpack.c.l.b16 %v261
  %v1250 = vunpack.c.h.b16 %v261
  %v1251 = vunpack.c.l.b16 %v262
  %v1252 = vunpack.c.h.b16 %v262
  %v1253 = vunpack.c.l.b16 %v263
  %v1254 = vunpack.c.h.b16 %v263
  %v1255 = vunpack.c.l.b16 %v264
  %v1256 = vunpack.c.l.b16 %v265
  %v1257 = vunpack.c.h.b16 %v265
  %v1258 = vunpack.c.l.b16 %v266
  %v1259 = vunpack.c.h.b16 %v266
  %v1260 = vunpack.c.l.b16 %v267
  %v1261 = vunpack.c.h.b16 %v267
  %v1262 = vunpack.c.l.b16 %v268
  %v1263 = vunpack.c.h.b16 %v268
  %v1264 = vunpack.c.l.b16 %v269
  %v1265 = vunpack.c.l.b16 %v270
  %v1266 = vunpack.c.h.b16 %v270
  %v1267 = vunpack.c.l.b16 %v271
  %v1268 = vunpack.c.h.b16 %v271
  %v1269 = vunpack.c.l.b16 %v272
  %v1270 = vunpack.c.h.b16 %v272
  %v1271 = vunpack.c.l.b16 %v273
  %v1272 = vunpack.c.h.b16 %v273
  %v1273 = vunpack.c.l.b16 %v274
  %v1274 = vunpack.c.l.b16 %v275
  %v1275 = vunpack.c.h.b16 %v275
  %v1276 = vunpack.c.l.b16 %v276
  %v1277 = vunpack.c.h.b16 %v276
  %v1278 = vunpack.c.l.b16 %v277
  %v1279 = vunpack.c.h.b16 %v277
  %v1280 = vunpack.c.l.b16 %v278
  %v1281 = vunpack.c.h.b16 %v278
  %v1282 = vunpack.c.l.b16 %v279
  %v1283 = vunpack.c.l.b16 %v280
  %v1284 = vunpack.c.h.b16 %v280
  %v1285 = vunpack.c.l.b16 %v281
  %v1286 = vunpack.c.h.b16 %v281
  %v1287 = vunpack.c.l.b16 %v282
  %v1288 = vunpack.c.h.b16 %v282
  %v1289 = vunpack.c.l.b16 %v283
  %v1290 = vunpack.c.h.b16 %v283
  %v1291 = vunpack.c.l.b16 %v284
  %v1292 = vunpack.c.l.b16 %v285
  %v1293 = vunpack.c.h.b16 %v285
  %v1294 = vunpack.c.l.b16 %v286
  %v1295 = vunpack.c.h.b16 %v286
  %v1296 = vunpack.c.l.b16 %v287
  %v1297 = vunpack.c.h.b16 %v287
  %v1298 = vunpack.c.l.b16 %v288
  %v1299 = vunpack.c.h.b16 %v288
  %v1300 = vunpack.c.l.b16 %v289
  %v1301 = vunpack.c.l.b16 %v290
  %v1302 = vunpack.c.h.b16 %v290
  %v1303 = vunpack.c.l.b16 %v291
  %v1304 = vunpack.c.h.b16 %v291
  %v1305 = vunpack.c.l.b16 %v292
  %v1306 = vunpack.c.h.b16 %v292
  %v1307 = vunpack.c.l.b16 %v293
  %v1308 = vunpack.c.h.b16 %v293
  %v1309 = vunpack.c.l.b16 %v294
  %v1310 = vunpack.c.l.b16 %v295
  %v1311 = vunpack.c.h.b16 %v295
  %v1312 = vunpack.c.l.b16 %v296
  %v1313 = vunpack.c.h.b16 %v296
  %v1314 = vunpack.c.l.b16 %v297
  %v1315 = vunpack.c.h.b16 %v297
  %v1316 = vunpack.c.l.b16 %v298
  %v1317 = vunpack.c.h.b16 %v298
  %v1318 = vunpack.c.l.b16 %v299
  %v1319 = vunpack.c.l.b16 %v300
  %v1320 = vunpack.c.h.b16 %v300
  %v1321 = vunpack.c.l.b16 %v301
  %v1322 = vunpack.c.h.b16 %v301
  %v1323 = vunpack.c.l.b16 %v302
  %v1324 = vunpack.c.h.b16 %v302
  %v1325 = vunpack.c.l.b16 %v303
  %v1326 = vunpack.c.h.b16 %v303
  %v1327 = vunpack.c.l.b16 %v304
  %v1328 = vunpack.c.l.b16 %v305
  %v1329 = vunpack.c.h.b16 %v305
  %v1330 = vunpack.c.l.b16 %v306
  %v1331 = vunpack.c.h.b16 %v306
  %v1332 = vunpack.c.l.b16 %v307
  %v1333 = vunpack.c.h.b16 %v307
  %v1334 = vunpack.c.l.b16 %v308
  %v1335 = vunpack.c.h.b16 %v308
  %v1336 = vunpack.c.l.b16 %v309
  %v1337 = vunpack.c.l.b16 %v310
  %v1338 = vunpack.c.h.b16 %v310
  %v1339 = vunpack.c.l.b16 %v311
  %v1340 = vunpack.c.h.b16 %v311
  %v1341 = vunpack.c.l.b16 %v312
  %v1342 = vunpack.c.h.b16 %v312
  %v1343 = vunpack.c.l.b16 %v313
  %v1344 = vunpack.c.h.b16 %v313
  %v1345 = vunpack.c.l.b16 %v314
  %v1346 = vunpack.c.l.b16 %v315
  %v1347 = vunpack.c.h.b16 %v315
  %v1348 = vunpack.c.l.b16 %v316
  %v1349 = vunpack.c.h.b16 %v316
  %v1350 = vunpack.c.l.b16 %v317
  %v1351 = vunpack.c.h.b16 %v317
  %v1352 = vunpack.c.l.b16 %v318
  %v1353 = vunpack.c.h.b16 %v318
  %v1354 = vunpack.c.l.b16 %v319
  %v1355 = vunpack.c.l.b16 %v320
  %v1356 = vunpack.c.h.b16 %v320
  %v1357 = vunpack.c.l.b16 %v321
  %v1358 = vunpack.c.h.b16 %v321
  %v1359 = vunpack.c.l.b16 %v322
  %v1360 = vunpack.c.h.b16 %v322
  %v1361 = vunpack.c.l.b16 %v323
  %v1362 = vunpack.c.h.b16 %v323
  %v1363 = vunpack.c.l.b16 %v324
  %v1364 = vunpack.c.l.b16 %v325
  %v1365 = vunpack.c.h.b16 %v325
  %v1366 = vunpack.c.l.b16 %v326
  %v1367 = vunpack.c.h.b16 %v326
  %v1368 = vunpack.c.l.b16 %v327
  %v1369 = vunpack.c.h.b16 %v327
  %v1370 = vunpack.c.l.b16 %v328
  %v1371 = vunpack.c.h.b16 %v328
  %v1372 = vunpack.c.l.b16 %v329
  %v1373 = vunpack.c.l.b16 %v330
  %v1374 = vunpack.c.h.b16 %v330
  %v1375 = vunpack.c.l.b16 %v331
  %v1376 = vunpack.c.h.b16 %v331
  %v1377 = vunpack.c.l.b16 %v332
  %v1378 = vunpack.c.h.b16 %v332
  %v1379 = vunpack.c.l.b16 %v333
  %v1380 = vunpack.c.h.b16 %v333
  %v1381 = vunpack.c.l.b16 %v334
  %v1382 = vpack.c.b16 %v815, %v806
  %v1383 = vpack.c.b16 %v816, %v807
  %v1384 = vpack.c.b16 %v817, %v808
  %v1385 = vpack.c.b16 %v818, %v809
  %v1386 = vpack.c.b16 %v819, %v810
  %v1387 = vpack.c.b16 %v820, %v811
  %v1388 = vpack.c.b16 %v821, %v812
  %v1389 = vpack.c.b16 %v822, %v813
  %v1390 = vpack.c.b16 %v823, %v814
  %v1391 = vpack.c.b16 %v833, %v824
  %v1392 = vpack.c.b16 %v834, %v825
  %v1393 = vpack.c.b16 %v835, %v826
  %v1394 = vpack.c.b16 %v836, %v827
  %v1395 = vpack.c.b16 %v837, %v828
  %v1396 = vpack.c.b16 %v838, %v829
  %v1397 = vpack.c.b16 %v839, %v830
  %v1398 = vpack.c.b16 %v840, %v831
  %v1399 = vpack.c.b16 %v841, %v832
  %v1400 = vpack.c.b16 %v851, %v842
  %v1401 = vpack.c.b16 %v852, %v843
  %v1402 = vpack.c.b16 %v853, %v844
  %v1403 = vpack.c.b16 %v854, %v845
  %v1404 = vpack.c.b16 %v855, %v846
  %v1405 = vpack.c.b16 %v856, %v847
  %v1406 = vpack.c.b16 %v857, %v848
  %v1407 = vpack.c.b16 %v858, %v849
  %v1408 = vpack.c.b16 %v859, %v850
  %v1409 = vpack.c.b16 %v869, %v860
  %v1410 = vpack.c.b16 %v870, %v861
  %v1411 = vpack.c.b16 %v871, %v862
  %v1412 = vpack.c.b16 %v872, %v863
  %v1413 = vpack.c.b16 %v873, %v864
  %v1414 = vpack.c.b16 %v874, %v865
  %v1415 = vpack.c.b16 %v875, %v866
  %v1416 = vpack.c.b16 %v876, %v867
  %v1417 = vpack.c.b16 %v877, %v868
  %v1418 = vpack.c.b16 %v887, %v878
  %v1419 = vpack.c.b16 %v888, %v879
  %v1420 = vpack.c.b16 %v889, %v880
  %v1421 = vpack.c.b16 %v890, %v881
  %v1422 = vpack.c.b16 %v891, %v882
  %v1423 = vpack.c.b16 %v892, %v883
  %v1424 = vpack.c.b16 %v893, %v884
  %v1425 = vpack.c.b16 %v894, %v885
  %v1426 = vpack.c.b16 %v895, %v886
  %v1427 = vpack.c.b16 %v905, %v896
  %v1428 = vpack.c.b16 %v906, %v897
  %v1429 = vpack.c.b16 %v907, %v898
  %v1430 = vpack.c.b16 %v908, %v899
  %v1431 = vpack.c.b16 %v909, %v900
  %v1432 = vpack.c.b16 %v910, %v901
  %v1433 = vpack.c.b16 %v911, %v902
  %v1434 = vpack.c.b16 %v912, %v903
  %v1435 = vpack.c.b16 %v913, %v904
  %v1436 = vpack.c.b16 %v923, %v914
  %v1437 = vpack.c.b16 %v924, %v915
  %v1438 = vpack.c.b16 %v925, %v916
  %v1439 = vpack.c.b16 %v926, %v917
  %v1440 = vpack.c.b16 %v927, %v918
  %v1441 = vpack.c.b16 %v928, %v919
  %v1442 = vpack.c.b16 %v929, %v920
  %v1443 = vpack.c.b16 %v930, %v921
  %v1444 = vpack.c.b16 %v931, %v922
  %v1445 = vpack.c.b16 %v941, %v932
  %v1446 = vpack.c.b16 %v942, %v933
  %v1447 = vpack.c.b16 %v943, %v934
  %v1448 = vpack.c.b16 %v944, %v935
  %v1449 = vpack.c.b16 %v945, %v936
  %v1450 = vpack.c.b16 %v946, %v937
  %v1451 = vpack.c.b16 %v947, %v938
  %v1452 = vpack.c.b16 %v948, %v939
  %v1453 = vpack.c.b16 %v949, %v940
  %v1454 = vpack.c.b16 %v959, %v950
  %v1455 = vpack.c.b16 %v960, %v951
  %v1456 = vpack.c.b16 %v961, %v952
  %v1457 = vpack.c.b16 %v962, %v953
  %v1458 = vpack.c.b16 %v963, %v954
  %v1459 = vpack.c.b16 %v964, %v955
  %v1460 = vpack.c.b16 %v965, %v956
  %v1461 = vpack.c.b16 %v966, %v957
  %v1462 = vpack.c.b16 %v967, %v958
  %v1463 = vpack.c.b16 %v977, %v968
  %v1464 = vpack.c.b16 %v978, %v969
  %v1465 = vpack.c.b16 %v979, %v970
  %v1466 = vpack.c.b16 %v980, %v971
  %v1467 = vpack.c.b16 %v981, %v972
  %v1468 = vpack.c.b16 %v982, %v973
  %v1469 = vpack.c.b16 %v983, %v974
  %v1470 = vpack.c.b16 %v984, %v975
  %v1471 = vpack.c.b16 %v985, %v976
  %v1472 = vpack.c.b16 %v995, %v986
  %v1473 = vpack.c.b16 %v996, %v987
  %v1474 = vpack.c.b16 %v997, %v988
  %v1475 = vpack.c.b16 %v998, %v989
  %v1476 = vpack.c.b16 %v999, %v990
  %v1477 = vpack.c.b16 %v1000, %v991
  %v1478 = vpack.c.b16 %v1001, %v992
  %v1479 = vpack.c.b16 %v1002, %v993
  %v1480 = vpack.c.b16 %v1003, %v994
  %v1481 = vpack.c.b16 %v1013, %v1004
  %v1482 = vpack.c.b16 %v1014, %v1005
  %v1483 = vpack.c.b16 %v1015, %v1006
  %v1484 = vpack.c.b16 %v1016, %v1007
  %v1485 = vpack.c.b16 %v1017, %v1008
  %v1486 = vpack.c.b16 %v1018, %v1009
  %v1487 = vpack.c.b16 %v1019, %v1010
  %v1488 = vpack.c.b16 %v1020, %v1011
  %v1489 = vpack.c.b16 %v1021, %v1012
  %v1490 = vpack.c.b16 %v1031, %v1022
  %v1491 = vpack.c.b16 %v1032, %v1023
  %v1492 = vpack.c.b16 %v1033, %v1024
  %v1493 = vpack.c.b16 %v1034, %v1025
  %v1494 = vpack.c.b16 %v1035, %v1026
  %v1495 = vpack.c.b16 %v1036, %v1027
  %v1496 = vpack.c.b16 %v1037, %v1028
  %v1497 = vpack.c.b16 %v1038, %v1029
  %v1498 = vpack.c.b16 %v1039, %v1030
  %v1499 = vpack.c.b16 %v1049, %v1040
  %v1500 = vpack.c.b16 %v1050, %v1041
  %v1501 = vpack.c.b16 %v1051, %v1042
  %v1502 = vpack.c.b16 %v1052, %v1043
  %v1503 = vpack.c.b16 %v1053, %v1044
  %v1504 = vpack.c.b16 %v1054, %v1045
  %v1505 = vpack.c.b16 %v1055, %v1046
  %v1506 = vpack.c.b16 %v1056, %v1047
  %v1507 = vpack.c.b16 %v1057, %v1048
  %v1508 = vpack.c.b16 %v1067, %v1058
  %v1509 = vpack.c.b16 %v1068, %v1059
  %v1510 = vpack.c.b16 %v1069, %v1060
  %v1511 = vpack.c.b16 %v1070, %v1061
  %v1512 = vpack.c.b16 %v1071, %v1062
  %v1513 = vpack.c.b16 %v1072, %v1063
  %v1514 = vpack.c.b16 %v1073, %v1064
  %v1515 = vpack.c.b16 %v1074, %v1065
  %v1516 = vpack.c.b16 %v1075, %v1066
  %v1517 = vpack.c.b16 %v1085, %v1076
  %v1518 = vpack.c.b16 %v1086, %v1077
  %v1519 = vpack.c.b16 %v1087, %v1078
  %v1520 = vpack.c.b16 %v1088, %v1079
  %v1521 = vpack.c.b16 %v1089, %v1080
  %v1522 = vpack.c.b16 %v1090, %v1081
  %v1523 = vpack.c.b16 %v1091, %v1082
  %v1524 = vpack.c.b16 %v1092, %v1083
  %v1525 = vpack.c.b16 %v1093, %v1084
  %v1526 = vpack.c.b16 %v1103, %v1094
  %v1527 = vpack.c.b16 %v1104, %v1095
  %v1528 = vpack.c.b16 %v1105, %v1096
  %v1529 = vpack.c.b16 %v1106, %v1097
  %v1530 = vpack.c.b16 %v1107, %v1098
  %v1531 = vpack.c.b16 %v1108, %v1099
  %v1532 = vpack.c.b16 %v1109, %v1100
  %v1533 = vpack.c.b16 %v1110, %v1101
  %v1534 = vpack.c.b16 %v1111, %v1102
  %v1535 = vpack.c.b16 %v1121, %v1112
  %v1536 = vpack.c.b16 %v1122, %v1113
  %v1537 = vpack.c.b16 %v1123, %v1114
  %v1538 = vpack.c.b16 %v1124, %v1115
  %v1539 = vpack.c.b16 %v1125, %v1116
  %v1540 = vpack.c.b16 %v1126, %v1117
  %v1541 = vpack.c.b16 %v1127, %v1118
  %v1542 = vpack.c.b16 %v1128, %v1119
  %v1543 = vpack.c.b16 %v1129, %v1120
  %v1544 = vpack.c.b16 %v1139, %v1130
  %v1545 = vpack.c.b16 %v1140, %v1131
  %v1546 = vpack.c.b16 %v1141, %v1132
  %v1547 = vpack.c.b16 %v1142, %v1133
  %v1548 = vpack.c.b16 %v1143, %v1134
  %v1549 = vpack.c.b16 %v1144, %v1135
  %v1550 = vpack.c.b16 %v1145, %v1136
  %v1551 = vpack.c.b16 %v1146, %v1137
  %v1552 = vpack.c.b16 %v1147, %v1138
  %v1553 = vpack.c.b16 %v1157, %v1148
  %v1554 = vpack.c.b16 %v1158, %v1149
  %v1555 = vpack.c.b16 %v1159, %v1150
  %v1556 = vpack.c.b16 %v1160, %v1151
  %v1557 = vpack.c.b16 %v1161, %v1152
  %v1558 = vpack.c.b16 %v1162, %v1153
  %v1559 = vpack.c.b16 %v1163, %v1154
  %v1560 = vpack.c.b16 %v1164, %v1155
  %v1561 = vpack.c.b16 %v1165, %v1156
  %v1562 = vpack.c.b16 %v1175, %v1166
  %v1563 = vpack.c.b16 %v1176, %v1167
  %v1564 = vpack.c.b16 %v1177, %v1168
  %v1565 = vpack.c.b16 %v1178, %v1169
  %v1566 = vpack.c.b16 %v1179, %v1170
  %v1567 = vpack.c.b16 %v1180, %v1171
  %v1568 = vpack.c.b16 %v1181, %v1172
  %v1569 = vpack.c.b16 %v1182, %v1173
  %v1570 = vpack.c.b16 %v1183, %v1174
  %v1571 = vpack.c.b16 %v1193, %v1184
  %v1572 = vpack.c.b16 %v1194, %v1185
  %v1573 = vpack.c.b16 %v1195, %v1186
  %v1574 = vpack.c.b16 %v1196, %v1187
  %v1575 = vpack.c.b16 %v1197, %v1188
  %v1576 = vpack.c.b16 %v1198, %v1189
  %v1577 = vpack.c.b16 %v1199, %v1190
  %v1578 = vpack.c.b16 %v1200, %v1191
  %v1579 = vpack.c.b16 %v1201, %v1192
  %v1580 = vpack.c.b16 %v1211, %v1202
  %v1581 = vpack.c.b16 %v1212, %v1203
  %v1582 = vpack.c.b16 %v1213, %v1204
  %v1583 = vpack.c.b16 %v1214, %v1205
  %v1584 = vpack.c.b16 %v1215, %v1206
  %v1585 = vpack.c.b16 %v1216, %v1207
  %v1586 = vpack.c.b16 %v1217, %v1208
  %v1587 = vpack.c.b16 %v1218, %v1209
  %v1588 = vpack.c.b16 %v1219, %v1210
  %v1589 = vpack.c.b16 %v1229, %v1220
  %v1590 = vpack.c.b16 %v1230, %v1221
  %v1591 = vpack.c.b16 %v1231, %v1222
  %v1592 = vpack.c.b16 %v1232, %v1223
  %v1593 = vpack.c.b16 %v1233, %v1224
  %v1594 = vpack.c.b16 %v1234, %v1225
  %v1595 = vpack.c.b16 %v1235, %v1226
  %v1596 = vpack.c.b16 %v1236, %v1227
  %v1597 = vpack.c.b16 %v1237, %v1228
  %v1598 = vpack.c.b16 %v1247, %v1238
  %v1599 = vpack.c.b16 %v1248, %v1239
  %v1600 = vpack.c.b16 %v1249, %v1240
  %v1601 = vpack.c.b16 %v1250, %v1241
  %v1602 = vpack.c.b16 %v1251, %v1242
  %v1603 = vpack.c.b16 %v1252, %v1243
  %v1604 = vpack.c.b16 %v1253, %v1244
  %v1605 = vpack.c.b16 %v1254, %v1245
  %v1606 = vpack.c.b16 %v1255, %v1246
  %v1607 = vpack.c.b16 %v1265, %v1256
  %v1608 = vpack.c.b16 %v1266, %v1257
  %v1609 = vpack.c.b16 %v1267, %v1258
  %v1610 = vpack.c.b16 %v1268, %v1259
  %v1611 = vpack.c.b16 %v1269, %v1260
  %v1612 = vpack.c.b16 %v1270, %v1261
  %v1613 = vpack.c.b16 %v1271, %v1262
  %v1614 = vpack.c.b16 %v1272, %v1263
  %v1615 = vpack.c.b16 %v1273, %v1264
  %v1616 = vpack.c.b16 %v1283, %v1274
  %v1617 = vpack.c.b16 %v1284, %v1275
  %v1618 = vpack.c.b16 %v1285, %v1276
  %v1619 = vpack.c.b16 %v1286, %v1277
  %v1620 = vpack.c.b16 %v1287, %v1278
  %v1621 = vpack.c.b16 %v1288, %v1279
  %v1622 = vpack.c.b16 %v1289, %v1280
  %v1623 = vpack.c.b16 %v1290, %v1281
  %v1624 = vpack.c.b16 %v1291, %v1282
  %v1625 = vpack.c.b16 %v1301, %v1292
  %v1626 = vpack.c.b16 %v1302, %v1293
  %v1627 = vpack.c.b16 %v1303, %v1294
  %v1628 = vpack.c.b16 %v1304, %v1295
  %v1629 = vpack.c.b16 %v1305, %v1296
  %v1630 = vpack.c.b16 %v1306, %v1297
  %v1631 = vpack.c.b16 %v1307, %v1298
  %v1632 = vpack.c.b16 %v1308, %v1299
  %v1633 = vpack.c.b16 %v1309, %v1300
  %v1634 = vpack.c.b16 %v1319, %v1310
  %v1635 = vpack.c.b16 %v1320, %v1311
  %v1636 = vpack.c.b16 %v1321, %v1312
  %v1637 = vpack.c.b16 %v1322, %v1313
  %v1638 = vpack.c.b16 %v1323, %v1314
  %v1639 = vpack.c.b16 %v1324, %v1315
  %v1640 = vpack.c.b16 %v1325, %v1316
  %v1641 = vpack.c.b16 %v1326, %v1317
  %v1642 = vpack.c.b16 %v1327, %v1318
  %v1643 = vpack.c.b16 %v1337, %v1328
  %v1644 = vpack.c.b16 %v1338, %v1329
  %v1645 = vpack.c.b16 %v1339, %v1330
  %v1646 = vpack.c.b16 %v1340, %v1331
  %v1647 = vpack.c.b16 %v1341, %v1332
  %v1648 = vpack.c.b16 %v1342, %v1333
  %v1649 = vpack.c.b16 %v1343, %v1334
  %v1650 = vpack.c.b16 %v1344, %v1335
  %v1651 = vpack.c.b16 %v1345, %v1336
  %v1652 = vpack.c.b16 %v1355, %v1346
  %v1653 = vpack.c.b16 %v1356, %v1347
  %v1654 = vpack.c.b16 %v1357, %v1348
  %v1655 = vpack.c.b16 %v1358, %v1349
  %v1656 = vpack.c.b16 %v1359, %v1350
  %v1657 = vpack.c.b16 %v1360, %v1351
  %v1658 = vpack.c.b16 %v1361, %v1352
  %v1659 = vpack.c.b16 %v1362, %v1353
  %v1660 = vpack.c.b16 %v1363, %v1354
  %v1661 = vpack.c.b16 %v1373, %v1364
  %v1662 = vpack.c.b16 %v1374, %v1365
  %v1663 = vpack.c.b16 %v1375, %v1366
  %v1664 = vpack.c.b16 %v1376, %v1367
  %v1665 = vpack.c.b16 %v1377, %v1368
  %v1666 = vpack.c.b16 %v1378, %v1369
  %v1667 = vpack.c.b16 %v1379, %v1370
  %v1668 = vpack.c.b16 %v1380, %v1371
  %v1669 = vpack.c.b16 %v1381, %v1372
  %v2102 = vunpack.c.l.b16 %v335
  %v2103 = vunpack.c.l.b16 %v336
  %v2104 = vunpack.c.l.b16 %v337
  %v2105 = vunpack.c.l.b16 %v338
  %v2106 = vunpack.c.l.b16 %v339
  %v2107 = vunpack.c.l.b16 %v340
  %v2108 = vunpack.c.l.b16 %v341
  %v2109 = vunpack.c.l.b16 %v342
  %v2110 = vunpack.c.l.b16 %v343
  %v2111 = vunpack.c.l.b16 %v344
  %v2112 = vunpack.c.l.b16 %v345
  %v2113 = vunpack.c.l.b16 %v346
  %v2114 = vunpack.c.l.b16 %v347
  %v2115 = vunpack.c.l.b16 %v348
  %v2116 = vunpack.c.l.b16 %v349
  %v2117 = vunpack.c.l.b16 %v350
  %v2118 = vunpack.c.l.b16 %v351
  %v2119 = vunpack.c.l.b16 %v352
  %v2120 = vunpack.c.l.b16 %v353
  %v2121 = vunpack.c.l.b16 %v354
  %v2122 = vunpack.c.l.b16 %v355
  %v2123 = vunpack.c.l.b16 %v356
  %v2124 = vunpack.c.l.b16 %v357
  %v2125 = vunpack.c.l.b16 %v358
  %v2126 = vunpack.c.l.b16 %v359
  %v2127 = vunpack.c.l.b16 %v360
  %v2128 = vunpack.c.l.b16 %v361
  %v2129 = vunpack.c.l.b16 %v362
  %v2130 = vunpack.c.l.b16 %v363
  %v2131 = vunpack.c.l.b16 %v364
  %v2132 = vunpack.c.l.b16 %v365
  %v2133 = vunpack.c.l.b16 %v366
  %v2134 = vunpack.c.l.b16 %v367
  %v2135 = vunpack.c.l.b16 %v368
  %v2136 = vunpack.c.l.b16 %v369
  %v2137 = vunpack.c.l.b16 %v370
  %v2138 = vunpack.c.l.b16 %v371
  %v2139 = vunpack.c.l.b16 %v372
  %v2140 = vunpack.c.l.b16 %v373
  %v2141 = vunpack.c.l.b16 %v374
  %v2142 = vunpack.c.l.b16 %v375
  %v2143 = vunpack.c.l.b16 %v376
  %v2144 = vunpack.c.l.b16 %v377
  %v2145 = vunpack.c.l.b16 %v378
  %v2146 = vunpack.c.l.b16 %v379
  %v2147 = vunpack.c.l.b16 %v380
  %v2148 = vunpack.c.l.b16 %v381
  %v2149 = vunpack.c.l.b16 %v382
  %v2150 = vunpack.c.l.b16 %v383
  %v2151 = vunpack.c.l.b16 %v384
  %v2152 = vunpack.c.l.b16 %v385
  %v2153 = vunpack.c.l.b16 %v386
  %v2154 = vunpack.c.l.b16 %v387
  %v2155 = vunpack.c.l.b16 %v388
  %v2156 = vunpack.c.l.b16 %v389
  %v2157 = vunpack.c.l.b16 %v390
  %v2158 = vunpack.c.l.b16 %v391
  %v2159 = vunpack.c.l.b16 %v392
  %v2160 = vunpack.c.l.b16 %v393
  %v2161 = vunpack.c.l.b16 %v394
  %v2162 = vunpack.c.l.b16 %v395
  %v2163 = vunpack.c.l.b16 %v396
  %v2164 = vunpack.c.l.b16 %v397
  %v2165 = vunpack.c.l.b16 %v398
  %v2166 = vunpack.c.l.b16 %v399
  %v2167 = vunpack.c.l.b16 %v400
  %v2168 = vunpack.c.l.b16 %v401
  %v2169 = vunpack.c.l.b16 %v402
  %v2170 = vunpack.c.l.b16 %v403
  %v2171 = vunpack.c.l.b16 %v404
  %v2172 = vunpack.c.l.b16 %v405
  %v2173 = vunpack.c.l.b16 %v406
  %v2174 = vunpack.c.l.b16 %v407
  %v2175 = vunpack.c.l.b16 %v408
  %v2176 = vunpack.c.l.b16 %v409
  %v2177 = vunpack.c.l.b16 %v410
  %v2178 = vunpack.c.l.b16 %v411
  %v2179 = vunpack.c.l.b16 %v412
  %v2180 = vunpack.c.l.b16 %v413
  %v2181 = vunpack.c.l.b16 %v414
  %v2182 = vunpack.c.l.b16 %v415
  %v2183 = vunpack.c.l.b16 %v416
  %v2184 = vunpack.c.l.b16 %v417
  %v2185 = vunpack.c.l.b16 %v418
  %v2186 = vunpack.c.l.b16 %v419
  %v2187 = vunpack.c.l.b16 %v420
  %v2188 = vunpack.c.l.b16 %v421
  %v2189 = vunpack.c.l.b16 %v422
  %v2190 = vunpack.c.l.b16 %v423
  %v2191 = vunpack.c.l.b16 %v424
  %v2192 = vunpack.c.l.b16 %v425
  %v2193 = vunpack.c.l.b16 %v426
  %v2194 = vunpack.c.l.b16 %v427
  %v2195 = vunpack.c.l.b16 %v428
  %v2196 = vunpack.c.l.b16 %v429
  %v2197 = vunpack.c.l.b16 %v430
  %v2198 = vunpack.c.l.b16 %v431
  %v2199 = vunpack.c.l.b16 %v432
  %v2200 = vunpack.c.l.b16 %v433
  %v2201 = vunpack.c.l.b16 %v434
  %v2202 = vunpack.c.l.b16 %v435
  %v2203 = vunpack.c.l.b16 %v436
  %v2204 = vunpack.c.l.b16 %v437
  %v2205 = vunpack.c.l.b16 %v438
  %v2206 = vunpack.c.l.b16 %v439
  %v2207 = vunpack.c.l.b16 %v440
  %v2208 = vunpack.c.l.b16 %v441
  %v2209 = vunpack.c.l.b16 %v442
  %v2210 = vunpack.c.l.b16 %v443
  %v2211 = vunpack.c.l.b16 %v444
  %v2212 = vunpack.c.l.b16 %v445
  %v2213 = vunpack.c.l.b16 %v446
  %v2214 = vunpack.c.l.b16 %v447
  %v2215 = vunpack.c.l.b16 %v448
  %v2216 = vunpack.c.l.b16 %v449
  %v2217 = vunpack.c.l.b16 %v450
  %v2218 = vunpack.c.l.b16 %v451
  %v2219 = vunpack.c.l.b16 %v452
  %v2220 = vunpack.c.l.b16 %v453
  %v2221 = vunpack.c.l.b16 %v454
  %v2222 = vunpack.c.l.b16 %v455
  %v2223 = vunpack.c.l.b16 %v456
  %v2224 = vunpack.c.l.b16 %v457
  %v2225 = vunpack.c.l.b16 %v458
  %v2226 = vunpack.c.l.b16 %v459
  %v2227 = vunpack.c.l.b16 %v460
  %v2228 = vunpack.c.l.b16 %v461
  %v2229 = vunpack.c.l.b16 %v462
  %v2230 = vunpack.c.l.b16 %v463
  %v2231 = vunpack.c.l.b16 %v464
  %v2232 = vunpack.c.l.b16 %v465
  %v2233 = vunpack.c.l.b16 %v466
  %v2234 = vunpack.c.l.b16 %v467
  %v2235 = vunpack.c.l.b16 %v468
  %v2236 = vunpack.c.l.b16 %v469
  %v2237 = vunpack.c.l.b16 %v470
  %v2238 = vunpack.c.l.b16 %v471
  %v2239 = vunpack.c.l.b16 %v472
  %v2240 = vunpack.c.l.b16 %v473
  %v2241 = vunpack.c.l.b16 %v474
  %v2242 = vunpack.c.l.b16 %v475
  %v2243 = vunpack.c.l.b16 %v476
  %v2244 = vunpack.c.l.b16 %v477
  %v2245 = vunpack.c.l.b16 %v478
  %v2246 = vpack.c.b16 %v2103, %v2102
  %v2247 = vpack.c.b16 %v2105, %v2104
  %v2248 = vpack.c.b16 %v2107, %v2106
  %v2249 = vpack.c.b16 %v2109, %v2108
  %v2250 = vpack.c.b16 %v2111, %v2110
  %v2251 = vpack.c.b16 %v2113, %v2112
  %v2252 = vpack.c.b16 %v2115, %v2114
  %v2253 = vpack.c.b16 %v2117, %v2116
  %v2254 = vpack.c.b16 %v2119, %v2118
  %v2255 = vpack.c.b16 %v2121, %v2120
  %v2256 = vpack.c.b16 %v2123, %v2122
  %v2257 = vpack.c.b16 %v2125, %v2124
  %v2258 = vpack.c.b16 %v2127, %v2126
  %v2259 = vpack.c.b16 %v2129, %v2128
  %v2260 = vpack.c.b16 %v2131, %v2130
  %v2261 = vpack.c.b16 %v2133, %v2132
  %v2262 = vpack.c.b16 %v2135, %v2134
  %v2263 = vpack.c.b16 %v2137, %v2136
  %v2264 = vpack.c.b16 %v2139, %v2138
  %v2265 = vpack.c.b16 %v2141, %v2140
  %v2266 = vpack.c.b16 %v2143, %v2142
  %v2267 = vpack.c.b16 %v2145, %v2144
  %v2268 = vpack.c.b16 %v2147, %v2146
  %v2269 = vpack.c.b16 %v2149, %v2148
  %v2270 = vpack.c.b16 %v2151, %v2150
  %v2271 = vpack.c.b16 %v2153, %v2152
  %v2272 = vpack.c.b16 %v2155, %v2154
  %v2273 = vpack.c.b16 %v2157, %v2156
  %v2274 = vpack.c.b16 %v2159, %v2158
  %v2275 = vpack.c.b16 %v2161, %v2160
  %v2276 = vpack.c.b16 %v2163, %v2162
  %v2277 = vpack.c.b16 %v2165, %v2164
  %v2278 = vpack.c.b16 %v2167, %v2166
  %v2279 = vpack.c.b16 %v2169, %v2168
  %v2280 = vpack.c.b16 %v2171, %v2170
  %v2281 = vpack.c.b16 %v2173, %v2172
  %v2282 = vpack.c.b16 %v2175, %v2174
  %v2283 = vpack.c.b16 %v2177, %v2176
  %v2284 = vpack.c.b16 %v2179, %v2178
  %v2285 = vpack.c.b16 %v2181, %v2180
  %v2286 = vpack.c.b16 %v2183, %v2182
  %v2287 = vpack.c.b16 %v2185, %v2184
  %v2288 = vpack.c.b16 %v2187, %v2186
  %v2289 = vpack.c.b16 %v2189, %v2188
  %v2290 = vpack.c.b16 %v2191, %v2190
  %v2291 = vpack.c.b16 %v2193, %v2192
  %v2292 = vpack.c.b16 %v2195, %v2194
  %v2293 = vpack.c.b16 %v2197, %v2196
  %v2294 = vpack.c.b16 %v2199, %v2198
  %v2295 = vpack.c.b16 %v2201, %v2200
  %v2296 = vpack.c.b16 %v2203, %v2202
  %v2297 = vpack.c.b16 %v2205, %v2204
  %v2298 = vpack.c.b16 %v2207, %v2206
  %v2299 = vpack.c.b16 %v2209, %v2208
  %v2300 = vpack.c.b16 %v2211, %v2210
  %v2301 = vpack.c.b16 %v2213, %v2212
  %v2302 = vpack.c.b16 %v2215, %v2214
  %v2303 = vpack.c.b16 %v2217, %v2216
  %v2304 = vpack.c.b16 %v2219, %v2218
  %v2305 = vpack.c.b16 %v2221, %v2220
  %v2306 = vpack.c.b16 %v2223, %v2222
  %v2307 = vpack.c.b16 %v2225, %v2224
  %v2308 = vpack.c.b16 %v2227, %v2226
  %v2309 = vpack.c.b16 %v2229, %v2228
  %v2310 = vpack.c.b16 %v2231, %v2230
  %v2311 = vpack.c.b16 %v2233, %v2232
  %v2312 = vpack.c.b16 %v2235, %v2234
  %v2313 = vpack.c.b16 %v2237, %v2236
  %v2314 = vpack.c.b16 %v2239, %v2238
  %v2315 = vpack.c.b16 %v2241, %v2240
  %v2316 = vpack.c.b16 %v2243, %v2242
  %v2317 = vpack.c.b16 %v2245, %v2244
  %2390 = vmatprep.subr.bf16.mxu0 0
  %2391 = vmatpush1.bf16.msra.mxu0 %v2253
  %2392 = vmatprep.subr.bf16.mxu0 0
  %2393 = vmatpush1.bf16.msra.mxu0 %v2252
  %2394 = vmatprep.subr.bf16.mxu0 0
  %2395 = vmatpush1.bf16.msra.mxu0 %v2251
  %2396 = vmatprep.subr.bf16.mxu0 0
  %2397 = vmatpush1.bf16.msra.mxu0 %v2250
  %2398 = vmatprep.subr.bf16.mxu0 0
  %2399 = vmatpush1.bf16.msra.mxu0 %v2249
  %2400 = vmatprep.subr.bf16.mxu0 0
  %2401 = vmatpush1.bf16.msra.mxu0 %v2248
  %2402 = vmatprep.subr.bf16.mxu0 0
  %2403 = vmatpush1.bf16.msra.mxu0 %v2247
  %2404 = vmatprep.subr.bf16.mxu0 0
  %2405 = vmatpush1.bf16.msra.mxu0 %v2246
  %2406 = vmatprep.subr.bf16.mxu0 0
  %2407 = vmatpush2.bf16.msra.mxu0 %v2261
  %2408 = vmatprep.subr.bf16.mxu0 0
  %2409 = vmatpush2.bf16.msra.mxu0 %v2260
  %2410 = vmatprep.subr.bf16.mxu0 0
  %2411 = vmatpush2.bf16.msra.mxu0 %v2259
  %2412 = vmatprep.subr.bf16.mxu0 0
  %2413 = vmatpush2.bf16.msra.mxu0 %v2258
  %2414 = vmatprep.subr.bf16.mxu0 0
  %2415 = vmatpush2.bf16.msra.mxu0 %v2257
  %2416 = vmatprep.subr.bf16.mxu0 0
  %2417 = vmatpush2.bf16.msra.mxu0 %v2256
  %2418 = vmatprep.subr.bf16.mxu0 0
  %2419 = vmatpush2.bf16.msra.mxu0 %v2255
  %2420 = vmatprep.subr.bf16.mxu0 0
  %2421 = vmatpush2.bf16.msra.mxu0 %v2254
  %2422 = vmatprep.mubr.bf16.mxu0 %v1383
  %2423 = vmatmul.mubr.bf16.gmra.mxu0 %v1382
  %v2424 = vpop.f32.mrf.mxu0
  %v2425 = vadd.f32 %v484, %v2424
  %v2426 = vpop.f32.mrf.mxu0
  %v2427 = vpop.f32.mrf.mxu0
  %v2428 = vadd.f32 %v484, %v2427
  %v2429 = vpop.f32.mrf.mxu0
  %2430 = vmatprep.mubr.bf16.mxu0 %v1392
  %2431 = vmatmul.mubr.bf16.gmra.mxu0 %v1391
  %v2432 = vpop.f32.mrf.mxu0
  %v2433 = vadd.f32 %v484, %v2432
  %v2434 = vpop.f32.mrf.mxu0
  %v2435 = vpop.f32.mrf.mxu0
  %v2436 = vadd.f32 %v484, %v2435
  %v2437 = vpop.f32.mrf.mxu0
  %2438 = vmatprep.mubr.bf16.mxu0 %v1401
  %2439 = vmatmul.mubr.bf16.gmra.mxu0 %v1400
  %v2440 = vpop.f32.mrf.mxu0
  %v2441 = vadd.f32 %v484, %v2440
  %v2442 = vpop.f32.mrf.mxu0
  %v2443 = vpop.f32.mrf.mxu0
  %v2444 = vadd.f32 %v484, %v2443
  %v2445 = vpop.f32.mrf.mxu0
  %2446 = vmatprep.mubr.bf16.mxu0 %v1410
  %2447 = vmatmul.mubr.bf16.gmra.mxu0 %v1409
  %v2448 = vpop.f32.mrf.mxu0
  %v2449 = vadd.f32 %v484, %v2448
  %v2450 = vpop.f32.mrf.mxu0
  %v2451 = vpop.f32.mrf.mxu0
  %v2452 = vadd.f32 %v484, %v2451
  %v2453 = vpop.f32.mrf.mxu0
  %2454 = vmatprep.mubr.bf16.mxu0 %v1419
  %2455 = vmatmul.mubr.bf16.gmra.mxu0 %v1418
  %v2456 = vpop.f32.mrf.mxu0
  %v2457 = vadd.f32 %v484, %v2456
  %v2458 = vpop.f32.mrf.mxu0
  %v2459 = vpop.f32.mrf.mxu0
  %v2460 = vadd.f32 %v484, %v2459
  %v2461 = vpop.f32.mrf.mxu0
  %2462 = vmatprep.mubr.bf16.mxu0 %v1428
  %2463 = vmatmul.mubr.bf16.gmra.mxu0 %v1427
  %v2464 = vpop.f32.mrf.mxu0
  %v2465 = vadd.f32 %v484, %v2464
  %v2466 = vpop.f32.mrf.mxu0
  %v2467 = vpop.f32.mrf.mxu0
  %v2468 = vadd.f32 %v484, %v2467
  %v2469 = vpop.f32.mrf.mxu0
  %2470 = vmatprep.mubr.bf16.mxu0 %v1437
  %2471 = vmatmul.mubr.bf16.gmra.mxu0 %v1436
  %v2472 = vpop.f32.mrf.mxu0
  %v2473 = vadd.f32 %v484, %v2472
  %v2474 = vpop.f32.mrf.mxu0
  %v2475 = vpop.f32.mrf.mxu0
  %v2476 = vadd.f32 %v484, %v2475
  %v2477 = vpop.f32.mrf.mxu0
  %2478 = vmatprep.mubr.bf16.mxu0 %v1446
  %2479 = vmatmul.mubr.bf16.gmra.mxu0 %v1445
  %v2480 = vpop.f32.mrf.mxu0
  %v2481 = vadd.f32 %v484, %v2480
  %v2482 = vpop.f32.mrf.mxu0
  %v2483 = vpop.f32.mrf.mxu0
  %v2484 = vadd.f32 %v484, %v2483
  %v2485 = vpop.f32.mrf.mxu0
  %2486 = vmatprep.mubr.bf16.mxu0 %v1455
  %2487 = vmatmul.mubr.bf16.gmra.mxu0 %v1454
  %v2488 = vpop.f32.mrf.mxu0
  %v2489 = vadd.f32 %v484, %v2488
  %v2490 = vpop.f32.mrf.mxu0
  %v2491 = vpop.f32.mrf.mxu0
  %v2492 = vadd.f32 %v484, %v2491
  %v2493 = vpop.f32.mrf.mxu0
  %2494 = vmatprep.mubr.bf16.mxu0 %v1464
  %2495 = vmatmul.mubr.bf16.gmra.mxu0 %v1463
  %v2496 = vpop.f32.mrf.mxu0
  %v2497 = vadd.f32 %v484, %v2496
  %v2498 = vpop.f32.mrf.mxu0
  %v2499 = vpop.f32.mrf.mxu0
  %v2500 = vadd.f32 %v484, %v2499
  %v2501 = vpop.f32.mrf.mxu0
  %2502 = vmatprep.mubr.bf16.mxu0 %v1473
  %2503 = vmatmul.mubr.bf16.gmra.mxu0 %v1472
  %v2504 = vpop.f32.mrf.mxu0
  %v2505 = vadd.f32 %v484, %v2504
  %v2506 = vpop.f32.mrf.mxu0
  %v2507 = vpop.f32.mrf.mxu0
  %v2508 = vadd.f32 %v484, %v2507
  %v2509 = vpop.f32.mrf.mxu0
  %2510 = vmatprep.mubr.bf16.mxu0 %v1482
  %2511 = vmatmul.mubr.bf16.gmra.mxu0 %v1481
  %v2512 = vpop.f32.mrf.mxu0
  %v2513 = vadd.f32 %v484, %v2512
  %v2514 = vpop.f32.mrf.mxu0
  %v2515 = vpop.f32.mrf.mxu0
  %v2516 = vadd.f32 %v484, %v2515
  %v2517 = vpop.f32.mrf.mxu0
  %2518 = vmatprep.mubr.bf16.mxu0 %v1491
  %2519 = vmatmul.mubr.bf16.gmra.mxu0 %v1490
  %v2520 = vpop.f32.mrf.mxu0
  %v2521 = vadd.f32 %v484, %v2520
  %v2522 = vpop.f32.mrf.mxu0
  %v2523 = vpop.f32.mrf.mxu0
  %v2524 = vadd.f32 %v484, %v2523
  %v2525 = vpop.f32.mrf.mxu0
  %2526 = vmatprep.mubr.bf16.mxu0 %v1500
  %2527 = vmatmul.mubr.bf16.gmra.mxu0 %v1499
  %v2528 = vpop.f32.mrf.mxu0
  %v2529 = vadd.f32 %v484, %v2528
  %v2530 = vpop.f32.mrf.mxu0
  %v2531 = vpop.f32.mrf.mxu0
  %v2532 = vadd.f32 %v484, %v2531
  %v2533 = vpop.f32.mrf.mxu0
  %2534 = vmatprep.mubr.bf16.mxu0 %v1509
  %2535 = vmatmul.mubr.bf16.gmra.mxu0 %v1508
  %v2536 = vpop.f32.mrf.mxu0
  %v2537 = vadd.f32 %v484, %v2536
  %v2538 = vpop.f32.mrf.mxu0
  %v2539 = vpop.f32.mrf.mxu0
  %v2540 = vadd.f32 %v484, %v2539
  %v2541 = vpop.f32.mrf.mxu0
  %2542 = vmatprep.mubr.bf16.mxu0 %v1518
  %2543 = vmatmul.mubr.bf16.gmra.mxu0 %v1517
  %v2544 = vpop.f32.mrf.mxu0
  %v2545 = vadd.f32 %v484, %v2544
  %v2546 = vpop.f32.mrf.mxu0
  %v2547 = vpop.f32.mrf.mxu0
  %v2548 = vadd.f32 %v484, %v2547
  %v2549 = vpop.f32.mrf.mxu0
  %2550 = vmatprep.mubr.bf16.mxu0 %v1527
  %2551 = vmatmul.mubr.bf16.gmra.mxu0 %v1526
  %v2552 = vpop.f32.mrf.mxu0
  %v2553 = vadd.f32 %v484, %v2552
  %v2554 = vpop.f32.mrf.mxu0
  %v2555 = vpop.f32.mrf.mxu0
  %v2556 = vadd.f32 %v484, %v2555
  %v2557 = vpop.f32.mrf.mxu0
  %2558 = vmatprep.mubr.bf16.mxu0 %v1536
  %2559 = vmatmul.mubr.bf16.gmra.mxu0 %v1535
  %v2560 = vpop.f32.mrf.mxu0
  %v2561 = vadd.f32 %v484, %v2560
  %v2562 = vpop.f32.mrf.mxu0
  %v2563 = vpop.f32.mrf.mxu0
  %v2564 = vadd.f32 %v484, %v2563
  %v2565 = vpop.f32.mrf.mxu0
  %2566 = vmatprep.mubr.bf16.mxu0 %v1545
  %2567 = vmatmul.mubr.bf16.gmra.mxu0 %v1544
  %v2568 = vpop.f32.mrf.mxu0
  %v2569 = vadd.f32 %v484, %v2568
  %v2570 = vpop.f32.mrf.mxu0
  %v2571 = vpop.f32.mrf.mxu0
  %v2572 = vadd.f32 %v484, %v2571
  %v2573 = vpop.f32.mrf.mxu0
  %2574 = vmatprep.mubr.bf16.mxu0 %v1554
  %2575 = vmatmul.mubr.bf16.gmra.mxu0 %v1553
  %v2576 = vpop.f32.mrf.mxu0
  %v2577 = vadd.f32 %v484, %v2576
  %v2578 = vpop.f32.mrf.mxu0
  %v2579 = vpop.f32.mrf.mxu0
  %v2580 = vadd.f32 %v484, %v2579
  %v2581 = vpop.f32.mrf.mxu0
  %2582 = vmatprep.mubr.bf16.mxu0 %v1563
  %2583 = vmatmul.mubr.bf16.gmra.mxu0 %v1562
  %v2584 = vpop.f32.mrf.mxu0
  %v2585 = vadd.f32 %v484, %v2584
  %v2586 = vpop.f32.mrf.mxu0
  %v2587 = vpop.f32.mrf.mxu0
  %v2588 = vadd.f32 %v484, %v2587
  %v2589 = vpop.f32.mrf.mxu0
  %2590 = vmatprep.mubr.bf16.mxu0 %v1572
  %2591 = vmatmul.mubr.bf16.gmra.mxu0 %v1571
  %v2592 = vpop.f32.mrf.mxu0
  %v2593 = vadd.f32 %v484, %v2592
  %v2594 = vpop.f32.mrf.mxu0
  %v2595 = vpop.f32.mrf.mxu0
  %v2596 = vadd.f32 %v484, %v2595
  %v2597 = vpop.f32.mrf.mxu0
  %2598 = vmatprep.mubr.bf16.mxu0 %v1581
  %2599 = vmatmul.mubr.bf16.gmra.mxu0 %v1580
  %v2600 = vpop.f32.mrf.mxu0
  %v2601 = vadd.f32 %v484, %v2600
  %v2602 = vpop.f32.mrf.mxu0
  %v2603 = vpop.f32.mrf.mxu0
  %v2604 = vadd.f32 %v484, %v2603
  %v2605 = vpop.f32.mrf.mxu0
  %2606 = vmatprep.mubr.bf16.mxu0 %v1590
  %2607 = vmatmul.mubr.bf16.gmra.mxu0 %v1589
  %v2608 = vpop.f32.mrf.mxu0
  %v2609 = vadd.f32 %v484, %v2608
  %v2610 = vpop.f32.mrf.mxu0
  %v2611 = vpop.f32.mrf.mxu0
  %v2612 = vadd.f32 %v484, %v2611
  %v2613 = vpop.f32.mrf.mxu0
  %2614 = vmatprep.mubr.bf16.mxu0 %v1599
  %2615 = vmatmul.mubr.bf16.gmra.mxu0 %v1598
  %v2616 = vpop.f32.mrf.mxu0
  %v2617 = vadd.f32 %v484, %v2616
  %v2618 = vpop.f32.mrf.mxu0
  %v2619 = vpop.f32.mrf.mxu0
  %v2620 = vadd.f32 %v484, %v2619
  %v2621 = vpop.f32.mrf.mxu0
  %2622 = vmatprep.mubr.bf16.mxu0 %v1608
  %2623 = vmatmul.mubr.bf16.gmra.mxu0 %v1607
  %v2624 = vpop.f32.mrf.mxu0
  %v2625 = vadd.f32 %v484, %v2624
  %v2626 = vpop.f32.mrf.mxu0
  %v2627 = vpop.f32.mrf.mxu0
  %v2628 = vadd.f32 %v484, %v2627
  %v2629 = vpop.f32.mrf.mxu0
  %2630 = vmatprep.mubr.bf16.mxu0 %v1617
  %2631 = vmatmul.mubr.bf16.gmra.mxu0 %v1616
  %v2632 = vpop.f32.mrf.mxu0
  %v2633 = vadd.f32 %v484, %v2632
  %v2634 = vpop.f32.mrf.mxu0
  %v2635 = vpop.f32.mrf.mxu0
  %v2636 = vadd.f32 %v484, %v2635
  %v2637 = vpop.f32.mrf.mxu0
  %2638 = vmatprep.mubr.bf16.mxu0 %v1626
  %2639 = vmatmul.mubr.bf16.gmra.mxu0 %v1625
  %v2640 = vpop.f32.mrf.mxu0
  %v2641 = vadd.f32 %v484, %v2640
  %v2642 = vpop.f32.mrf.mxu0
  %v2643 = vpop.f32.mrf.mxu0
  %v2644 = vadd.f32 %v484, %v2643
  %v2645 = vpop.f32.mrf.mxu0
  %2646 = vmatprep.mubr.bf16.mxu0 %v1635
  %2647 = vmatmul.mubr.bf16.gmra.mxu0 %v1634
  %v2648 = vpop.f32.mrf.mxu0
  %v2649 = vadd.f32 %v484, %v2648
  %v2650 = vpop.f32.mrf.mxu0
  %v2651 = vpop.f32.mrf.mxu0
  %v2652 = vadd.f32 %v484, %v2651
  %v2653 = vpop.f32.mrf.mxu0
  %2654 = vmatprep.mubr.bf16.mxu0 %v1644
  %2655 = vmatmul.mubr.bf16.gmra.mxu0 %v1643
  %v2656 = vpop.f32.mrf.mxu0
  %v2657 = vadd.f32 %v484, %v2656
  %v2658 = vpop.f32.mrf.mxu0
  %v2659 = vpop.f32.mrf.mxu0
  %v2660 = vadd.f32 %v484, %v2659
  %v2661 = vpop.f32.mrf.mxu0
  %2662 = vmatprep.mubr.bf16.mxu0 %v1653
  %2663 = vmatmul.mubr.bf16.gmra.mxu0 %v1652
  %v2664 = vpop.f32.mrf.mxu0
  %v2665 = vadd.f32 %v484, %v2664
  %v2666 = vpop.f32.mrf.mxu0
  %v2667 = vpop.f32.mrf.mxu0
  %v2668 = vadd.f32 %v484, %v2667
  %v2669 = vpop.f32.mrf.mxu0
  %2670 = vmatprep.mubr.bf16.mxu0 %v1662
  %2671 = vmatmul.mubr.bf16.gmra.mxu0 %v1661
  %v2672 = vpop.f32.mrf.mxu0
  %v2673 = vadd.f32 %v484, %v2672
  %v2674 = vpop.f32.mrf.mxu0
  %v2675 = vpop.f32.mrf.mxu0
  %v2676 = vadd.f32 %v484, %v2675
  %v2677 = vpop.f32.mrf.mxu0
  %2678 = vdwg.mxu0
  %2679 = vmatprep.subr.bf16.mxu0 0
  %2680 = vmatpush1.bf16.msra.mxu0 %v2269
  %2681 = vmatprep.subr.bf16.mxu0 0
  %2682 = vmatpush1.bf16.msra.mxu0 %v2268
  %2683 = vmatprep.subr.bf16.mxu0 0
  %2684 = vmatpush1.bf16.msra.mxu0 %v2267
  %2685 = vmatprep.subr.bf16.mxu0 0
  %2686 = vmatpush1.bf16.msra.mxu0 %v2266
  %2687 = vmatprep.subr.bf16.mxu0 0
  %2688 = vmatpush1.bf16.msra.mxu0 %v2265
  %2689 = vmatprep.subr.bf16.mxu0 0
  %2690 = vmatpush1.bf16.msra.mxu0 %v2264
  %2691 = vmatprep.subr.bf16.mxu0 0
  %2692 = vmatpush1.bf16.msra.mxu0 %v2263
  %2693 = vmatprep.subr.bf16.mxu0 0
  %2694 = vmatpush1.bf16.msra.mxu0 %v2262
  %2695 = vmatprep.subr.bf16.mxu0 0
  %2696 = vmatpush2.bf16.msra.mxu0 %v2277
  %2697 = vmatprep.subr.bf16.mxu0 0
  %2698 = vmatpush2.bf16.msra.mxu0 %v2276
  %2699 = vmatprep.subr.bf16.mxu0 0
  %2700 = vmatpush2.bf16.msra.mxu0 %v2275
  %2701 = vmatprep.subr.bf16.mxu0 0
  %2702 = vmatpush2.bf16.msra.mxu0 %v2274
  %2703 = vmatprep.subr.bf16.mxu0 0
  %2704 = vmatpush2.bf16.msra.mxu0 %v2273
  %2705 = vmatprep.subr.bf16.mxu0 0
  %2706 = vmatpush2.bf16.msra.mxu0 %v2272
  %2707 = vmatprep.subr.bf16.mxu0 0
  %2708 = vmatpush2.bf16.msra.mxu0 %v2271
  %2709 = vmatprep.subr.bf16.mxu0 0
  %2710 = vmatpush2.bf16.msra.mxu0 %v2270
  %2711 = vmatprep.mubr.bf16.mxu0 %v1385
  %2712 = vmatmul.mubr.bf16.gmra.mxu0 %v1384
  %v2713 = vpop.f32.mrf.mxu0
  %v2714 = vadd.f32 %v2425, %v2713
  %v2715 = vpop.f32.mrf.mxu0
  %v2716 = vpop.f32.mrf.mxu0
  %v2717 = vadd.f32 %v2428, %v2716
  %v2718 = vpop.f32.mrf.mxu0
  %2719 = vmatprep.mubr.bf16.mxu0 %v1394
  %2720 = vmatmul.mubr.bf16.gmra.mxu0 %v1393
  %v2721 = vpop.f32.mrf.mxu0
  %v2722 = vadd.f32 %v2433, %v2721
  %v2723 = vpop.f32.mrf.mxu0
  %v2724 = vpop.f32.mrf.mxu0
  %v2725 = vadd.f32 %v2436, %v2724
  %v2726 = vpop.f32.mrf.mxu0
  %2727 = vmatprep.mubr.bf16.mxu0 %v1403
  %2728 = vmatmul.mubr.bf16.gmra.mxu0 %v1402
  %v2729 = vpop.f32.mrf.mxu0
  %v2730 = vadd.f32 %v2441, %v2729
  %v2731 = vpop.f32.mrf.mxu0
  %v2732 = vpop.f32.mrf.mxu0
  %v2733 = vadd.f32 %v2444, %v2732
  %v2734 = vpop.f32.mrf.mxu0
  %2735 = vmatprep.mubr.bf16.mxu0 %v1412
  %2736 = vmatmul.mubr.bf16.gmra.mxu0 %v1411
  %v2737 = vpop.f32.mrf.mxu0
  %v2738 = vadd.f32 %v2449, %v2737
  %v2739 = vpop.f32.mrf.mxu0
  %v2740 = vpop.f32.mrf.mxu0
  %v2741 = vadd.f32 %v2452, %v2740
  %v2742 = vpop.f32.mrf.mxu0
  %2743 = vmatprep.mubr.bf16.mxu0 %v1421
  %2744 = vmatmul.mubr.bf16.gmra.mxu0 %v1420
  %v2745 = vpop.f32.mrf.mxu0
  %v2746 = vadd.f32 %v2457, %v2745
  %v2747 = vpop.f32.mrf.mxu0
  %v2748 = vpop.f32.mrf.mxu0
  %v2749 = vadd.f32 %v2460, %v2748
  %v2750 = vpop.f32.mrf.mxu0
  %2751 = vmatprep.mubr.bf16.mxu0 %v1430
  %2752 = vmatmul.mubr.bf16.gmra.mxu0 %v1429
  %v2753 = vpop.f32.mrf.mxu0
  %v2754 = vadd.f32 %v2465, %v2753
  %v2755 = vpop.f32.mrf.mxu0
  %v2756 = vpop.f32.mrf.mxu0
  %v2757 = vadd.f32 %v2468, %v2756
  %v2758 = vpop.f32.mrf.mxu0
  %2759 = vmatprep.mubr.bf16.mxu0 %v1439
  %2760 = vmatmul.mubr.bf16.gmra.mxu0 %v1438
  %v2761 = vpop.f32.mrf.mxu0
  %v2762 = vadd.f32 %v2473, %v2761
  %v2763 = vpop.f32.mrf.mxu0
  %v2764 = vpop.f32.mrf.mxu0
  %v2765 = vadd.f32 %v2476, %v2764
  %v2766 = vpop.f32.mrf.mxu0
  %2767 = vmatprep.mubr.bf16.mxu0 %v1448
  %2768 = vmatmul.mubr.bf16.gmra.mxu0 %v1447
  %v2769 = vpop.f32.mrf.mxu0
  %v2770 = vadd.f32 %v2481, %v2769
  %v2771 = vpop.f32.mrf.mxu0
  %v2772 = vpop.f32.mrf.mxu0
  %v2773 = vadd.f32 %v2484, %v2772
  %v2774 = vpop.f32.mrf.mxu0
  %2775 = vmatprep.mubr.bf16.mxu0 %v1457
  %2776 = vmatmul.mubr.bf16.gmra.mxu0 %v1456
  %v2777 = vpop.f32.mrf.mxu0
  %v2778 = vadd.f32 %v2489, %v2777
  %v2779 = vpop.f32.mrf.mxu0
  %v2780 = vpop.f32.mrf.mxu0
  %v2781 = vadd.f32 %v2492, %v2780
  %v2782 = vpop.f32.mrf.mxu0
  %2783 = vmatprep.mubr.bf16.mxu0 %v1466
  %2784 = vmatmul.mubr.bf16.gmra.mxu0 %v1465
  %v2785 = vpop.f32.mrf.mxu0
  %v2786 = vadd.f32 %v2497, %v2785
  %v2787 = vpop.f32.mrf.mxu0
  %v2788 = vpop.f32.mrf.mxu0
  %v2789 = vadd.f32 %v2500, %v2788
  %v2790 = vpop.f32.mrf.mxu0
  %2791 = vmatprep.mubr.bf16.mxu0 %v1475
  %2792 = vmatmul.mubr.bf16.gmra.mxu0 %v1474
  %v2793 = vpop.f32.mrf.mxu0
  %v2794 = vadd.f32 %v2505, %v2793
  %v2795 = vpop.f32.mrf.mxu0
  %v2796 = vpop.f32.mrf.mxu0
  %v2797 = vadd.f32 %v2508, %v2796
  %v2798 = vpop.f32.mrf.mxu0
  %2799 = vmatprep.mubr.bf16.mxu0 %v1484
  %2800 = vmatmul.mubr.bf16.gmra.mxu0 %v1483
  %v2801 = vpop.f32.mrf.mxu0
  %v2802 = vadd.f32 %v2513, %v2801
  %v2803 = vpop.f32.mrf.mxu0
  %v2804 = vpop.f32.mrf.mxu0
  %v2805 = vadd.f32 %v2516, %v2804
  %v2806 = vpop.f32.mrf.mxu0
  %2807 = vmatprep.mubr.bf16.mxu0 %v1493
  %2808 = vmatmul.mubr.bf16.gmra.mxu0 %v1492
  %v2809 = vpop.f32.mrf.mxu0
  %v2810 = vadd.f32 %v2521, %v2809
  %v2811 = vpop.f32.mrf.mxu0
  %v2812 = vpop.f32.mrf.mxu0
  %v2813 = vadd.f32 %v2524, %v2812
  %v2814 = vpop.f32.mrf.mxu0
  %2815 = vmatprep.mubr.bf16.mxu0 %v1502
  %2816 = vmatmul.mubr.bf16.gmra.mxu0 %v1501
  %v2817 = vpop.f32.mrf.mxu0
  %v2818 = vadd.f32 %v2529, %v2817
  %v2819 = vpop.f32.mrf.mxu0
  %v2820 = vpop.f32.mrf.mxu0
  %v2821 = vadd.f32 %v2532, %v2820
  %v2822 = vpop.f32.mrf.mxu0
  %2823 = vmatprep.mubr.bf16.mxu0 %v1511
  %2824 = vmatmul.mubr.bf16.gmra.mxu0 %v1510
  %v2825 = vpop.f32.mrf.mxu0
  %v2826 = vadd.f32 %v2537, %v2825
  %v2827 = vpop.f32.mrf.mxu0
  %v2828 = vpop.f32.mrf.mxu0
  %v2829 = vadd.f32 %v2540, %v2828
  %v2830 = vpop.f32.mrf.mxu0
  %2831 = vmatprep.mubr.bf16.mxu0 %v1520
  %2832 = vmatmul.mubr.bf16.gmra.mxu0 %v1519
  %v2833 = vpop.f32.mrf.mxu0
  %v2834 = vadd.f32 %v2545, %v2833
  %v2835 = vpop.f32.mrf.mxu0
  %v2836 = vpop.f32.mrf.mxu0
  %v2837 = vadd.f32 %v2548, %v2836
  %v2838 = vpop.f32.mrf.mxu0
  %2839 = vmatprep.mubr.bf16.mxu0 %v1529
  %2840 = vmatmul.mubr.bf16.gmra.mxu0 %v1528
  %v2841 = vpop.f32.mrf.mxu0
  %v2842 = vadd.f32 %v2553, %v2841
  %v2843 = vpop.f32.mrf.mxu0
  %v2844 = vpop.f32.mrf.mxu0
  %v2845 = vadd.f32 %v2556, %v2844
  %v2846 = vpop.f32.mrf.mxu0
  %2847 = vmatprep.mubr.bf16.mxu0 %v1538
  %2848 = vmatmul.mubr.bf16.gmra.mxu0 %v1537
  %v2849 = vpop.f32.mrf.mxu0
  %v2850 = vadd.f32 %v2561, %v2849
  %v2851 = vpop.f32.mrf.mxu0
  %v2852 = vpop.f32.mrf.mxu0
  %v2853 = vadd.f32 %v2564, %v2852
  %v2854 = vpop.f32.mrf.mxu0
  %2855 = vmatprep.mubr.bf16.mxu0 %v1547
  %2856 = vmatmul.mubr.bf16.gmra.mxu0 %v1546
  %v2857 = vpop.f32.mrf.mxu0
  %v2858 = vadd.f32 %v2569, %v2857
  %v2859 = vpop.f32.mrf.mxu0
  %v2860 = vpop.f32.mrf.mxu0
  %v2861 = vadd.f32 %v2572, %v2860
  %v2862 = vpop.f32.mrf.mxu0
  %2863 = vmatprep.mubr.bf16.mxu0 %v1556
  %2864 = vmatmul.mubr.bf16.gmra.mxu0 %v1555
  %v2865 = vpop.f32.mrf.mxu0
  %v2866 = vadd.f32 %v2577, %v2865
  %v2867 = vpop.f32.mrf.mxu0
  %v2868 = vpop.f32.mrf.mxu0
  %v2869 = vadd.f32 %v2580, %v2868
  %v2870 = vpop.f32.mrf.mxu0
  %2871 = vmatprep.mubr.bf16.mxu0 %v1565
  %2872 = vmatmul.mubr.bf16.gmra.mxu0 %v1564
  %v2873 = vpop.f32.mrf.mxu0
  %v2874 = vadd.f32 %v2585, %v2873
  %v2875 = vpop.f32.mrf.mxu0
  %v2876 = vpop.f32.mrf.mxu0
  %v2877 = vadd.f32 %v2588, %v2876
  %v2878 = vpop.f32.mrf.mxu0
  %2879 = vmatprep.mubr.bf16.mxu0 %v1574
  %2880 = vmatmul.mubr.bf16.gmra.mxu0 %v1573
  %v2881 = vpop.f32.mrf.mxu0
  %v2882 = vadd.f32 %v2593, %v2881
  %v2883 = vpop.f32.mrf.mxu0
  %v2884 = vpop.f32.mrf.mxu0
  %v2885 = vadd.f32 %v2596, %v2884
  %v2886 = vpop.f32.mrf.mxu0
  %2887 = vmatprep.mubr.bf16.mxu0 %v1583
  %2888 = vmatmul.mubr.bf16.gmra.mxu0 %v1582
  %v2889 = vpop.f32.mrf.mxu0
  %v2890 = vadd.f32 %v2601, %v2889
  %v2891 = vpop.f32.mrf.mxu0
  %v2892 = vpop.f32.mrf.mxu0
  %v2893 = vadd.f32 %v2604, %v2892
  %v2894 = vpop.f32.mrf.mxu0
  %2895 = vmatprep.mubr.bf16.mxu0 %v1592
  %2896 = vmatmul.mubr.bf16.gmra.mxu0 %v1591
  %v2897 = vpop.f32.mrf.mxu0
  %v2898 = vadd.f32 %v2609, %v2897
  %v2899 = vpop.f32.mrf.mxu0
  %v2900 = vpop.f32.mrf.mxu0
  %v2901 = vadd.f32 %v2612, %v2900
  %v2902 = vpop.f32.mrf.mxu0
  %2903 = vmatprep.mubr.bf16.mxu0 %v1601
  %2904 = vmatmul.mubr.bf16.gmra.mxu0 %v1600
  %v2905 = vpop.f32.mrf.mxu0
  %v2906 = vadd.f32 %v2617, %v2905
  %v2907 = vpop.f32.mrf.mxu0
  %v2908 = vpop.f32.mrf.mxu0
  %v2909 = vadd.f32 %v2620, %v2908
  %v2910 = vpop.f32.mrf.mxu0
  %2911 = vmatprep.mubr.bf16.mxu0 %v1610
  %2912 = vmatmul.mubr.bf16.gmra.mxu0 %v1609
  %v2913 = vpop.f32.mrf.mxu0
  %v2914 = vadd.f32 %v2625, %v2913
  %v2915 = vpop.f32.mrf.mxu0
  %v2916 = vpop.f32.mrf.mxu0
  %v2917 = vadd.f32 %v2628, %v2916
  %v2918 = vpop.f32.mrf.mxu0
  %2919 = vmatprep.mubr.bf16.mxu0 %v1619
  %2920 = vmatmul.mubr.bf16.gmra.mxu0 %v1618
  %v2921 = vpop.f32.mrf.mxu0
  %v2922 = vadd.f32 %v2633, %v2921
  %v2923 = vpop.f32.mrf.mxu0
  %v2924 = vpop.f32.mrf.mxu0
  %v2925 = vadd.f32 %v2636, %v2924
  %v2926 = vpop.f32.mrf.mxu0
  %2927 = vmatprep.mubr.bf16.mxu0 %v1628
  %2928 = vmatmul.mubr.bf16.gmra.mxu0 %v1627
  %v2929 = vpop.f32.mrf.mxu0
  %v2930 = vadd.f32 %v2641, %v2929
  %v2931 = vpop.f32.mrf.mxu0
  %v2932 = vpop.f32.mrf.mxu0
  %v2933 = vadd.f32 %v2644, %v2932
  %v2934 = vpop.f32.mrf.mxu0
  %2935 = vmatprep.mubr.bf16.mxu0 %v1637
  %2936 = vmatmul.mubr.bf16.gmra.mxu0 %v1636
  %v2937 = vpop.f32.mrf.mxu0
  %v2938 = vadd.f32 %v2649, %v2937
  %v2939 = vpop.f32.mrf.mxu0
  %v2940 = vpop.f32.mrf.mxu0
  %v2941 = vadd.f32 %v2652, %v2940
  %v2942 = vpop.f32.mrf.mxu0
  %2943 = vmatprep.mubr.bf16.mxu0 %v1646
  %2944 = vmatmul.mubr.bf16.gmra.mxu0 %v1645
  %v2945 = vpop.f32.mrf.mxu0
  %v2946 = vadd.f32 %v2657, %v2945
  %v2947 = vpop.f32.mrf.mxu0
  %v2948 = vpop.f32.mrf.mxu0
  %v2949 = vadd.f32 %v2660, %v2948
  %v2950 = vpop.f32.mrf.mxu0
  %2951 = vmatprep.mubr.bf16.mxu0 %v1655
  %2952 = vmatmul.mubr.bf16.gmra.mxu0 %v1654
  %v2953 = vpop.f32.mrf.mxu0
  %v2954 = vadd.f32 %v2665, %v2953
  %v2955 = vpop.f32.mrf.mxu0
  %v2956 = vpop.f32.mrf.mxu0
  %v2957 = vadd.f32 %v2668, %v2956
  %v2958 = vpop.f32.mrf.mxu0
  %2959 = vmatprep.mubr.bf16.mxu0 %v1664
  %2960 = vmatmul.mubr.bf16.gmra.mxu0 %v1663
  %v2961 = vpop.f32.mrf.mxu0
  %v2962 = vadd.f32 %v2673, %v2961
  %v2963 = vpop.f32.mrf.mxu0
  %v2964 = vpop.f32.mrf.mxu0
  %v2965 = vadd.f32 %v2676, %v2964
  %v2966 = vpop.f32.mrf.mxu0
  %2967 = vdwg.mxu0
  %2968 = vmatprep.subr.bf16.mxu0 0
  %2969 = vmatpush1.bf16.msra.mxu0 %v2285
  %2970 = vmatprep.subr.bf16.mxu0 0
  %2971 = vmatpush1.bf16.msra.mxu0 %v2284
  %2972 = vmatprep.subr.bf16.mxu0 0
  %2973 = vmatpush1.bf16.msra.mxu0 %v2283
  %2974 = vmatprep.subr.bf16.mxu0 0
  %2975 = vmatpush1.bf16.msra.mxu0 %v2282
  %2976 = vmatprep.subr.bf16.mxu0 0
  %2977 = vmatpush1.bf16.msra.mxu0 %v2281
  %2978 = vmatprep.subr.bf16.mxu0 0
  %2979 = vmatpush1.bf16.msra.mxu0 %v2280
  %2980 = vmatprep.subr.bf16.mxu0 0
  %2981 = vmatpush1.bf16.msra.mxu0 %v2279
  %2982 = vmatprep.subr.bf16.mxu0 0
  %2983 = vmatpush1.bf16.msra.mxu0 %v2278
  %2984 = vmatprep.subr.bf16.mxu0 0
  %2985 = vmatpush2.bf16.msra.mxu0 %v2293
  %2986 = vmatprep.subr.bf16.mxu0 0
  %2987 = vmatpush2.bf16.msra.mxu0 %v2292
  %2988 = vmatprep.subr.bf16.mxu0 0
  %2989 = vmatpush2.bf16.msra.mxu0 %v2291
  %2990 = vmatprep.subr.bf16.mxu0 0
  %2991 = vmatpush2.bf16.msra.mxu0 %v2290
  %2992 = vmatprep.subr.bf16.mxu0 0
  %2993 = vmatpush2.bf16.msra.mxu0 %v2289
  %2994 = vmatprep.subr.bf16.mxu0 0
  %2995 = vmatpush2.bf16.msra.mxu0 %v2288
  %2996 = vmatprep.subr.bf16.mxu0 0
  %2997 = vmatpush2.bf16.msra.mxu0 %v2287
  %2998 = vmatprep.subr.bf16.mxu0 0
  %2999 = vmatpush2.bf16.msra.mxu0 %v2286
  %3000 = vmatprep.mubr.bf16.mxu0 %v1387
  %3001 = vmatmul.mubr.bf16.gmra.mxu0 %v1386
  %v3002 = vpop.f32.mrf.mxu0
  %v3003 = vadd.f32 %v2714, %v3002
  %v3004 = vpop.f32.mrf.mxu0
  %v3005 = vpop.f32.mrf.mxu0
  %v3006 = vadd.f32 %v2717, %v3005
  %v3007 = vpop.f32.mrf.mxu0
  %3008 = vmatprep.mubr.bf16.mxu0 %v1396
  %3009 = vmatmul.mubr.bf16.gmra.mxu0 %v1395
  %v3010 = vpop.f32.mrf.mxu0
  %v3011 = vadd.f32 %v2722, %v3010
  %v3012 = vpop.f32.mrf.mxu0
  %v3013 = vpop.f32.mrf.mxu0
  %v3014 = vadd.f32 %v2725, %v3013
  %v3015 = vpop.f32.mrf.mxu0
  %3016 = vmatprep.mubr.bf16.mxu0 %v1405
  %3017 = vmatmul.mubr.bf16.gmra.mxu0 %v1404
  %v3018 = vpop.f32.mrf.mxu0
  %v3019 = vadd.f32 %v2730, %v3018
  %v3020 = vpop.f32.mrf.mxu0
  %v3021 = vpop.f32.mrf.mxu0
  %v3022 = vadd.f32 %v2733, %v3021
  %v3023 = vpop.f32.mrf.mxu0
  %3024 = vmatprep.mubr.bf16.mxu0 %v1414
  %3025 = vmatmul.mubr.bf16.gmra.mxu0 %v1413
  %v3026 = vpop.f32.mrf.mxu0
  %v3027 = vadd.f32 %v2738, %v3026
  %v3028 = vpop.f32.mrf.mxu0
  %v3029 = vpop.f32.mrf.mxu0
  %v3030 = vadd.f32 %v2741, %v3029
  %v3031 = vpop.f32.mrf.mxu0
  %3032 = vmatprep.mubr.bf16.mxu0 %v1423
  %3033 = vmatmul.mubr.bf16.gmra.mxu0 %v1422
  %v3034 = vpop.f32.mrf.mxu0
  %v3035 = vadd.f32 %v2746, %v3034
  %v3036 = vpop.f32.mrf.mxu0
  %v3037 = vpop.f32.mrf.mxu0
  %v3038 = vadd.f32 %v2749, %v3037
  %v3039 = vpop.f32.mrf.mxu0
  %3040 = vmatprep.mubr.bf16.mxu0 %v1432
  %3041 = vmatmul.mubr.bf16.gmra.mxu0 %v1431
  %v3042 = vpop.f32.mrf.mxu0
  %v3043 = vadd.f32 %v2754, %v3042
  %v3044 = vpop.f32.mrf.mxu0
  %v3045 = vpop.f32.mrf.mxu0
  %v3046 = vadd.f32 %v2757, %v3045
  %v3047 = vpop.f32.mrf.mxu0
  %3048 = vmatprep.mubr.bf16.mxu0 %v1441
  %3049 = vmatmul.mubr.bf16.gmra.mxu0 %v1440
  %v3050 = vpop.f32.mrf.mxu0
  %v3051 = vadd.f32 %v2762, %v3050
  %v3052 = vpop.f32.mrf.mxu0
  %v3053 = vpop.f32.mrf.mxu0
  %v3054 = vadd.f32 %v2765, %v3053
  %v3055 = vpop.f32.mrf.mxu0
  %3056 = vmatprep.mubr.bf16.mxu0 %v1450
  %3057 = vmatmul.mubr.bf16.gmra.mxu0 %v1449
  %v3058 = vpop.f32.mrf.mxu0
  %v3059 = vadd.f32 %v2770, %v3058
  %v3060 = vpop.f32.mrf.mxu0
  %v3061 = vpop.f32.mrf.mxu0
  %v3062 = vadd.f32 %v2773, %v3061
  %v3063 = vpop.f32.mrf.mxu0
  %3064 = vmatprep.mubr.bf16.mxu0 %v1459
  %3065 = vmatmul.mubr.bf16.gmra.mxu0 %v1458
  %v3066 = vpop.f32.mrf.mxu0
  %v3067 = vadd.f32 %v2778, %v3066
  %v3068 = vpop.f32.mrf.mxu0
  %v3069 = vpop.f32.mrf.mxu0
  %v3070 = vadd.f32 %v2781, %v3069
  %v3071 = vpop.f32.mrf.mxu0
  %3072 = vmatprep.mubr.bf16.mxu0 %v1468
  %3073 = vmatmul.mubr.bf16.gmra.mxu0 %v1467
  %v3074 = vpop.f32.mrf.mxu0
  %v3075 = vadd.f32 %v2786, %v3074
  %v3076 = vpop.f32.mrf.mxu0
  %v3077 = vpop.f32.mrf.mxu0
  %v3078 = vadd.f32 %v2789, %v3077
  %v3079 = vpop.f32.mrf.mxu0
  %3080 = vmatprep.mubr.bf16.mxu0 %v1477
  %3081 = vmatmul.mubr.bf16.gmra.mxu0 %v1476
  %v3082 = vpop.f32.mrf.mxu0
  %v3083 = vadd.f32 %v2794, %v3082
  %v3084 = vpop.f32.mrf.mxu0
  %v3085 = vpop.f32.mrf.mxu0
  %v3086 = vadd.f32 %v2797, %v3085
  %v3087 = vpop.f32.mrf.mxu0
  %3088 = vmatprep.mubr.bf16.mxu0 %v1486
  %3089 = vmatmul.mubr.bf16.gmra.mxu0 %v1485
  %v3090 = vpop.f32.mrf.mxu0
  %v3091 = vadd.f32 %v2802, %v3090
  %v3092 = vpop.f32.mrf.mxu0
  %v3093 = vpop.f32.mrf.mxu0
  %v3094 = vadd.f32 %v2805, %v3093
  %v3095 = vpop.f32.mrf.mxu0
  %3096 = vmatprep.mubr.bf16.mxu0 %v1495
  %3097 = vmatmul.mubr.bf16.gmra.mxu0 %v1494
  %v3098 = vpop.f32.mrf.mxu0
  %v3099 = vadd.f32 %v2810, %v3098
  %v3100 = vpop.f32.mrf.mxu0
  %v3101 = vpop.f32.mrf.mxu0
  %v3102 = vadd.f32 %v2813, %v3101
  %v3103 = vpop.f32.mrf.mxu0
  %3104 = vmatprep.mubr.bf16.mxu0 %v1504
  %3105 = vmatmul.mubr.bf16.gmra.mxu0 %v1503
  %v3106 = vpop.f32.mrf.mxu0
  %v3107 = vadd.f32 %v2818, %v3106
  %v3108 = vpop.f32.mrf.mxu0
  %v3109 = vpop.f32.mrf.mxu0
  %v3110 = vadd.f32 %v2821, %v3109
  %v3111 = vpop.f32.mrf.mxu0
  %3112 = vmatprep.mubr.bf16.mxu0 %v1513
  %3113 = vmatmul.mubr.bf16.gmra.mxu0 %v1512
  %v3114 = vpop.f32.mrf.mxu0
  %v3115 = vadd.f32 %v2826, %v3114
  %v3116 = vpop.f32.mrf.mxu0
  %v3117 = vpop.f32.mrf.mxu0
  %v3118 = vadd.f32 %v2829, %v3117
  %v3119 = vpop.f32.mrf.mxu0
  %3120 = vmatprep.mubr.bf16.mxu0 %v1522
  %3121 = vmatmul.mubr.bf16.gmra.mxu0 %v1521
  %v3122 = vpop.f32.mrf.mxu0
  %v3123 = vadd.f32 %v2834, %v3122
  %v3124 = vpop.f32.mrf.mxu0
  %v3125 = vpop.f32.mrf.mxu0
  %v3126 = vadd.f32 %v2837, %v3125
  %v3127 = vpop.f32.mrf.mxu0
  %3128 = vmatprep.mubr.bf16.mxu0 %v1531
  %3129 = vmatmul.mubr.bf16.gmra.mxu0 %v1530
  %v3130 = vpop.f32.mrf.mxu0
  %v3131 = vadd.f32 %v2842, %v3130
  %v3132 = vpop.f32.mrf.mxu0
  %v3133 = vpop.f32.mrf.mxu0
  %v3134 = vadd.f32 %v2845, %v3133
  %v3135 = vpop.f32.mrf.mxu0
  %3136 = vmatprep.mubr.bf16.mxu0 %v1540
  %3137 = vmatmul.mubr.bf16.gmra.mxu0 %v1539
  %v3138 = vpop.f32.mrf.mxu0
  %v3139 = vadd.f32 %v2850, %v3138
  %v3140 = vpop.f32.mrf.mxu0
  %v3141 = vpop.f32.mrf.mxu0
  %v3142 = vadd.f32 %v2853, %v3141
  %v3143 = vpop.f32.mrf.mxu0
  %3144 = vmatprep.mubr.bf16.mxu0 %v1549
  %3145 = vmatmul.mubr.bf16.gmra.mxu0 %v1548
  %v3146 = vpop.f32.mrf.mxu0
  %v3147 = vadd.f32 %v2858, %v3146
  %v3148 = vpop.f32.mrf.mxu0
  %v3149 = vpop.f32.mrf.mxu0
  %v3150 = vadd.f32 %v2861, %v3149
  %v3151 = vpop.f32.mrf.mxu0
  %3152 = vmatprep.mubr.bf16.mxu0 %v1558
  %3153 = vmatmul.mubr.bf16.gmra.mxu0 %v1557
  %v3154 = vpop.f32.mrf.mxu0
  %v3155 = vadd.f32 %v2866, %v3154
  %v3156 = vpop.f32.mrf.mxu0
  %v3157 = vpop.f32.mrf.mxu0
  %v3158 = vadd.f32 %v2869, %v3157
  %v3159 = vpop.f32.mrf.mxu0
  %3160 = vmatprep.mubr.bf16.mxu0 %v1567
  %3161 = vmatmul.mubr.bf16.gmra.mxu0 %v1566
  %v3162 = vpop.f32.mrf.mxu0
  %v3163 = vadd.f32 %v2874, %v3162
  %v3164 = vpop.f32.mrf.mxu0
  %v3165 = vpop.f32.mrf.mxu0
  %v3166 = vadd.f32 %v2877, %v3165
  %v3167 = vpop.f32.mrf.mxu0
  %3168 = vmatprep.mubr.bf16.mxu0 %v1576
  %3169 = vmatmul.mubr.bf16.gmra.mxu0 %v1575
  %v3170 = vpop.f32.mrf.mxu0
  %v3171 = vadd.f32 %v2882, %v3170
  %v3172 = vpop.f32.mrf.mxu0
  %v3173 = vpop.f32.mrf.mxu0
  %v3174 = vadd.f32 %v2885, %v3173
  %v3175 = vpop.f32.mrf.mxu0
  %3176 = vmatprep.mubr.bf16.mxu0 %v1585
  %3177 = vmatmul.mubr.bf16.gmra.mxu0 %v1584
  %v3178 = vpop.f32.mrf.mxu0
  %v3179 = vadd.f32 %v2890, %v3178
  %v3180 = vpop.f32.mrf.mxu0
  %v3181 = vpop.f32.mrf.mxu0
  %v3182 = vadd.f32 %v2893, %v3181
  %v3183 = vpop.f32.mrf.mxu0
  %3184 = vmatprep.mubr.bf16.mxu0 %v1594
  %3185 = vmatmul.mubr.bf16.gmra.mxu0 %v1593
  %v3186 = vpop.f32.mrf.mxu0
  %v3187 = vadd.f32 %v2898, %v3186
  %v3188 = vpop.f32.mrf.mxu0
  %v3189 = vpop.f32.mrf.mxu0
  %v3190 = vadd.f32 %v2901, %v3189
  %v3191 = vpop.f32.mrf.mxu0
  %3192 = vmatprep.mubr.bf16.mxu0 %v1603
  %3193 = vmatmul.mubr.bf16.gmra.mxu0 %v1602
  %v3194 = vpop.f32.mrf.mxu0
  %v3195 = vadd.f32 %v2906, %v3194
  %v3196 = vpop.f32.mrf.mxu0
  %v3197 = vpop.f32.mrf.mxu0
  %v3198 = vadd.f32 %v2909, %v3197
  %v3199 = vpop.f32.mrf.mxu0
  %3200 = vmatprep.mubr.bf16.mxu0 %v1612
  %3201 = vmatmul.mubr.bf16.gmra.mxu0 %v1611
  %v3202 = vpop.f32.mrf.mxu0
  %v3203 = vadd.f32 %v2914, %v3202
  %v3204 = vpop.f32.mrf.mxu0
  %v3205 = vpop.f32.mrf.mxu0
  %v3206 = vadd.f32 %v2917, %v3205
  %v3207 = vpop.f32.mrf.mxu0
  %3208 = vmatprep.mubr.bf16.mxu0 %v1621
  %3209 = vmatmul.mubr.bf16.gmra.mxu0 %v1620
  %v3210 = vpop.f32.mrf.mxu0
  %v3211 = vadd.f32 %v2922, %v3210
  %v3212 = vpop.f32.mrf.mxu0
  %v3213 = vpop.f32.mrf.mxu0
  %v3214 = vadd.f32 %v2925, %v3213
  %v3215 = vpop.f32.mrf.mxu0
  %3216 = vmatprep.mubr.bf16.mxu0 %v1630
  %3217 = vmatmul.mubr.bf16.gmra.mxu0 %v1629
  %v3218 = vpop.f32.mrf.mxu0
  %v3219 = vadd.f32 %v2930, %v3218
  %v3220 = vpop.f32.mrf.mxu0
  %v3221 = vpop.f32.mrf.mxu0
  %v3222 = vadd.f32 %v2933, %v3221
  %v3223 = vpop.f32.mrf.mxu0
  %3224 = vmatprep.mubr.bf16.mxu0 %v1639
  %3225 = vmatmul.mubr.bf16.gmra.mxu0 %v1638
  %v3226 = vpop.f32.mrf.mxu0
  %v3227 = vadd.f32 %v2938, %v3226
  %v3228 = vpop.f32.mrf.mxu0
  %v3229 = vpop.f32.mrf.mxu0
  %v3230 = vadd.f32 %v2941, %v3229
  %v3231 = vpop.f32.mrf.mxu0
  %3232 = vmatprep.mubr.bf16.mxu0 %v1648
  %3233 = vmatmul.mubr.bf16.gmra.mxu0 %v1647
  %v3234 = vpop.f32.mrf.mxu0
  %v3235 = vadd.f32 %v2946, %v3234
  %v3236 = vpop.f32.mrf.mxu0
  %v3237 = vpop.f32.mrf.mxu0
  %v3238 = vadd.f32 %v2949, %v3237
  %v3239 = vpop.f32.mrf.mxu0
  %3240 = vmatprep.mubr.bf16.mxu0 %v1657
  %3241 = vmatmul.mubr.bf16.gmra.mxu0 %v1656
  %v3242 = vpop.f32.mrf.mxu0
  %v3243 = vadd.f32 %v2954, %v3242
  %v3244 = vpop.f32.mrf.mxu0
  %v3245 = vpop.f32.mrf.mxu0
  %v3246 = vadd.f32 %v2957, %v3245
  %v3247 = vpop.f32.mrf.mxu0
  %3248 = vmatprep.mubr.bf16.mxu0 %v1666
  %3249 = vmatmul.mubr.bf16.gmra.mxu0 %v1665
  %v3250 = vpop.f32.mrf.mxu0
  %v3251 = vadd.f32 %v2962, %v3250
  %v3252 = vpop.f32.mrf.mxu0
  %v3253 = vpop.f32.mrf.mxu0
  %v3254 = vadd.f32 %v2965, %v3253
  %v3255 = vpop.f32.mrf.mxu0
  %3256 = vdwg.mxu0
  %3257 = vmatprep.subr.bf16.mxu0 0
  %3258 = vmatpush1.bf16.msra.mxu0 %v2301
  %3259 = vmatprep.subr.bf16.mxu0 0
  %3260 = vmatpush1.bf16.msra.mxu0 %v2300
  %3261 = vmatprep.subr.bf16.mxu0 0
  %3262 = vmatpush1.bf16.msra.mxu0 %v2299
  %3263 = vmatprep.subr.bf16.mxu0 0
  %3264 = vmatpush1.bf16.msra.mxu0 %v2298
  %3265 = vmatprep.subr.bf16.mxu0 0
  %3266 = vmatpush1.bf16.msra.mxu0 %v2297
  %3267 = vmatprep.subr.bf16.mxu0 0
  %3268 = vmatpush1.bf16.msra.mxu0 %v2296
  %3269 = vmatprep.subr.bf16.mxu0 0
  %3270 = vmatpush1.bf16.msra.mxu0 %v2295
  %3271 = vmatprep.subr.bf16.mxu0 0
  %3272 = vmatpush1.bf16.msra.mxu0 %v2294
  %3273 = vmatprep.subr.bf16.mxu0 0
  %3274 = vmatpush2.bf16.msra.mxu0 %v2309
  %3275 = vmatprep.subr.bf16.mxu0 0
  %3276 = vmatpush2.bf16.msra.mxu0 %v2308
  %3277 = vmatprep.subr.bf16.mxu0 0
  %3278 = vmatpush2.bf16.msra.mxu0 %v2307
  %3279 = vmatprep.subr.bf16.mxu0 0
  %3280 = vmatpush2.bf16.msra.mxu0 %v2306
  %3281 = vmatprep.subr.bf16.mxu0 0
  %3282 = vmatpush2.bf16.msra.mxu0 %v2305
  %3283 = vmatprep.subr.bf16.mxu0 0
  %3284 = vmatpush2.bf16.msra.mxu0 %v2304
  %3285 = vmatprep.subr.bf16.mxu0 0
  %3286 = vmatpush2.bf16.msra.mxu0 %v2303
  %3287 = vmatprep.subr.bf16.mxu0 0
  %3288 = vmatpush2.bf16.msra.mxu0 %v2302
  %3289 = vmatprep.mubr.bf16.mxu0 %v1389
  %3290 = vmatmul.mubr.bf16.gmra.mxu0 %v1388
  %v3291 = vpop.f32.mrf.mxu0
  %v3292 = vadd.f32 %v3003, %v3291
  %v3293 = vpop.f32.mrf.mxu0
  %v3294 = vpop.f32.mrf.mxu0
  %v3295 = vadd.f32 %v3006, %v3294
  %v3296 = vpop.f32.mrf.mxu0
  %3297 = vmatprep.mubr.bf16.mxu0 %v1398
  %3298 = vmatmul.mubr.bf16.gmra.mxu0 %v1397
  %v3299 = vpop.f32.mrf.mxu0
  %v3300 = vadd.f32 %v3011, %v3299
  %v3301 = vpop.f32.mrf.mxu0
  %v3302 = vpop.f32.mrf.mxu0
  %v3303 = vadd.f32 %v3014, %v3302
  %v3304 = vpop.f32.mrf.mxu0
  %3305 = vmatprep.mubr.bf16.mxu0 %v1407
  %3306 = vmatmul.mubr.bf16.gmra.mxu0 %v1406
  %v3307 = vpop.f32.mrf.mxu0
  %v3308 = vadd.f32 %v3019, %v3307
  %v3309 = vpop.f32.mrf.mxu0
  %v3310 = vpop.f32.mrf.mxu0
  %v3311 = vadd.f32 %v3022, %v3310
  %v3312 = vpop.f32.mrf.mxu0
  %3313 = vmatprep.mubr.bf16.mxu0 %v1416
  %3314 = vmatmul.mubr.bf16.gmra.mxu0 %v1415
  %v3315 = vpop.f32.mrf.mxu0
  %v3316 = vadd.f32 %v3027, %v3315
  %v3317 = vpop.f32.mrf.mxu0
  %v3318 = vpop.f32.mrf.mxu0
  %v3319 = vadd.f32 %v3030, %v3318
  %v3320 = vpop.f32.mrf.mxu0
  %3321 = vmatprep.mubr.bf16.mxu0 %v1425
  %3322 = vmatmul.mubr.bf16.gmra.mxu0 %v1424
  %v3323 = vpop.f32.mrf.mxu0
  %v3324 = vadd.f32 %v3035, %v3323
  %v3325 = vpop.f32.mrf.mxu0
  %v3326 = vpop.f32.mrf.mxu0
  %v3327 = vadd.f32 %v3038, %v3326
  %v3328 = vpop.f32.mrf.mxu0
  %3329 = vmatprep.mubr.bf16.mxu0 %v1434
  %3330 = vmatmul.mubr.bf16.gmra.mxu0 %v1433
  %v3331 = vpop.f32.mrf.mxu0
  %v3332 = vadd.f32 %v3043, %v3331
  %v3333 = vpop.f32.mrf.mxu0
  %v3334 = vpop.f32.mrf.mxu0
  %v3335 = vadd.f32 %v3046, %v3334
  %v3336 = vpop.f32.mrf.mxu0
  %3337 = vmatprep.mubr.bf16.mxu0 %v1443
  %3338 = vmatmul.mubr.bf16.gmra.mxu0 %v1442
  %v3339 = vpop.f32.mrf.mxu0
  %v3340 = vadd.f32 %v3051, %v3339
  %v3341 = vpop.f32.mrf.mxu0
  %v3342 = vpop.f32.mrf.mxu0
  %v3343 = vadd.f32 %v3054, %v3342
  %v3344 = vpop.f32.mrf.mxu0
  %3345 = vmatprep.mubr.bf16.mxu0 %v1452
  %3346 = vmatmul.mubr.bf16.gmra.mxu0 %v1451
  %v3347 = vpop.f32.mrf.mxu0
  %v3348 = vadd.f32 %v3059, %v3347
  %v3349 = vpop.f32.mrf.mxu0
  %v3350 = vpop.f32.mrf.mxu0
  %v3351 = vadd.f32 %v3062, %v3350
  %v3352 = vpop.f32.mrf.mxu0
  %3353 = vmatprep.mubr.bf16.mxu0 %v1461
  %3354 = vmatmul.mubr.bf16.gmra.mxu0 %v1460
  %v3355 = vpop.f32.mrf.mxu0
  %v3356 = vadd.f32 %v3067, %v3355
  %v3357 = vpop.f32.mrf.mxu0
  %v3358 = vpop.f32.mrf.mxu0
  %v3359 = vadd.f32 %v3070, %v3358
  %v3360 = vpop.f32.mrf.mxu0
  %3361 = vmatprep.mubr.bf16.mxu0 %v1470
  %3362 = vmatmul.mubr.bf16.gmra.mxu0 %v1469
  %v3363 = vpop.f32.mrf.mxu0
  %v3364 = vadd.f32 %v3075, %v3363
  %v3365 = vpop.f32.mrf.mxu0
  %v3366 = vpop.f32.mrf.mxu0
  %v3367 = vadd.f32 %v3078, %v3366
  %v3368 = vpop.f32.mrf.mxu0
  %3369 = vmatprep.mubr.bf16.mxu0 %v1479
  %3370 = vmatmul.mubr.bf16.gmra.mxu0 %v1478
  %v3371 = vpop.f32.mrf.mxu0
  %v3372 = vadd.f32 %v3083, %v3371
  %v3373 = vpop.f32.mrf.mxu0
  %v3374 = vpop.f32.mrf.mxu0
  %v3375 = vadd.f32 %v3086, %v3374
  %v3376 = vpop.f32.mrf.mxu0
  %3377 = vmatprep.mubr.bf16.mxu0 %v1488
  %3378 = vmatmul.mubr.bf16.gmra.mxu0 %v1487
  %v3379 = vpop.f32.mrf.mxu0
  %v3380 = vadd.f32 %v3091, %v3379
  %v3381 = vpop.f32.mrf.mxu0
  %v3382 = vpop.f32.mrf.mxu0
  %v3383 = vadd.f32 %v3094, %v3382
  %v3384 = vpop.f32.mrf.mxu0
  %3385 = vmatprep.mubr.bf16.mxu0 %v1497
  %3386 = vmatmul.mubr.bf16.gmra.mxu0 %v1496
  %v3387 = vpop.f32.mrf.mxu0
  %v3388 = vadd.f32 %v3099, %v3387
  %v3389 = vpop.f32.mrf.mxu0
  %v3390 = vpop.f32.mrf.mxu0
  %v3391 = vadd.f32 %v3102, %v3390
  %v3392 = vpop.f32.mrf.mxu0
  %3393 = vmatprep.mubr.bf16.mxu0 %v1506
  %3394 = vmatmul.mubr.bf16.gmra.mxu0 %v1505
  %v3395 = vpop.f32.mrf.mxu0
  %v3396 = vadd.f32 %v3107, %v3395
  %v3397 = vpop.f32.mrf.mxu0
  %v3398 = vpop.f32.mrf.mxu0
  %v3399 = vadd.f32 %v3110, %v3398
  %v3400 = vpop.f32.mrf.mxu0
  %3401 = vmatprep.mubr.bf16.mxu0 %v1515
  %3402 = vmatmul.mubr.bf16.gmra.mxu0 %v1514
  %v3403 = vpop.f32.mrf.mxu0
  %v3404 = vadd.f32 %v3115, %v3403
  %v3405 = vpop.f32.mrf.mxu0
  %v3406 = vpop.f32.mrf.mxu0
  %v3407 = vadd.f32 %v3118, %v3406
  %v3408 = vpop.f32.mrf.mxu0
  %3409 = vmatprep.mubr.bf16.mxu0 %v1524
  %3410 = vmatmul.mubr.bf16.gmra.mxu0 %v1523
  %v3411 = vpop.f32.mrf.mxu0
  %v3412 = vadd.f32 %v3123, %v3411
  %v3413 = vpop.f32.mrf.mxu0
  %v3414 = vpop.f32.mrf.mxu0
  %v3415 = vadd.f32 %v3126, %v3414
  %v3416 = vpop.f32.mrf.mxu0
  %3417 = vmatprep.mubr.bf16.mxu0 %v1533
  %3418 = vmatmul.mubr.bf16.gmra.mxu0 %v1532
  %v3419 = vpop.f32.mrf.mxu0
  %v3420 = vadd.f32 %v3131, %v3419
  %v3421 = vpop.f32.mrf.mxu0
  %v3422 = vpop.f32.mrf.mxu0
  %v3423 = vadd.f32 %v3134, %v3422
  %v3424 = vpop.f32.mrf.mxu0
  %3425 = vmatprep.mubr.bf16.mxu0 %v1542
  %3426 = vmatmul.mubr.bf16.gmra.mxu0 %v1541
  %v3427 = vpop.f32.mrf.mxu0
  %v3428 = vadd.f32 %v3139, %v3427
  %v3429 = vpop.f32.mrf.mxu0
  %v3430 = vpop.f32.mrf.mxu0
  %v3431 = vadd.f32 %v3142, %v3430
  %v3432 = vpop.f32.mrf.mxu0
  %3433 = vmatprep.mubr.bf16.mxu0 %v1551
  %3434 = vmatmul.mubr.bf16.gmra.mxu0 %v1550
  %v3435 = vpop.f32.mrf.mxu0
  %v3436 = vadd.f32 %v3147, %v3435
  %v3437 = vpop.f32.mrf.mxu0
  %v3438 = vpop.f32.mrf.mxu0
  %v3439 = vadd.f32 %v3150, %v3438
  %v3440 = vpop.f32.mrf.mxu0
  %3441 = vmatprep.mubr.bf16.mxu0 %v1560
  %3442 = vmatmul.mubr.bf16.gmra.mxu0 %v1559
  %v3443 = vpop.f32.mrf.mxu0
  %v3444 = vadd.f32 %v3155, %v3443
  %v3445 = vpop.f32.mrf.mxu0
  %v3446 = vpop.f32.mrf.mxu0
  %v3447 = vadd.f32 %v3158, %v3446
  %v3448 = vpop.f32.mrf.mxu0
  %3449 = vmatprep.mubr.bf16.mxu0 %v1569
  %3450 = vmatmul.mubr.bf16.gmra.mxu0 %v1568
  %v3451 = vpop.f32.mrf.mxu0
  %v3452 = vadd.f32 %v3163, %v3451
  %v3453 = vpop.f32.mrf.mxu0
  %v3454 = vpop.f32.mrf.mxu0
  %v3455 = vadd.f32 %v3166, %v3454
  %v3456 = vpop.f32.mrf.mxu0
  %3457 = vmatprep.mubr.bf16.mxu0 %v1578
  %3458 = vmatmul.mubr.bf16.gmra.mxu0 %v1577
  %v3459 = vpop.f32.mrf.mxu0
  %v3460 = vadd.f32 %v3171, %v3459
  %v3461 = vpop.f32.mrf.mxu0
  %v3462 = vpop.f32.mrf.mxu0
  %v3463 = vadd.f32 %v3174, %v3462
  %v3464 = vpop.f32.mrf.mxu0
  %3465 = vmatprep.mubr.bf16.mxu0 %v1587
  %3466 = vmatmul.mubr.bf16.gmra.mxu0 %v1586
  %v3467 = vpop.f32.mrf.mxu0
  %v3468 = vadd.f32 %v3179, %v3467
  %v3469 = vpop.f32.mrf.mxu0
  %v3470 = vpop.f32.mrf.mxu0
  %v3471 = vadd.f32 %v3182, %v3470
  %v3472 = vpop.f32.mrf.mxu0
  %3473 = vmatprep.mubr.bf16.mxu0 %v1596
  %3474 = vmatmul.mubr.bf16.gmra.mxu0 %v1595
  %v3475 = vpop.f32.mrf.mxu0
  %v3476 = vadd.f32 %v3187, %v3475
  %v3477 = vpop.f32.mrf.mxu0
  %v3478 = vpop.f32.mrf.mxu0
  %v3479 = vadd.f32 %v3190, %v3478
  %v3480 = vpop.f32.mrf.mxu0
  %3481 = vmatprep.mubr.bf16.mxu0 %v1605
  %3482 = vmatmul.mubr.bf16.gmra.mxu0 %v1604
  %v3483 = vpop.f32.mrf.mxu0
  %v3484 = vadd.f32 %v3195, %v3483
  %v3485 = vpop.f32.mrf.mxu0
  %v3486 = vpop.f32.mrf.mxu0
  %v3487 = vadd.f32 %v3198, %v3486
  %v3488 = vpop.f32.mrf.mxu0
  %3489 = vmatprep.mubr.bf16.mxu0 %v1614
  %3490 = vmatmul.mubr.bf16.gmra.mxu0 %v1613
  %v3491 = vpop.f32.mrf.mxu0
  %v3492 = vadd.f32 %v3203, %v3491
  %v3493 = vpop.f32.mrf.mxu0
  %v3494 = vpop.f32.mrf.mxu0
  %v3495 = vadd.f32 %v3206, %v3494
  %v3496 = vpop.f32.mrf.mxu0
  %3497 = vmatprep.mubr.bf16.mxu0 %v1623
  %3498 = vmatmul.mubr.bf16.gmra.mxu0 %v1622
  %v3499 = vpop.f32.mrf.mxu0
  %v3500 = vadd.f32 %v3211, %v3499
  %v3501 = vpop.f32.mrf.mxu0
  %v3502 = vpop.f32.mrf.mxu0
  %v3503 = vadd.f32 %v3214, %v3502
  %v3504 = vpop.f32.mrf.mxu0
  %3505 = vmatprep.mubr.bf16.mxu0 %v1632
  %3506 = vmatmul.mubr.bf16.gmra.mxu0 %v1631
  %v3507 = vpop.f32.mrf.mxu0
  %v3508 = vadd.f32 %v3219, %v3507
  %v3509 = vpop.f32.mrf.mxu0
  %v3510 = vpop.f32.mrf.mxu0
  %v3511 = vadd.f32 %v3222, %v3510
  %v3512 = vpop.f32.mrf.mxu0
  %3513 = vmatprep.mubr.bf16.mxu0 %v1641
  %3514 = vmatmul.mubr.bf16.gmra.mxu0 %v1640
  %v3515 = vpop.f32.mrf.mxu0
  %v3516 = vadd.f32 %v3227, %v3515
  %v3517 = vpop.f32.mrf.mxu0
  %v3518 = vpop.f32.mrf.mxu0
  %v3519 = vadd.f32 %v3230, %v3518
  %v3520 = vpop.f32.mrf.mxu0
  %3521 = vmatprep.mubr.bf16.mxu0 %v1650
  %3522 = vmatmul.mubr.bf16.gmra.mxu0 %v1649
  %v3523 = vpop.f32.mrf.mxu0
  %v3524 = vadd.f32 %v3235, %v3523
  %v3525 = vpop.f32.mrf.mxu0
  %v3526 = vpop.f32.mrf.mxu0
  %v3527 = vadd.f32 %v3238, %v3526
  %v3528 = vpop.f32.mrf.mxu0
  %3529 = vmatprep.mubr.bf16.mxu0 %v1659
  %3530 = vmatmul.mubr.bf16.gmra.mxu0 %v1658
  %v3531 = vpop.f32.mrf.mxu0
  %v3532 = vadd.f32 %v3243, %v3531
  %v3533 = vpop.f32.mrf.mxu0
  %v3534 = vpop.f32.mrf.mxu0
  %v3535 = vadd.f32 %v3246, %v3534
  %v3536 = vpop.f32.mrf.mxu0
  %3537 = vmatprep.mubr.bf16.mxu0 %v1668
  %3538 = vmatmul.mubr.bf16.gmra.mxu0 %v1667
  %v3539 = vpop.f32.mrf.mxu0
  %v3540 = vadd.f32 %v3251, %v3539
  %v3541 = vpop.f32.mrf.mxu0
  %v3542 = vpop.f32.mrf.mxu0
  %v3543 = vadd.f32 %v3254, %v3542
  %v3544 = vpop.f32.mrf.mxu0
  %3545 = vdwg.mxu0
  %3546 = vmatprep.subr.bf16.mxu0 0
  %3547 = vmatpush1.bf16.msra.mxu0 %v2317
  %3548 = vmatprep.subr.bf16.mxu0 0
  %3549 = vmatpush1.bf16.msra.mxu0 %v2316
  %3550 = vmatprep.subr.bf16.mxu0 0
  %3551 = vmatpush1.bf16.msra.mxu0 %v2315
  %3552 = vmatprep.subr.bf16.mxu0 0
  %3553 = vmatpush1.bf16.msra.mxu0 %v2314
  %3554 = vmatprep.subr.bf16.mxu0 0
  %3555 = vmatpush1.bf16.msra.mxu0 %v2313
  %3556 = vmatprep.subr.bf16.mxu0 0
  %3557 = vmatpush1.bf16.msra.mxu0 %v2312
  %3558 = vmatprep.subr.bf16.mxu0 0
  %3559 = vmatpush1.bf16.msra.mxu0 %v2311
  %3560 = vmatprep.subr.bf16.mxu0 0
  %3561 = vmatpush1.bf16.msra.mxu0 %v2310
  %3562 = vmatprep.subr.bf16.mxu0 0
  %3563 = vmatpush2.bf16.msra.mxu0 0
  %3564 = vmatprep.subr.bf16.mxu0 0
  %3565 = vmatpush2.bf16.msra.mxu0 0
  %3566 = vmatprep.subr.bf16.mxu0 0
  %3567 = vmatpush2.bf16.msra.mxu0 0
  %3568 = vmatprep.subr.bf16.mxu0 0
  %3569 = vmatpush2.bf16.msra.mxu0 0
  %3570 = vmatprep.subr.bf16.mxu0 0
  %3571 = vmatpush2.bf16.msra.mxu0 0
  %3572 = vmatprep.subr.bf16.mxu0 0
  %3573 = vmatpush2.bf16.msra.mxu0 0
  %3574 = vmatprep.subr.bf16.mxu0 0
  %3575 = vmatpush2.bf16.msra.mxu0 0
  %3576 = vmatprep.subr.bf16.mxu0 0
  %3577 = vmatpush2.bf16.msra.mxu0 0
  %3578 = vmatprep.mubr.bf16.mxu0 0
  %3579 = vmatmul.mubr.bf16.gmra.mxu0 %v1390
  %v3580 = vpop.f32.mrf.mxu0
  %v3581 = vadd.f32 %v3292, %v3580
  %v3582 = vpop.f32.mrf.mxu0
  %v3583 = vpop.f32.mrf.mxu0
  %v3584 = vadd.f32 %v3295, %v3583
  %v3585 = vpop.f32.mrf.mxu0
  %3586 = vmatprep.mubr.bf16.mxu0 0
  %3587 = vmatmul.mubr.bf16.gmra.mxu0 %v1399
  %v3588 = vpop.f32.mrf.mxu0
  %v3589 = vadd.f32 %v3300, %v3588
  %v3590 = vpop.f32.mrf.mxu0
  %v3591 = vpop.f32.mrf.mxu0
  %v3592 = vadd.f32 %v3303, %v3591
  %v3593 = vpop.f32.mrf.mxu0
  %3594 = vmatprep.mubr.bf16.mxu0 0
  %3595 = vmatmul.mubr.bf16.gmra.mxu0 %v1408
  %v3596 = vpop.f32.mrf.mxu0
  %v3597 = vadd.f32 %v3308, %v3596
  %v3598 = vpop.f32.mrf.mxu0
  %v3599 = vpop.f32.mrf.mxu0
  %v3600 = vadd.f32 %v3311, %v3599
  %v3601 = vpop.f32.mrf.mxu0
  %3602 = vmatprep.mubr.bf16.mxu0 0
  %3603 = vmatmul.mubr.bf16.gmra.mxu0 %v1417
  %v3604 = vpop.f32.mrf.mxu0
  %v3605 = vadd.f32 %v3316, %v3604
  %v3606 = vpop.f32.mrf.mxu0
  %v3607 = vpop.f32.mrf.mxu0
  %v3608 = vadd.f32 %v3319, %v3607
  %v3609 = vpop.f32.mrf.mxu0
  %3610 = vmatprep.mubr.bf16.mxu0 0
  %3611 = vmatmul.mubr.bf16.gmra.mxu0 %v1426
  %v3612 = vpop.f32.mrf.mxu0
  %v3613 = vadd.f32 %v3324, %v3612
  %v3614 = vpop.f32.mrf.mxu0
  %v3615 = vpop.f32.mrf.mxu0
  %v3616 = vadd.f32 %v3327, %v3615
  %v3617 = vpop.f32.mrf.mxu0
  %3618 = vmatprep.mubr.bf16.mxu0 0
  %3619 = vmatmul.mubr.bf16.gmra.mxu0 %v1435
  %v3620 = vpop.f32.mrf.mxu0
  %v3621 = vadd.f32 %v3332, %v3620
  %v3622 = vpop.f32.mrf.mxu0
  %v3623 = vpop.f32.mrf.mxu0
  %v3624 = vadd.f32 %v3335, %v3623
  %v3625 = vpop.f32.mrf.mxu0
  %3626 = vmatprep.mubr.bf16.mxu0 0
  %3627 = vmatmul.mubr.bf16.gmra.mxu0 %v1444
  %v3628 = vpop.f32.mrf.mxu0
  %v3629 = vadd.f32 %v3340, %v3628
  %v3630 = vpop.f32.mrf.mxu0
  %v3631 = vpop.f32.mrf.mxu0
  %v3632 = vadd.f32 %v3343, %v3631
  %v3633 = vpop.f32.mrf.mxu0
  %3634 = vmatprep.mubr.bf16.mxu0 0
  %3635 = vmatmul.mubr.bf16.gmra.mxu0 %v1453
  %v3636 = vpop.f32.mrf.mxu0
  %v3637 = vadd.f32 %v3348, %v3636
  %v3638 = vpop.f32.mrf.mxu0
  %v3639 = vpop.f32.mrf.mxu0
  %v3640 = vadd.f32 %v3351, %v3639
  %v3641 = vpop.f32.mrf.mxu0
  %3642 = vmatprep.mubr.bf16.mxu0 0
  %3643 = vmatmul.mubr.bf16.gmra.mxu0 %v1462
  %v3644 = vpop.f32.mrf.mxu0
  %v3645 = vadd.f32 %v3356, %v3644
  %v3646 = vpop.f32.mrf.mxu0
  %v3647 = vpop.f32.mrf.mxu0
  %v3648 = vadd.f32 %v3359, %v3647
  %v3649 = vpop.f32.mrf.mxu0
  %3650 = vmatprep.mubr.bf16.mxu0 0
  %3651 = vmatmul.mubr.bf16.gmra.mxu0 %v1471
  %v3652 = vpop.f32.mrf.mxu0
  %v3653 = vadd.f32 %v3364, %v3652
  %v3654 = vpop.f32.mrf.mxu0
  %v3655 = vpop.f32.mrf.mxu0
  %v3656 = vadd.f32 %v3367, %v3655
  %v3657 = vpop.f32.mrf.mxu0
  %3658 = vmatprep.mubr.bf16.mxu0 0
  %3659 = vmatmul.mubr.bf16.gmra.mxu0 %v1480
  %v3660 = vpop.f32.mrf.mxu0
  %v3661 = vadd.f32 %v3372, %v3660
  %v3662 = vpop.f32.mrf.mxu0
  %v3663 = vpop.f32.mrf.mxu0
  %v3664 = vadd.f32 %v3375, %v3663
  %v3665 = vpop.f32.mrf.mxu0
  %3666 = vmatprep.mubr.bf16.mxu0 0
  %3667 = vmatmul.mubr.bf16.gmra.mxu0 %v1489
  %v3668 = vpop.f32.mrf.mxu0
  %v3669 = vadd.f32 %v3380, %v3668
  %v3670 = vpop.f32.mrf.mxu0
  %v3671 = vpop.f32.mrf.mxu0
  %v3672 = vadd.f32 %v3383, %v3671
  %v3673 = vpop.f32.mrf.mxu0
  %3674 = vmatprep.mubr.bf16.mxu0 0
  %3675 = vmatmul.mubr.bf16.gmra.mxu0 %v1498
  %v3676 = vpop.f32.mrf.mxu0
  %v3677 = vadd.f32 %v3388, %v3676
  %v3678 = vpop.f32.mrf.mxu0
  %v3679 = vpop.f32.mrf.mxu0
  %v3680 = vadd.f32 %v3391, %v3679
  %v3681 = vpop.f32.mrf.mxu0
  %3682 = vmatprep.mubr.bf16.mxu0 0
  %3683 = vmatmul.mubr.bf16.gmra.mxu0 %v1507
  %v3684 = vpop.f32.mrf.mxu0
  %v3685 = vadd.f32 %v3396, %v3684
  %v3686 = vpop.f32.mrf.mxu0
  %v3687 = vpop.f32.mrf.mxu0
  %v3688 = vadd.f32 %v3399, %v3687
  %v3689 = vpop.f32.mrf.mxu0
  %3690 = vmatprep.mubr.bf16.mxu0 0
  %3691 = vmatmul.mubr.bf16.gmra.mxu0 %v1516
  %v3692 = vpop.f32.mrf.mxu0
  %v3693 = vadd.f32 %v3404, %v3692
  %v3694 = vpop.f32.mrf.mxu0
  %v3695 = vpop.f32.mrf.mxu0
  %v3696 = vadd.f32 %v3407, %v3695
  %v3697 = vpop.f32.mrf.mxu0
  %3698 = vmatprep.mubr.bf16.mxu0 0
  %3699 = vmatmul.mubr.bf16.gmra.mxu0 %v1525
  %v3700 = vpop.f32.mrf.mxu0
  %v3701 = vadd.f32 %v3412, %v3700
  %v3702 = vpop.f32.mrf.mxu0
  %v3703 = vpop.f32.mrf.mxu0
  %v3704 = vadd.f32 %v3415, %v3703
  %v3705 = vpop.f32.mrf.mxu0
  %3706 = vmatprep.mubr.bf16.mxu0 0
  %3707 = vmatmul.mubr.bf16.gmra.mxu0 %v1534
  %v3708 = vpop.f32.mrf.mxu0
  %v3709 = vadd.f32 %v3420, %v3708
  %v3710 = vpop.f32.mrf.mxu0
  %v3711 = vpop.f32.mrf.mxu0
  %v3712 = vadd.f32 %v3423, %v3711
  %v3713 = vpop.f32.mrf.mxu0
  %3714 = vmatprep.mubr.bf16.mxu0 0
  %3715 = vmatmul.mubr.bf16.gmra.mxu0 %v1543
  %v3716 = vpop.f32.mrf.mxu0
  %v3717 = vadd.f32 %v3428, %v3716
  %v3718 = vpop.f32.mrf.mxu0
  %v3719 = vpop.f32.mrf.mxu0
  %v3720 = vadd.f32 %v3431, %v3719
  %v3721 = vpop.f32.mrf.mxu0
  %3722 = vmatprep.mubr.bf16.mxu0 0
  %3723 = vmatmul.mubr.bf16.gmra.mxu0 %v1552
  %v3724 = vpop.f32.mrf.mxu0
  %v3725 = vadd.f32 %v3436, %v3724
  %v3726 = vpop.f32.mrf.mxu0
  %v3727 = vpop.f32.mrf.mxu0
  %v3728 = vadd.f32 %v3439, %v3727
  %v3729 = vpop.f32.mrf.mxu0
  %3730 = vmatprep.mubr.bf16.mxu0 0
  %3731 = vmatmul.mubr.bf16.gmra.mxu0 %v1561
  %v3732 = vpop.f32.mrf.mxu0
  %v3733 = vadd.f32 %v3444, %v3732
  %v3734 = vpop.f32.mrf.mxu0
  %v3735 = vpop.f32.mrf.mxu0
  %v3736 = vadd.f32 %v3447, %v3735
  %v3737 = vpop.f32.mrf.mxu0
  %3738 = vmatprep.mubr.bf16.mxu0 0
  %3739 = vmatmul.mubr.bf16.gmra.mxu0 %v1570
  %v3740 = vpop.f32.mrf.mxu0
  %v3741 = vadd.f32 %v3452, %v3740
  %v3742 = vpop.f32.mrf.mxu0
  %v3743 = vpop.f32.mrf.mxu0
  %v3744 = vadd.f32 %v3455, %v3743
  %v3745 = vpop.f32.mrf.mxu0
  %3746 = vmatprep.mubr.bf16.mxu0 0
  %3747 = vmatmul.mubr.bf16.gmra.mxu0 %v1579
  %v3748 = vpop.f32.mrf.mxu0
  %v3749 = vadd.f32 %v3460, %v3748
  %v3750 = vpop.f32.mrf.mxu0
  %v3751 = vpop.f32.mrf.mxu0
  %v3752 = vadd.f32 %v3463, %v3751
  %v3753 = vpop.f32.mrf.mxu0
  %3754 = vmatprep.mubr.bf16.mxu0 0
  %3755 = vmatmul.mubr.bf16.gmra.mxu0 %v1588
  %v3756 = vpop.f32.mrf.mxu0
  %v3757 = vadd.f32 %v3468, %v3756
  %v3758 = vpop.f32.mrf.mxu0
  %v3759 = vpop.f32.mrf.mxu0
  %v3760 = vadd.f32 %v3471, %v3759
  %v3761 = vpop.f32.mrf.mxu0
  %3762 = vmatprep.mubr.bf16.mxu0 0
  %3763 = vmatmul.mubr.bf16.gmra.mxu0 %v1597
  %v3764 = vpop.f32.mrf.mxu0
  %v3765 = vadd.f32 %v3476, %v3764
  %v3766 = vpop.f32.mrf.mxu0
  %v3767 = vpop.f32.mrf.mxu0
  %v3768 = vadd.f32 %v3479, %v3767
  %v3769 = vpop.f32.mrf.mxu0
  %3770 = vmatprep.mubr.bf16.mxu0 0
  %3771 = vmatmul.mubr.bf16.gmra.mxu0 %v1606
  %v3772 = vpop.f32.mrf.mxu0
  %v3773 = vadd.f32 %v3484, %v3772
  %v3774 = vpop.f32.mrf.mxu0
  %v3775 = vpop.f32.mrf.mxu0
  %v3776 = vadd.f32 %v3487, %v3775
  %v3777 = vpop.f32.mrf.mxu0
  %3778 = vmatprep.mubr.bf16.mxu0 0
  %3779 = vmatmul.mubr.bf16.gmra.mxu0 %v1615
  %v3780 = vpop.f32.mrf.mxu0
  %v3781 = vadd.f32 %v3492, %v3780
  %v3782 = vpop.f32.mrf.mxu0
  %v3783 = vpop.f32.mrf.mxu0
  %v3784 = vadd.f32 %v3495, %v3783
  %v3785 = vpop.f32.mrf.mxu0
  %3786 = vmatprep.mubr.bf16.mxu0 0
  %3787 = vmatmul.mubr.bf16.gmra.mxu0 %v1624
  %v3788 = vpop.f32.mrf.mxu0
  %v3789 = vadd.f32 %v3500, %v3788
  %v3790 = vpop.f32.mrf.mxu0
  %v3791 = vpop.f32.mrf.mxu0
  %v3792 = vadd.f32 %v3503, %v3791
  %v3793 = vpop.f32.mrf.mxu0
  %3794 = vmatprep.mubr.bf16.mxu0 0
  %3795 = vmatmul.mubr.bf16.gmra.mxu0 %v1633
  %v3796 = vpop.f32.mrf.mxu0
  %v3797 = vadd.f32 %v3508, %v3796
  %v3798 = vpop.f32.mrf.mxu0
  %v3799 = vpop.f32.mrf.mxu0
  %v3800 = vadd.f32 %v3511, %v3799
  %v3801 = vpop.f32.mrf.mxu0
  %3802 = vmatprep.mubr.bf16.mxu0 0
  %3803 = vmatmul.mubr.bf16.gmra.mxu0 %v1642
  %v3804 = vpop.f32.mrf.mxu0
  %v3805 = vadd.f32 %v3516, %v3804
  %v3806 = vpop.f32.mrf.mxu0
  %v3807 = vpop.f32.mrf.mxu0
  %v3808 = vadd.f32 %v3519, %v3807
  %v3809 = vpop.f32.mrf.mxu0
  %3810 = vmatprep.mubr.bf16.mxu0 0
  %3811 = vmatmul.mubr.bf16.gmra.mxu0 %v1651
  %v3812 = vpop.f32.mrf.mxu0
  %v3813 = vadd.f32 %v3524, %v3812
  %v3814 = vpop.f32.mrf.mxu0
  %v3815 = vpop.f32.mrf.mxu0
  %v3816 = vadd.f32 %v3527, %v3815
  %v3817 = vpop.f32.mrf.mxu0
  %3818 = vmatprep.mubr.bf16.mxu0 0
  %3819 = vmatmul.mubr.bf16.gmra.mxu0 %v1660
  %v3820 = vpop.f32.mrf.mxu0
  %v3821 = vadd.f32 %v3532, %v3820
  %v3822 = vpop.f32.mrf.mxu0
  %v3823 = vpop.f32.mrf.mxu0
  %v3824 = vadd.f32 %v3535, %v3823
  %v3825 = vpop.f32.mrf.mxu0
  %3826 = vmatprep.mubr.bf16.mxu0 0
  %3827 = vmatmul.mubr.bf16.gmra.mxu0 %v1669
  %v3828 = vpop.f32.mrf.mxu0
  %v3829 = vadd.f32 %v3540, %v3828
  %v3830 = vpop.f32.mrf.mxu0
  %v3831 = vpop.f32.mrf.mxu0
  %v3832 = vadd.f32 %v3543, %v3831
  %v3833 = vpop.f32.mrf.mxu0
  %3834 = vdwg.mxu0
  %v3835 = vmax.f32 %v3581, 0.0
  %v3836 = vmax.f32 %v3584, 0.0
  %v3837 = vmax.f32 %v3589, 0.0
  %v3838 = vmax.f32 %v3592, 0.0
  %v3839 = vmax.f32 %v3597, 0.0
  %v3840 = vmax.f32 %v3600, 0.0
  %v3841 = vmax.f32 %v3605, 0.0
  %v3842 = vmax.f32 %v3608, 0.0
  %v3843 = vmax.f32 %v3613, 0.0
  %v3844 = vmax.f32 %v3616, 0.0
  %v3845 = vmax.f32 %v3621, 0.0
  %v3846 = vmax.f32 %v3624, 0.0
  %v3847 = vmax.f32 %v3629, 0.0
  %v3848 = vmax.f32 %v3632, 0.0
  %v3849 = vmax.f32 %v3637, 0.0
  %v3850 = vmax.f32 %v3640, 0.0
  %v3851 = vmax.f32 %v3645, 0.0
  %v3852 = vmax.f32 %v3648, 0.0
  %v3853 = vmax.f32 %v3653, 0.0
  %v3854 = vmax.f32 %v3656, 0.0
  %v3855 = vmax.f32 %v3661, 0.0
  %v3856 = vmax.f32 %v3664, 0.0
  %v3857 = vmax.f32 %v3669, 0.0
  %v3858 = vmax.f32 %v3672, 0.0
  %v3859 = vmax.f32 %v3677, 0.0
  %v3860 = vmax.f32 %v3680, 0.0
  %v3861 = vmax.f32 %v3685, 0.0
  %v3862 = vmax.f32 %v3688, 0.0
  %v3863 = vmax.f32 %v3693, 0.0
  %v3864 = vmax.f32 %v3696, 0.0
  %v3865 = vmax.f32 %v3701, 0.0
  %v3866 = vmax.f32 %v3704, 0.0
  %v3867 = vmax.f32 %v3709, 0.0
  %v3868 = vmax.f32 %v3712, 0.0
  %v3869 = vmax.f32 %v3717, 0.0
  %v3870 = vmax.f32 %v3720, 0.0
  %v3871 = vmax.f32 %v3725, 0.0
  %v3872 = vmax.f32 %v3728, 0.0
  %v3873 = vmax.f32 %v3733, 0.0
  %v3874 = vmax.f32 %v3736, 0.0
  %v3875 = vmax.f32 %v3741, 0.0
  %v3876 = vmax.f32 %v3744, 0.0
  %v3877 = vmax.f32 %v3749, 0.0
  %v3878 = vmax.f32 %v3752, 0.0
  %v3879 = vmax.f32 %v3757, 0.0
  %v3880 = vmax.f32 %v3760, 0.0
  %v3881 = vmax.f32 %v3765, 0.0
  %v3882 = vmax.f32 %v3768, 0.0
  %v3883 = vmax.f32 %v3773, 0.0
  %v3884 = vmax.f32 %v3776, 0.0
  %v3885 = vmax.f32 %v3781, 0.0
  %v3886 = vmax.f32 %v3784, 0.0
  %v3887 = vmax.f32 %v3789, 0.0
  %v3888 = vmax.f32 %v3792, 0.0
  %v3889 = vmax.f32 %v3797, 0.0
  %v3890 = vmax.f32 %v3800, 0.0
  %v3891 = vmax.f32 %v3805, 0.0
  %v3892 = vmax.f32 %v3808, 0.0
  %v3893 = vmax.f32 %v3813, 0.0
  %v3894 = vmax.f32 %v3816, 0.0
  %v3895 = vmax.f32 %v3821, 0.0
  %v3896 = vmax.f32 %v3824, 0.0
  %v3897 = vmax.f32 %v3829, 0.0
  %v3898 = vmax.f32 %v3832, 0.0
  %v3899 = vpack.c.bf16 %v3836, %v3835
  %v3900 = vpack.c.bf16 %v3838, %v3837
  %v3901 = vpack.c.bf16 %v3840, %v3839
  %v3902 = vpack.c.bf16 %v3842, %v3841
  %v3903 = vpack.c.bf16 %v3844, %v3843
  %v3904 = vpack.c.bf16 %v3846, %v3845
  %v3905 = vpack.c.bf16 %v3848, %v3847
  %v3906 = vpack.c.bf16 %v3850, %v3849
  %v3907 = vpack.c.bf16 %v3852, %v3851
  %v3908 = vpack.c.bf16 %v3854, %v3853
  %v3909 = vpack.c.bf16 %v3856, %v3855
  %v3910 = vpack.c.bf16 %v3858, %v3857
  %v3911 = vpack.c.bf16 %v3860, %v3859
  %v3912 = vpack.c.bf16 %v3862, %v3861
  %v3913 = vpack.c.bf16 %v3864, %v3863
  %v3914 = vpack.c.bf16 %v3866, %v3865
  %v3915 = vpack.c.bf16 %v3868, %v3867
  %v3916 = vpack.c.bf16 %v3870, %v3869
  %v3917 = vpack.c.bf16 %v3872, %v3871
  %v3918 = vpack.c.bf16 %v3874, %v3873
  %v3919 = vpack.c.bf16 %v3876, %v3875
  %v3920 = vpack.c.bf16 %v3878, %v3877
  %v3921 = vpack.c.bf16 %v3880, %v3879
  %v3922 = vpack.c.bf16 %v3882, %v3881
  %v3923 = vpack.c.bf16 %v3884, %v3883
  %v3924 = vpack.c.bf16 %v3886, %v3885
  %v3925 = vpack.c.bf16 %v3888, %v3887
  %v3926 = vpack.c.bf16 %v3890, %v3889
  %v3927 = vpack.c.bf16 %v3892, %v3891
  %v3928 = vpack.c.bf16 %v3894, %v3893
  %v3929 = vpack.c.bf16 %v3896, %v3895
  %v3930 = vpack.c.bf16 %v3898, %v3897
  %v3963 = vunpack.c.l.b16 %v3899
  %v3964 = vunpack.c.h.b16 %v3899
  %v3965 = vunpack.c.l.b16 %v3900
  %v3966 = vunpack.c.h.b16 %v3900
  %v3967 = vunpack.c.l.b16 %v3901
  %v3968 = vunpack.c.h.b16 %v3901
  %v3969 = vunpack.c.l.b16 %v3902
  %v3970 = vunpack.c.h.b16 %v3902
  %v3971 = vunpack.c.l.b16 %v3903
  %v3972 = vunpack.c.h.b16 %v3903
  %v3973 = vunpack.c.l.b16 %v3904
  %v3974 = vunpack.c.h.b16 %v3904
  %v3975 = vunpack.c.l.b16 %v3905
  %v3976 = vunpack.c.h.b16 %v3905
  %v3977 = vunpack.c.l.b16 %v3906
  %v3978 = vunpack.c.h.b16 %v3906
  %v3979 = vunpack.c.l.b16 %v3907
  %v3980 = vunpack.c.h.b16 %v3907
  %v3981 = vunpack.c.l.b16 %v3908
  %v3982 = vunpack.c.h.b16 %v3908
  %v3983 = vunpack.c.l.b16 %v3909
  %v3984 = vunpack.c.h.b16 %v3909
  %v3985 = vunpack.c.l.b16 %v3910
  %v3986 = vunpack.c.h.b16 %v3910
  %v3987 = vunpack.c.l.b16 %v3911
  %v3988 = vunpack.c.h.b16 %v3911
  %v3989 = vunpack.c.l.b16 %v3912
  %v3990 = vunpack.c.h.b16 %v3912
  %v3991 = vunpack.c.l.b16 %v3913
  %v3992 = vunpack.c.h.b16 %v3913
  %v3993 = vunpack.c.l.b16 %v3914
  %v3994 = vunpack.c.h.b16 %v3914
  %v3995 = vunpack.c.l.b16 %v3915
  %v3996 = vunpack.c.h.b16 %v3915
  %v3997 = vunpack.c.l.b16 %v3916
  %v3998 = vunpack.c.h.b16 %v3916
  %v3999 = vunpack.c.l.b16 %v3917
  %v4000 = vunpack.c.h.b16 %v3917
  %v4001 = vunpack.c.l.b16 %v3918
  %v4002 = vunpack.c.h.b16 %v3918
  %v4003 = vunpack.c.l.b16 %v3919
  %v4004 = vunpack.c.h.b16 %v3919
  %v4005 = vunpack.c.l.b16 %v3920
  %v4006 = vunpack.c.h.b16 %v3920
  %v4007 = vunpack.c.l.b16 %v3921
  %v4008 = vunpack.c.h.b16 %v3921
  %v4009 = vunpack.c.l.b16 %v3922
  %v4010 = vunpack.c.h.b16 %v3922
  %v4011 = vunpack.c.l.b16 %v3923
  %v4012 = vunpack.c.h.b16 %v3923
  %v4013 = vunpack.c.l.b16 %v3924
  %v4014 = vunpack.c.h.b16 %v3924
  %v4015 = vunpack.c.l.b16 %v3925
  %v4016 = vunpack.c.h.b16 %v3925
  %v4017 = vunpack.c.l.b16 %v3926
  %v4018 = vunpack.c.h.b16 %v3926
  %v4019 = vunpack.c.l.b16 %v3927
  %v4020 = vunpack.c.h.b16 %v3927
  %v4021 = vunpack.c.l.b16 %v3928
  %v4022 = vunpack.c.h.b16 %v3928
  %v4023 = vunpack.c.l.b16 %v3929
  %v4024 = vunpack.c.h.b16 %v3929
  %v4025 = vunpack.c.l.b16 %v3930
  %v4026 = vunpack.c.h.b16 %v3930
  %v4027 = vpack.c.b16 %v3963, %v3963
  %v4028 = vpack.c.b16 %v3964, %v3964
  %v4029 = vpack.c.b16 %v3965, %v3965
  %v4030 = vpack.c.b16 %v3966, %v3966
  %v4031 = vpack.c.b16 %v3967, %v3967
  %v4032 = vpack.c.b16 %v3968, %v3968
  %v4033 = vpack.c.b16 %v3969, %v3969
  %v4034 = vpack.c.b16 %v3970, %v3970
  %v4035 = vpack.c.b16 %v3971, %v3971
  %v4036 = vpack.c.b16 %v3972, %v3972
  %v4037 = vpack.c.b16 %v3973, %v3973
  %v4038 = vpack.c.b16 %v3974, %v3974
  %v4039 = vpack.c.b16 %v3975, %v3975
  %v4040 = vpack.c.b16 %v3976, %v3976
  %v4041 = vpack.c.b16 %v3977, %v3977
  %v4042 = vpack.c.b16 %v3978, %v3978
  %v4043 = vpack.c.b16 %v3979, %v3979
  %v4044 = vpack.c.b16 %v3980, %v3980
  %v4045 = vpack.c.b16 %v3981, %v3981
  %v4046 = vpack.c.b16 %v3982, %v3982
  %v4047 = vpack.c.b16 %v3983, %v3983
  %v4048 = vpack.c.b16 %v3984, %v3984
  %v4049 = vpack.c.b16 %v3985, %v3985
  %v4050 = vpack.c.b16 %v3986, %v3986
  %v4051 = vpack.c.b16 %v3987, %v3987
  %v4052 = vpack.c.b16 %v3988, %v3988
  %v4053 = vpack.c.b16 %v3989, %v3989
  %v4054 = vpack.c.b16 %v3990, %v3990
  %v4055 = vpack.c.b16 %v3991, %v3991
  %v4056 = vpack.c.b16 %v3992, %v3992
  %v4057 = vpack.c.b16 %v3993, %v3993
  %v4058 = vpack.c.b16 %v3994, %v3994
  %v4059 = vpack.c.b16 %v3995, %v3995
  %v4060 = vpack.c.b16 %v3996, %v3996
  %v4061 = vpack.c.b16 %v3997, %v3997
  %v4062 = vpack.c.b16 %v3998, %v3998
  %v4063 = vpack.c.b16 %v3999, %v3999
  %v4064 = vpack.c.b16 %v4000, %v4000
  %v4065 = vpack.c.b16 %v4001, %v4001
  %v4066 = vpack.c.b16 %v4002, %v4002
  %v4067 = vpack.c.b16 %v4003, %v4003
  %v4068 = vpack.c.b16 %v4004, %v4004
  %v4069 = vpack.c.b16 %v4005, %v4005
  %v4070 = vpack.c.b16 %v4006, %v4006
  %v4071 = vpack.c.b16 %v4007, %v4007
  %v4072 = vpack.c.b16 %v4008, %v4008
  %v4073 = vpack.c.b16 %v4009, %v4009
  %v4074 = vpack.c.b16 %v4010, %v4010
  %v4075 = vpack.c.b16 %v4011, %v4011
  %v4076 = vpack.c.b16 %v4012, %v4012
  %v4077 = vpack.c.b16 %v4013, %v4013
  %v4078 = vpack.c.b16 %v4014, %v4014
  %v4079 = vpack.c.b16 %v4015, %v4015
  %v4080 = vpack.c.b16 %v4016, %v4016
  %v4081 = vpack.c.b16 %v4017, %v4017
  %v4082 = vpack.c.b16 %v4018, %v4018
  %v4083 = vpack.c.b16 %v4019, %v4019
  %v4084 = vpack.c.b16 %v4020, %v4020
  %v4085 = vpack.c.b16 %v4021, %v4021
  %v4086 = vpack.c.b16 %v4022, %v4022
  %v4087 = vpack.c.b16 %v4023, %v4023
  %v4088 = vpack.c.b16 %v4024, %v4024
  %v4089 = vpack.c.b16 %v4025, %v4025
  %v4090 = vpack.c.b16 %v4026, %v4026
  %vm4155 = vcmask 519168
  %4156 = vst.msk [vmem:[%s3] sm:$0xf] %vm4155, %v4027
  %4157 = vst.msk [vmem:[%s3 + $0x4] sm:$0xf] %vm4155, %v4028
  %4158 = vst.msk [vmem:[%s3 + $0x8] sm:$0xf] %vm4155, %v4029
  %4159 = vst.msk [vmem:[%s3 + $0xc] sm:$0xf] %vm4155, %v4030
  %4160 = vst.msk [vmem:[%s3 + $0x10] sm:$0xf] %vm4155, %v4031
  %4161 = vst.msk [vmem:[%s3 + $0x14] sm:$0xf] %vm4155, %v4032
  %4162 = vst.msk [vmem:[%s3 + $0x18] sm:$0xf] %vm4155, %v4033
  %4163 = vst.msk [vmem:[%s3 + $0x1c] sm:$0xf] %vm4155, %v4034
  %4164 = vst.msk [vmem:[%s3 + $0x20] sm:$0xf] %vm4155, %v4035
  %4165 = vst.msk [vmem:[%s3 + $0x24] sm:$0xf] %vm4155, %v4036
  %4166 = vst.msk [vmem:[%s3 + $0x28] sm:$0xf] %vm4155, %v4037
  %4167 = vst.msk [vmem:[%s3 + $0x2c] sm:$0xf] %vm4155, %v4038
  %4168 = vst.msk [vmem:[%s3 + $0x30] sm:$0xf] %vm4155, %v4039
  %4169 = vst.msk [vmem:[%s3 + $0x34] sm:$0xf] %vm4155, %v4040
  %4170 = vst.msk [vmem:[%s3 + $0x38] sm:$0xf] %vm4155, %v4041
  %4171 = vst.msk [vmem:[%s3 + $0x3c] sm:$0xf] %vm4155, %v4042
  %4172 = vst.msk [vmem:[%s3 + $0x40] sm:$0xf] %vm4155, %v4043
  %4173 = vst.msk [vmem:[%s3 + $0x44] sm:$0xf] %vm4155, %v4044
  %4174 = vst.msk [vmem:[%s3 + $0x48] sm:$0xf] %vm4155, %v4045
  %4175 = vst.msk [vmem:[%s3 + $0x4c] sm:$0xf] %vm4155, %v4046
  %4176 = vst.msk [vmem:[%s3 + $0x50] sm:$0xf] %vm4155, %v4047
  %4177 = vst.msk [vmem:[%s3 + $0x54] sm:$0xf] %vm4155, %v4048
  %4178 = vst.msk [vmem:[%s3 + $0x58] sm:$0xf] %vm4155, %v4049
  %4179 = vst.msk [vmem:[%s3 + $0x5c] sm:$0xf] %vm4155, %v4050
  %4180 = vst.msk [vmem:[%s3 + $0x60] sm:$0xf] %vm4155, %v4051
  %4181 = vst.msk [vmem:[%s3 + $0x64] sm:$0xf] %vm4155, %v4052
  %4182 = vst.msk [vmem:[%s3 + $0x68] sm:$0xf] %vm4155, %v4053
  %4183 = vst.msk [vmem:[%s3 + $0x6c] sm:$0xf] %vm4155, %v4054
  %4184 = vst.msk [vmem:[%s3 + $0x70] sm:$0xf] %vm4155, %v4055
  %4185 = vst.msk [vmem:[%s3 + $0x74] sm:$0xf] %vm4155, %v4056
  %4186 = vst.msk [vmem:[%s3 + $0x78] sm:$0xf] %vm4155, %v4057
  %4187 = vst.msk [vmem:[%s3 + $0x7c] sm:$0xf] %vm4155, %v4058
  %4188 = vst.msk [vmem:[%s3 + $0x80] sm:$0xf] %vm4155, %v4059
  %4189 = vst.msk [vmem:[%s3 + $0x84] sm:$0xf] %vm4155, %v4060
  %4190 = vst.msk [vmem:[%s3 + $0x88] sm:$0xf] %vm4155, %v4061
  %4191 = vst.msk [vmem:[%s3 + $0x8c] sm:$0xf] %vm4155, %v4062
  %4192 = vst.msk [vmem:[%s3 + $0x90] sm:$0xf] %vm4155, %v4063
  %4193 = vst.msk [vmem:[%s3 + $0x94] sm:$0xf] %vm4155, %v4064
  %4194 = vst.msk [vmem:[%s3 + $0x98] sm:$0xf] %vm4155, %v4065
  %4195 = vst.msk [vmem:[%s3 + $0x9c] sm:$0xf] %vm4155, %v4066
  %4196 = vst.msk [vmem:[%s3 + $0xa0] sm:$0xf] %vm4155, %v4067
  %4197 = vst.msk [vmem:[%s3 + $0xa4] sm:$0xf] %vm4155, %v4068
  %4198 = vst.msk [vmem:[%s3 + $0xa8] sm:$0xf] %vm4155, %v4069
  %4199 = vst.msk [vmem:[%s3 + $0xac] sm:$0xf] %vm4155, %v4070
  %4200 = vst.msk [vmem:[%s3 + $0xb0] sm:$0xf] %vm4155, %v4071
  %4201 = vst.msk [vmem:[%s3 + $0xb4] sm:$0xf] %vm4155, %v4072
  %4202 = vst.msk [vmem:[%s3 + $0xb8] sm:$0xf] %vm4155, %v4073
  %4203 = vst.msk [vmem:[%s3 + $0xbc] sm:$0xf] %vm4155, %v4074
  %4204 = vst.msk [vmem:[%s3 + $0xc0] sm:$0xf] %vm4155, %v4075
  %4205 = vst.msk [vmem:[%s3 + $0xc4] sm:$0xf] %vm4155, %v4076
  %4206 = vst.msk [vmem:[%s3 + $0xc8] sm:$0xf] %vm4155, %v4077
  %4207 = vst.msk [vmem:[%s3 + $0xcc] sm:$0xf] %vm4155, %v4078
  %4208 = vst.msk [vmem:[%s3 + $0xd0] sm:$0xf] %vm4155, %v4079
  %4209 = vst.msk [vmem:[%s3 + $0xd4] sm:$0xf] %vm4155, %v4080
  %4210 = vst.msk [vmem:[%s3 + $0xd8] sm:$0xf] %vm4155, %v4081
  %4211 = vst.msk [vmem:[%s3 + $0xdc] sm:$0xf] %vm4155, %v4082
  %4212 = vst.msk [vmem:[%s3 + $0xe0] sm:$0xf] %vm4155, %v4083
  %4213 = vst.msk [vmem:[%s3 + $0xe4] sm:$0xf] %vm4155, %v4084
  %4214 = vst.msk [vmem:[%s3 + $0xe8] sm:$0xf] %vm4155, %v4085
  %4215 = vst.msk [vmem:[%s3 + $0xec] sm:$0xf] %vm4155, %v4086
  %4216 = vst.msk [vmem:[%s3 + $0xf0] sm:$0xf] %vm4155, %v4087
  %4217 = vst.msk [vmem:[%s3 + $0xf4] sm:$0xf] %vm4155, %v4088
  %4218 = vst.msk [vmem:[%s3 + $0xf8] sm:$0xf] %vm4155, %v4089
  %4219 = vst.msk [vmem:[%s3 + $0xfc] sm:$0xf] %vm4155, %v4090
  // Predicated region
  $region14: #{resource_cnn_forward.4} parent=0 // pred_check
    _
  $region15: #{resource_cnn_forward.4} parent=0 // pred_check_branch
    %4221 = sbr.rel (0) target = $region17
  $region16: #{resource_cnn_forward.4} parent=0 // pred_region
    _
  $region17: #{resource_cnn_forward.4} parent=0 // pred_fallthru
    _
  // Predicated region
  $region18: #{resource_cnn_forward.4} parent=0 // pred_check
    _
  $region19: #{resource_cnn_forward.4} parent=0 // pred_check_branch
    %4223 = sbr.rel (0) target = $region21
  $region20: #{resource_cnn_forward.4} parent=0 // pred_region
    _
  $region21: #{resource_cnn_forward.4} parent=0 // pred_fallthru
    _

</llo_original>
